<compile_context>
chip_gen: v7x
topology: tpu7x:2x2x1
jax: 0.10.0
libtpu: 0.0.40
codegen_flags: <defaults>
</compile_context>

<pallas_src>
import functools
import math

import jax
import jax.numpy as jnp
from jax.experimental import pallas as pl
from jax.experimental.pallas import tpu as pltpu

# ---------------- model dims (small synthetic configuration) ----------------
D_MODEL = 32        # transformer / visual feature dim
N_HEADS = 4         # head dim 8
FFN_DIM = 64
D_TEXT = 48         # text-encoder hidden dim (resized to D_MODEL by feat_resizer)
TEXT_HEADS = 6      # head dim 8
TEXT_FFN = 96
VOCAB = 64


# =============================== helpers =====================================

def _layernorm(x, g, b, eps=1e-5):
    """Single-pass LayerNorm: var = E[x^2] - mean^2 (two independent reductions)."""
    m = jnp.mean(x, axis=-1, keepdims=True)
    m2 = jnp.mean(x * x, axis=-1, keepdims=True)
    var = m2 - m * m
    return (x - m) * jax.lax.rsqrt(var + eps) * g + b


_TRANS_B_DIMS = (((1,), (1,)), ((), ()))   # contract last axis of both operands


# ============== fused (resizer-prologue + encoder-layer) kernel ==============

def _fused_layer_kernel(prefix_ref, prefpos_ref, qemb_ref, bias_ref,
                        rzw_ref, rzb_ref, rzg_ref, rzbeta_ref,
                        wqkv_ref, bqkv_ref, wo_ref, bo_ref,
                        ln1g_ref, ln1b_ref, fc1w_ref, fc1b_ref,
                        fc2w_ref, fc2b_ref, ln2g_ref, ln2b_ref,
                        out_ref, qrs_ref, *, n_heads, s_pad):
    """One batch element: FeatureResizer prologue on the question rows, then a
    full DETR-style post-norm encoder layer (MHA + FFN + 2x LN), all in VMEM."""
    D = prefix_ref.shape[-1]
    dh = D // n_heads

    # ---- feat_resizer prologue: Linear(Dt -> D) + LayerNorm on question rows
    qr = _layernorm(
        jnp.dot(qemb_ref[...], rzw_ref[...],
                preferred_element_type=jnp.float32) + rzb_ref[...],
        rzg_ref[...], rzbeta_ref[...])
    qrs_ref[...] = qr                                       # [Lq, D]

    prefix = prefix_ref[...]                                # [S_pre, D]
    qk_pref = prefix + prefpos_ref[...]                     # q = k = src + pos

    # Build the fused sequence (question + pad pos are zero, so qk == src there).
    if s_pad:
        zpad = jnp.zeros((s_pad, D), jnp.float32)
        x = jnp.concatenate([prefix, qr, zpad], axis=0)     # [S, D]
        qk_in = jnp.concatenate([qk_pref, qr, zpad], axis=0)
    else:
        x = jnp.concatenate([prefix, qr], axis=0)
        qk_in = jnp.concatenate([qk_pref, qr], axis=0)
    S = x.shape[0]

    # ---- single merged QKV projection ([D, 3D]); softmax scale folded into Wq.
    #      rows [0:S]  = (src+pos) @ W  -> q, k
    #      rows [S:2S] =  src      @ W  -> v
    xin = jnp.concatenate([qk_in, x], axis=0)               # [2S, D]
    proj = jnp.dot(xin, wqkv_ref[...],
                   preferred_element_type=jnp.float32) + bqkv_ref[...]
    q = proj[:S, 0:D]
    k = proj[:S, D:2 * D]
    v = proj[S:, 2 * D:3 * D]

    wo = wo_ref[...]
    bias_full = jnp.broadcast_to(bias_ref[...], (S, S))     # hoisted: one broadcast

    # Per-head attention; output projection accumulated per head:
    #   concat_h(o_h) @ Wo == sum_h o_h @ Wo[h*dh:(h+1)*dh, :]
    attn = jnp.zeros((S, D), jnp.float32)
    for h in range(n_heads):                                # n_heads <= 4, tiny tiles
        lo = h * dh
        qh = q[:, lo:lo + dh]
        kh = k[:, lo:lo + dh]
        vh = v[:, lo:lo + dh]
        # trans-B contraction: no explicit [dh, S] transpose materialized.
        s = jax.lax.dot_general(qh, kh, _TRANS_B_DIMS,
                                preferred_element_type=jnp.float32) + bias_full
        m = jnp.max(s, axis=-1, keepdims=True)
        e = jnp.exp(s - m)
        inv = pl.reciprocal(jnp.sum(e, axis=-1, keepdims=True), approx=True)
        oh = jnp.dot(e, vh, preferred_element_type=jnp.float32) * inv
        attn = attn + jnp.dot(oh, wo[lo:lo + dh, :],
                              preferred_element_type=jnp.float32)

    # residual + LN1 (dropout = eval no-op)
    x1 = _layernorm(x + attn + bo_ref[...], ln1g_ref[...], ln1b_ref[...])
    # FFN (fc1 relu, fc2) + residual + LN2
    hdn = jnp.maximum(
        jnp.dot(x1, fc1w_ref[...], preferred_element_type=jnp.float32) + fc1b_ref[...],
        0.0)
    x2 = x1 + jnp.dot(hdn, fc2w_ref[...],
                      preferred_element_type=jnp.float32) + fc2b_ref[...]
    out_ref[...] = _layernorm(x2, ln2g_ref[...], ln2b_ref[...])


def fused_layer(prefix, prefix_pos, prefix_mask, q_raw, q_pad_mask,
                layer_p, rz_w, rz_b, rz_g, rz_beta, n_heads):
    """prefix/prefix_pos: [B, S_pre, D] (model dim); q_raw: [B, Lq, Dt] raw question
    representation (word embeddings or text-encoder hidden states) that is resized
    in-kernel; masks: True == padding.  Returns (layer_out [B, S_real, D],
    resized_question [B, Lq, D])."""
    B, S_pre, D = prefix.shape
    _, Lq, Dt = q_raw.shape
    F = layer_p["fc1_w"].shape[1]
    S_real = S_pre + Lq
    S = ((S_real + 7) // 8) * 8                 # sublane-align the fused sequence
    s_pad = S - S_real

    mask_parts = [prefix_mask, q_pad_mask]
    if s_pad:
        mask_parts.append(jnp.ones((B, s_pad), dtype=bool))
    mask = jnp.concatenate(mask_parts, axis=1)                       # [B, S]
    bias = jnp.where(mask, -1e9, 0.0).astype(jnp.float32).reshape(B, 1, S)

    a = layer_p["attn"]
    scale = 1.0 / math.sqrt(D // n_heads)
    # merged Q|K|V weights; softmax scale folded into the Q columns.
    wqkv = jnp.concatenate([a["wq"] * scale, a["wk"], a["wv"]], axis=1)     # [D, 3D]
    bqkv = jnp.concatenate([a["bq"] * scale, a["bk"], a["bv"]]).reshape(1, 3 * D)

    def batched(s2, s3):          # per-batch block, leading dim squeezed
        return pl.BlockSpec((None, s2, s3), lambda b: (b, 0, 0))

    def full(r, c):               # whole weight matrix
        return pl.BlockSpec((r, c), lambda b: (0, 0))

    def row(n):                   # broadcast row vector (bias / LN params)
        return pl.BlockSpec((1, n), lambda b: (0, 0))

    out, qrs = pl.pallas_call(
        functools.partial(_fused_layer_kernel, n_heads=n_heads, s_pad=s_pad),
        out_shape=(jax.ShapeDtypeStruct((B, S, D), jnp.float32),
                   jax.ShapeDtypeStruct((B, Lq, D), jnp.float32)),
        grid=(B,),
        in_specs=[batched(S_pre, D), batched(S_pre, D), batched(Lq, Dt), batched(1, S),
                  full(Dt, D), row(D), row(D), row(D),
                  full(D, 3 * D), row(3 * D),
                  full(D, D), row(D),
                  row(D), row(D),
                  full(D, F), row(F),
                  full(F, D), row(D),
                  row(D), row(D)],
        out_specs=(batched(S, D), batched(Lq, D)),
        compiler_params=pltpu.CompilerParams(dimension_semantics=("parallel",)),
    )(prefix, prefix_pos, q_raw, bias,
      rz_w, rz_b.reshape(1, D), rz_g.reshape(1, D), rz_beta.reshape(1, D),
      wqkv, bqkv,
      a["wo"], a["bo"].reshape(1, D),
      layer_p["ln1_g"].reshape(1, D), layer_p["ln1_b"].reshape(1, D),
      layer_p["fc1_w"], layer_p["fc1_b"].reshape(1, F),
      layer_p["fc2_w"], layer_p["fc2_b"].reshape(1, D),
      layer_p["ln2_g"].reshape(1, D), layer_p["ln2_b"].reshape(1, D))
    return out[:, :S_real], qrs                 # drop the alignment-pad rows


# =============== tiny ops left in plain XLA (launch-overhead) ================

def sine_pos_embed(n, d):
    pos = jnp.arange(n, dtype=jnp.float32)[:, None]
    dim = jnp.arange(d, dtype=jnp.float32)[None, :]
    div = jnp.power(10000.0, (2.0 * jnp.floor(dim / 2.0)) / d)
    ang = pos / div
    return jnp.where(jnp.mod(dim, 2) == 0, jnp.sin(ang), jnp.cos(ang))


def visual_encoder(image, p):
    """image: [B, C, H, W] NCHW.  1x1 conv == [B*HW, C] x [C, D] matmul — far below
    launch-overhead floor as a Pallas call, so plain XLA (perf review)."""
    B, C, H, W = image.shape
    x = image.transpose(0, 2, 3, 1).reshape(B, H * W, C)
    feat = x @ p["vis_proj_w"] + p["vis_proj_b"]
    pe = sine_pos_embed(H * W, D_MODEL)
    pos = jnp.broadcast_to(pe[None, :, :], (B, H * W, D_MODEL))
    mask = jnp.zeros((B, H * W), dtype=bool)                   # no padding
    return {"feature": feat, "position": pos, "mask": mask}


def xla_encoder_layer(src, pos, key_pad, p, n_heads):
    """Post-norm encoder layer in plain XLA (only used for the tiny text encoder)."""
    B, S, D = src.shape
    dh = D // n_heads
    a = p["attn"]
    qk_in = src + pos
    q = (qk_in @ a["wq"] + a["bq"]).reshape(B, S, n_heads, dh)
    k = (qk_in @ a["wk"] + a["bk"]).reshape(B, S, n_heads, dh)
    v = (src @ a["wv"] + a["bv"]).reshape(B, S, n_heads, dh)
    scores = jnp.einsum("bqhd,bkhd->bhqk", q, k) / math.sqrt(dh)
    scores = scores + jnp.where(key_pad, -1e9, 0.0)[:, None, None, :]
    w = jax.nn.softmax(scores, axis=-1)
    o = jnp.einsum("bhqk,bkhd->bqhd", w, v).reshape(B, S, D)
    x1 = _layernorm(src + o @ a["wo"] + a["bo"], p["ln1_g"], p["ln1_b"])
    h = jax.nn.relu(x1 @ p["fc1_w"] + p["fc1_b"])
    x2 = x1 + h @ p["fc2_w"] + p["fc2_b"]
    return _layernorm(x2, p["ln2_g"], p["ln2_b"])


def text_word_embed(ids, p):
    return jnp.take(p["word_embeddings"], ids, axis=0)         # [B, Lq, Dt]


def text_encoder_full(ids, attn_mask, p):
    """BERT-like: embeddings + 1 transformer layer + tanh pooler (all tiny — XLA)."""
    emb = text_word_embed(ids, p)                              # [B, Lq, Dt]
    key_pad = attn_mask == 0
    hidden = xla_encoder_layer(emb, jnp.zeros_like(emb), key_pad,
                               p["text_layer"], TEXT_HEADS)
    pooled = jnp.tanh(hidden[:, 0, :] @ p["pooler_w"] + p["pooler_b"])
    return {"last_hidden_state": hidden, "pooler_output": pooled}


# ============================ AREEncoder forward =============================

def encode_event_knowledge(visual_info, q_ids, q_attn, p):
    # TODO(synk): HF tokenizer (string -> ids) has no Pallas equivalent; ids are inputs.
    B = q_ids.shape[0]
    q_emb = text_word_embed(q_ids, p)                          # [B, Lq, D_TEXT]
    q_pad = q_attn != 1                                        # True == padding
    event = jnp.broadcast_to(p["event_token"].reshape(1, 1, D_MODEL), (B, 1, D_MODEL))
    answer = jnp.broadcast_to(p["answer_token"].reshape(1, 1, D_MODEL), (B, 1, D_MODEL))
    prefix = jnp.concatenate([event, answer, visual_info["feature"]], axis=1)
    prefix_pos = jnp.concatenate([jnp.zeros((B, 2, D_MODEL), jnp.float32),
                                  visual_info["position"]], axis=1)
    prefix_mask = jnp.concatenate([jnp.zeros((B, 2), dtype=bool),
                                   visual_info["mask"]], axis=1)
    # feat_resizer on the raw word embeddings is fused into the reasoning layer kernel.
    out, _ = fused_layer(prefix, prefix_pos, prefix_mask, q_emb, q_pad,
                         p["reasoning_layer"],
                         p["resizer_w"], p["resizer_b"],
                         p["resizer_ln_g"], p["resizer_ln_b"], N_HEADS)
    return {"event_feature": out[:, 0],
            "knowledge_feature": out[:, 1],
            "relation_feature": out[:, 2],
            "gate_feature": out[:, 3:].transpose(1, 0, 2)}     # [S-3, B, D] seq-first


def encode_grounding(visual_info, q_ids, q_attn, p):
    # is_pass_pos=True -> visual_info passed through unchanged (the False branch
    # in the reference would torch.cat a None position and crash).
    orig = text_encoder_full(q_ids, q_attn, p)
    q_pad = q_attn != 1
    Lq = q_ids.shape[1]
    # feat_resizer on the text-encoder hidden states is fused into the explaining
    # layer kernel; the resized question block is emitted as a second output.
    out, q_resized = fused_layer(visual_info["feature"], visual_info["position"],
                                 visual_info["mask"],
                                 orig["last_hidden_state"], q_pad,
                                 p["explaining_layer"],
                                 p["resizer_w"], p["resizer_b"],
                                 p["resizer_ln_g"], p["resizer_ln_b"], N_HEADS)
    out_sbd = out.transpose(1, 0, 2)                           # module layout [S, B, D]
    q_pos = jnp.zeros_like(q_resized)
    mask_full = jnp.concatenate([visual_info["mask"], q_pad], axis=1)
    pos_full = jnp.concatenate([visual_info["position"], q_pos], axis=1)

    res = {
        "question_resize_feature": q_resized.transpose(1, 0, 2),     # [Lq, B, D]
        "question_original_feature": orig,
        "question_position": q_pos.transpose(1, 0, 2),
        "question_mask": q_pad,
        "question_token": {"input_ids": q_ids, "attention_mask": q_attn},
    }
    res["grounding_question_feature"] = out_sbd[-Lq:]
    res["grounding_encoder_feature"] = out_sbd
    res["question_pool_feature"] = orig["pooler_output"]
    res["visual_pool_feature"] = out_sbd[0]
    res["grounding_mask"] = mask_full
    res["grounding_position"] = pos_full.transpose(1, 0, 2)
    return res


def are_encoder_forward(params, image, q_ids, q_attn):
    visual_info = visual_encoder(image, params)
    reasoning = encode_event_knowledge(visual_info, q_ids, q_attn, params)
    grounding = encode_grounding(visual_info, q_ids, q_attn, params)
    return {"explaining_encoder": grounding, "reasoning_encoder": reasoning}


# ============================== parameter init ===============================

def _init_attn(key, d):
    ks = jax.random.split(key, 4)
    p = {}
    for name, kk in zip(("q", "k", "v", "o"), ks):
        p["w" + name] = jax.random.normal(kk, (d, d), jnp.float32) * 0.02
        p["b" + name] = jnp.zeros((d,), jnp.float32)
    return p


def _init_layer(key, d, ffn):
    k1, k2, k3 = jax.random.split(key, 3)
    return {
        "attn": _init_attn(k1, d),
        "ln1_g": jnp.ones((d,), jnp.float32), "ln1_b": jnp.zeros((d,), jnp.float32),
        "ln2_g": jnp.ones((d,), jnp.float32), "ln2_b": jnp.zeros((d,), jnp.float32),
        "fc1_w": jax.random.normal(k2, (d, ffn), jnp.float32) * 0.02,
        "fc1_b": jnp.zeros((ffn,), jnp.float32),
        "fc2_w": jax.random.normal(k3, (ffn, d), jnp.float32) * 0.02,
        "fc2_b": jnp.zeros((d,), jnp.float32),
    }


def init_params(key, c_in):
    ks = jax.random.split(key, 9)
    return {
        "event_token": jax.random.normal(ks[0], (1, D_MODEL), jnp.float32) * 0.02,
        "answer_token": jax.random.normal(ks[1], (1, D_MODEL), jnp.float32) * 0.02,
        "word_embeddings": jax.random.normal(ks[2], (VOCAB, D_TEXT), jnp.float32) * 0.02,
        "text_layer": _init_layer(ks[3], D_TEXT, TEXT_FFN),
        "pooler_w": jax.random.normal(ks[4], (D_TEXT, D_TEXT), jnp.float32) * 0.02,
        "pooler_b": jnp.zeros((D_TEXT,), jnp.float32),
        "resizer_w": jax.random.normal(ks[5], (D_TEXT, D_MODEL), jnp.float32) * 0.02,
        "resizer_b": jnp.zeros((D_MODEL,), jnp.float32),
        "resizer_ln_g": jnp.ones((D_MODEL,), jnp.float32),
        "resizer_ln_b": jnp.zeros((D_MODEL,), jnp.float32),
        "vis_proj_w": jax.random.normal(ks[6], (c_in, D_MODEL), jnp.float32) * 0.02,
        "vis_proj_b": jnp.zeros((D_MODEL,), jnp.float32),
        "reasoning_layer": _init_layer(ks[7], D_MODEL, FFN_DIM),
        "explaining_layer": _init_layer(ks[8], D_MODEL, FFN_DIM),
    }


# =================================== main ====================================

if __name__ == "__main__":
    B, C, H, W = 2, 4, 8, 8
    Lq = 8

    key = jax.random.PRNGKey(0)
    k_img, k_ids, k_params = jax.random.split(key, 3)

    image = jax.random.normal(k_img, (B, C, H, W), jnp.float32)      # NCHW
    # Deterministic synthetic "tokenized" question (padding in 2nd sample).
    q_ids = jax.random.randint(k_ids, (B, Lq), 1, VOCAB, dtype=jnp.int32)
    q_attn = jnp.array([[1] * Lq, [1] * (Lq - 3) + [0] * 3], dtype=jnp.int32)

    params = init_params(k_params, C)

    fwd = jax.jit(are_encoder_forward)
    out = fwd(params, image, q_ids, q_attn)
    out = jax.tree_util.tree_map(jax.block_until_ready, out)

    # sanity on a couple of output shapes
    assert out["reasoning_encoder"]["event_feature"].shape == (B, D_MODEL)
    assert out["reasoning_encoder"]["gate_feature"].shape == (H * W + Lq + 2 - 3, B, D_MODEL)
    assert out["explaining_encoder"]["grounding_encoder_feature"].shape == (H * W + Lq, B, D_MODEL)
    assert out["explaining_encoder"]["question_resize_feature"].shape == (Lq, B, D_MODEL)
    assert out["explaining_encoder"]["question_pool_feature"].shape == (B, D_TEXT)

    print("KERNEL_OK")
</pallas_src>

<mosaic_0001>
module attributes {stable_mosaic.version = 11 : i64} {
  func.func @_fused_layer_kernel(%arg0: i32, %arg1: memref<1x64x32xf32, #tpu.memory_space<vmem>>, %arg2: memref<1x64x32xf32, #tpu.memory_space<vmem>>, %arg3: memref<1x8x48xf32, #tpu.memory_space<vmem>>, %arg4: memref<1x1x72xf32, #tpu.memory_space<vmem>>, %arg5: memref<48x32xf32, #tpu.memory_space<vmem>>, %arg6: memref<1x32xf32, #tpu.memory_space<vmem>>, %arg7: memref<1x32xf32, #tpu.memory_space<vmem>>, %arg8: memref<1x32xf32, #tpu.memory_space<vmem>>, %arg9: memref<32x96xf32, #tpu.memory_space<vmem>>, %arg10: memref<1x96xf32, #tpu.memory_space<vmem>>, %arg11: memref<32x32xf32, #tpu.memory_space<vmem>>, %arg12: memref<1x32xf32, #tpu.memory_space<vmem>>, %arg13: memref<1x32xf32, #tpu.memory_space<vmem>>, %arg14: memref<1x32xf32, #tpu.memory_space<vmem>>, %arg15: memref<32x64xf32, #tpu.memory_space<vmem>>, %arg16: memref<1x64xf32, #tpu.memory_space<vmem>>, %arg17: memref<64x32xf32, #tpu.memory_space<vmem>>, %arg18: memref<1x32xf32, #tpu.memory_space<vmem>>, %arg19: memref<1x32xf32, #tpu.memory_space<vmem>>, %arg20: memref<1x32xf32, #tpu.memory_space<vmem>>, %arg21: memref<1x72x32xf32, #tpu.memory_space<vmem>>, %arg22: memref<1x8x32xf32, #tpu.memory_space<vmem>>) attributes {dimension_semantics = [#tpu.dimension_semantics<parallel>], iteration_bounds = array<i64: 2>, scalar_prefetch = 0 : i64, scratch_operands = 0 : i64, tpu.core_type = #tpu.core_type<tc>, window_params = [{transform_indices = @transform_0, window_bounds = array<i64: 1, 64, 32>}, {transform_indices = @transform_1, window_bounds = array<i64: 1, 64, 32>}, {transform_indices = @transform_2, window_bounds = array<i64: 1, 8, 48>}, {transform_indices = @transform_3, window_bounds = array<i64: 1, 1, 72>}, {pipeline_mode = #tpu.pipeline_mode<synchronous>, transform_indices = @transform_4, window_bounds = array<i64: 48, 32>}, {pipeline_mode = #tpu.pipeline_mode<synchronous>, transform_indices = @transform_5, window_bounds = array<i64: 1, 32>}, {pipeline_mode = #tpu.pipeline_mode<synchronous>, transform_indices = @transform_6, window_bounds = array<i64: 1, 32>}, {pipeline_mode = #tpu.pipeline_mode<synchronous>, transform_indices = @transform_7, window_bounds = array<i64: 1, 32>}, {pipeline_mode = #tpu.pipeline_mode<synchronous>, transform_indices = @transform_8, window_bounds = array<i64: 32, 96>}, {pipeline_mode = #tpu.pipeline_mode<synchronous>, transform_indices = @transform_9, window_bounds = array<i64: 1, 96>}, {pipeline_mode = #tpu.pipeline_mode<synchronous>, transform_indices = @transform_10, window_bounds = array<i64: 32, 32>}, {pipeline_mode = #tpu.pipeline_mode<synchronous>, transform_indices = @transform_11, window_bounds = array<i64: 1, 32>}, {pipeline_mode = #tpu.pipeline_mode<synchronous>, transform_indices = @transform_12, window_bounds = array<i64: 1, 32>}, {pipeline_mode = #tpu.pipeline_mode<synchronous>, transform_indices = @transform_13, window_bounds = array<i64: 1, 32>}, {pipeline_mode = #tpu.pipeline_mode<synchronous>, transform_indices = @transform_14, window_bounds = array<i64: 32, 64>}, {pipeline_mode = #tpu.pipeline_mode<synchronous>, transform_indices = @transform_15, window_bounds = array<i64: 1, 64>}, {pipeline_mode = #tpu.pipeline_mode<synchronous>, transform_indices = @transform_16, window_bounds = array<i64: 64, 32>}, {pipeline_mode = #tpu.pipeline_mode<synchronous>, transform_indices = @transform_17, window_bounds = array<i64: 1, 32>}, {pipeline_mode = #tpu.pipeline_mode<synchronous>, transform_indices = @transform_18, window_bounds = array<i64: 1, 32>}, {pipeline_mode = #tpu.pipeline_mode<synchronous>, transform_indices = @transform_19, window_bounds = array<i64: 1, 32>}, {transform_indices = @transform_20, window_bounds = array<i64: 1, 72, 32>}, {transform_indices = @transform_21, window_bounds = array<i64: 1, 8, 32>}]} {
    %c0 = arith.constant 0 : index
    %c0_0 = arith.constant 0 : index
    %c0_1 = arith.constant 0 : index
    %0 = vector.load %arg3[%c0, %c0_0, %c0_1] : memref<1x8x48xf32, #tpu.memory_space<vmem>>, vector<1x8x48xf32>
    %1 = vector.shape_cast %0 : vector<1x8x48xf32> to vector<8x48xf32>
    %c0_2 = arith.constant 0 : index
    %c0_3 = arith.constant 0 : index
    %2 = vector.load %arg5[%c0_2, %c0_3] : memref<48x32xf32, #tpu.memory_space<vmem>>, vector<48x32xf32>
    %cst = arith.constant dense<0.000000e+00> : vector<8x32xf32>
    %3 = tpu.matmul %1, %2, %cst {dimension_numbers = #tpu.dot_dimension_numbers<[1], [0], [0], [1], [0, 0, 1, 1], [], []>} : vector<8x48xf32>, vector<48x32xf32>, vector<8x32xf32> -> vector<8x32xf32>
    %c0_4 = arith.constant 0 : index
    %c0_5 = arith.constant 0 : index
    %4 = vector.load %arg6[%c0_4, %c0_5] : memref<1x32xf32, #tpu.memory_space<vmem>>, vector<1x32xf32>
    %5 = vector.broadcast %4 : vector<1x32xf32> to vector<8x32xf32>
    %6 = arith.addf %3, %5 : vector<8x32xf32>
    %c0_6 = arith.constant 0 : index
    %c0_7 = arith.constant 0 : index
    %7 = vector.load %arg7[%c0_6, %c0_7] : memref<1x32xf32, #tpu.memory_space<vmem>>, vector<1x32xf32>
    %c0_8 = arith.constant 0 : index
    %c0_9 = arith.constant 0 : index
    %8 = vector.load %arg8[%c0_8, %c0_9] : memref<1x32xf32, #tpu.memory_space<vmem>>, vector<1x32xf32>
    %cst_10 = arith.constant dense<0.000000e+00> : vector<8xf32>
    %9 = vector.multi_reduction <add>, %6, %cst_10 [1] : vector<8x32xf32> to vector<8xf32>
    %10 = vector.shape_cast %9 : vector<8xf32> to vector<8x1xf32>
    %cst_11 = arith.constant 3.200000e+01 : f32
    %11 = vector.broadcast %cst_11 : f32 to vector<8x1xf32>
    %12 = arith.divf %10, %11 : vector<8x1xf32>
    %13 = arith.mulf %6, %6 : vector<8x32xf32>
    %cst_12 = arith.constant dense<0.000000e+00> : vector<8xf32>
    %14 = vector.multi_reduction <add>, %13, %cst_12 [1] : vector<8x32xf32> to vector<8xf32>
    %15 = vector.shape_cast %14 : vector<8xf32> to vector<8x1xf32>
    %cst_13 = arith.constant 3.200000e+01 : f32
    %16 = vector.broadcast %cst_13 : f32 to vector<8x1xf32>
    %17 = arith.divf %15, %16 : vector<8x1xf32>
    %18 = arith.mulf %12, %12 : vector<8x1xf32>
    %19 = arith.subf %17, %18 : vector<8x1xf32>
    %20 = vector.broadcast %12 : vector<8x1xf32> to vector<8x32xf32>
    %21 = arith.subf %6, %20 : vector<8x32xf32>
    %cst_14 = arith.constant 9.99999974E-6 : f32
    %22 = vector.broadcast %cst_14 : f32 to vector<8x1xf32>
    %23 = arith.addf %19, %22 : vector<8x1xf32>
    %24 = math.rsqrt %23 : vector<8x1xf32>
    %25 = vector.broadcast %24 : vector<8x1xf32> to vector<8x32xf32>
    %26 = arith.mulf %21, %25 : vector<8x32xf32>
    %27 = vector.broadcast %7 : vector<1x32xf32> to vector<8x32xf32>
    %28 = arith.mulf %26, %27 : vector<8x32xf32>
    %29 = vector.broadcast %8 : vector<1x32xf32> to vector<8x32xf32>
    %30 = arith.addf %28, %29 : vector<8x32xf32>
    %c0_15 = arith.constant 0 : index
    %c0_16 = arith.constant 0 : index
    %c0_17 = arith.constant 0 : index
    %31 = vector.load %arg22[%c0_15, %c0_16, %c0_17] : memref<1x8x32xf32, #tpu.memory_space<vmem>>, vector<1x8x32xf32>
    %32 = vector.shape_cast %31 : vector<1x8x32xf32> to vector<8x32xf32>
    %33 = vector.shape_cast %30 : vector<8x32xf32> to vector<1x8x32xf32>
    tpu.vector_store %arg22[%c0_15, %c0_16, %c0_17], %33 {strides = array<i32>} : memref<1x8x32xf32, #tpu.memory_space<vmem>>, vector<1x8x32xf32>,
    %c0_18 = arith.constant 0 : index
    %c0_19 = arith.constant 0 : index
    %c0_20 = arith.constant 0 : index
    %34 = vector.load %arg1[%c0_18, %c0_19, %c0_20] : memref<1x64x32xf32, #tpu.memory_space<vmem>>, vector<1x64x32xf32>
    %35 = vector.shape_cast %34 : vector<1x64x32xf32> to vector<64x32xf32>
    %c0_21 = arith.constant 0 : index
    %c0_22 = arith.constant 0 : index
    %c0_23 = arith.constant 0 : index
    %36 = vector.load %arg2[%c0_21, %c0_22, %c0_23] : memref<1x64x32xf32, #tpu.memory_space<vmem>>, vector<1x64x32xf32>
    %37 = vector.shape_cast %36 : vector<1x64x32xf32> to vector<64x32xf32>
    %38 = arith.addf %35, %37 : vector<64x32xf32>
    %39 = tpu.concatenate %35, %30 in 0 : vector<64x32xf32>, vector<8x32xf32> -> vector<72x32xf32>
    %40 = tpu.concatenate %38, %30 in 0 : vector<64x32xf32>, vector<8x32xf32> -> vector<72x32xf32>
    %41 = tpu.concatenate %40, %39 in 0 : vector<72x32xf32>, vector<72x32xf32> -> vector<144x32xf32>
    %c0_24 = arith.constant 0 : index
    %c0_25 = arith.constant 0 : index
    %42 = vector.load %arg9[%c0_24, %c0_25] : memref<32x96xf32, #tpu.memory_space<vmem>>, vector<32x96xf32>
    %cst_26 = arith.constant dense<0.000000e+00> : vector<144x96xf32>
    %43 = tpu.matmul %41, %42, %cst_26 {dimension_numbers = #tpu.dot_dimension_numbers<[1], [0], [0], [1], [0, 0, 1, 1], [], []>} : vector<144x32xf32>, vector<32x96xf32>, vector<144x96xf32> -> vector<144x96xf32>
    %c0_27 = arith.constant 0 : index
    %c0_28 = arith.constant 0 : index
    %44 = vector.load %arg10[%c0_27, %c0_28] : memref<1x96xf32, #tpu.memory_space<vmem>>, vector<1x96xf32>
    %45 = vector.broadcast %44 : vector<1x96xf32> to vector<144x96xf32>
    %46 = arith.addf %43, %45 : vector<144x96xf32>
    %47 = vector.extract_strided_slice %46 {offsets = [0, 0], sizes = [72, 32], strides = [1, 1]} : vector<144x96xf32> to vector<72x32xf32>
    %48 = vector.extract_strided_slice %46 {offsets = [0, 32], sizes = [72, 32], strides = [1, 1]} : vector<144x96xf32> to vector<72x32xf32>
    %49 = vector.extract_strided_slice %46 {offsets = [72, 64], sizes = [72, 32], strides = [1, 1]} : vector<144x96xf32> to vector<72x32xf32>
    %c0_29 = arith.constant 0 : index
    %c0_30 = arith.constant 0 : index
    %50 = vector.load %arg11[%c0_29, %c0_30] : memref<32x32xf32, #tpu.memory_space<vmem>>, vector<32x32xf32>
    %c0_31 = arith.constant 0 : index
    %c0_32 = arith.constant 0 : index
    %c0_33 = arith.constant 0 : index
    %51 = vector.load %arg4[%c0_31, %c0_32, %c0_33] : memref<1x1x72xf32, #tpu.memory_space<vmem>>, vector<1x1x72xf32>
    %52 = vector.shape_cast %51 : vector<1x1x72xf32> to vector<1x72xf32>
    %53 = vector.shape_cast %52 : vector<1x72xf32> to vector<1x72xf32>
    %54 = vector.broadcast %53 : vector<1x72xf32> to vector<72x72xf32>
    %cst_34 = arith.constant 0.000000e+00 : f32
    %55 = vector.broadcast %cst_34 : f32 to vector<72x32xf32>
    %56 = vector.extract_strided_slice %47 {offsets = [0, 0], sizes = [72, 8], strides = [1, 1]} : vector<72x32xf32> to vector<72x8xf32>
    %57 = vector.extract_strided_slice %48 {offsets = [0, 0], sizes = [72, 8], strides = [1, 1]} : vector<72x32xf32> to vector<72x8xf32>
    %58 = vector.extract_strided_slice %49 {offsets = [0, 0], sizes = [72, 8], strides = [1, 1]} : vector<72x32xf32> to vector<72x8xf32>
    %cst_35 = arith.constant dense<0.000000e+00> : vector<72x72xf32>
    %59 = tpu.matmul %56, %57, %cst_35 {dimension_numbers = #tpu.dot_dimension_numbers<[1], [1], [0], [0], [0, 0, 1, 0], [], []>} : vector<72x8xf32>, vector<72x8xf32>, vector<72x72xf32> -> vector<72x72xf32>
    %60 = arith.addf %59, %54 : vector<72x72xf32>
    %cst_36 = arith.constant dense<0xFF800000> : vector<72xf32>
    %61 = vector.multi_reduction <maximumf>, %60, %cst_36 [1] : vector<72x72xf32> to vector<72xf32>
    %62 = vector.shape_cast %61 : vector<72xf32> to vector<72x1xf32>
    %63 = vector.broadcast %62 : vector<72x1xf32> to vector<72x72xf32>
    %64 = arith.subf %60, %63 : vector<72x72xf32>
    %65 = math.exp %64 : vector<72x72xf32>
    %cst_37 = arith.constant dense<0.000000e+00> : vector<72xf32>
    %66 = vector.multi_reduction <add>, %65, %cst_37 [1] : vector<72x72xf32> to vector<72xf32>
    %67 = vector.shape_cast %66 : vector<72xf32> to vector<72x1xf32>
    %68 = tpu.reciprocal %67 {approx = true} : vector<72x1xf32> -> vector<72x1xf32>
    %cst_38 = arith.constant dense<0.000000e+00> : vector<72x8xf32>
    %69 = tpu.matmul %65, %58, %cst_38 {dimension_numbers = #tpu.dot_dimension_numbers<[1], [0], [0], [1], [0, 0, 1, 1], [], []>} : vector<72x72xf32>, vector<72x8xf32>, vector<72x8xf32> -> vector<72x8xf32>
    %70 = vector.broadcast %68 : vector<72x1xf32> to vector<72x8xf32>
    %71 = arith.mulf %69, %70 : vector<72x8xf32>
    %72 = vector.extract_strided_slice %50 {offsets = [0, 0], sizes = [8, 32], strides = [1, 1]} : vector<32x32xf32> to vector<8x32xf32>
    %cst_39 = arith.constant dense<0.000000e+00> : vector<72x32xf32>
    %73 = tpu.matmul %71, %72, %cst_39 {dimension_numbers = #tpu.dot_dimension_numbers<[1], [0], [0], [1], [0, 0, 1, 1], [], []>} : vector<72x8xf32>, vector<8x32xf32>, vector<72x32xf32> -> vector<72x32xf32>
    %74 = arith.addf %55, %73 : vector<72x32xf32>
    %75 = vector.extract_strided_slice %47 {offsets = [0, 8], sizes = [72, 8], strides = [1, 1]} : vector<72x32xf32> to vector<72x8xf32>
    %76 = vector.extract_strided_slice %48 {offsets = [0, 8], sizes = [72, 8], strides = [1, 1]} : vector<72x32xf32> to vector<72x8xf32>
    %77 = vector.extract_strided_slice %49 {offsets = [0, 8], sizes = [72, 8], strides = [1, 1]} : vector<72x32xf32> to vector<72x8xf32>
    %cst_40 = arith.constant dense<0.000000e+00> : vector<72x72xf32>
    %78 = tpu.matmul %75, %76, %cst_40 {dimension_numbers = #tpu.dot_dimension_numbers<[1], [1], [0], [0], [0, 0, 1, 0], [], []>} : vector<72x8xf32>, vector<72x8xf32>, vector<72x72xf32> -> vector<72x72xf32>
    %79 = arith.addf %78, %54 : vector<72x72xf32>
    %cst_41 = arith.constant dense<0xFF800000> : vector<72xf32>
    %80 = vector.multi_reduction <maximumf>, %79, %cst_41 [1] : vector<72x72xf32> to vector<72xf32>
    %81 = vector.shape_cast %80 : vector<72xf32> to vector<72x1xf32>
    %82 = vector.broadcast %81 : vector<72x1xf32> to vector<72x72xf32>
    %83 = arith.subf %79, %82 : vector<72x72xf32>
    %84 = math.exp %83 : vector<72x72xf32>
    %cst_42 = arith.constant dense<0.000000e+00> : vector<72xf32>
    %85 = vector.multi_reduction <add>, %84, %cst_42 [1] : vector<72x72xf32> to vector<72xf32>
    %86 = vector.shape_cast %85 : vector<72xf32> to vector<72x1xf32>
    %87 = tpu.reciprocal %86 {approx = true} : vector<72x1xf32> -> vector<72x1xf32>
    %cst_43 = arith.constant dense<0.000000e+00> : vector<72x8xf32>
    %88 = tpu.matmul %84, %77, %cst_43 {dimension_numbers = #tpu.dot_dimension_numbers<[1], [0], [0], [1], [0, 0, 1, 1], [], []>} : vector<72x72xf32>, vector<72x8xf32>, vector<72x8xf32> -> vector<72x8xf32>
    %89 = vector.broadcast %87 : vector<72x1xf32> to vector<72x8xf32>
    %90 = arith.mulf %88, %89 : vector<72x8xf32>
    %91 = vector.extract_strided_slice %50 {offsets = [8, 0], sizes = [8, 32], strides = [1, 1]} : vector<32x32xf32> to vector<8x32xf32>
    %cst_44 = arith.constant dense<0.000000e+00> : vector<72x32xf32>
    %92 = tpu.matmul %90, %91, %cst_44 {dimension_numbers = #tpu.dot_dimension_numbers<[1], [0], [0], [1], [0, 0, 1, 1], [], []>} : vector<72x8xf32>, vector<8x32xf32>, vector<72x32xf32> -> vector<72x32xf32>
    %93 = arith.addf %74, %92 : vector<72x32xf32>
    %94 = vector.extract_strided_slice %47 {offsets = [0, 16], sizes = [72, 8], strides = [1, 1]} : vector<72x32xf32> to vector<72x8xf32>
    %95 = vector.extract_strided_slice %48 {offsets = [0, 16], sizes = [72, 8], strides = [1, 1]} : vector<72x32xf32> to vector<72x8xf32>
    %96 = vector.extract_strided_slice %49 {offsets = [0, 16], sizes = [72, 8], strides = [1, 1]} : vector<72x32xf32> to vector<72x8xf32>
    %cst_45 = arith.constant dense<0.000000e+00> : vector<72x72xf32>
    %97 = tpu.matmul %94, %95, %cst_45 {dimension_numbers = #tpu.dot_dimension_numbers<[1], [1], [0], [0], [0, 0, 1, 0], [], []>} : vector<72x8xf32>, vector<72x8xf32>, vector<72x72xf32> -> vector<72x72xf32>
    %98 = arith.addf %97, %54 : vector<72x72xf32>
    %cst_46 = arith.constant dense<0xFF800000> : vector<72xf32>
    %99 = vector.multi_reduction <maximumf>, %98, %cst_46 [1] : vector<72x72xf32> to vector<72xf32>
    %100 = vector.shape_cast %99 : vector<72xf32> to vector<72x1xf32>
    %101 = vector.broadcast %100 : vector<72x1xf32> to vector<72x72xf32>
    %102 = arith.subf %98, %101 : vector<72x72xf32>
    %103 = math.exp %102 : vector<72x72xf32>
    %cst_47 = arith.constant dense<0.000000e+00> : vector<72xf32>
    %104 = vector.multi_reduction <add>, %103, %cst_47 [1] : vector<72x72xf32> to vector<72xf32>
    %105 = vector.shape_cast %104 : vector<72xf32> to vector<72x1xf32>
    %106 = tpu.reciprocal %105 {approx = true} : vector<72x1xf32> -> vector<72x1xf32>
    %cst_48 = arith.constant dense<0.000000e+00> : vector<72x8xf32>
    %107 = tpu.matmul %103, %96, %cst_48 {dimension_numbers = #tpu.dot_dimension_numbers<[1], [0], [0], [1], [0, 0, 1, 1], [], []>} : vector<72x72xf32>, vector<72x8xf32>, vector<72x8xf32> -> vector<72x8xf32>
    %108 = vector.broadcast %106 : vector<72x1xf32> to vector<72x8xf32>
    %109 = arith.mulf %107, %108 : vector<72x8xf32>
    %110 = vector.extract_strided_slice %50 {offsets = [16, 0], sizes = [8, 32], strides = [1, 1]} : vector<32x32xf32> to vector<8x32xf32>
    %cst_49 = arith.constant dense<0.000000e+00> : vector<72x32xf32>
    %111 = tpu.matmul %109, %110, %cst_49 {dimension_numbers = #tpu.dot_dimension_numbers<[1], [0], [0], [1], [0, 0, 1, 1], [], []>} : vector<72x8xf32>, vector<8x32xf32>, vector<72x32xf32> -> vector<72x32xf32>
    %112 = arith.addf %93, %111 : vector<72x32xf32>
    %113 = vector.extract_strided_slice %47 {offsets = [0, 24], sizes = [72, 8], strides = [1, 1]} : vector<72x32xf32> to vector<72x8xf32>
    %114 = vector.extract_strided_slice %48 {offsets = [0, 24], sizes = [72, 8], strides = [1, 1]} : vector<72x32xf32> to vector<72x8xf32>
    %115 = vector.extract_strided_slice %49 {offsets = [0, 24], sizes = [72, 8], strides = [1, 1]} : vector<72x32xf32> to vector<72x8xf32>
    %cst_50 = arith.constant dense<0.000000e+00> : vector<72x72xf32>
    %116 = tpu.matmul %113, %114, %cst_50 {dimension_numbers = #tpu.dot_dimension_numbers<[1], [1], [0], [0], [0, 0, 1, 0], [], []>} : vector<72x8xf32>, vector<72x8xf32>, vector<72x72xf32> -> vector<72x72xf32>
    %117 = arith.addf %116, %54 : vector<72x72xf32>
    %cst_51 = arith.constant dense<0xFF800000> : vector<72xf32>
    %118 = vector.multi_reduction <maximumf>, %117, %cst_51 [1] : vector<72x72xf32> to vector<72xf32>
    %119 = vector.shape_cast %118 : vector<72xf32> to vector<72x1xf32>
    %120 = vector.broadcast %119 : vector<72x1xf32> to vector<72x72xf32>
    %121 = arith.subf %117, %120 : vector<72x72xf32>
    %122 = math.exp %121 : vector<72x72xf32>
    %cst_52 = arith.constant dense<0.000000e+00> : vector<72xf32>
    %123 = vector.multi_reduction <add>, %122, %cst_52 [1] : vector<72x72xf32> to vector<72xf32>
    %124 = vector.shape_cast %123 : vector<72xf32> to vector<72x1xf32>
    %125 = tpu.reciprocal %124 {approx = true} : vector<72x1xf32> -> vector<72x1xf32>
    %cst_53 = arith.constant dense<0.000000e+00> : vector<72x8xf32>
    %126 = tpu.matmul %122, %115, %cst_53 {dimension_numbers = #tpu.dot_dimension_numbers<[1], [0], [0], [1], [0, 0, 1, 1], [], []>} : vector<72x72xf32>, vector<72x8xf32>, vector<72x8xf32> -> vector<72x8xf32>
    %127 = vector.broadcast %125 : vector<72x1xf32> to vector<72x8xf32>
    %128 = arith.mulf %126, %127 : vector<72x8xf32>
    %129 = vector.extract_strided_slice %50 {offsets = [24, 0], sizes = [8, 32], strides = [1, 1]} : vector<32x32xf32> to vector<8x32xf32>
    %cst_54 = arith.constant dense<0.000000e+00> : vector<72x32xf32>
    %130 = tpu.matmul %128, %129, %cst_54 {dimension_numbers = #tpu.dot_dimension_numbers<[1], [0], [0], [1], [0, 0, 1, 1], [], []>} : vector<72x8xf32>, vector<8x32xf32>, vector<72x32xf32> -> vector<72x32xf32>
    %131 = arith.addf %112, %130 : vector<72x32xf32>
    %132 = arith.addf %39, %131 : vector<72x32xf32>
    %c0_55 = arith.constant 0 : index
    %c0_56 = arith.constant 0 : index
    %133 = vector.load %arg12[%c0_55, %c0_56] : memref<1x32xf32, #tpu.memory_space<vmem>>, vector<1x32xf32>
    %134 = vector.broadcast %133 : vector<1x32xf32> to vector<72x32xf32>
    %135 = arith.addf %132, %134 : vector<72x32xf32>
    %c0_57 = arith.constant 0 : index
    %c0_58 = arith.constant 0 : index
    %136 = vector.load %arg13[%c0_57, %c0_58] : memref<1x32xf32, #tpu.memory_space<vmem>>, vector<1x32xf32>
    %c0_59 = arith.constant 0 : index
    %c0_60 = arith.constant 0 : index
    %137 = vector.load %arg14[%c0_59, %c0_60] : memref<1x32xf32, #tpu.memory_space<vmem>>, vector<1x32xf32>
    %cst_61 = arith.constant dense<0.000000e+00> : vector<72xf32>
    %138 = vector.multi_reduction <add>, %135, %cst_61 [1] : vector<72x32xf32> to vector<72xf32>
    %139 = vector.shape_cast %138 : vector<72xf32> to vector<72x1xf32>
    %cst_62 = arith.constant 3.200000e+01 : f32
    %140 = vector.broadcast %cst_62 : f32 to vector<72x1xf32>
    %141 = arith.divf %139, %140 : vector<72x1xf32>
    %142 = arith.mulf %135, %135 : vector<72x32xf32>
    %cst_63 = arith.constant dense<0.000000e+00> : vector<72xf32>
    %143 = vector.multi_reduction <add>, %142, %cst_63 [1] : vector<72x32xf32> to vector<72xf32>
    %144 = vector.shape_cast %143 : vector<72xf32> to vector<72x1xf32>
    %cst_64 = arith.constant 3.200000e+01 : f32
    %145 = vector.broadcast %cst_64 : f32 to vector<72x1xf32>
    %146 = arith.divf %144, %145 : vector<72x1xf32>
    %147 = arith.mulf %141, %141 : vector<72x1xf32>
    %148 = arith.subf %146, %147 : vector<72x1xf32>
    %149 = vector.broadcast %141 : vector<72x1xf32> to vector<72x32xf32>
    %150 = arith.subf %135, %149 : vector<72x32xf32>
    %cst_65 = arith.constant 9.99999974E-6 : f32
    %151 = vector.broadcast %cst_65 : f32 to vector<72x1xf32>
    %152 = arith.addf %148, %151 : vector<72x1xf32>
    %153 = math.rsqrt %152 : vector<72x1xf32>
    %154 = vector.broadcast %153 : vector<72x1xf32> to vector<72x32xf32>
    %155 = arith.mulf %150, %154 : vector<72x32xf32>
    %156 = vector.broadcast %136 : vector<1x32xf32> to vector<72x32xf32>
    %157 = arith.mulf %155, %156 : vector<72x32xf32>
    %158 = vector.broadcast %137 : vector<1x32xf32> to vector<72x32xf32>
    %159 = arith.addf %157, %158 : vector<72x32xf32>
    %c0_66 = arith.constant 0 : index
    %c0_67 = arith.constant 0 : index
    %160 = vector.load %arg15[%c0_66, %c0_67] : memref<32x64xf32, #tpu.memory_space<vmem>>, vector<32x64xf32>
    %cst_68 = arith.constant dense<0.000000e+00> : vector<72x64xf32>
    %161 = tpu.matmul %159, %160, %cst_68 {dimension_numbers = #tpu.dot_dimension_numbers<[1], [0], [0], [1], [0, 0, 1, 1], [], []>} : vector<72x32xf32>, vector<32x64xf32>, vector<72x64xf32> -> vector<72x64xf32>
    %c0_69 = arith.constant 0 : index
    %c0_70 = arith.constant 0 : index
    %162 = vector.load %arg16[%c0_69, %c0_70] : memref<1x64xf32, #tpu.memory_space<vmem>>, vector<1x64xf32>
    %163 = vector.broadcast %162 : vector<1x64xf32> to vector<72x64xf32>
    %164 = arith.addf %161, %163 : vector<72x64xf32>
    %cst_71 = arith.constant 0.000000e+00 : f32
    %165 = vector.broadcast %cst_71 : f32 to vector<72x64xf32>
    %166 = arith.maximumf %164, %165 : vector<72x64xf32>
    %c0_72 = arith.constant 0 : index
    %c0_73 = arith.constant 0 : index
    %167 = vector.load %arg17[%c0_72, %c0_73] : memref<64x32xf32, #tpu.memory_space<vmem>>, vector<64x32xf32>
    %cst_74 = arith.constant dense<0.000000e+00> : vector<72x32xf32>
    %168 = tpu.matmul %166, %167, %cst_74 {dimension_numbers = #tpu.dot_dimension_numbers<[1], [0], [0], [1], [0, 0, 1, 1], [], []>} : vector<72x64xf32>, vector<64x32xf32>, vector<72x32xf32> -> vector<72x32xf32>
    %169 = arith.addf %159, %168 : vector<72x32xf32>
    %c0_75 = arith.constant 0 : index
    %c0_76 = arith.constant 0 : index
    %170 = vector.load %arg18[%c0_75, %c0_76] : memref<1x32xf32, #tpu.memory_space<vmem>>, vector<1x32xf32>
    %171 = vector.broadcast %170 : vector<1x32xf32> to vector<72x32xf32>
    %172 = arith.addf %169, %171 : vector<72x32xf32>
    %c0_77 = arith.constant 0 : index
    %c0_78 = arith.constant 0 : index
    %173 = vector.load %arg19[%c0_77, %c0_78] : memref<1x32xf32, #tpu.memory_space<vmem>>, vector<1x32xf32>
    %c0_79 = arith.constant 0 : index
    %c0_80 = arith.constant 0 : index
    %174 = vector.load %arg20[%c0_79, %c0_80] : memref<1x32xf32, #tpu.memory_space<vmem>>, vector<1x32xf32>
    %cst_81 = arith.constant dense<0.000000e+00> : vector<72xf32>
    %175 = vector.multi_reduction <add>, %172, %cst_81 [1] : vector<72x32xf32> to vector<72xf32>
    %176 = vector.shape_cast %175 : vector<72xf32> to vector<72x1xf32>
    %cst_82 = arith.constant 3.200000e+01 : f32
    %177 = vector.broadcast %cst_82 : f32 to vector<72x1xf32>
    %178 = arith.divf %176, %177 : vector<72x1xf32>
    %179 = arith.mulf %172, %172 : vector<72x32xf32>
    %cst_83 = arith.constant dense<0.000000e+00> : vector<72xf32>
    %180 = vector.multi_reduction <add>, %179, %cst_83 [1] : vector<72x32xf32> to vector<72xf32>
    %181 = vector.shape_cast %180 : vector<72xf32> to vector<72x1xf32>
    %cst_84 = arith.constant 3.200000e+01 : f32
    %182 = vector.broadcast %cst_84 : f32 to vector<72x1xf32>
    %183 = arith.divf %181, %182 : vector<72x1xf32>
    %184 = arith.mulf %178, %178 : vector<72x1xf32>
    %185 = arith.subf %183, %184 : vector<72x1xf32>
    %186 = vector.broadcast %178 : vector<72x1xf32> to vector<72x32xf32>
    %187 = arith.subf %172, %186 : vector<72x32xf32>
    %cst_85 = arith.constant 9.99999974E-6 : f32
    %188 = vector.broadcast %cst_85 : f32 to vector<72x1xf32>
    %189 = arith.addf %185, %188 : vector<72x1xf32>
    %190 = math.rsqrt %189 : vector<72x1xf32>
    %191 = vector.broadcast %190 : vector<72x1xf32> to vector<72x32xf32>
    %192 = arith.mulf %187, %191 : vector<72x32xf32>
    %193 = vector.broadcast %173 : vector<1x32xf32> to vector<72x32xf32>
    %194 = arith.mulf %192, %193 : vector<72x32xf32>
    %195 = vector.broadcast %174 : vector<1x32xf32> to vector<72x32xf32>
    %196 = arith.addf %194, %195 : vector<72x32xf32>
    %c0_86 = arith.constant 0 : index
    %c0_87 = arith.constant 0 : index
    %c0_88 = arith.constant 0 : index
    %197 = vector.load %arg21[%c0_86, %c0_87, %c0_88] : memref<1x72x32xf32, #tpu.memory_space<vmem>>, vector<1x72x32xf32>
    %198 = vector.shape_cast %197 : vector<1x72x32xf32> to vector<72x32xf32>
    %199 = vector.shape_cast %196 : vector<72x32xf32> to vector<1x72x32xf32>
    tpu.vector_store %arg21[%c0_86, %c0_87, %c0_88], %199 {strides = array<i32>} : memref<1x72x32xf32, #tpu.memory_space<vmem>>, vector<1x72x32xf32>,
    return
  }
  func.func @transform_0(%arg0: i32) -> (i32, i32, i32) {
    %c0_i32 = arith.constant 0 : i32
    %c0_i32_0 = arith.constant 0 : i32
    %c0_i32_1 = arith.constant 0 : i32
    return %arg0, %c0_i32, %c0_i32_0 : i32, i32, i32
  }
  func.func @transform_1(%arg0: i32) -> (i32, i32, i32) {
    %c0_i32 = arith.constant 0 : i32
    %c0_i32_0 = arith.constant 0 : i32
    %c0_i32_1 = arith.constant 0 : i32
    return %arg0, %c0_i32, %c0_i32_0 : i32, i32, i32
  }
  func.func @transform_2(%arg0: i32) -> (i32, i32, i32) {
    %c0_i32 = arith.constant 0 : i32
    %c0_i32_0 = arith.constant 0 : i32
    %c0_i32_1 = arith.constant 0 : i32
    return %arg0, %c0_i32, %c0_i32_0 : i32, i32, i32
  }
  func.func @transform_3(%arg0: i32) -> (i32, i32, i32) {
    %c0_i32 = arith.constant 0 : i32
    %c0_i32_0 = arith.constant 0 : i32
    %c0_i32_1 = arith.constant 0 : i32
    return %arg0, %c0_i32, %c0_i32_0 : i32, i32, i32
  }
  func.func @transform_4(%arg0: i32) -> (i32, i32) {
    %c0_i32 = arith.constant 0 : i32
    %c0_i32_0 = arith.constant 0 : i32
    %c0_i32_1 = arith.constant 0 : i32
    return %c0_i32, %c0_i32_0 : i32, i32
  }
  func.func @transform_5(%arg0: i32) -> (i32, i32) {
    %c0_i32 = arith.constant 0 : i32
    %c0_i32_0 = arith.constant 0 : i32
    %c0_i32_1 = arith.constant 0 : i32
    return %c0_i32, %c0_i32_0 : i32, i32
  }
  func.func @transform_6(%arg0: i32) -> (i32, i32) {
    %c0_i32 = arith.constant 0 : i32
    %c0_i32_0 = arith.constant 0 : i32
    %c0_i32_1 = arith.constant 0 : i32
    return %c0_i32, %c0_i32_0 : i32, i32
  }
  func.func @transform_7(%arg0: i32) -> (i32, i32) {
    %c0_i32 = arith.constant 0 : i32
    %c0_i32_0 = arith.constant 0 : i32
    %c0_i32_1 = arith.constant 0 : i32
    return %c0_i32, %c0_i32_0 : i32, i32
  }
  func.func @transform_8(%arg0: i32) -> (i32, i32) {
    %c0_i32 = arith.constant 0 : i32
    %c0_i32_0 = arith.constant 0 : i32
    %c0_i32_1 = arith.constant 0 : i32
    return %c0_i32, %c0_i32_0 : i32, i32
  }
  func.func @transform_9(%arg0: i32) -> (i32, i32) {
    %c0_i32 = arith.constant 0 : i32
    %c0_i32_0 = arith.constant 0 : i32
    %c0_i32_1 = arith.constant 0 : i32
    return %c0_i32, %c0_i32_0 : i32, i32
  }
  func.func @transform_10(%arg0: i32) -> (i32, i32) {
    %c0_i32 = arith.constant 0 : i32
    %c0_i32_0 = arith.constant 0 : i32
    %c0_i32_1 = arith.constant 0 : i32
    return %c0_i32, %c0_i32_0 : i32, i32
  }
  func.func @transform_11(%arg0: i32) -> (i32, i32) {
    %c0_i32 = arith.constant 0 : i32
    %c0_i32_0 = arith.constant 0 : i32
    %c0_i32_1 = arith.constant 0 : i32
    return %c0_i32, %c0_i32_0 : i32, i32
  }
  func.func @transform_12(%arg0: i32) -> (i32, i32) {
    %c0_i32 = arith.constant 0 : i32
    %c0_i32_0 = arith.constant 0 : i32
    %c0_i32_1 = arith.constant 0 : i32
    return %c0_i32, %c0_i32_0 : i32, i32
  }
  func.func @transform_13(%arg0: i32) -> (i32, i32) {
    %c0_i32 = arith.constant 0 : i32
    %c0_i32_0 = arith.constant 0 : i32
    %c0_i32_1 = arith.constant 0 : i32
    return %c0_i32, %c0_i32_0 : i32, i32
  }
  func.func @transform_14(%arg0: i32) -> (i32, i32) {
    %c0_i32 = arith.constant 0 : i32
    %c0_i32_0 = arith.constant 0 : i32
    %c0_i32_1 = arith.constant 0 : i32
    return %c0_i32, %c0_i32_0 : i32, i32
  }
  func.func @transform_15(%arg0: i32) -> (i32, i32) {
    %c0_i32 = arith.constant 0 : i32
    %c0_i32_0 = arith.constant 0 : i32
    %c0_i32_1 = arith.constant 0 : i32
    return %c0_i32, %c0_i32_0 : i32, i32
  }
  func.func @transform_16(%arg0: i32) -> (i32, i32) {
    %c0_i32 = arith.constant 0 : i32
    %c0_i32_0 = arith.constant 0 : i32
    %c0_i32_1 = arith.constant 0 : i32
    return %c0_i32, %c0_i32_0 : i32, i32
  }
  func.func @transform_17(%arg0: i32) -> (i32, i32) {
    %c0_i32 = arith.constant 0 : i32
    %c0_i32_0 = arith.constant 0 : i32
    %c0_i32_1 = arith.constant 0 : i32
    return %c0_i32, %c0_i32_0 : i32, i32
  }
  func.func @transform_18(%arg0: i32) -> (i32, i32) {
    %c0_i32 = arith.constant 0 : i32
    %c0_i32_0 = arith.constant 0 : i32
    %c0_i32_1 = arith.constant 0 : i32
    return %c0_i32, %c0_i32_0 : i32, i32
  }
  func.func @transform_19(%arg0: i32) -> (i32, i32) {
    %c0_i32 = arith.constant 0 : i32
    %c0_i32_0 = arith.constant 0 : i32
    %c0_i32_1 = arith.constant 0 : i32
    return %c0_i32, %c0_i32_0 : i32, i32
  }
  func.func @transform_20(%arg0: i32) -> (i32, i32, i32) {
    %c0_i32 = arith.constant 0 : i32
    %c0_i32_0 = arith.constant 0 : i32
    %c0_i32_1 = arith.constant 0 : i32
    return %arg0, %c0_i32, %c0_i32_0 : i32, i32, i32
  }
  func.func @transform_21(%arg0: i32) -> (i32, i32, i32) {
    %c0_i32 = arith.constant 0 : i32
    %c0_i32_0 = arith.constant 0 : i32
    %c0_i32_1 = arith.constant 0 : i32
    return %arg0, %c0_i32, %c0_i32_0 : i32, i32, i32
  }
}

module attributes {stable_mosaic.version = 11 : i64} {
  func.func @_fused_layer_kernel(%arg0: i32, %arg1: memref<1x66x32xf32, #tpu.memory_space<vmem>>, %arg2: memref<1x66x32xf32, #tpu.memory_space<vmem>>, %arg3: memref<1x8x48xf32, #tpu.memory_space<vmem>>, %arg4: memref<1x1x80xf32, #tpu.memory_space<vmem>>, %arg5: memref<48x32xf32, #tpu.memory_space<vmem>>, %arg6: memref<1x32xf32, #tpu.memory_space<vmem>>, %arg7: memref<1x32xf32, #tpu.memory_space<vmem>>, %arg8: memref<1x32xf32, #tpu.memory_space<vmem>>, %arg9: memref<32x96xf32, #tpu.memory_space<vmem>>, %arg10: memref<1x96xf32, #tpu.memory_space<vmem>>, %arg11: memref<32x32xf32, #tpu.memory_space<vmem>>, %arg12: memref<1x32xf32, #tpu.memory_space<vmem>>, %arg13: memref<1x32xf32, #tpu.memory_space<vmem>>, %arg14: memref<1x32xf32, #tpu.memory_space<vmem>>, %arg15: memref<32x64xf32, #tpu.memory_space<vmem>>, %arg16: memref<1x64xf32, #tpu.memory_space<vmem>>, %arg17: memref<64x32xf32, #tpu.memory_space<vmem>>, %arg18: memref<1x32xf32, #tpu.memory_space<vmem>>, %arg19: memref<1x32xf32, #tpu.memory_space<vmem>>, %arg20: memref<1x32xf32, #tpu.memory_space<vmem>>, %arg21: memref<1x80x32xf32, #tpu.memory_space<vmem>>, %arg22: memref<1x8x32xf32, #tpu.memory_space<vmem>>) attributes {dimension_semantics = [#tpu.dimension_semantics<parallel>], iteration_bounds = array<i64: 2>, scalar_prefetch = 0 : i64, scratch_operands = 0 : i64, tpu.core_type = #tpu.core_type<tc>, window_params = [{transform_indices = @transform_0, window_bounds = array<i64: 1, 66, 32>}, {transform_indices = @transform_1, window_bounds = array<i64: 1, 66, 32>}, {transform_indices = @transform_2, window_bounds = array<i64: 1, 8, 48>}, {transform_indices = @transform_3, window_bounds = array<i64: 1, 1, 80>}, {pipeline_mode = #tpu.pipeline_mode<synchronous>, transform_indices = @transform_4, window_bounds = array<i64: 48, 32>}, {pipeline_mode = #tpu.pipeline_mode<synchronous>, transform_indices = @transform_5, window_bounds = array<i64: 1, 32>}, {pipeline_mode = #tpu.pipeline_mode<synchronous>, transform_indices = @transform_6, window_bounds = array<i64: 1, 32>}, {pipeline_mode = #tpu.pipeline_mode<synchronous>, transform_indices = @transform_7, window_bounds = array<i64: 1, 32>}, {pipeline_mode = #tpu.pipeline_mode<synchronous>, transform_indices = @transform_8, window_bounds = array<i64: 32, 96>}, {pipeline_mode = #tpu.pipeline_mode<synchronous>, transform_indices = @transform_9, window_bounds = array<i64: 1, 96>}, {pipeline_mode = #tpu.pipeline_mode<synchronous>, transform_indices = @transform_10, window_bounds = array<i64: 32, 32>}, {pipeline_mode = #tpu.pipeline_mode<synchronous>, transform_indices = @transform_11, window_bounds = array<i64: 1, 32>}, {pipeline_mode = #tpu.pipeline_mode<synchronous>, transform_indices = @transform_12, window_bounds = array<i64: 1, 32>}, {pipeline_mode = #tpu.pipeline_mode<synchronous>, transform_indices = @transform_13, window_bounds = array<i64: 1, 32>}, {pipeline_mode = #tpu.pipeline_mode<synchronous>, transform_indices = @transform_14, window_bounds = array<i64: 32, 64>}, {pipeline_mode = #tpu.pipeline_mode<synchronous>, transform_indices = @transform_15, window_bounds = array<i64: 1, 64>}, {pipeline_mode = #tpu.pipeline_mode<synchronous>, transform_indices = @transform_16, window_bounds = array<i64: 64, 32>}, {pipeline_mode = #tpu.pipeline_mode<synchronous>, transform_indices = @transform_17, window_bounds = array<i64: 1, 32>}, {pipeline_mode = #tpu.pipeline_mode<synchronous>, transform_indices = @transform_18, window_bounds = array<i64: 1, 32>}, {pipeline_mode = #tpu.pipeline_mode<synchronous>, transform_indices = @transform_19, window_bounds = array<i64: 1, 32>}, {transform_indices = @transform_20, window_bounds = array<i64: 1, 80, 32>}, {transform_indices = @transform_21, window_bounds = array<i64: 1, 8, 32>}]} {
    %c0 = arith.constant 0 : index
    %c0_0 = arith.constant 0 : index
    %c0_1 = arith.constant 0 : index
    %0 = vector.load %arg3[%c0, %c0_0, %c0_1] : memref<1x8x48xf32, #tpu.memory_space<vmem>>, vector<1x8x48xf32>
    %1 = vector.shape_cast %0 : vector<1x8x48xf32> to vector<8x48xf32>
    %c0_2 = arith.constant 0 : index
    %c0_3 = arith.constant 0 : index
    %2 = vector.load %arg5[%c0_2, %c0_3] : memref<48x32xf32, #tpu.memory_space<vmem>>, vector<48x32xf32>
    %cst = arith.constant dense<0.000000e+00> : vector<8x32xf32>
    %3 = tpu.matmul %1, %2, %cst {dimension_numbers = #tpu.dot_dimension_numbers<[1], [0], [0], [1], [0, 0, 1, 1], [], []>} : vector<8x48xf32>, vector<48x32xf32>, vector<8x32xf32> -> vector<8x32xf32>
    %c0_4 = arith.constant 0 : index
    %c0_5 = arith.constant 0 : index
    %4 = vector.load %arg6[%c0_4, %c0_5] : memref<1x32xf32, #tpu.memory_space<vmem>>, vector<1x32xf32>
    %5 = vector.broadcast %4 : vector<1x32xf32> to vector<8x32xf32>
    %6 = arith.addf %3, %5 : vector<8x32xf32>
    %c0_6 = arith.constant 0 : index
    %c0_7 = arith.constant 0 : index
    %7 = vector.load %arg7[%c0_6, %c0_7] : memref<1x32xf32, #tpu.memory_space<vmem>>, vector<1x32xf32>
    %c0_8 = arith.constant 0 : index
    %c0_9 = arith.constant 0 : index
    %8 = vector.load %arg8[%c0_8, %c0_9] : memref<1x32xf32, #tpu.memory_space<vmem>>, vector<1x32xf32>
    %cst_10 = arith.constant dense<0.000000e+00> : vector<8xf32>
    %9 = vector.multi_reduction <add>, %6, %cst_10 [1] : vector<8x32xf32> to vector<8xf32>
    %10 = vector.shape_cast %9 : vector<8xf32> to vector<8x1xf32>
    %cst_11 = arith.constant 3.200000e+01 : f32
    %11 = vector.broadcast %cst_11 : f32 to vector<8x1xf32>
    %12 = arith.divf %10, %11 : vector<8x1xf32>
    %13 = arith.mulf %6, %6 : vector<8x32xf32>
    %cst_12 = arith.constant dense<0.000000e+00> : vector<8xf32>
    %14 = vector.multi_reduction <add>, %13, %cst_12 [1] : vector<8x32xf32> to vector<8xf32>
    %15 = vector.shape_cast %14 : vector<8xf32> to vector<8x1xf32>
    %cst_13 = arith.constant 3.200000e+01 : f32
    %16 = vector.broadcast %cst_13 : f32 to vector<8x1xf32>
    %17 = arith.divf %15, %16 : vector<8x1xf32>
    %18 = arith.mulf %12, %12 : vector<8x1xf32>
    %19 = arith.subf %17, %18 : vector<8x1xf32>
    %20 = vector.broadcast %12 : vector<8x1xf32> to vector<8x32xf32>
    %21 = arith.subf %6, %20 : vector<8x32xf32>
    %cst_14 = arith.constant 9.99999974E-6 : f32
    %22 = vector.broadcast %cst_14 : f32 to vector<8x1xf32>
    %23 = arith.addf %19, %22 : vector<8x1xf32>
    %24 = math.rsqrt %23 : vector<8x1xf32>
    %25 = vector.broadcast %24 : vector<8x1xf32> to vector<8x32xf32>
    %26 = arith.mulf %21, %25 : vector<8x32xf32>
    %27 = vector.broadcast %7 : vector<1x32xf32> to vector<8x32xf32>
    %28 = arith.mulf %26, %27 : vector<8x32xf32>
    %29 = vector.broadcast %8 : vector<1x32xf32> to vector<8x32xf32>
    %30 = arith.addf %28, %29 : vector<8x32xf32>
    %c0_15 = arith.constant 0 : index
    %c0_16 = arith.constant 0 : index
    %c0_17 = arith.constant 0 : index
    %31 = vector.load %arg22[%c0_15, %c0_16, %c0_17] : memref<1x8x32xf32, #tpu.memory_space<vmem>>, vector<1x8x32xf32>
    %32 = vector.shape_cast %31 : vector<1x8x32xf32> to vector<8x32xf32>
    %33 = vector.shape_cast %30 : vector<8x32xf32> to vector<1x8x32xf32>
    tpu.vector_store %arg22[%c0_15, %c0_16, %c0_17], %33 {strides = array<i32>} : memref<1x8x32xf32, #tpu.memory_space<vmem>>, vector<1x8x32xf32>,
    %c0_18 = arith.constant 0 : index
    %c0_19 = arith.constant 0 : index
    %c0_20 = arith.constant 0 : index
    %34 = vector.load %arg1[%c0_18, %c0_19, %c0_20] : memref<1x66x32xf32, #tpu.memory_space<vmem>>, vector<1x66x32xf32>
    %35 = vector.shape_cast %34 : vector<1x66x32xf32> to vector<66x32xf32>
    %c0_21 = arith.constant 0 : index
    %c0_22 = arith.constant 0 : index
    %c0_23 = arith.constant 0 : index
    %36 = vector.load %arg2[%c0_21, %c0_22, %c0_23] : memref<1x66x32xf32, #tpu.memory_space<vmem>>, vector<1x66x32xf32>
    %37 = vector.shape_cast %36 : vector<1x66x32xf32> to vector<66x32xf32>
    %38 = arith.addf %35, %37 : vector<66x32xf32>
    %cst_24 = arith.constant 0.000000e+00 : f32
    %39 = vector.broadcast %cst_24 : f32 to vector<6x32xf32>
    %40 = tpu.concatenate %35, %30, %39 in 0 : vector<66x32xf32>, vector<8x32xf32>, vector<6x32xf32> -> vector<80x32xf32>
    %41 = tpu.concatenate %38, %30, %39 in 0 : vector<66x32xf32>, vector<8x32xf32>, vector<6x32xf32> -> vector<80x32xf32>
    %42 = tpu.concatenate %41, %40 in 0 : vector<80x32xf32>, vector<80x32xf32> -> vector<160x32xf32>
    %c0_25 = arith.constant 0 : index
    %c0_26 = arith.constant 0 : index
    %43 = vector.load %arg9[%c0_25, %c0_26] : memref<32x96xf32, #tpu.memory_space<vmem>>, vector<32x96xf32>
    %cst_27 = arith.constant dense<0.000000e+00> : vector<160x96xf32>
    %44 = tpu.matmul %42, %43, %cst_27 {dimension_numbers = #tpu.dot_dimension_numbers<[1], [0], [0], [1], [0, 0, 1, 1], [], []>} : vector<160x32xf32>, vector<32x96xf32>, vector<160x96xf32> -> vector<160x96xf32>
    %c0_28 = arith.constant 0 : index
    %c0_29 = arith.constant 0 : index
    %45 = vector.load %arg10[%c0_28, %c0_29] : memref<1x96xf32, #tpu.memory_space<vmem>>, vector<1x96xf32>
    %46 = vector.broadcast %45 : vector<1x96xf32> to vector<160x96xf32>
    %47 = arith.addf %44, %46 : vector<160x96xf32>
    %48 = vector.extract_strided_slice %47 {offsets = [0, 0], sizes = [80, 32], strides = [1, 1]} : vector<160x96xf32> to vector<80x32xf32>
    %49 = vector.extract_strided_slice %47 {offsets = [0, 32], sizes = [80, 32], strides = [1, 1]} : vector<160x96xf32> to vector<80x32xf32>
    %50 = vector.extract_strided_slice %47 {offsets = [80, 64], sizes = [80, 32], strides = [1, 1]} : vector<160x96xf32> to vector<80x32xf32>
    %c0_30 = arith.constant 0 : index
    %c0_31 = arith.constant 0 : index
    %51 = vector.load %arg11[%c0_30, %c0_31] : memref<32x32xf32, #tpu.memory_space<vmem>>, vector<32x32xf32>
    %c0_32 = arith.constant 0 : index
    %c0_33 = arith.constant 0 : index
    %c0_34 = arith.constant 0 : index
    %52 = vector.load %arg4[%c0_32, %c0_33, %c0_34] : memref<1x1x80xf32, #tpu.memory_space<vmem>>, vector<1x1x80xf32>
    %53 = vector.shape_cast %52 : vector<1x1x80xf32> to vector<1x80xf32>
    %54 = vector.shape_cast %53 : vector<1x80xf32> to vector<1x80xf32>
    %55 = vector.broadcast %54 : vector<1x80xf32> to vector<80x80xf32>
    %cst_35 = arith.constant 0.000000e+00 : f32
    %56 = vector.broadcast %cst_35 : f32 to vector<80x32xf32>
    %57 = vector.extract_strided_slice %48 {offsets = [0, 0], sizes = [80, 8], strides = [1, 1]} : vector<80x32xf32> to vector<80x8xf32>
    %58 = vector.extract_strided_slice %49 {offsets = [0, 0], sizes = [80, 8], strides = [1, 1]} : vector<80x32xf32> to vector<80x8xf32>
    %59 = vector.extract_strided_slice %50 {offsets = [0, 0], sizes = [80, 8], strides = [1, 1]} : vector<80x32xf32> to vector<80x8xf32>
    %cst_36 = arith.constant dense<0.000000e+00> : vector<80x80xf32>
    %60 = tpu.matmul %57, %58, %cst_36 {dimension_numbers = #tpu.dot_dimension_numbers<[1], [1], [0], [0], [0, 0, 1, 0], [], []>} : vector<80x8xf32>, vector<80x8xf32>, vector<80x80xf32> -> vector<80x80xf32>
    %61 = arith.addf %60, %55 : vector<80x80xf32>
    %cst_37 = arith.constant dense<0xFF800000> : vector<80xf32>
    %62 = vector.multi_reduction <maximumf>, %61, %cst_37 [1] : vector<80x80xf32> to vector<80xf32>
    %63 = vector.shape_cast %62 : vector<80xf32> to vector<80x1xf32>
    %64 = vector.broadcast %63 : vector<80x1xf32> to vector<80x80xf32>
    %65 = arith.subf %61, %64 : vector<80x80xf32>
    %66 = math.exp %65 : vector<80x80xf32>
    %cst_38 = arith.constant dense<0.000000e+00> : vector<80xf32>
    %67 = vector.multi_reduction <add>, %66, %cst_38 [1] : vector<80x80xf32> to vector<80xf32>
    %68 = vector.shape_cast %67 : vector<80xf32> to vector<80x1xf32>
    %69 = tpu.reciprocal %68 {approx = true} : vector<80x1xf32> -> vector<80x1xf32>
    %cst_39 = arith.constant dense<0.000000e+00> : vector<80x8xf32>
    %70 = tpu.matmul %66, %59, %cst_39 {dimension_numbers = #tpu.dot_dimension_numbers<[1], [0], [0], [1], [0, 0, 1, 1], [], []>} : vector<80x80xf32>, vector<80x8xf32>, vector<80x8xf32> -> vector<80x8xf32>
    %71 = vector.broadcast %69 : vector<80x1xf32> to vector<80x8xf32>
    %72 = arith.mulf %70, %71 : vector<80x8xf32>
    %73 = vector.extract_strided_slice %51 {offsets = [0, 0], sizes = [8, 32], strides = [1, 1]} : vector<32x32xf32> to vector<8x32xf32>
    %cst_40 = arith.constant dense<0.000000e+00> : vector<80x32xf32>
    %74 = tpu.matmul %72, %73, %cst_40 {dimension_numbers = #tpu.dot_dimension_numbers<[1], [0], [0], [1], [0, 0, 1, 1], [], []>} : vector<80x8xf32>, vector<8x32xf32>, vector<80x32xf32> -> vector<80x32xf32>
    %75 = arith.addf %56, %74 : vector<80x32xf32>
    %76 = vector.extract_strided_slice %48 {offsets = [0, 8], sizes = [80, 8], strides = [1, 1]} : vector<80x32xf32> to vector<80x8xf32>
    %77 = vector.extract_strided_slice %49 {offsets = [0, 8], sizes = [80, 8], strides = [1, 1]} : vector<80x32xf32> to vector<80x8xf32>
    %78 = vector.extract_strided_slice %50 {offsets = [0, 8], sizes = [80, 8], strides = [1, 1]} : vector<80x32xf32> to vector<80x8xf32>
    %cst_41 = arith.constant dense<0.000000e+00> : vector<80x80xf32>
    %79 = tpu.matmul %76, %77, %cst_41 {dimension_numbers = #tpu.dot_dimension_numbers<[1], [1], [0], [0], [0, 0, 1, 0], [], []>} : vector<80x8xf32>, vector<80x8xf32>, vector<80x80xf32> -> vector<80x80xf32>
    %80 = arith.addf %79, %55 : vector<80x80xf32>
    %cst_42 = arith.constant dense<0xFF800000> : vector<80xf32>
    %81 = vector.multi_reduction <maximumf>, %80, %cst_42 [1] : vector<80x80xf32> to vector<80xf32>
    %82 = vector.shape_cast %81 : vector<80xf32> to vector<80x1xf32>
    %83 = vector.broadcast %82 : vector<80x1xf32> to vector<80x80xf32>
    %84 = arith.subf %80, %83 : vector<80x80xf32>
    %85 = math.exp %84 : vector<80x80xf32>
    %cst_43 = arith.constant dense<0.000000e+00> : vector<80xf32>
    %86 = vector.multi_reduction <add>, %85, %cst_43 [1] : vector<80x80xf32> to vector<80xf32>
    %87 = vector.shape_cast %86 : vector<80xf32> to vector<80x1xf32>
    %88 = tpu.reciprocal %87 {approx = true} : vector<80x1xf32> -> vector<80x1xf32>
    %cst_44 = arith.constant dense<0.000000e+00> : vector<80x8xf32>
    %89 = tpu.matmul %85, %78, %cst_44 {dimension_numbers = #tpu.dot_dimension_numbers<[1], [0], [0], [1], [0, 0, 1, 1], [], []>} : vector<80x80xf32>, vector<80x8xf32>, vector<80x8xf32> -> vector<80x8xf32>
    %90 = vector.broadcast %88 : vector<80x1xf32> to vector<80x8xf32>
    %91 = arith.mulf %89, %90 : vector<80x8xf32>
    %92 = vector.extract_strided_slice %51 {offsets = [8, 0], sizes = [8, 32], strides = [1, 1]} : vector<32x32xf32> to vector<8x32xf32>
    %cst_45 = arith.constant dense<0.000000e+00> : vector<80x32xf32>
    %93 = tpu.matmul %91, %92, %cst_45 {dimension_numbers = #tpu.dot_dimension_numbers<[1], [0], [0], [1], [0, 0, 1, 1], [], []>} : vector<80x8xf32>, vector<8x32xf32>, vector<80x32xf32> -> vector<80x32xf32>
    %94 = arith.addf %75, %93 : vector<80x32xf32>
    %95 = vector.extract_strided_slice %48 {offsets = [0, 16], sizes = [80, 8], strides = [1, 1]} : vector<80x32xf32> to vector<80x8xf32>
    %96 = vector.extract_strided_slice %49 {offsets = [0, 16], sizes = [80, 8], strides = [1, 1]} : vector<80x32xf32> to vector<80x8xf32>
    %97 = vector.extract_strided_slice %50 {offsets = [0, 16], sizes = [80, 8], strides = [1, 1]} : vector<80x32xf32> to vector<80x8xf32>
    %cst_46 = arith.constant dense<0.000000e+00> : vector<80x80xf32>
    %98 = tpu.matmul %95, %96, %cst_46 {dimension_numbers = #tpu.dot_dimension_numbers<[1], [1], [0], [0], [0, 0, 1, 0], [], []>} : vector<80x8xf32>, vector<80x8xf32>, vector<80x80xf32> -> vector<80x80xf32>
    %99 = arith.addf %98, %55 : vector<80x80xf32>
    %cst_47 = arith.constant dense<0xFF800000> : vector<80xf32>
    %100 = vector.multi_reduction <maximumf>, %99, %cst_47 [1] : vector<80x80xf32> to vector<80xf32>
    %101 = vector.shape_cast %100 : vector<80xf32> to vector<80x1xf32>
    %102 = vector.broadcast %101 : vector<80x1xf32> to vector<80x80xf32>
    %103 = arith.subf %99, %102 : vector<80x80xf32>
    %104 = math.exp %103 : vector<80x80xf32>
    %cst_48 = arith.constant dense<0.000000e+00> : vector<80xf32>
    %105 = vector.multi_reduction <add>, %104, %cst_48 [1] : vector<80x80xf32> to vector<80xf32>
    %106 = vector.shape_cast %105 : vector<80xf32> to vector<80x1xf32>
    %107 = tpu.reciprocal %106 {approx = true} : vector<80x1xf32> -> vector<80x1xf32>
    %cst_49 = arith.constant dense<0.000000e+00> : vector<80x8xf32>
    %108 = tpu.matmul %104, %97, %cst_49 {dimension_numbers = #tpu.dot_dimension_numbers<[1], [0], [0], [1], [0, 0, 1, 1], [], []>} : vector<80x80xf32>, vector<80x8xf32>, vector<80x8xf32> -> vector<80x8xf32>
    %109 = vector.broadcast %107 : vector<80x1xf32> to vector<80x8xf32>
    %110 = arith.mulf %108, %109 : vector<80x8xf32>
    %111 = vector.extract_strided_slice %51 {offsets = [16, 0], sizes = [8, 32], strides = [1, 1]} : vector<32x32xf32> to vector<8x32xf32>
    %cst_50 = arith.constant dense<0.000000e+00> : vector<80x32xf32>
    %112 = tpu.matmul %110, %111, %cst_50 {dimension_numbers = #tpu.dot_dimension_numbers<[1], [0], [0], [1], [0, 0, 1, 1], [], []>} : vector<80x8xf32>, vector<8x32xf32>, vector<80x32xf32> -> vector<80x32xf32>
    %113 = arith.addf %94, %112 : vector<80x32xf32>
    %114 = vector.extract_strided_slice %48 {offsets = [0, 24], sizes = [80, 8], strides = [1, 1]} : vector<80x32xf32> to vector<80x8xf32>
    %115 = vector.extract_strided_slice %49 {offsets = [0, 24], sizes = [80, 8], strides = [1, 1]} : vector<80x32xf32> to vector<80x8xf32>
    %116 = vector.extract_strided_slice %50 {offsets = [0, 24], sizes = [80, 8], strides = [1, 1]} : vector<80x32xf32> to vector<80x8xf32>
    %cst_51 = arith.constant dense<0.000000e+00> : vector<80x80xf32>
    %117 = tpu.matmul %114, %115, %cst_51 {dimension_numbers = #tpu.dot_dimension_numbers<[1], [1], [0], [0], [0, 0, 1, 0], [], []>} : vector<80x8xf32>, vector<80x8xf32>, vector<80x80xf32> -> vector<80x80xf32>
    %118 = arith.addf %117, %55 : vector<80x80xf32>
    %cst_52 = arith.constant dense<0xFF800000> : vector<80xf32>
    %119 = vector.multi_reduction <maximumf>, %118, %cst_52 [1] : vector<80x80xf32> to vector<80xf32>
    %120 = vector.shape_cast %119 : vector<80xf32> to vector<80x1xf32>
    %121 = vector.broadcast %120 : vector<80x1xf32> to vector<80x80xf32>
    %122 = arith.subf %118, %121 : vector<80x80xf32>
    %123 = math.exp %122 : vector<80x80xf32>
    %cst_53 = arith.constant dense<0.000000e+00> : vector<80xf32>
    %124 = vector.multi_reduction <add>, %123, %cst_53 [1] : vector<80x80xf32> to vector<80xf32>
    %125 = vector.shape_cast %124 : vector<80xf32> to vector<80x1xf32>
    %126 = tpu.reciprocal %125 {approx = true} : vector<80x1xf32> -> vector<80x1xf32>
    %cst_54 = arith.constant dense<0.000000e+00> : vector<80x8xf32>
    %127 = tpu.matmul %123, %116, %cst_54 {dimension_numbers = #tpu.dot_dimension_numbers<[1], [0], [0], [1], [0, 0, 1, 1], [], []>} : vector<80x80xf32>, vector<80x8xf32>, vector<80x8xf32> -> vector<80x8xf32>
    %128 = vector.broadcast %126 : vector<80x1xf32> to vector<80x8xf32>
    %129 = arith.mulf %127, %128 : vector<80x8xf32>
    %130 = vector.extract_strided_slice %51 {offsets = [24, 0], sizes = [8, 32], strides = [1, 1]} : vector<32x32xf32> to vector<8x32xf32>
    %cst_55 = arith.constant dense<0.000000e+00> : vector<80x32xf32>
    %131 = tpu.matmul %129, %130, %cst_55 {dimension_numbers = #tpu.dot_dimension_numbers<[1], [0], [0], [1], [0, 0, 1, 1], [], []>} : vector<80x8xf32>, vector<8x32xf32>, vector<80x32xf32> -> vector<80x32xf32>
    %132 = arith.addf %113, %131 : vector<80x32xf32>
    %133 = arith.addf %40, %132 : vector<80x32xf32>
    %c0_56 = arith.constant 0 : index
    %c0_57 = arith.constant 0 : index
    %134 = vector.load %arg12[%c0_56, %c0_57] : memref<1x32xf32, #tpu.memory_space<vmem>>, vector<1x32xf32>
    %135 = vector.broadcast %134 : vector<1x32xf32> to vector<80x32xf32>
    %136 = arith.addf %133, %135 : vector<80x32xf32>
    %c0_58 = arith.constant 0 : index
    %c0_59 = arith.constant 0 : index
    %137 = vector.load %arg13[%c0_58, %c0_59] : memref<1x32xf32, #tpu.memory_space<vmem>>, vector<1x32xf32>
    %c0_60 = arith.constant 0 : index
    %c0_61 = arith.constant 0 : index
    %138 = vector.load %arg14[%c0_60, %c0_61] : memref<1x32xf32, #tpu.memory_space<vmem>>, vector<1x32xf32>
    %cst_62 = arith.constant dense<0.000000e+00> : vector<80xf32>
    %139 = vector.multi_reduction <add>, %136, %cst_62 [1] : vector<80x32xf32> to vector<80xf32>
    %140 = vector.shape_cast %139 : vector<80xf32> to vector<80x1xf32>
    %cst_63 = arith.constant 3.200000e+01 : f32
    %141 = vector.broadcast %cst_63 : f32 to vector<80x1xf32>
    %142 = arith.divf %140, %141 : vector<80x1xf32>
    %143 = arith.mulf %136, %136 : vector<80x32xf32>
    %cst_64 = arith.constant dense<0.000000e+00> : vector<80xf32>
    %144 = vector.multi_reduction <add>, %143, %cst_64 [1] : vector<80x32xf32> to vector<80xf32>
    %145 = vector.shape_cast %144 : vector<80xf32> to vector<80x1xf32>
    %cst_65 = arith.constant 3.200000e+01 : f32
    %146 = vector.broadcast %cst_65 : f32 to vector<80x1xf32>
    %147 = arith.divf %145, %146 : vector<80x1xf32>
    %148 = arith.mulf %142, %142 : vector<80x1xf32>
    %149 = arith.subf %147, %148 : vector<80x1xf32>
    %150 = vector.broadcast %142 : vector<80x1xf32> to vector<80x32xf32>
    %151 = arith.subf %136, %150 : vector<80x32xf32>
    %cst_66 = arith.constant 9.99999974E-6 : f32
    %152 = vector.broadcast %cst_66 : f32 to vector<80x1xf32>
    %153 = arith.addf %149, %152 : vector<80x1xf32>
    %154 = math.rsqrt %153 : vector<80x1xf32>
    %155 = vector.broadcast %154 : vector<80x1xf32> to vector<80x32xf32>
    %156 = arith.mulf %151, %155 : vector<80x32xf32>
    %157 = vector.broadcast %137 : vector<1x32xf32> to vector<80x32xf32>
    %158 = arith.mulf %156, %157 : vector<80x32xf32>
    %159 = vector.broadcast %138 : vector<1x32xf32> to vector<80x32xf32>
    %160 = arith.addf %158, %159 : vector<80x32xf32>
    %c0_67 = arith.constant 0 : index
    %c0_68 = arith.constant 0 : index
    %161 = vector.load %arg15[%c0_67, %c0_68] : memref<32x64xf32, #tpu.memory_space<vmem>>, vector<32x64xf32>
    %cst_69 = arith.constant dense<0.000000e+00> : vector<80x64xf32>
    %162 = tpu.matmul %160, %161, %cst_69 {dimension_numbers = #tpu.dot_dimension_numbers<[1], [0], [0], [1], [0, 0, 1, 1], [], []>} : vector<80x32xf32>, vector<32x64xf32>, vector<80x64xf32> -> vector<80x64xf32>
    %c0_70 = arith.constant 0 : index
    %c0_71 = arith.constant 0 : index
    %163 = vector.load %arg16[%c0_70, %c0_71] : memref<1x64xf32, #tpu.memory_space<vmem>>, vector<1x64xf32>
    %164 = vector.broadcast %163 : vector<1x64xf32> to vector<80x64xf32>
    %165 = arith.addf %162, %164 : vector<80x64xf32>
    %cst_72 = arith.constant 0.000000e+00 : f32
    %166 = vector.broadcast %cst_72 : f32 to vector<80x64xf32>
    %167 = arith.maximumf %165, %166 : vector<80x64xf32>
    %c0_73 = arith.constant 0 : index
    %c0_74 = arith.constant 0 : index
    %168 = vector.load %arg17[%c0_73, %c0_74] : memref<64x32xf32, #tpu.memory_space<vmem>>, vector<64x32xf32>
    %cst_75 = arith.constant dense<0.000000e+00> : vector<80x32xf32>
    %169 = tpu.matmul %167, %168, %cst_75 {dimension_numbers = #tpu.dot_dimension_numbers<[1], [0], [0], [1], [0, 0, 1, 1], [], []>} : vector<80x64xf32>, vector<64x32xf32>, vector<80x32xf32> -> vector<80x32xf32>
    %170 = arith.addf %160, %169 : vector<80x32xf32>
    %c0_76 = arith.constant 0 : index
    %c0_77 = arith.constant 0 : index
    %171 = vector.load %arg18[%c0_76, %c0_77] : memref<1x32xf32, #tpu.memory_space<vmem>>, vector<1x32xf32>
    %172 = vector.broadcast %171 : vector<1x32xf32> to vector<80x32xf32>
    %173 = arith.addf %170, %172 : vector<80x32xf32>
    %c0_78 = arith.constant 0 : index
    %c0_79 = arith.constant 0 : index
    %174 = vector.load %arg19[%c0_78, %c0_79] : memref<1x32xf32, #tpu.memory_space<vmem>>, vector<1x32xf32>
    %c0_80 = arith.constant 0 : index
    %c0_81 = arith.constant 0 : index
    %175 = vector.load %arg20[%c0_80, %c0_81] : memref<1x32xf32, #tpu.memory_space<vmem>>, vector<1x32xf32>
    %cst_82 = arith.constant dense<0.000000e+00> : vector<80xf32>
    %176 = vector.multi_reduction <add>, %173, %cst_82 [1] : vector<80x32xf32> to vector<80xf32>
    %177 = vector.shape_cast %176 : vector<80xf32> to vector<80x1xf32>
    %cst_83 = arith.constant 3.200000e+01 : f32
    %178 = vector.broadcast %cst_83 : f32 to vector<80x1xf32>
    %179 = arith.divf %177, %178 : vector<80x1xf32>
    %180 = arith.mulf %173, %173 : vector<80x32xf32>
    %cst_84 = arith.constant dense<0.000000e+00> : vector<80xf32>
    %181 = vector.multi_reduction <add>, %180, %cst_84 [1] : vector<80x32xf32> to vector<80xf32>
    %182 = vector.shape_cast %181 : vector<80xf32> to vector<80x1xf32>
    %cst_85 = arith.constant 3.200000e+01 : f32
    %183 = vector.broadcast %cst_85 : f32 to vector<80x1xf32>
    %184 = arith.divf %182, %183 : vector<80x1xf32>
    %185 = arith.mulf %179, %179 : vector<80x1xf32>
    %186 = arith.subf %184, %185 : vector<80x1xf32>
    %187 = vector.broadcast %179 : vector<80x1xf32> to vector<80x32xf32>
    %188 = arith.subf %173, %187 : vector<80x32xf32>
    %cst_86 = arith.constant 9.99999974E-6 : f32
    %189 = vector.broadcast %cst_86 : f32 to vector<80x1xf32>
    %190 = arith.addf %186, %189 : vector<80x1xf32>
    %191 = math.rsqrt %190 : vector<80x1xf32>
    %192 = vector.broadcast %191 : vector<80x1xf32> to vector<80x32xf32>
    %193 = arith.mulf %188, %192 : vector<80x32xf32>
    %194 = vector.broadcast %174 : vector<1x32xf32> to vector<80x32xf32>
    %195 = arith.mulf %193, %194 : vector<80x32xf32>
    %196 = vector.broadcast %175 : vector<1x32xf32> to vector<80x32xf32>
    %197 = arith.addf %195, %196 : vector<80x32xf32>
    %c0_87 = arith.constant 0 : index
    %c0_88 = arith.constant 0 : index
    %c0_89 = arith.constant 0 : index
    %198 = vector.load %arg21[%c0_87, %c0_88, %c0_89] : memref<1x80x32xf32, #tpu.memory_space<vmem>>, vector<1x80x32xf32>
    %199 = vector.shape_cast %198 : vector<1x80x32xf32> to vector<80x32xf32>
    %200 = vector.shape_cast %197 : vector<80x32xf32> to vector<1x80x32xf32>
    tpu.vector_store %arg21[%c0_87, %c0_88, %c0_89], %200 {strides = array<i32>} : memref<1x80x32xf32, #tpu.memory_space<vmem>>, vector<1x80x32xf32>,
    return
  }
  func.func @transform_0(%arg0: i32) -> (i32, i32, i32) {
    %c0_i32 = arith.constant 0 : i32
    %c0_i32_0 = arith.constant 0 : i32
    %c0_i32_1 = arith.constant 0 : i32
    return %arg0, %c0_i32, %c0_i32_0 : i32, i32, i32
  }
  func.func @transform_1(%arg0: i32) -> (i32, i32, i32) {
    %c0_i32 = arith.constant 0 : i32
    %c0_i32_0 = arith.constant 0 : i32
    %c0_i32_1 = arith.constant 0 : i32
    return %arg0, %c0_i32, %c0_i32_0 : i32, i32, i32
  }
  func.func @transform_2(%arg0: i32) -> (i32, i32, i32) {
    %c0_i32 = arith.constant 0 : i32
    %c0_i32_0 = arith.constant 0 : i32
    %c0_i32_1 = arith.constant 0 : i32
    return %arg0, %c0_i32, %c0_i32_0 : i32, i32, i32
  }
  func.func @transform_3(%arg0: i32) -> (i32, i32, i32) {
    %c0_i32 = arith.constant 0 : i32
    %c0_i32_0 = arith.constant 0 : i32
    %c0_i32_1 = arith.constant 0 : i32
    return %arg0, %c0_i32, %c0_i32_0 : i32, i32, i32
  }
  func.func @transform_4(%arg0: i32) -> (i32, i32) {
    %c0_i32 = arith.constant 0 : i32
    %c0_i32_0 = arith.constant 0 : i32
    %c0_i32_1 = arith.constant 0 : i32
    return %c0_i32, %c0_i32_0 : i32, i32
  }
  func.func @transform_5(%arg0: i32) -> (i32, i32) {
    %c0_i32 = arith.constant 0 : i32
    %c0_i32_0 = arith.constant 0 : i32
    %c0_i32_1 = arith.constant 0 : i32
    return %c0_i32, %c0_i32_0 : i32, i32
  }
  func.func @transform_6(%arg0: i32) -> (i32, i32) {
    %c0_i32 = arith.constant 0 : i32
    %c0_i32_0 = arith.constant 0 : i32
    %c0_i32_1 = arith.constant 0 : i32
    return %c0_i32, %c0_i32_0 : i32, i32
  }
  func.func @transform_7(%arg0: i32) -> (i32, i32) {
    %c0_i32 = arith.constant 0 : i32
    %c0_i32_0 = arith.constant 0 : i32
    %c0_i32_1 = arith.constant 0 : i32
    return %c0_i32, %c0_i32_0 : i32, i32
  }
  func.func @transform_8(%arg0: i32) -> (i32, i32) {
    %c0_i32 = arith.constant 0 : i32
    %c0_i32_0 = arith.constant 0 : i32
    %c0_i32_1 = arith.constant 0 : i32
    return %c0_i32, %c0_i32_0 : i32, i32
  }
  func.func @transform_9(%arg0: i32) -> (i32, i32) {
    %c0_i32 = arith.constant 0 : i32
    %c0_i32_0 = arith.constant 0 : i32
    %c0_i32_1 = arith.constant 0 : i32
    return %c0_i32, %c0_i32_0 : i32, i32
  }
  func.func @transform_10(%arg0: i32) -> (i32, i32) {
    %c0_i32 = arith.constant 0 : i32
    %c0_i32_0 = arith.constant 0 : i32
    %c0_i32_1 = arith.constant 0 : i32
    return %c0_i32, %c0_i32_0 : i32, i32
  }
  func.func @transform_11(%arg0: i32) -> (i32, i32) {
    %c0_i32 = arith.constant 0 : i32
    %c0_i32_0 = arith.constant 0 : i32
    %c0_i32_1 = arith.constant 0 : i32
    return %c0_i32, %c0_i32_0 : i32, i32
  }
  func.func @transform_12(%arg0: i32) -> (i32, i32) {
    %c0_i32 = arith.constant 0 : i32
    %c0_i32_0 = arith.constant 0 : i32
    %c0_i32_1 = arith.constant 0 : i32
    return %c0_i32, %c0_i32_0 : i32, i32
  }
  func.func @transform_13(%arg0: i32) -> (i32, i32) {
    %c0_i32 = arith.constant 0 : i32
    %c0_i32_0 = arith.constant 0 : i32
    %c0_i32_1 = arith.constant 0 : i32
    return %c0_i32, %c0_i32_0 : i32, i32
  }
  func.func @transform_14(%arg0: i32) -> (i32, i32) {
    %c0_i32 = arith.constant 0 : i32
    %c0_i32_0 = arith.constant 0 : i32
    %c0_i32_1 = arith.constant 0 : i32
    return %c0_i32, %c0_i32_0 : i32, i32
  }
  func.func @transform_15(%arg0: i32) -> (i32, i32) {
    %c0_i32 = arith.constant 0 : i32
    %c0_i32_0 = arith.constant 0 : i32
    %c0_i32_1 = arith.constant 0 : i32
    return %c0_i32, %c0_i32_0 : i32, i32
  }
  func.func @transform_16(%arg0: i32) -> (i32, i32) {
    %c0_i32 = arith.constant 0 : i32
    %c0_i32_0 = arith.constant 0 : i32
    %c0_i32_1 = arith.constant 0 : i32
    return %c0_i32, %c0_i32_0 : i32, i32
  }
  func.func @transform_17(%arg0: i32) -> (i32, i32) {
    %c0_i32 = arith.constant 0 : i32
    %c0_i32_0 = arith.constant 0 : i32
    %c0_i32_1 = arith.constant 0 : i32
    return %c0_i32, %c0_i32_0 : i32, i32
  }
  func.func @transform_18(%arg0: i32) -> (i32, i32) {
    %c0_i32 = arith.constant 0 : i32
    %c0_i32_0 = arith.constant 0 : i32
    %c0_i32_1 = arith.constant 0 : i32
    return %c0_i32, %c0_i32_0 : i32, i32
  }
  func.func @transform_19(%arg0: i32) -> (i32, i32) {
    %c0_i32 = arith.constant 0 : i32
    %c0_i32_0 = arith.constant 0 : i32
    %c0_i32_1 = arith.constant 0 : i32
    return %c0_i32, %c0_i32_0 : i32, i32
  }
  func.func @transform_20(%arg0: i32) -> (i32, i32, i32) {
    %c0_i32 = arith.constant 0 : i32
    %c0_i32_0 = arith.constant 0 : i32
    %c0_i32_1 = arith.constant 0 : i32
    return %arg0, %c0_i32, %c0_i32_0 : i32, i32, i32
  }
  func.func @transform_21(%arg0: i32) -> (i32, i32, i32) {
    %c0_i32 = arith.constant 0 : i32
    %c0_i32_0 = arith.constant 0 : i32
    %c0_i32_1 = arith.constant 0 : i32
    return %arg0, %c0_i32, %c0_i32_0 : i32, i32, i32
  }
}

</mosaic_0001>

<llo_original>
// kernel: are_encoder_forward.3
$region0: #{are_encoder_forward.3}
  #allocation0 [shape = 'u32[]', space=smem, size = 0x4, offset = 0x4, fixed_abs, tag = 'smem constant byte address 0x4 - core index']
  #allocation1 [shape = 'u32[144,128]{1,0:T(1,128)}', space=vmem, size = 0x12000, scoped, tag = 'internal scratch']
  %s0 = inlined_call_operand.vmem [shape: f32[2,64,32], index: 0, kind: input, shape index: {}]
  %s1 = inlined_call_operand.vmem [shape: f32[2,64,32], index: 1, kind: input, shape index: {}]
  %s2 = inlined_call_operand.vmem [shape: f32[2,8,48], index: 2, kind: input, shape index: {}]
  %s3 = inlined_call_operand.vmem [shape: f32[2,1,72], index: 3, kind: input, shape index: {}]
  %s4 = inlined_call_operand.vmem [shape: f32[48,32], index: 4, kind: input, shape index: {}]
  %s5 = inlined_call_operand.vmem [shape: f32[1,32], index: 5, kind: input, shape index: {}]
  %s6 = inlined_call_operand.vmem [shape: f32[1,32], index: 6, kind: input, shape index: {}]
  %s7 = inlined_call_operand.vmem [shape: f32[1,32], index: 7, kind: input, shape index: {}]
  %s8 = inlined_call_operand.vmem [shape: f32[32,96], index: 8, kind: input, shape index: {}]
  %s9 = inlined_call_operand.vmem [shape: f32[1,96], index: 9, kind: input, shape index: {}]
  %s10 = inlined_call_operand.vmem [shape: f32[32,32], index: 10, kind: input, shape index: {}]
  %s11 = inlined_call_operand.vmem [shape: f32[1,32], index: 11, kind: input, shape index: {}]
  %s12 = inlined_call_operand.vmem [shape: f32[1,32], index: 12, kind: input, shape index: {}]
  %s13 = inlined_call_operand.vmem [shape: f32[1,32], index: 13, kind: input, shape index: {}]
  %s14 = inlined_call_operand.vmem [shape: f32[32,64], index: 14, kind: input, shape index: {}]
  %s15 = inlined_call_operand.vmem [shape: f32[1,64], index: 15, kind: input, shape index: {}]
  %s16 = inlined_call_operand.vmem [shape: f32[64,32], index: 16, kind: input, shape index: {}]
  %s17 = inlined_call_operand.vmem [shape: f32[1,32], index: 17, kind: input, shape index: {}]
  %s18 = inlined_call_operand.vmem [shape: f32[1,32], index: 18, kind: input, shape index: {}]
  %s19 = inlined_call_operand.vmem [shape: f32[1,32], index: 19, kind: input, shape index: {}]
  %s20 = inlined_call_operand.vmem [shape: f32[2,72,32], index: 20, kind: output, shape index: {0}]
  %s21 = inlined_call_operand.vmem [shape: f32[2,8,32], index: 21, kind: output, shape index: {1}]
  %22 = xla_tuple %s20, %s21
  %s23 = sld [smem:[#allocation0]]
  $region121: #{are_encoder_forward.3} parent=0
    _
  %s25 = ssub.s32 1, %s23
  %s26 = scalar_select 0, %s25, %s23
  loop: start=0, step=1, limit=4
  $region2: #{are_encoder_forward.3} parent=0 // loop_pre_header
    _
  $region3: #{are_encoder_forward.3} parent=0 // loop_header
    %s28 = sphi 0, %s32
    %p29 = scmp.ge.s32.totalorder %s28, 4
    %s38 = sphi 0, %s40
    %s41 = sphi 0, %s38
    %s42 = sphi 0, %s41
    %s58 = sphi 0, %s42
    %s64 = sphi 0, %s66
    %s67 = sphi 0, %s64
    %s68 = sphi 0, %s67
    %s84 = sphi 0, %s68
    %s90 = sphi 0, %s92
    %s93 = sphi 0, %s90
    %s94 = sphi 0, %s93
    %s110 = sphi 0, %s94
    %s116 = sphi 0, %s118
    %s119 = sphi 0, %s116
    %s120 = sphi 0, %s119
    %s136 = sphi 0, %s120
    %s140 = sphi 0, %s140
    %s142 = sphi 0, %s140
    %s143 = sphi 0, %s142
    %s157 = sphi 0, %s143
    %s161 = sphi 0, %s161
    %s163 = sphi 0, %s161
    %s164 = sphi 0, %s163
    %s178 = sphi 0, %s164
    %s182 = sphi 0, %s182
    %s184 = sphi 0, %s182
    %s185 = sphi 0, %s184
    %s199 = sphi 0, %s185
    %s203 = sphi 0, %s203
    %s205 = sphi 0, %s203
    %s206 = sphi 0, %s205
    %s220 = sphi 0, %s206
    %s224 = sphi 0, %s224
    %s226 = sphi 0, %s224
    %s227 = sphi 0, %s226
    %s241 = sphi 0, %s227
    %s245 = sphi 0, %s245
    %s247 = sphi 0, %s245
    %s248 = sphi 0, %s247
    %s262 = sphi 0, %s248
    %s266 = sphi 0, %s266
    %s268 = sphi 0, %s266
    %s269 = sphi 0, %s268
    %s283 = sphi 0, %s269
    %s287 = sphi 0, %s287
    %s289 = sphi 0, %s287
    %s290 = sphi 0, %s289
    %s304 = sphi 0, %s290
    %s308 = sphi 0, %s308
    %s310 = sphi 0, %s308
    %s311 = sphi 0, %s310
    %s325 = sphi 0, %s311
    %s329 = sphi 0, %s329
    %s331 = sphi 0, %s329
    %s332 = sphi 0, %s331
    %s346 = sphi 0, %s332
    %s350 = sphi 0, %s350
    %s352 = sphi 0, %s350
    %s353 = sphi 0, %s352
    %s367 = sphi 0, %s353
    %s371 = sphi 0, %s371
    %s373 = sphi 0, %s371
    %s374 = sphi 0, %s373
    %s388 = sphi 0, %s374
    %s392 = sphi 0, %s392
    %s394 = sphi 0, %s392
    %s395 = sphi 0, %s394
    %s409 = sphi 0, %s395
    %s413 = sphi 0, %s413
    %s415 = sphi 0, %s413
    %s416 = sphi 0, %s415
    %s430 = sphi 0, %s416
    %s434 = sphi 0, %s434
    %s436 = sphi 0, %s434
    %s437 = sphi 0, %s436
    %s451 = sphi 0, %s437
    %s455 = sphi 0, %s455
    %s457 = sphi 0, %s455
    %s458 = sphi 0, %s457
    %s472 = sphi 0, %s458
    %s478 = sphi 0, %s480
    %s481 = sphi 0, %s478
    %s482 = sphi 0, %s481
    %s498 = sphi 0, %s482
    %s504 = sphi 0, %s506
    %s507 = sphi 0, %s504
    %s508 = sphi 0, %s507
    %s524 = sphi 0, %s508
  $region4: #{are_encoder_forward.3} parent=0 // loop_header_branch
    %31 = sbr.rel (%p29) target = $region8
  $region5: #{are_encoder_forward.3} parent=0 // loop_body
    %s33 = ssub.s32 %s28, 1
    %s34 = ssub.s32 %s28, 2
    %s35 = sadd.s32 %s28, 1
    %s36 = ssub.s32 %s28, %s35
    %p37 = scmp.eq.s32.totalorder %s36, 0
    %s39 = sadd.s32 %s38, 1
    %s40 = scalar_select %p37, %s38, %s39
    %p43 = pneg %p37
    %p44 = scmp.eq.s32.totalorder %s28, 1
    %p45 = por %p43, %p44
    %p46 = scmp.ne.s32.totalorder %s38, %s41
    %p47 = scmp.eq.s32.totalorder %s28, 0
    %p48 = por %p46, %p47
    %p49 = scmp.ne.s32.totalorder %s38, %s41
    %p50 = scmp.eq.s32.totalorder %s33, 1
    %p51 = por %p49, %p50
    %p52 = scmp.ne.s32.totalorder %s41, %s42
    %p53 = scmp.eq.s32.totalorder %s33, 0
    %p54 = por %p52, %p53
    %p55 = scmp.ne.s32.totalorder %s41, %s42
    %p56 = scmp.eq.s32.totalorder %s34, 1
    %p57 = por %p55, %p56
    %p59 = scmp.ne.s32.totalorder %s42, %s58
    %p60 = scmp.eq.s32.totalorder %s34, 0
    %p61 = por %p59, %p60
    %s62 = ssub.s32 %s28, %s35
    %p63 = scmp.eq.s32.totalorder %s62, 0
    %s65 = sadd.s32 %s64, 1
    %s66 = scalar_select %p63, %s64, %s65
    %p69 = pneg %p63
    %p70 = scmp.eq.s32.totalorder %s28, 1
    %p71 = por %p69, %p70
    %p72 = scmp.ne.s32.totalorder %s64, %s67
    %p73 = scmp.eq.s32.totalorder %s28, 0
    %p74 = por %p72, %p73
    %p75 = scmp.ne.s32.totalorder %s64, %s67
    %p76 = scmp.eq.s32.totalorder %s33, 1
    %p77 = por %p75, %p76
    %p78 = scmp.ne.s32.totalorder %s67, %s68
    %p79 = scmp.eq.s32.totalorder %s33, 0
    %p80 = por %p78, %p79
    %p81 = scmp.ne.s32.totalorder %s67, %s68
    %p82 = scmp.eq.s32.totalorder %s34, 1
    %p83 = por %p81, %p82
    %p85 = scmp.ne.s32.totalorder %s68, %s84
    %p86 = scmp.eq.s32.totalorder %s34, 0
    %p87 = por %p85, %p86
    %s88 = ssub.s32 %s28, %s35
    %p89 = scmp.eq.s32.totalorder %s88, 0
    %s91 = sadd.s32 %s90, 1
    %s92 = scalar_select %p89, %s90, %s91
    %p95 = pneg %p89
    %p96 = scmp.eq.s32.totalorder %s28, 1
    %p97 = por %p95, %p96
    %p98 = scmp.ne.s32.totalorder %s90, %s93
    %p99 = scmp.eq.s32.totalorder %s28, 0
    %p100 = por %p98, %p99
    %p101 = scmp.ne.s32.totalorder %s90, %s93
    %p102 = scmp.eq.s32.totalorder %s33, 1
    %p103 = por %p101, %p102
    %p104 = scmp.ne.s32.totalorder %s93, %s94
    %p105 = scmp.eq.s32.totalorder %s33, 0
    %p106 = por %p104, %p105
    %p107 = scmp.ne.s32.totalorder %s93, %s94
    %p108 = scmp.eq.s32.totalorder %s34, 1
    %p109 = por %p107, %p108
    %p111 = scmp.ne.s32.totalorder %s94, %s110
    %p112 = scmp.eq.s32.totalorder %s34, 0
    %p113 = por %p111, %p112
    %s114 = ssub.s32 %s28, %s35
    %p115 = scmp.eq.s32.totalorder %s114, 0
    %s117 = sadd.s32 %s116, 1
    %s118 = scalar_select %p115, %s116, %s117
    %p121 = pneg %p115
    %p122 = scmp.eq.s32.totalorder %s28, 1
    %p123 = por %p121, %p122
    %p124 = scmp.ne.s32.totalorder %s116, %s119
    %p125 = scmp.eq.s32.totalorder %s28, 0
    %p126 = por %p124, %p125
    %p127 = scmp.ne.s32.totalorder %s116, %s119
    %p128 = scmp.eq.s32.totalorder %s33, 1
    %p129 = por %p127, %p128
    %p130 = scmp.ne.s32.totalorder %s119, %s120
    %p131 = scmp.eq.s32.totalorder %s33, 0
    %p132 = por %p130, %p131
    %p133 = scmp.ne.s32.totalorder %s119, %s120
    %p134 = scmp.eq.s32.totalorder %s34, 1
    %p135 = por %p133, %p134
    %p137 = scmp.ne.s32.totalorder %s120, %s136
    %p138 = scmp.eq.s32.totalorder %s34, 0
    %p139 = por %p137, %p138
    %s141 = sadd.s32 %s140, 1
    %p144 = scmp.eq.s32.totalorder %s28, 1
    %p145 = scmp.ne.s32.totalorder %s140, %s142
    %p146 = scmp.eq.s32.totalorder %s28, 0
    %p147 = por %p145, %p146
    %p148 = scmp.ne.s32.totalorder %s140, %s142
    %p149 = scmp.eq.s32.totalorder %s33, 1
    %p150 = por %p148, %p149
    %p151 = scmp.ne.s32.totalorder %s142, %s143
    %p152 = scmp.eq.s32.totalorder %s33, 0
    %p153 = por %p151, %p152
    %p154 = scmp.ne.s32.totalorder %s142, %s143
    %p155 = scmp.eq.s32.totalorder %s34, 1
    %p156 = por %p154, %p155
    %p158 = scmp.ne.s32.totalorder %s143, %s157
    %p159 = scmp.eq.s32.totalorder %s34, 0
    %p160 = por %p158, %p159
    %s162 = sadd.s32 %s161, 1
    %p165 = scmp.eq.s32.totalorder %s28, 1
    %p166 = scmp.ne.s32.totalorder %s161, %s163
    %p167 = scmp.eq.s32.totalorder %s28, 0
    %p168 = por %p166, %p167
    %p169 = scmp.ne.s32.totalorder %s161, %s163
    %p170 = scmp.eq.s32.totalorder %s33, 1
    %p171 = por %p169, %p170
    %p172 = scmp.ne.s32.totalorder %s163, %s164
    %p173 = scmp.eq.s32.totalorder %s33, 0
    %p174 = por %p172, %p173
    %p175 = scmp.ne.s32.totalorder %s163, %s164
    %p176 = scmp.eq.s32.totalorder %s34, 1
    %p177 = por %p175, %p176
    %p179 = scmp.ne.s32.totalorder %s164, %s178
    %p180 = scmp.eq.s32.totalorder %s34, 0
    %p181 = por %p179, %p180
    %s183 = sadd.s32 %s182, 1
    %p186 = scmp.eq.s32.totalorder %s28, 1
    %p187 = scmp.ne.s32.totalorder %s182, %s184
    %p188 = scmp.eq.s32.totalorder %s28, 0
    %p189 = por %p187, %p188
    %p190 = scmp.ne.s32.totalorder %s182, %s184
    %p191 = scmp.eq.s32.totalorder %s33, 1
    %p192 = por %p190, %p191
    %p193 = scmp.ne.s32.totalorder %s184, %s185
    %p194 = scmp.eq.s32.totalorder %s33, 0
    %p195 = por %p193, %p194
    %p196 = scmp.ne.s32.totalorder %s184, %s185
    %p197 = scmp.eq.s32.totalorder %s34, 1
    %p198 = por %p196, %p197
    %p200 = scmp.ne.s32.totalorder %s185, %s199
    %p201 = scmp.eq.s32.totalorder %s34, 0
    %p202 = por %p200, %p201
    %s204 = sadd.s32 %s203, 1
    %p207 = scmp.eq.s32.totalorder %s28, 1
    %p208 = scmp.ne.s32.totalorder %s203, %s205
    %p209 = scmp.eq.s32.totalorder %s28, 0
    %p210 = por %p208, %p209
    %p211 = scmp.ne.s32.totalorder %s203, %s205
    %p212 = scmp.eq.s32.totalorder %s33, 1
    %p213 = por %p211, %p212
    %p214 = scmp.ne.s32.totalorder %s205, %s206
    %p215 = scmp.eq.s32.totalorder %s33, 0
    %p216 = por %p214, %p215
    %p217 = scmp.ne.s32.totalorder %s205, %s206
    %p218 = scmp.eq.s32.totalorder %s34, 1
    %p219 = por %p217, %p218
    %p221 = scmp.ne.s32.totalorder %s206, %s220
    %p222 = scmp.eq.s32.totalorder %s34, 0
    %p223 = por %p221, %p222
    %s225 = sadd.s32 %s224, 1
    %p228 = scmp.eq.s32.totalorder %s28, 1
    %p229 = scmp.ne.s32.totalorder %s224, %s226
    %p230 = scmp.eq.s32.totalorder %s28, 0
    %p231 = por %p229, %p230
    %p232 = scmp.ne.s32.totalorder %s224, %s226
    %p233 = scmp.eq.s32.totalorder %s33, 1
    %p234 = por %p232, %p233
    %p235 = scmp.ne.s32.totalorder %s226, %s227
    %p236 = scmp.eq.s32.totalorder %s33, 0
    %p237 = por %p235, %p236
    %p238 = scmp.ne.s32.totalorder %s226, %s227
    %p239 = scmp.eq.s32.totalorder %s34, 1
    %p240 = por %p238, %p239
    %p242 = scmp.ne.s32.totalorder %s227, %s241
    %p243 = scmp.eq.s32.totalorder %s34, 0
    %p244 = por %p242, %p243
    %s246 = sadd.s32 %s245, 1
    %p249 = scmp.eq.s32.totalorder %s28, 1
    %p250 = scmp.ne.s32.totalorder %s245, %s247
    %p251 = scmp.eq.s32.totalorder %s28, 0
    %p252 = por %p250, %p251
    %p253 = scmp.ne.s32.totalorder %s245, %s247
    %p254 = scmp.eq.s32.totalorder %s33, 1
    %p255 = por %p253, %p254
    %p256 = scmp.ne.s32.totalorder %s247, %s248
    %p257 = scmp.eq.s32.totalorder %s33, 0
    %p258 = por %p256, %p257
    %p259 = scmp.ne.s32.totalorder %s247, %s248
    %p260 = scmp.eq.s32.totalorder %s34, 1
    %p261 = por %p259, %p260
    %p263 = scmp.ne.s32.totalorder %s248, %s262
    %p264 = scmp.eq.s32.totalorder %s34, 0
    %p265 = por %p263, %p264
    %s267 = sadd.s32 %s266, 1
    %p270 = scmp.eq.s32.totalorder %s28, 1
    %p271 = scmp.ne.s32.totalorder %s266, %s268
    %p272 = scmp.eq.s32.totalorder %s28, 0
    %p273 = por %p271, %p272
    %p274 = scmp.ne.s32.totalorder %s266, %s268
    %p275 = scmp.eq.s32.totalorder %s33, 1
    %p276 = por %p274, %p275
    %p277 = scmp.ne.s32.totalorder %s268, %s269
    %p278 = scmp.eq.s32.totalorder %s33, 0
    %p279 = por %p277, %p278
    %p280 = scmp.ne.s32.totalorder %s268, %s269
    %p281 = scmp.eq.s32.totalorder %s34, 1
    %p282 = por %p280, %p281
    %p284 = scmp.ne.s32.totalorder %s269, %s283
    %p285 = scmp.eq.s32.totalorder %s34, 0
    %p286 = por %p284, %p285
    %s288 = sadd.s32 %s287, 1
    %p291 = scmp.eq.s32.totalorder %s28, 1
    %p292 = scmp.ne.s32.totalorder %s287, %s289
    %p293 = scmp.eq.s32.totalorder %s28, 0
    %p294 = por %p292, %p293
    %p295 = scmp.ne.s32.totalorder %s287, %s289
    %p296 = scmp.eq.s32.totalorder %s33, 1
    %p297 = por %p295, %p296
    %p298 = scmp.ne.s32.totalorder %s289, %s290
    %p299 = scmp.eq.s32.totalorder %s33, 0
    %p300 = por %p298, %p299
    %p301 = scmp.ne.s32.totalorder %s289, %s290
    %p302 = scmp.eq.s32.totalorder %s34, 1
    %p303 = por %p301, %p302
    %p305 = scmp.ne.s32.totalorder %s290, %s304
    %p306 = scmp.eq.s32.totalorder %s34, 0
    %p307 = por %p305, %p306
    %s309 = sadd.s32 %s308, 1
    %p312 = scmp.eq.s32.totalorder %s28, 1
    %p313 = scmp.ne.s32.totalorder %s308, %s310
    %p314 = scmp.eq.s32.totalorder %s28, 0
    %p315 = por %p313, %p314
    %p316 = scmp.ne.s32.totalorder %s308, %s310
    %p317 = scmp.eq.s32.totalorder %s33, 1
    %p318 = por %p316, %p317
    %p319 = scmp.ne.s32.totalorder %s310, %s311
    %p320 = scmp.eq.s32.totalorder %s33, 0
    %p321 = por %p319, %p320
    %p322 = scmp.ne.s32.totalorder %s310, %s311
    %p323 = scmp.eq.s32.totalorder %s34, 1
    %p324 = por %p322, %p323
    %p326 = scmp.ne.s32.totalorder %s311, %s325
    %p327 = scmp.eq.s32.totalorder %s34, 0
    %p328 = por %p326, %p327
    %s330 = sadd.s32 %s329, 1
    %p333 = scmp.eq.s32.totalorder %s28, 1
    %p334 = scmp.ne.s32.totalorder %s329, %s331
    %p335 = scmp.eq.s32.totalorder %s28, 0
    %p336 = por %p334, %p335
    %p337 = scmp.ne.s32.totalorder %s329, %s331
    %p338 = scmp.eq.s32.totalorder %s33, 1
    %p339 = por %p337, %p338
    %p340 = scmp.ne.s32.totalorder %s331, %s332
    %p341 = scmp.eq.s32.totalorder %s33, 0
    %p342 = por %p340, %p341
    %p343 = scmp.ne.s32.totalorder %s331, %s332
    %p344 = scmp.eq.s32.totalorder %s34, 1
    %p345 = por %p343, %p344
    %p347 = scmp.ne.s32.totalorder %s332, %s346
    %p348 = scmp.eq.s32.totalorder %s34, 0
    %p349 = por %p347, %p348
    %s351 = sadd.s32 %s350, 1
    %p354 = scmp.eq.s32.totalorder %s28, 1
    %p355 = scmp.ne.s32.totalorder %s350, %s352
    %p356 = scmp.eq.s32.totalorder %s28, 0
    %p357 = por %p355, %p356
    %p358 = scmp.ne.s32.totalorder %s350, %s352
    %p359 = scmp.eq.s32.totalorder %s33, 1
    %p360 = por %p358, %p359
    %p361 = scmp.ne.s32.totalorder %s352, %s353
    %p362 = scmp.eq.s32.totalorder %s33, 0
    %p363 = por %p361, %p362
    %p364 = scmp.ne.s32.totalorder %s352, %s353
    %p365 = scmp.eq.s32.totalorder %s34, 1
    %p366 = por %p364, %p365
    %p368 = scmp.ne.s32.totalorder %s353, %s367
    %p369 = scmp.eq.s32.totalorder %s34, 0
    %p370 = por %p368, %p369
    %s372 = sadd.s32 %s371, 1
    %p375 = scmp.eq.s32.totalorder %s28, 1
    %p376 = scmp.ne.s32.totalorder %s371, %s373
    %p377 = scmp.eq.s32.totalorder %s28, 0
    %p378 = por %p376, %p377
    %p379 = scmp.ne.s32.totalorder %s371, %s373
    %p380 = scmp.eq.s32.totalorder %s33, 1
    %p381 = por %p379, %p380
    %p382 = scmp.ne.s32.totalorder %s373, %s374
    %p383 = scmp.eq.s32.totalorder %s33, 0
    %p384 = por %p382, %p383
    %p385 = scmp.ne.s32.totalorder %s373, %s374
    %p386 = scmp.eq.s32.totalorder %s34, 1
    %p387 = por %p385, %p386
    %p389 = scmp.ne.s32.totalorder %s374, %s388
    %p390 = scmp.eq.s32.totalorder %s34, 0
    %p391 = por %p389, %p390
    %s393 = sadd.s32 %s392, 1
    %p396 = scmp.eq.s32.totalorder %s28, 1
    %p397 = scmp.ne.s32.totalorder %s392, %s394
    %p398 = scmp.eq.s32.totalorder %s28, 0
    %p399 = por %p397, %p398
    %p400 = scmp.ne.s32.totalorder %s392, %s394
    %p401 = scmp.eq.s32.totalorder %s33, 1
    %p402 = por %p400, %p401
    %p403 = scmp.ne.s32.totalorder %s394, %s395
    %p404 = scmp.eq.s32.totalorder %s33, 0
    %p405 = por %p403, %p404
    %p406 = scmp.ne.s32.totalorder %s394, %s395
    %p407 = scmp.eq.s32.totalorder %s34, 1
    %p408 = por %p406, %p407
    %p410 = scmp.ne.s32.totalorder %s395, %s409
    %p411 = scmp.eq.s32.totalorder %s34, 0
    %p412 = por %p410, %p411
    %s414 = sadd.s32 %s413, 1
    %p417 = scmp.eq.s32.totalorder %s28, 1
    %p418 = scmp.ne.s32.totalorder %s413, %s415
    %p419 = scmp.eq.s32.totalorder %s28, 0
    %p420 = por %p418, %p419
    %p421 = scmp.ne.s32.totalorder %s413, %s415
    %p422 = scmp.eq.s32.totalorder %s33, 1
    %p423 = por %p421, %p422
    %p424 = scmp.ne.s32.totalorder %s415, %s416
    %p425 = scmp.eq.s32.totalorder %s33, 0
    %p426 = por %p424, %p425
    %p427 = scmp.ne.s32.totalorder %s415, %s416
    %p428 = scmp.eq.s32.totalorder %s34, 1
    %p429 = por %p427, %p428
    %p431 = scmp.ne.s32.totalorder %s416, %s430
    %p432 = scmp.eq.s32.totalorder %s34, 0
    %p433 = por %p431, %p432
    %s435 = sadd.s32 %s434, 1
    %p438 = scmp.eq.s32.totalorder %s28, 1
    %p439 = scmp.ne.s32.totalorder %s434, %s436
    %p440 = scmp.eq.s32.totalorder %s28, 0
    %p441 = por %p439, %p440
    %p442 = scmp.ne.s32.totalorder %s434, %s436
    %p443 = scmp.eq.s32.totalorder %s33, 1
    %p444 = por %p442, %p443
    %p445 = scmp.ne.s32.totalorder %s436, %s437
    %p446 = scmp.eq.s32.totalorder %s33, 0
    %p447 = por %p445, %p446
    %p448 = scmp.ne.s32.totalorder %s436, %s437
    %p449 = scmp.eq.s32.totalorder %s34, 1
    %p450 = por %p448, %p449
    %p452 = scmp.ne.s32.totalorder %s437, %s451
    %p453 = scmp.eq.s32.totalorder %s34, 0
    %p454 = por %p452, %p453
    %s456 = sadd.s32 %s455, 1
    %p459 = scmp.eq.s32.totalorder %s28, 1
    %p460 = scmp.ne.s32.totalorder %s455, %s457
    %p461 = scmp.eq.s32.totalorder %s28, 0
    %p462 = por %p460, %p461
    %p463 = scmp.ne.s32.totalorder %s455, %s457
    %p464 = scmp.eq.s32.totalorder %s33, 1
    %p465 = por %p463, %p464
    %p466 = scmp.ne.s32.totalorder %s457, %s458
    %p467 = scmp.eq.s32.totalorder %s33, 0
    %p468 = por %p466, %p467
    %p469 = scmp.ne.s32.totalorder %s457, %s458
    %p470 = scmp.eq.s32.totalorder %s34, 1
    %p471 = por %p469, %p470
    %p473 = scmp.ne.s32.totalorder %s458, %s472
    %p474 = scmp.eq.s32.totalorder %s34, 0
    %p475 = por %p473, %p474
    %s476 = ssub.s32 %s28, %s35
    %p477 = scmp.eq.s32.totalorder %s476, 0
    %s479 = sadd.s32 %s478, 1
    %s480 = scalar_select %p477, %s478, %s479
    %p483 = pneg %p477
    %p484 = scmp.eq.s32.totalorder %s28, 1
    %p485 = por %p483, %p484
    %p486 = scmp.ne.s32.totalorder %s478, %s481
    %p487 = scmp.eq.s32.totalorder %s28, 0
    %p488 = por %p486, %p487
    %p489 = scmp.ne.s32.totalorder %s478, %s481
    %p490 = scmp.eq.s32.totalorder %s33, 1
    %p491 = por %p489, %p490
    %p492 = scmp.ne.s32.totalorder %s481, %s482
    %p493 = scmp.eq.s32.totalorder %s33, 0
    %p494 = por %p492, %p493
    %p495 = scmp.ne.s32.totalorder %s481, %s482
    %p496 = scmp.eq.s32.totalorder %s34, 1
    %p497 = por %p495, %p496
    %p499 = scmp.ne.s32.totalorder %s482, %s498
    %p500 = scmp.eq.s32.totalorder %s34, 0
    %p501 = por %p499, %p500
    %s502 = ssub.s32 %s28, %s35
    %p503 = scmp.eq.s32.totalorder %s502, 0
    %s505 = sadd.s32 %s504, 1
    %s506 = scalar_select %p503, %s504, %s505
    %p509 = pneg %p503
    %p510 = scmp.eq.s32.totalorder %s28, 1
    %p511 = por %p509, %p510
    %p512 = scmp.ne.s32.totalorder %s504, %s507
    %p513 = scmp.eq.s32.totalorder %s28, 0
    %p514 = por %p512, %p513
    %p515 = scmp.ne.s32.totalorder %s504, %s507
    %p516 = scmp.eq.s32.totalorder %s33, 1
    %p517 = por %p515, %p516
    %p518 = scmp.ne.s32.totalorder %s507, %s508
    %p519 = scmp.eq.s32.totalorder %s33, 0
    %p520 = por %p518, %p519
    %p521 = scmp.ne.s32.totalorder %s507, %s508
    %p522 = scmp.eq.s32.totalorder %s34, 1
    %p523 = por %p521, %p522
    %p525 = scmp.ne.s32.totalorder %s508, %s524
    %p526 = scmp.eq.s32.totalorder %s34, 0
    %p527 = por %p525, %p526
    %p528 = scmp.le.s32.totalorder 1, %s28
    %p529 = scmp.lt.s32.totalorder %s28, 3
    %p530 = pnand %p528, %p529
    %p531 = pneg %p530
    // Predicated region
    $region9: #{are_encoder_forward.3} parent=5 // pred_check
      _
    $region10: #{are_encoder_forward.3} parent=5 // pred_check_branch
      %533 = sbr.rel (%p530) target = $region12
    $region11: #{are_encoder_forward.3} parent=5 // pred_region
      %s534 = ssub.s32 %s28, 1
      // Predicated region
      $region13: #{are_encoder_forward.3} parent=11 // pred_check
        %p535 = pneg %p153
      $region14: #{are_encoder_forward.3} parent=11 // pred_check_branch
        %537 = sbr.rel (%p535) target = $region16
      $region15: #{are_encoder_forward.3} parent=11 // pred_region
        _
      $region16: #{are_encoder_forward.3} parent=11 // pred_fallthru
        _
      // Predicated region
      $region17: #{are_encoder_forward.3} parent=11 // pred_check
        %p538 = pneg %p174
      $region18: #{are_encoder_forward.3} parent=11 // pred_check_branch
        %540 = sbr.rel (%p538) target = $region20
      $region19: #{are_encoder_forward.3} parent=11 // pred_region
        _
      $region20: #{are_encoder_forward.3} parent=11 // pred_fallthru
        _
      // Predicated region
      $region21: #{are_encoder_forward.3} parent=11 // pred_check
        %p541 = pneg %p195
      $region22: #{are_encoder_forward.3} parent=11 // pred_check_branch
        %543 = sbr.rel (%p541) target = $region24
      $region23: #{are_encoder_forward.3} parent=11 // pred_region
        _
      $region24: #{are_encoder_forward.3} parent=11 // pred_fallthru
        _
      // Predicated region
      $region25: #{are_encoder_forward.3} parent=11 // pred_check
        %p544 = pneg %p216
      $region26: #{are_encoder_forward.3} parent=11 // pred_check_branch
        %546 = sbr.rel (%p544) target = $region28
      $region27: #{are_encoder_forward.3} parent=11 // pred_region
        _
      $region28: #{are_encoder_forward.3} parent=11 // pred_fallthru
        _
      // Predicated region
      $region29: #{are_encoder_forward.3} parent=11 // pred_check
        %p547 = pneg %p237
      $region30: #{are_encoder_forward.3} parent=11 // pred_check_branch
        %549 = sbr.rel (%p547) target = $region32
      $region31: #{are_encoder_forward.3} parent=11 // pred_region
        _
      $region32: #{are_encoder_forward.3} parent=11 // pred_fallthru
        _
      // Predicated region
      $region33: #{are_encoder_forward.3} parent=11 // pred_check
        %p550 = pneg %p258
      $region34: #{are_encoder_forward.3} parent=11 // pred_check_branch
        %552 = sbr.rel (%p550) target = $region36
      $region35: #{are_encoder_forward.3} parent=11 // pred_region
        _
      $region36: #{are_encoder_forward.3} parent=11 // pred_fallthru
        _
      // Predicated region
      $region37: #{are_encoder_forward.3} parent=11 // pred_check
        %p553 = pneg %p279
      $region38: #{are_encoder_forward.3} parent=11 // pred_check_branch
        %555 = sbr.rel (%p553) target = $region40
      $region39: #{are_encoder_forward.3} parent=11 // pred_region
        _
      $region40: #{are_encoder_forward.3} parent=11 // pred_fallthru
        _
      // Predicated region
      $region41: #{are_encoder_forward.3} parent=11 // pred_check
        %p556 = pneg %p300
      $region42: #{are_encoder_forward.3} parent=11 // pred_check_branch
        %558 = sbr.rel (%p556) target = $region44
      $region43: #{are_encoder_forward.3} parent=11 // pred_region
        _
      $region44: #{are_encoder_forward.3} parent=11 // pred_fallthru
        _
      // Predicated region
      $region45: #{are_encoder_forward.3} parent=11 // pred_check
        %p559 = pneg %p321
      $region46: #{are_encoder_forward.3} parent=11 // pred_check_branch
        %561 = sbr.rel (%p559) target = $region48
      $region47: #{are_encoder_forward.3} parent=11 // pred_region
        _
      $region48: #{are_encoder_forward.3} parent=11 // pred_fallthru
        _
      // Predicated region
      $region49: #{are_encoder_forward.3} parent=11 // pred_check
        %p562 = pneg %p342
      $region50: #{are_encoder_forward.3} parent=11 // pred_check_branch
        %564 = sbr.rel (%p562) target = $region52
      $region51: #{are_encoder_forward.3} parent=11 // pred_region
        _
      $region52: #{are_encoder_forward.3} parent=11 // pred_fallthru
        _
      // Predicated region
      $region53: #{are_encoder_forward.3} parent=11 // pred_check
        %p565 = pneg %p363
      $region54: #{are_encoder_forward.3} parent=11 // pred_check_branch
        %567 = sbr.rel (%p565) target = $region56
      $region55: #{are_encoder_forward.3} parent=11 // pred_region
        _
      $region56: #{are_encoder_forward.3} parent=11 // pred_fallthru
        _
      // Predicated region
      $region57: #{are_encoder_forward.3} parent=11 // pred_check
        %p568 = pneg %p384
      $region58: #{are_encoder_forward.3} parent=11 // pred_check_branch
        %570 = sbr.rel (%p568) target = $region60
      $region59: #{are_encoder_forward.3} parent=11 // pred_region
        _
      $region60: #{are_encoder_forward.3} parent=11 // pred_fallthru
        _
      // Predicated region
      $region61: #{are_encoder_forward.3} parent=11 // pred_check
        %p571 = pneg %p405
      $region62: #{are_encoder_forward.3} parent=11 // pred_check_branch
        %573 = sbr.rel (%p571) target = $region64
      $region63: #{are_encoder_forward.3} parent=11 // pred_region
        _
      $region64: #{are_encoder_forward.3} parent=11 // pred_fallthru
        _
      // Predicated region
      $region65: #{are_encoder_forward.3} parent=11 // pred_check
        %p574 = pneg %p426
      $region66: #{are_encoder_forward.3} parent=11 // pred_check_branch
        %576 = sbr.rel (%p574) target = $region68
      $region67: #{are_encoder_forward.3} parent=11 // pred_region
        _
      $region68: #{are_encoder_forward.3} parent=11 // pred_fallthru
        _
      // Predicated region
      $region69: #{are_encoder_forward.3} parent=11 // pred_check
        %p577 = pneg %p447
      $region70: #{are_encoder_forward.3} parent=11 // pred_check_branch
        %579 = sbr.rel (%p577) target = $region72
      $region71: #{are_encoder_forward.3} parent=11 // pred_region
        _
      $region72: #{are_encoder_forward.3} parent=11 // pred_fallthru
        _
      // Predicated region
      $region73: #{are_encoder_forward.3} parent=11 // pred_check
        %p580 = pneg %p468
      $region74: #{are_encoder_forward.3} parent=11 // pred_check_branch
        %582 = sbr.rel (%p580) target = $region76
      $region75: #{are_encoder_forward.3} parent=11 // pred_region
        _
      $region76: #{are_encoder_forward.3} parent=11 // pred_fallthru
        _
    $region12: #{are_encoder_forward.3} parent=5 // pred_fallthru
      _
    %p583 = scmp.lt.s32.totalorder %s28, 2
    // Predicated region
    $region77: #{are_encoder_forward.3} parent=5 // pred_check
      %p584 = pneg %p583
    $region78: #{are_encoder_forward.3} parent=5 // pred_check_branch
      %586 = sbr.rel (%p584) target = $region80
    $region79: #{are_encoder_forward.3} parent=5 // pred_region
      // Predicated region
      $region81: #{are_encoder_forward.3} parent=79 // pred_check
        %p587 = pneg %p48
      $region82: #{are_encoder_forward.3} parent=79 // pred_check_branch
        %589 = sbr.rel (%p587) target = $region84
      $region83: #{are_encoder_forward.3} parent=79 // pred_region
        %p590 = scmp.lt.s32.totalorder %s28, 1
        %s591 = scalar_select %p590, %s28, 1
        %s592 = smul.addr %s591, 8
        %s593 = smul.addr %s592, 8
        %s594 = scalar_lea.vmem %s0, %s593
      $region84: #{are_encoder_forward.3} parent=79 // pred_fallthru
        _
      // Predicated region
      $region85: #{are_encoder_forward.3} parent=79 // pred_check
        %p595 = pneg %p74
      $region86: #{are_encoder_forward.3} parent=79 // pred_check_branch
        %597 = sbr.rel (%p595) target = $region88
      $region87: #{are_encoder_forward.3} parent=79 // pred_region
        %p598 = scmp.lt.s32.totalorder %s28, 1
        %s599 = scalar_select %p598, %s28, 1
        %s600 = smul.addr %s599, 8
        %s601 = smul.addr %s600, 8
        %s602 = scalar_lea.vmem %s1, %s601
      $region88: #{are_encoder_forward.3} parent=79 // pred_fallthru
        _
      // Predicated region
      $region89: #{are_encoder_forward.3} parent=79 // pred_check
        %p603 = pneg %p100
      $region90: #{are_encoder_forward.3} parent=79 // pred_check_branch
        %605 = sbr.rel (%p603) target = $region92
      $region91: #{are_encoder_forward.3} parent=79 // pred_region
        %p606 = scmp.lt.s32.totalorder %s28, 1
        %s607 = scalar_select %p606, %s28, 1
        %s608 = smul.addr %s607, 8
        %s609 = scalar_lea.vmem %s2, %s608
      $region92: #{are_encoder_forward.3} parent=79 // pred_fallthru
        _
      // Predicated region
      $region93: #{are_encoder_forward.3} parent=79 // pred_check
        %p610 = pneg %p126
      $region94: #{are_encoder_forward.3} parent=79 // pred_check_branch
        %612 = sbr.rel (%p610) target = $region96
      $region95: #{are_encoder_forward.3} parent=79 // pred_region
        %p613 = scmp.lt.s32.totalorder %s28, 1
        %s614 = scalar_select %p613, %s28, 1
        %s615 = scalar_lea.vmem %s3, %s614
      $region96: #{are_encoder_forward.3} parent=79 // pred_fallthru
        _
    $region80: #{are_encoder_forward.3} parent=5 // pred_fallthru
      _
    %p616 = scmp.le.s32.totalorder 1, %s28
    %p617 = scmp.lt.s32.totalorder %s28, 3
    %p618 = pnand %p616, %p617
    %p619 = pneg %p618
    // Predicated region
    $region97: #{are_encoder_forward.3} parent=5 // pred_check
      _
    $region98: #{are_encoder_forward.3} parent=5 // pred_check_branch
      %621 = sbr.rel (%p618) target = $region100
    $region99: #{are_encoder_forward.3} parent=5 // pred_region
      %s622 = ssub.s32 %s28, 1
      %p623 = scmp.lt.s32.totalorder %s33, 1
      %s624 = scalar_select %p623, %s33, 1
      %s625 = smul.addr %s624, 8
      %s626 = smul.addr %s625, 8
      %s627 = scalar_lea.vmem %s0, %s626
      %p628 = pneg %p54
      %p629 = pneg %p51
      %p630 = scmp.lt.s32.totalorder %s33, 1
      %s631 = scalar_select %p630, %s33, 1
      %s632 = smul.addr %s631, 8
      %s633 = smul.addr %s632, 8
      %s634 = scalar_lea.vmem %s1, %s633
      %p635 = pneg %p80
      %p636 = pneg %p77
      %p637 = scmp.lt.s32.totalorder %s33, 1
      %s638 = scalar_select %p637, %s33, 1
      %s639 = smul.addr %s638, 8
      %s640 = scalar_lea.vmem %s2, %s639
      %p641 = pneg %p106
      %p642 = pneg %p103
      %p643 = scmp.lt.s32.totalorder %s33, 1
      %s644 = scalar_select %p643, %s33, 1
      %s645 = scalar_lea.vmem %s3, %s644
      %p646 = pneg %p132
      %p647 = pneg %p129
      %p648 = pneg %p153
      %p649 = pneg %p150
      %p650 = pneg %p174
      %p651 = pneg %p171
      %p652 = pneg %p195
      %p653 = pneg %p192
      %p654 = pneg %p216
      %p655 = pneg %p213
      %p656 = pneg %p237
      %p657 = pneg %p234
      %p658 = pneg %p258
      %p659 = pneg %p255
      %p660 = pneg %p279
      %p661 = pneg %p276
      %p662 = pneg %p300
      %p663 = pneg %p297
      %p664 = pneg %p321
      %p665 = pneg %p318
      %p666 = pneg %p342
      %p667 = pneg %p339
      %p668 = pneg %p363
      %p669 = pneg %p360
      %p670 = pneg %p384
      %p671 = pneg %p381
      %p672 = pneg %p405
      %p673 = pneg %p402
      %p674 = pneg %p426
      %p675 = pneg %p423
      %p676 = pneg %p447
      %p677 = pneg %p444
      %p678 = pneg %p468
      %p679 = pneg %p465
      %p680 = pneg %p494
      %p681 = pneg %p491
      %p682 = scmp.lt.s32.totalorder %s33, 1
      %s683 = scalar_select %p682, %s33, 1
      %s684 = smul.addr %s683, 9
      %s685 = smul.addr %s684, 8
      %s686 = scalar_lea.vmem %s20, %s685
      %p687 = pneg %p520
      %p688 = pneg %p517
      %p689 = scmp.lt.s32.totalorder %s33, 1
      %s690 = scalar_select %p689, %s33, 1
      %s691 = smul.addr %s690, 8
      %s692 = scalar_lea.vmem %s21, %s691
      %p693 = scmp.lt.s32.totalorder %s33, 1
      %s694 = scalar_select %p693, %s33, 1
      %s695 = smul.addr %s694, 8
      %s696 = smul.addr %s695, 8
      %s697 = scalar_lea.vmem %s0, %s696
      %p698 = scmp.lt.s32.totalorder %s33, 1
      %s699 = scalar_select %p698, %s33, 1
      %s700 = smul.addr %s699, 8
      %s701 = smul.addr %s700, 8
      %s702 = scalar_lea.vmem %s1, %s701
      %p703 = scmp.lt.s32.totalorder %s33, 1
      %s704 = scalar_select %p703, %s33, 1
      %s705 = smul.addr %s704, 8
      %s706 = scalar_lea.vmem %s2, %s705
      %p707 = scmp.lt.s32.totalorder %s33, 1
      %s708 = scalar_select %p707, %s33, 1
      %s709 = scalar_lea.vmem %s3, %s708
      %p710 = scmp.lt.s32.totalorder %s33, 1
      %s711 = scalar_select %p710, %s33, 1
      %s712 = smul.addr %s711, 9
      %s713 = smul.addr %s712, 8
      %s714 = scalar_lea.vmem %s20, %s713
      %p715 = scmp.lt.s32.totalorder %s33, 1
      %s716 = scalar_select %p715, %s33, 1
      %s717 = smul.addr %s716, 8
      %s718 = scalar_lea.vmem %s21, %s717
      %v719 = vld [vmem:[%s706] sm:$0xff]
      %v720 = vld [vmem:[%s4] sm:$0xff]
      %v721 = vld [vmem:[%s4 + $0x8] sm:$0xff]
      %v722 = vld [vmem:[%s4 + $0x10] sm:$0xff]
      %v723 = vld [vmem:[%s4 + $0x18] sm:$0xff]
      %v724 = vld [vmem:[%s4 + $0x20] sm:$0xff]
      %v725 = vld [vmem:[%s4 + $0x28] sm:$0xff]
      %v726 = vld [vmem:[%s5] sm:$0x1]
      %v728 = vlaneseq
      %v729 = vshrl.u32 %v728, 7
      %v730 = vsub.s32 0, %v729
      %v731 = vrot.slane %v726, %v730
      %vm733 = vcmask 392192
      %v735 = vsel %vm733, %v719, 0
      %737 = vmatprep.subr.mxu0 0.0
      %738 = vmatpush1.msra.mxu0 %v720
      %739 = vmatprep.subr.mxu0 0.0
      %740 = vmatpush1.msra.mxu0 %v721
      %741 = vmatprep.subr.mxu0 0.0
      %742 = vmatpush1.msra.mxu0 %v722
      %743 = vmatprep.subr.mxu0 0.0
      %744 = vmatpush1.msra.mxu0 %v723
      %745 = vmatprep.subr.mxu0 0.0
      %746 = vmatpush1.msra.mxu0 %v724
      %747 = vmatprep.subr.mxu0 0.0
      %748 = vmatpush1.msra.mxu0 %v725
      %749 = vmatprep.subr.mxu0 0.0
      %750 = vmatpush1.msra.mxu0 0.0
      %751 = vmatprep.subr.mxu0 0.0
      %752 = vmatpush1.msra.mxu0 0.0
      %753 = vmatprep.subr.mxu0 0.0
      %754 = vmatpush1.msra.mxu0 0.0
      %755 = vmatprep.subr.mxu0 0.0
      %756 = vmatpush1.msra.mxu0 0.0
      %757 = vmatprep.subr.mxu0 0.0
      %758 = vmatpush1.msra.mxu0 0.0
      %759 = vmatprep.subr.mxu0 0.0
      %760 = vmatpush1.msra.mxu0 0.0
      %761 = vmatprep.subr.mxu0 0.0
      %762 = vmatpush1.msra.mxu0 0.0
      %763 = vmatprep.subr.mxu0 0.0
      %764 = vmatpush1.msra.mxu0 0.0
      %765 = vmatprep.subr.mxu0 0.0
      %766 = vmatpush1.msra.mxu0 0.0
      %767 = vmatprep.subr.mxu0 0.0
      %768 = vmatpush1.msra.mxu0 0.0
      %769 = vmatprep.subr.mxu0 0.0
      %770 = vmatpush1.msra.mxu0 0.0
      %771 = vmatprep.subr.mxu0 0.0
      %772 = vmatpush1.msra.mxu0 0.0
      %773 = vmatprep.subr.mxu0 0.0
      %774 = vmatpush1.msra.mxu0 0.0
      %775 = vmatprep.subr.mxu0 0.0
      %776 = vmatpush1.msra.mxu0 0.0
      %777 = vmatprep.subr.mxu0 0.0
      %778 = vmatpush1.msra.mxu0 0.0
      %779 = vmatprep.subr.mxu0 0.0
      %780 = vmatpush1.msra.mxu0 0.0
      %781 = vmatprep.subr.mxu0 0.0
      %782 = vmatpush1.msra.mxu0 0.0
      %783 = vmatprep.subr.mxu0 0.0
      %784 = vmatpush1.msra.mxu0 0.0
      %785 = vmatprep.subr.mxu0 0.0
      %786 = vmatpush1.msra.mxu0 0.0
      %787 = vmatprep.subr.mxu0 0.0
      %788 = vmatpush1.msra.mxu0 0.0
      %789 = vmatprep.subr.mxu0 0.0
      %790 = vmatpush1.msra.mxu0 0.0
      %791 = vmatprep.subr.mxu0 0.0
      %792 = vmatpush1.msra.mxu0 0.0
      %793 = vmatprep.subr.mxu0 0.0
      %794 = vmatpush1.msra.mxu0 0.0
      %795 = vmatprep.subr.mxu0 0.0
      %796 = vmatpush1.msra.mxu0 0.0
      %797 = vmatprep.subr.mxu0 0.0
      %798 = vmatpush1.msra.mxu0 0.0
      %799 = vmatprep.subr.mxu0 0.0
      %800 = vmatpush1.msra.mxu0 0.0
      %801 = vmatprep.mubr.f32.mxu0 0.0
      %802 = vmatmul.mubr.f32.gmra.mrb[0].mxu0 %v735
      %v803 = vpop.f32.mrb[0].mxu0
      %v804 = vadd.f32 %v731, %v803
      %v805 = vpop.f32.mrb[0].mxu0
      %806 = vdwg.mxu0
      %v807 = vld [vmem:[%s6] sm:$0x1]
      %v808 = vld [vmem:[%s7] sm:$0x1]
      %vm809 = vcmask 261120
      %v810 = vsel %vm809, %v804, 0.0
      %811 = vadd.xlane.f32.xlu0 %v810
      %v812 = vpop.xlane.xlu0 %811
      %v813 = vrcp.pop 32.0
      %v814 = vmul.f32 %v812, %v813
      %v815 = vmul.f32 %v804, %v804
      %v816 = vsel %vm809, %v815, 0.0
      %817 = vadd.xlane.f32.xlu0 %v816
      %v818 = vpop.xlane.xlu0 %817
      %v819 = vmul.f32 %v818, %v813
      %v820 = vmul.f32 %v814, %v814
      %v821 = vsub.f32 %v819, %v820
      %v822 = vsub.f32 %v804, %v814
      %v823 = vadd.f32 %v821, 1e-05
      %v824 = vrsqrt.pop %v823
      %v825 = vmul.f32 %v822, %v824
      %v827 = vlaneseq
      %v828 = vshrl.u32 %v827, 7
      %v829 = vsub.s32 0, %v828
      %v830 = vrot.slane %v807, %v829
      %v832 = vmul.f32 %v825, %v830
      %v834 = vlaneseq
      %v835 = vshrl.u32 %v834, 7
      %v836 = vsub.s32 0, %v835
      %v837 = vrot.slane %v808, %v836
      %v839 = vadd.f32 %v832, %v837
      %840 = vst.msk [vmem:[%s718] sm:$0xff] %vm809, %v839
      %v841 = vld [vmem:[%s697] sm:$0xff]
      %v842 = vld [vmem:[%s697 + $0x8] sm:$0xff]
      %v843 = vld [vmem:[%s697 + $0x10] sm:$0xff]
      %v844 = vld [vmem:[%s697 + $0x18] sm:$0xff]
      %v845 = vld [vmem:[%s697 + $0x20] sm:$0xff]
      %v846 = vld [vmem:[%s697 + $0x28] sm:$0xff]
      %v847 = vld [vmem:[%s697 + $0x30] sm:$0xff]
      %v848 = vld [vmem:[%s697 + $0x38] sm:$0xff]
      %v849 = vld [vmem:[%s702] sm:$0xff]
      %v850 = vld [vmem:[%s702 + $0x8] sm:$0xff]
      %v851 = vld [vmem:[%s702 + $0x10] sm:$0xff]
      %v852 = vld [vmem:[%s702 + $0x18] sm:$0xff]
      %v853 = vld [vmem:[%s702 + $0x20] sm:$0xff]
      %v854 = vld [vmem:[%s702 + $0x28] sm:$0xff]
      %v855 = vld [vmem:[%s702 + $0x30] sm:$0xff]
      %v856 = vld [vmem:[%s702 + $0x38] sm:$0xff]
      %v857 = vadd.f32 %v841, %v849
      %v858 = vadd.f32 %v842, %v850
      %v859 = vadd.f32 %v843, %v851
      %v860 = vadd.f32 %v844, %v852
      %v861 = vadd.f32 %v845, %v853
      %v862 = vadd.f32 %v846, %v854
      %v863 = vadd.f32 %v847, %v855
      %v864 = vadd.f32 %v848, %v856
      %v865 = vld [vmem:[%s8] sm:$0xff]
      %v866 = vld [vmem:[%s8 + $0x8] sm:$0xff]
      %v867 = vld [vmem:[%s8 + $0x10] sm:$0xff]
      %v868 = vld [vmem:[%s8 + $0x18] sm:$0xff]
      %v869 = vld [vmem:[%s9] sm:$0x1]
      %v871 = vlaneseq
      %v872 = vshrl.u32 %v871, 7
      %v873 = vsub.s32 0, %v872
      %v874 = vrot.slane %v869, %v873
      %v877 = vsel %vm809, %v857, 0
      %v880 = vsel %vm809, %v858, 0
      %v883 = vsel %vm809, %v859, 0
      %v886 = vsel %vm809, %v860, 0
      %v889 = vsel %vm809, %v861, 0
      %v892 = vsel %vm809, %v862, 0
      %v895 = vsel %vm809, %v863, 0
      %v898 = vsel %vm809, %v864, 0
      %v901 = vsel %vm809, %v839, 0
      %v904 = vsel %vm809, %v841, 0
      %v907 = vsel %vm809, %v842, 0
      %v910 = vsel %vm809, %v843, 0
      %v913 = vsel %vm809, %v844, 0
      %v916 = vsel %vm809, %v845, 0
      %v919 = vsel %vm809, %v846, 0
      %v922 = vsel %vm809, %v847, 0
      %v925 = vsel %vm809, %v848, 0
      %927 = vmatprep.subr.mxu0 0.0
      %928 = vmatpush1.msra.mxu0 %v865
      %929 = vmatprep.subr.mxu0 0.0
      %930 = vmatpush1.msra.mxu0 %v866
      %931 = vmatprep.subr.mxu0 0.0
      %932 = vmatpush1.msra.mxu0 %v867
      %933 = vmatprep.subr.mxu0 0.0
      %934 = vmatpush1.msra.mxu0 %v868
      %935 = vmatprep.subr.mxu0 0.0
      %936 = vmatpush1.msra.mxu0 0.0
      %937 = vmatprep.subr.mxu0 0.0
      %938 = vmatpush1.msra.mxu0 0.0
      %939 = vmatprep.subr.mxu0 0.0
      %940 = vmatpush1.msra.mxu0 0.0
      %941 = vmatprep.subr.mxu0 0.0
      %942 = vmatpush1.msra.mxu0 0.0
      %943 = vmatprep.subr.mxu0 0.0
      %944 = vmatpush1.msra.mxu0 0.0
      %945 = vmatprep.subr.mxu0 0.0
      %946 = vmatpush1.msra.mxu0 0.0
      %947 = vmatprep.subr.mxu0 0.0
      %948 = vmatpush1.msra.mxu0 0.0
      %949 = vmatprep.subr.mxu0 0.0
      %950 = vmatpush1.msra.mxu0 0.0
      %951 = vmatprep.subr.mxu0 0.0
      %952 = vmatpush1.msra.mxu0 0.0
      %953 = vmatprep.subr.mxu0 0.0
      %954 = vmatpush1.msra.mxu0 0.0
      %955 = vmatprep.subr.mxu0 0.0
      %956 = vmatpush1.msra.mxu0 0.0
      %957 = vmatprep.subr.mxu0 0.0
      %958 = vmatpush1.msra.mxu0 0.0
      %959 = vmatprep.subr.mxu0 0.0
      %960 = vmatpush1.msra.mxu0 0.0
      %961 = vmatprep.subr.mxu0 0.0
      %962 = vmatpush1.msra.mxu0 0.0
      %963 = vmatprep.subr.mxu0 0.0
      %964 = vmatpush1.msra.mxu0 0.0
      %965 = vmatprep.subr.mxu0 0.0
      %966 = vmatpush1.msra.mxu0 0.0
      %967 = vmatprep.subr.mxu0 0.0
      %968 = vmatpush1.msra.mxu0 0.0
      %969 = vmatprep.subr.mxu0 0.0
      %970 = vmatpush1.msra.mxu0 0.0
      %971 = vmatprep.subr.mxu0 0.0
      %972 = vmatpush1.msra.mxu0 0.0
      %973 = vmatprep.subr.mxu0 0.0
      %974 = vmatpush1.msra.mxu0 0.0
      %975 = vmatprep.subr.mxu0 0.0
      %976 = vmatpush1.msra.mxu0 0.0
      %977 = vmatprep.subr.mxu0 0.0
      %978 = vmatpush1.msra.mxu0 0.0
      %979 = vmatprep.subr.mxu0 0.0
      %980 = vmatpush1.msra.mxu0 0.0
      %981 = vmatprep.subr.mxu0 0.0
      %982 = vmatpush1.msra.mxu0 0.0
      %983 = vmatprep.subr.mxu0 0.0
      %984 = vmatpush1.msra.mxu0 0.0
      %985 = vmatprep.subr.mxu0 0.0
      %986 = vmatpush1.msra.mxu0 0.0
      %987 = vmatprep.subr.mxu0 0.0
      %988 = vmatpush1.msra.mxu0 0.0
      %989 = vmatprep.subr.mxu0 0.0
      %990 = vmatpush1.msra.mxu0 0.0
      %991 = vmatprep.mubr.f32.mxu0 0.0
      %992 = vmatmul.mubr.f32.gmra.mrb[0].mxu0 %v877
      %v993 = vpop.f32.mrb[0].mxu0
      %v994 = vadd.f32 %v874, %v993
      %v995 = vpop.f32.mrb[0].mxu0
      %996 = vmatprep.mubr.f32.mxu0 0.0
      %997 = vmatmul.mubr.f32.gmra.mrb[0].mxu0 %v880
      %v998 = vpop.f32.mrb[0].mxu0
      %v999 = vadd.f32 %v874, %v998
      %v1000 = vpop.f32.mrb[0].mxu0
      %1001 = vmatprep.mubr.f32.mxu0 0.0
      %1002 = vmatmul.mubr.f32.gmra.mrb[0].mxu0 %v883
      %v1003 = vpop.f32.mrb[0].mxu0
      %v1004 = vadd.f32 %v874, %v1003
      %v1005 = vpop.f32.mrb[0].mxu0
      %1006 = vmatprep.mubr.f32.mxu0 0.0
      %1007 = vmatmul.mubr.f32.gmra.mrb[0].mxu0 %v886
      %v1008 = vpop.f32.mrb[0].mxu0
      %v1009 = vadd.f32 %v874, %v1008
      %v1010 = vpop.f32.mrb[0].mxu0
      %1011 = vmatprep.mubr.f32.mxu0 0.0
      %1012 = vmatmul.mubr.f32.gmra.mrb[0].mxu0 %v889
      %v1013 = vpop.f32.mrb[0].mxu0
      %v1014 = vadd.f32 %v874, %v1013
      %v1015 = vpop.f32.mrb[0].mxu0
      %1016 = vmatprep.mubr.f32.mxu0 0.0
      %1017 = vmatmul.mubr.f32.gmra.mrb[0].mxu0 %v892
      %v1018 = vpop.f32.mrb[0].mxu0
      %v1019 = vadd.f32 %v874, %v1018
      %v1020 = vpop.f32.mrb[0].mxu0
      %1021 = vmatprep.mubr.f32.mxu0 0.0
      %1022 = vmatmul.mubr.f32.gmra.mrb[0].mxu0 %v895
      %v1023 = vpop.f32.mrb[0].mxu0
      %v1024 = vadd.f32 %v874, %v1023
      %v1025 = vpop.f32.mrb[0].mxu0
      %1026 = vmatprep.mubr.f32.mxu0 0.0
      %1027 = vmatmul.mubr.f32.gmra.mrb[0].mxu0 %v898
      %v1028 = vpop.f32.mrb[0].mxu0
      %v1029 = vadd.f32 %v874, %v1028
      %v1030 = vpop.f32.mrb[0].mxu0
      %1031 = vmatprep.mubr.f32.mxu0 0.0
      %1032 = vmatmul.mubr.f32.gmra.mrb[0].mxu0 %v901
      %v1033 = vpop.f32.mrb[0].mxu0
      %v1034 = vadd.f32 %v874, %v1033
      %v1035 = vpop.f32.mrb[0].mxu0
      %1036 = vmatprep.mubr.f32.mxu0 0.0
      %1037 = vmatmul.mubr.f32.gmra.mrb[0].mxu0 %v904
      %v1038 = vpop.f32.mrb[0].mxu0
      %v1039 = vadd.f32 %v874, %v1038
      %v1040 = vpop.f32.mrb[0].mxu0
      %1041 = vmatprep.mubr.f32.mxu0 0.0
      %1042 = vmatmul.mubr.f32.gmra.mrb[0].mxu0 %v907
      %v1043 = vpop.f32.mrb[0].mxu0
      %v1044 = vadd.f32 %v874, %v1043
      %v1045 = vpop.f32.mrb[0].mxu0
      %1046 = vmatprep.mubr.f32.mxu0 0.0
      %1047 = vmatmul.mubr.f32.gmra.mrb[0].mxu0 %v910
      %v1048 = vpop.f32.mrb[0].mxu0
      %v1049 = vadd.f32 %v874, %v1048
      %v1050 = vpop.f32.mrb[0].mxu0
      %1051 = vmatprep.mubr.f32.mxu0 0.0
      %1052 = vmatmul.mubr.f32.gmra.mrb[0].mxu0 %v913
      %v1053 = vpop.f32.mrb[0].mxu0
      %v1054 = vadd.f32 %v874, %v1053
      %v1055 = vpop.f32.mrb[0].mxu0
      %1056 = vmatprep.mubr.f32.mxu0 0.0
      %1057 = vmatmul.mubr.f32.gmra.mrb[0].mxu0 %v916
      %v1058 = vpop.f32.mrb[0].mxu0
      %v1059 = vadd.f32 %v874, %v1058
      %v1060 = vpop.f32.mrb[0].mxu0
      %1061 = vmatprep.mubr.f32.mxu0 0.0
      %1062 = vmatmul.mubr.f32.gmra.mrb[0].mxu0 %v919
      %v1063 = vpop.f32.mrb[0].mxu0
      %v1064 = vadd.f32 %v874, %v1063
      %v1065 = vpop.f32.mrb[0].mxu0
      %1066 = vmatprep.mubr.f32.mxu0 0.0
      %1067 = vmatmul.mubr.f32.gmra.mrb[0].mxu0 %v922
      %v1068 = vpop.f32.mrb[0].mxu0
      %v1069 = vadd.f32 %v874, %v1068
      %v1070 = vpop.f32.mrb[0].mxu0
      %1071 = vmatprep.mubr.f32.mxu0 0.0
      %1072 = vmatmul.mubr.f32.gmra.mrb[0].mxu0 %v925
      %v1073 = vpop.f32.mrb[0].mxu0
      %v1074 = vadd.f32 %v874, %v1073
      %v1075 = vpop.f32.mrb[0].mxu0
      %1076 = vmatprep.mubr.f32.mxu0 0.0
      %1077 = vmatmul.mubr.f32.gmra.mrb[0].mxu0 %v901
      %v1078 = vpop.f32.mrb[0].mxu0
      %v1079 = vadd.f32 %v874, %v1078
      %v1080 = vpop.f32.mrb[0].mxu0
      %1081 = vdwg.mxu0
      %v1082 = vld [vmem:[%s10] sm:$0xff]
      %v1083 = vld [vmem:[%s10 + $0x8] sm:$0xff]
      %v1084 = vld [vmem:[%s10 + $0x10] sm:$0xff]
      %v1085 = vld [vmem:[%s10 + $0x18] sm:$0xff]
      %v1086 = vld [vmem:[%s709] sm:$0x1]
      %v1088 = vlaneseq
      %v1089 = vshrl.u32 %v1088, 7
      %v1090 = vsub.s32 0, %v1089
      %v1091 = vrot.slane %v1086, %v1090
      %1102 = vrot.lane.b32.xlu0 %v994, 96
      %v1103 = vpop.permute.xlu0 %1102
      %1104 = vrot.lane.b32.xlu0 %v999, 96
      %v1105 = vpop.permute.xlu0 %1104
      %1106 = vrot.lane.b32.xlu0 %v1004, 96
      %v1107 = vpop.permute.xlu0 %1106
      %1108 = vrot.lane.b32.xlu0 %v1009, 96
      %v1109 = vpop.permute.xlu0 %1108
      %1110 = vrot.lane.b32.xlu0 %v1014, 96
      %v1111 = vpop.permute.xlu0 %1110
      %1112 = vrot.lane.b32.xlu0 %v1019, 96
      %v1113 = vpop.permute.xlu0 %1112
      %1114 = vrot.lane.b32.xlu0 %v1024, 96
      %v1115 = vpop.permute.xlu0 %1114
      %1116 = vrot.lane.b32.xlu0 %v1029, 96
      %v1117 = vpop.permute.xlu0 %1116
      %1118 = vrot.lane.b32.xlu0 %v1034, 96
      %v1119 = vpop.permute.xlu0 %1118
      %vm1120 = vcmask 64512
      %v1121 = vsel %vm1120, %v994, 0
      %v1123 = vsel %vm1120, %v999, 0
      %v1125 = vsel %vm1120, %v1004, 0
      %v1127 = vsel %vm1120, %v1009, 0
      %v1129 = vsel %vm1120, %v1014, 0
      %v1131 = vsel %vm1120, %v1019, 0
      %v1133 = vsel %vm1120, %v1024, 0
      %v1135 = vsel %vm1120, %v1029, 0
      %v1137 = vsel %vm1120, %v1034, 0
      %v1139 = vsel %vm1120, %v1103, 0
      %v1141 = vsel %vm1120, %v1105, 0
      %v1143 = vsel %vm1120, %v1107, 0
      %v1145 = vsel %vm1120, %v1109, 0
      %v1147 = vsel %vm1120, %v1111, 0
      %v1149 = vsel %vm1120, %v1113, 0
      %v1151 = vsel %vm1120, %v1115, 0
      %v1153 = vsel %vm1120, %v1117, 0
      %v1155 = vsel %vm1120, %v1119, 0
      %1157 = vmatprep.subr.mxu0 0.0
      %1158 = vmatpush1.xpose.msra.mxu0 %v1139
      %1159 = vmatprep.subr.mxu0 0.0
      %1160 = vmatpush1.xpose.msra.mxu0 %v1141
      %1161 = vmatprep.subr.mxu0 0.0
      %1162 = vmatpush1.xpose.msra.mxu0 %v1143
      %1163 = vmatprep.subr.mxu0 0.0
      %1164 = vmatpush1.xpose.msra.mxu0 %v1145
      %1165 = vmatprep.subr.mxu0 0.0
      %1166 = vmatpush1.xpose.msra.mxu0 %v1147
      %1167 = vmatprep.subr.mxu0 0.0
      %1168 = vmatpush1.xpose.msra.mxu0 %v1149
      %1169 = vmatprep.subr.mxu0 0.0
      %1170 = vmatpush1.xpose.msra.mxu0 %v1151
      %1171 = vmatprep.subr.mxu0 0.0
      %1172 = vmatpush1.xpose.msra.mxu0 %v1153
      %1173 = vmatprep.subr.mxu0 0.0
      %1174 = vmatpush1.xpose.msra.mxu0 %v1155
      %1175 = vmatprep.subr.mxu0 0.0
      %1176 = vmatpush1.xpose.msra.mxu0 0.0
      %1177 = vmatprep.subr.mxu0 0.0
      %1178 = vmatpush1.xpose.msra.mxu0 0.0
      %1179 = vmatprep.subr.mxu0 0.0
      %1180 = vmatpush1.xpose.msra.mxu0 0.0
      %1181 = vmatprep.subr.mxu0 0.0
      %1182 = vmatpush1.xpose.msra.mxu0 0.0
      %1183 = vmatprep.subr.mxu0 0.0
      %1184 = vmatpush1.xpose.msra.mxu0 0.0
      %1185 = vmatprep.subr.mxu0 0.0
      %1186 = vmatpush1.xpose.msra.mxu0 0.0
      %1187 = vmatprep.subr.mxu0 0.0
      %1188 = vmatpush1.xpose.msra.mxu0 0.0
      %1189 = vmatprep.subr.mxu0 0.0
      %1190 = vmatpush1.xpose.msra.mxu0 0.0
      %1191 = vmatprep.subr.mxu0 0.0
      %1192 = vmatpush1.xpose.msra.mxu0 0.0
      %1193 = vmatprep.subr.mxu0 0.0
      %1194 = vmatpush1.xpose.msra.mxu0 0.0
      %1195 = vmatprep.subr.mxu0 0.0
      %1196 = vmatpush1.xpose.msra.mxu0 0.0
      %1197 = vmatprep.subr.mxu0 0.0
      %1198 = vmatpush1.xpose.msra.mxu0 0.0
      %1199 = vmatprep.subr.mxu0 0.0
      %1200 = vmatpush1.xpose.msra.mxu0 0.0
      %1201 = vmatprep.subr.mxu0 0.0
      %1202 = vmatpush1.xpose.msra.mxu0 0.0
      %1203 = vmatprep.subr.mxu0 0.0
      %1204 = vmatpush1.xpose.msra.mxu0 0.0
      %1205 = vmatprep.subr.mxu0 0.0
      %1206 = vmatpush1.xpose.msra.mxu0 0.0
      %1207 = vmatprep.subr.mxu0 0.0
      %1208 = vmatpush1.xpose.msra.mxu0 0.0
      %1209 = vmatprep.subr.mxu0 0.0
      %1210 = vmatpush1.xpose.msra.mxu0 0.0
      %1211 = vmatprep.subr.mxu0 0.0
      %1212 = vmatpush1.xpose.msra.mxu0 0.0
      %1213 = vmatprep.subr.mxu0 0.0
      %1214 = vmatpush1.xpose.msra.mxu0 0.0
      %1215 = vmatprep.subr.mxu0 0.0
      %1216 = vmatpush1.xpose.msra.mxu0 0.0
      %1217 = vmatprep.subr.mxu0 0.0
      %1218 = vmatpush1.xpose.msra.mxu0 0.0
      %1219 = vmatprep.subr.mxu0 0.0
      %1220 = vmatpush1.xpose.msra.mxu0 0.0
      %1221 = vmatprep.mubr.f32.mxu0 0.0
      %1222 = vmatmul.mubr.f32.gmra.mrb[0].mxu0 %v1121
      %v1223 = vpop.f32.mrb[0].mxu0
      %v1224 = vadd.f32 %v1091, %v1223
      %v1225 = vpop.f32.mrb[0].mxu0
      %1226 = vmatprep.mubr.f32.mxu0 0.0
      %1227 = vmatmul.mubr.f32.gmra.mrb[0].mxu0 %v1123
      %v1228 = vpop.f32.mrb[0].mxu0
      %v1229 = vadd.f32 %v1091, %v1228
      %v1230 = vpop.f32.mrb[0].mxu0
      %1231 = vmatprep.mubr.f32.mxu0 0.0
      %1232 = vmatmul.mubr.f32.gmra.mrb[0].mxu0 %v1125
      %v1233 = vpop.f32.mrb[0].mxu0
      %v1234 = vadd.f32 %v1091, %v1233
      %v1235 = vpop.f32.mrb[0].mxu0
      %1236 = vmatprep.mubr.f32.mxu0 0.0
      %1237 = vmatmul.mubr.f32.gmra.mrb[0].mxu0 %v1127
      %v1238 = vpop.f32.mrb[0].mxu0
      %v1239 = vadd.f32 %v1091, %v1238
      %v1240 = vpop.f32.mrb[0].mxu0
      %1241 = vmatprep.mubr.f32.mxu0 0.0
      %1242 = vmatmul.mubr.f32.gmra.mrb[0].mxu0 %v1129
      %v1243 = vpop.f32.mrb[0].mxu0
      %v1244 = vadd.f32 %v1091, %v1243
      %v1245 = vpop.f32.mrb[0].mxu0
      %1246 = vmatprep.mubr.f32.mxu0 0.0
      %1247 = vmatmul.mubr.f32.gmra.mrb[0].mxu0 %v1131
      %v1248 = vpop.f32.mrb[0].mxu0
      %v1249 = vadd.f32 %v1091, %v1248
      %v1250 = vpop.f32.mrb[0].mxu0
      %1251 = vmatprep.mubr.f32.mxu0 0.0
      %1252 = vmatmul.mubr.f32.gmra.mrb[0].mxu0 %v1133
      %v1253 = vpop.f32.mrb[0].mxu0
      %v1254 = vadd.f32 %v1091, %v1253
      %v1255 = vpop.f32.mrb[0].mxu0
      %1256 = vmatprep.mubr.f32.mxu0 0.0
      %1257 = vmatmul.mubr.f32.gmra.mrb[0].mxu0 %v1135
      %v1258 = vpop.f32.mrb[0].mxu0
      %v1259 = vadd.f32 %v1091, %v1258
      %v1260 = vpop.f32.mrb[0].mxu0
      %1261 = vmatprep.mubr.f32.mxu0 0.0
      %1262 = vmatmul.mubr.f32.gmra.mrb[0].mxu0 %v1137
      %v1263 = vpop.f32.mrb[0].mxu0
      %v1264 = vadd.f32 %v1091, %v1263
      %v1265 = vpop.f32.mrb[0].mxu0
      %1266 = vdwg.mxu0
      %vm1267 = vcmask 588800
      %v1268 = vsel %vm1267, %v1224, -inf
      %1269 = vmax.xlane.f32.xlu0 %v1268
      %v1270 = vpop.xlane.xlu0 %1269
      %v1271 = vsel %vm1267, %v1229, -inf
      %1272 = vmax.xlane.f32.xlu0 %v1271
      %v1273 = vpop.xlane.xlu0 %1272
      %v1274 = vsel %vm1267, %v1234, -inf
      %1275 = vmax.xlane.f32.xlu0 %v1274
      %v1276 = vpop.xlane.xlu0 %1275
      %v1277 = vsel %vm1267, %v1239, -inf
      %1278 = vmax.xlane.f32.xlu0 %v1277
      %v1279 = vpop.xlane.xlu0 %1278
      %v1280 = vsel %vm1267, %v1244, -inf
      %1281 = vmax.xlane.f32.xlu0 %v1280
      %v1282 = vpop.xlane.xlu0 %1281
      %v1283 = vsel %vm1267, %v1249, -inf
      %1284 = vmax.xlane.f32.xlu0 %v1283
      %v1285 = vpop.xlane.xlu0 %1284
      %v1286 = vsel %vm1267, %v1254, -inf
      %1287 = vmax.xlane.f32.xlu0 %v1286
      %v1288 = vpop.xlane.xlu0 %1287
      %v1289 = vsel %vm1267, %v1259, -inf
      %1290 = vmax.xlane.f32.xlu0 %v1289
      %v1291 = vpop.xlane.xlu0 %1290
      %v1292 = vsel %vm1267, %v1264, -inf
      %1293 = vmax.xlane.f32.xlu0 %v1292
      %v1294 = vpop.xlane.xlu0 %1293
      %v1295 = vsub.f32 %v1224, %v1270
      %v1296 = vsub.f32 %v1229, %v1273
      %v1297 = vsub.f32 %v1234, %v1276
      %v1298 = vsub.f32 %v1239, %v1279
      %v1299 = vsub.f32 %v1244, %v1282
      %v1300 = vsub.f32 %v1249, %v1285
      %v1301 = vsub.f32 %v1254, %v1288
      %v1302 = vsub.f32 %v1259, %v1291
      %v1303 = vsub.f32 %v1264, %v1294
      %v1304 = vmul.f32 %v1295, 1.442695
      %v1305 = vpow.pop %v1304
      %v1306 = vmul.f32 %v1296, 1.442695
      %v1307 = vpow.pop %v1306
      %v1308 = vmul.f32 %v1297, 1.442695
      %v1309 = vpow.pop %v1308
      %v1310 = vmul.f32 %v1298, 1.442695
      %v1311 = vpow.pop %v1310
      %v1312 = vmul.f32 %v1299, 1.442695
      %v1313 = vpow.pop %v1312
      %v1314 = vmul.f32 %v1300, 1.442695
      %v1315 = vpow.pop %v1314
      %v1316 = vmul.f32 %v1301, 1.442695
      %v1317 = vpow.pop %v1316
      %v1318 = vmul.f32 %v1302, 1.442695
      %v1319 = vpow.pop %v1318
      %v1320 = vmul.f32 %v1303, 1.442695
      %v1321 = vpow.pop %v1320
      %v1322 = vsel %vm1267, %v1305, 0.0
      %1323 = vadd.xlane.f32.xlu0 %v1322
      %v1324 = vpop.xlane.xlu0 %1323
      %v1325 = vsel %vm1267, %v1307, 0.0
      %1326 = vadd.xlane.f32.xlu0 %v1325
      %v1327 = vpop.xlane.xlu0 %1326
      %v1328 = vsel %vm1267, %v1309, 0.0
      %1329 = vadd.xlane.f32.xlu0 %v1328
      %v1330 = vpop.xlane.xlu0 %1329
      %v1331 = vsel %vm1267, %v1311, 0.0
      %1332 = vadd.xlane.f32.xlu0 %v1331
      %v1333 = vpop.xlane.xlu0 %1332
      %v1334 = vsel %vm1267, %v1313, 0.0
      %1335 = vadd.xlane.f32.xlu0 %v1334
      %v1336 = vpop.xlane.xlu0 %1335
      %v1337 = vsel %vm1267, %v1315, 0.0
      %1338 = vadd.xlane.f32.xlu0 %v1337
      %v1339 = vpop.xlane.xlu0 %1338
      %v1340 = vsel %vm1267, %v1317, 0.0
      %1341 = vadd.xlane.f32.xlu0 %v1340
      %v1342 = vpop.xlane.xlu0 %1341
      %v1343 = vsel %vm1267, %v1319, 0.0
      %1344 = vadd.xlane.f32.xlu0 %v1343
      %v1345 = vpop.xlane.xlu0 %1344
      %v1346 = vsel %vm1267, %v1321, 0.0
      %1347 = vadd.xlane.f32.xlu0 %v1346
      %v1348 = vpop.xlane.xlu0 %1347
      %v1349 = vrcp.pop %v1324
      %v1350 = vrcp.pop %v1327
      %v1351 = vrcp.pop %v1330
      %v1352 = vrcp.pop %v1333
      %v1353 = vrcp.pop %v1336
      %v1354 = vrcp.pop %v1339
      %v1355 = vrcp.pop %v1342
      %v1356 = vrcp.pop %v1345
      %v1357 = vrcp.pop %v1348
      %1367 = vrot.lane.b32.xlu0 %v1039, 64
      %v1368 = vpop.permute.xlu0 %1367
      %1369 = vrot.lane.b32.xlu0 %v1044, 64
      %v1370 = vpop.permute.xlu0 %1369
      %1371 = vrot.lane.b32.xlu0 %v1049, 64
      %v1372 = vpop.permute.xlu0 %1371
      %1373 = vrot.lane.b32.xlu0 %v1054, 64
      %v1374 = vpop.permute.xlu0 %1373
      %1375 = vrot.lane.b32.xlu0 %v1059, 64
      %v1376 = vpop.permute.xlu0 %1375
      %1377 = vrot.lane.b32.xlu0 %v1064, 64
      %v1378 = vpop.permute.xlu0 %1377
      %1379 = vrot.lane.b32.xlu0 %v1069, 64
      %v1380 = vpop.permute.xlu0 %1379
      %1381 = vrot.lane.b32.xlu0 %v1074, 64
      %v1382 = vpop.permute.xlu0 %1381
      %1383 = vrot.lane.b32.xlu0 %v1079, 64
      %v1384 = vpop.permute.xlu0 %1383
      %v1395 = vsel %vm1267, %v1305, 0
      %v1398 = vsel %vm1267, %v1307, 0
      %v1401 = vsel %vm1267, %v1309, 0
      %v1404 = vsel %vm1267, %v1311, 0
      %v1407 = vsel %vm1267, %v1313, 0
      %v1410 = vsel %vm1267, %v1315, 0
      %v1413 = vsel %vm1267, %v1317, 0
      %v1416 = vsel %vm1267, %v1319, 0
      %v1419 = vsel %vm1267, %v1321, 0
      %1421 = vmatprep.subr.mxu0 0.0
      %1422 = vmatpush1.msra.mxu0 %v1368
      %1423 = vmatprep.subr.mxu0 0.0
      %1424 = vmatpush1.msra.mxu0 %v1370
      %1425 = vmatprep.subr.mxu0 0.0
      %1426 = vmatpush1.msra.mxu0 %v1372
      %1427 = vmatprep.subr.mxu0 0.0
      %1428 = vmatpush1.msra.mxu0 %v1374
      %1429 = vmatprep.subr.mxu0 0.0
      %1430 = vmatpush1.msra.mxu0 %v1376
      %1431 = vmatprep.subr.mxu0 0.0
      %1432 = vmatpush1.msra.mxu0 %v1378
      %1433 = vmatprep.subr.mxu0 0.0
      %1434 = vmatpush1.msra.mxu0 %v1380
      %1435 = vmatprep.subr.mxu0 0.0
      %1436 = vmatpush1.msra.mxu0 %v1382
      %1437 = vmatprep.subr.mxu0 0.0
      %1438 = vmatpush1.msra.mxu0 %v1384
      %1439 = vmatprep.subr.mxu0 0.0
      %1440 = vmatpush1.msra.mxu0 0.0
      %1441 = vmatprep.subr.mxu0 0.0
      %1442 = vmatpush1.msra.mxu0 0.0
      %1443 = vmatprep.subr.mxu0 0.0
      %1444 = vmatpush1.msra.mxu0 0.0
      %1445 = vmatprep.subr.mxu0 0.0
      %1446 = vmatpush1.msra.mxu0 0.0
      %1447 = vmatprep.subr.mxu0 0.0
      %1448 = vmatpush1.msra.mxu0 0.0
      %1449 = vmatprep.subr.mxu0 0.0
      %1450 = vmatpush1.msra.mxu0 0.0
      %1451 = vmatprep.subr.mxu0 0.0
      %1452 = vmatpush1.msra.mxu0 0.0
      %1453 = vmatprep.subr.mxu0 0.0
      %1454 = vmatpush1.msra.mxu0 0.0
      %1455 = vmatprep.subr.mxu0 0.0
      %1456 = vmatpush1.msra.mxu0 0.0
      %1457 = vmatprep.subr.mxu0 0.0
      %1458 = vmatpush1.msra.mxu0 0.0
      %1459 = vmatprep.subr.mxu0 0.0
      %1460 = vmatpush1.msra.mxu0 0.0
      %1461 = vmatprep.subr.mxu0 0.0
      %1462 = vmatpush1.msra.mxu0 0.0
      %1463 = vmatprep.subr.mxu0 0.0
      %1464 = vmatpush1.msra.mxu0 0.0
      %1465 = vmatprep.subr.mxu0 0.0
      %1466 = vmatpush1.msra.mxu0 0.0
      %1467 = vmatprep.subr.mxu0 0.0
      %1468 = vmatpush1.msra.mxu0 0.0
      %1469 = vmatprep.subr.mxu0 0.0
      %1470 = vmatpush1.msra.mxu0 0.0
      %1471 = vmatprep.subr.mxu0 0.0
      %1472 = vmatpush1.msra.mxu0 0.0
      %1473 = vmatprep.subr.mxu0 0.0
      %1474 = vmatpush1.msra.mxu0 0.0
      %1475 = vmatprep.subr.mxu0 0.0
      %1476 = vmatpush1.msra.mxu0 0.0
      %1477 = vmatprep.subr.mxu0 0.0
      %1478 = vmatpush1.msra.mxu0 0.0
      %1479 = vmatprep.subr.mxu0 0.0
      %1480 = vmatpush1.msra.mxu0 0.0
      %1481 = vmatprep.subr.mxu0 0.0
      %1482 = vmatpush1.msra.mxu0 0.0
      %1483 = vmatprep.subr.mxu0 0.0
      %1484 = vmatpush1.msra.mxu0 0.0
      %1485 = vmatprep.mubr.f32.mxu0 0.0
      %1486 = vmatmul.mubr.f32.gmra.mrb[0].mxu0 %v1395
      %v1487 = vpop.f32.mrb[0].mxu0
      %v1488 = vadd.f32 0.0, %v1487
      %v1489 = vpop.f32.mrb[0].mxu0
      %1490 = vmatprep.mubr.f32.mxu0 0.0
      %1491 = vmatmul.mubr.f32.gmra.mrb[0].mxu0 %v1398
      %v1492 = vpop.f32.mrb[0].mxu0
      %v1493 = vadd.f32 0.0, %v1492
      %v1494 = vpop.f32.mrb[0].mxu0
      %1495 = vmatprep.mubr.f32.mxu0 0.0
      %1496 = vmatmul.mubr.f32.gmra.mrb[0].mxu0 %v1401
      %v1497 = vpop.f32.mrb[0].mxu0
      %v1498 = vadd.f32 0.0, %v1497
      %v1499 = vpop.f32.mrb[0].mxu0
      %1500 = vmatprep.mubr.f32.mxu0 0.0
      %1501 = vmatmul.mubr.f32.gmra.mrb[0].mxu0 %v1404
      %v1502 = vpop.f32.mrb[0].mxu0
      %v1503 = vadd.f32 0.0, %v1502
      %v1504 = vpop.f32.mrb[0].mxu0
      %1505 = vmatprep.mubr.f32.mxu0 0.0
      %1506 = vmatmul.mubr.f32.gmra.mrb[0].mxu0 %v1407
      %v1507 = vpop.f32.mrb[0].mxu0
      %v1508 = vadd.f32 0.0, %v1507
      %v1509 = vpop.f32.mrb[0].mxu0
      %1510 = vmatprep.mubr.f32.mxu0 0.0
      %1511 = vmatmul.mubr.f32.gmra.mrb[0].mxu0 %v1410
      %v1512 = vpop.f32.mrb[0].mxu0
      %v1513 = vadd.f32 0.0, %v1512
      %v1514 = vpop.f32.mrb[0].mxu0
      %1515 = vmatprep.mubr.f32.mxu0 0.0
      %1516 = vmatmul.mubr.f32.gmra.mrb[0].mxu0 %v1413
      %v1517 = vpop.f32.mrb[0].mxu0
      %v1518 = vadd.f32 0.0, %v1517
      %v1519 = vpop.f32.mrb[0].mxu0
      %1520 = vmatprep.mubr.f32.mxu0 0.0
      %1521 = vmatmul.mubr.f32.gmra.mrb[0].mxu0 %v1416
      %v1522 = vpop.f32.mrb[0].mxu0
      %v1523 = vadd.f32 0.0, %v1522
      %v1524 = vpop.f32.mrb[0].mxu0
      %1525 = vmatprep.mubr.f32.mxu0 0.0
      %1526 = vmatmul.mubr.f32.gmra.mrb[0].mxu0 %v1419
      %v1527 = vpop.f32.mrb[0].mxu0
      %v1528 = vadd.f32 0.0, %v1527
      %v1529 = vpop.f32.mrb[0].mxu0
      %1530 = vdwg.mxu0
      %v1531 = vmul.f32 %v1488, %v1349
      %v1532 = vmul.f32 %v1493, %v1350
      %v1533 = vmul.f32 %v1498, %v1351
      %v1534 = vmul.f32 %v1503, %v1352
      %v1535 = vmul.f32 %v1508, %v1353
      %v1536 = vmul.f32 %v1513, %v1354
      %v1537 = vmul.f32 %v1518, %v1355
      %v1538 = vmul.f32 %v1523, %v1356
      %v1539 = vmul.f32 %v1528, %v1357
      %1540 = vrot.lane.b32.xlu0 %v994, 120
      %v1541 = vpop.permute.xlu0 %1540
      %1542 = vrot.lane.b32.xlu0 %v999, 120
      %v1543 = vpop.permute.xlu0 %1542
      %1544 = vrot.lane.b32.xlu0 %v1004, 120
      %v1545 = vpop.permute.xlu0 %1544
      %1546 = vrot.lane.b32.xlu0 %v1009, 120
      %v1547 = vpop.permute.xlu0 %1546
      %1548 = vrot.lane.b32.xlu0 %v1014, 120
      %v1549 = vpop.permute.xlu0 %1548
      %1550 = vrot.lane.b32.xlu0 %v1019, 120
      %v1551 = vpop.permute.xlu0 %1550
      %1552 = vrot.lane.b32.xlu0 %v1024, 120
      %v1553 = vpop.permute.xlu0 %1552
      %1554 = vrot.lane.b32.xlu0 %v1029, 120
      %v1555 = vpop.permute.xlu0 %1554
      %1556 = vrot.lane.b32.xlu0 %v1034, 120
      %v1557 = vpop.permute.xlu0 %1556
      %1558 = vrot.lane.b32.xlu0 %v994, 88
      %v1559 = vpop.permute.xlu0 %1558
      %1560 = vrot.lane.b32.xlu0 %v999, 88
      %v1561 = vpop.permute.xlu0 %1560
      %1562 = vrot.lane.b32.xlu0 %v1004, 88
      %v1563 = vpop.permute.xlu0 %1562
      %1564 = vrot.lane.b32.xlu0 %v1009, 88
      %v1565 = vpop.permute.xlu0 %1564
      %1566 = vrot.lane.b32.xlu0 %v1014, 88
      %v1567 = vpop.permute.xlu0 %1566
      %1568 = vrot.lane.b32.xlu0 %v1019, 88
      %v1569 = vpop.permute.xlu0 %1568
      %1570 = vrot.lane.b32.xlu0 %v1024, 88
      %v1571 = vpop.permute.xlu0 %1570
      %1572 = vrot.lane.b32.xlu0 %v1029, 88
      %v1573 = vpop.permute.xlu0 %1572
      %1574 = vrot.lane.b32.xlu0 %v1034, 88
      %v1575 = vpop.permute.xlu0 %1574
      %v1576 = vsel %vm1120, %v1541, 0
      %v1578 = vsel %vm1120, %v1543, 0
      %v1580 = vsel %vm1120, %v1545, 0
      %v1582 = vsel %vm1120, %v1547, 0
      %v1584 = vsel %vm1120, %v1549, 0
      %v1586 = vsel %vm1120, %v1551, 0
      %v1588 = vsel %vm1120, %v1553, 0
      %v1590 = vsel %vm1120, %v1555, 0
      %v1592 = vsel %vm1120, %v1557, 0
      %v1594 = vsel %vm1120, %v1559, 0
      %v1596 = vsel %vm1120, %v1561, 0
      %v1598 = vsel %vm1120, %v1563, 0
      %v1600 = vsel %vm1120, %v1565, 0
      %v1602 = vsel %vm1120, %v1567, 0
      %v1604 = vsel %vm1120, %v1569, 0
      %v1606 = vsel %vm1120, %v1571, 0
      %v1608 = vsel %vm1120, %v1573, 0
      %v1610 = vsel %vm1120, %v1575, 0
      %1612 = vmatprep.subr.mxu0 0.0
      %1613 = vmatpush1.xpose.msra.mxu0 %v1594
      %1614 = vmatprep.subr.mxu0 0.0
      %1615 = vmatpush1.xpose.msra.mxu0 %v1596
      %1616 = vmatprep.subr.mxu0 0.0
      %1617 = vmatpush1.xpose.msra.mxu0 %v1598
      %1618 = vmatprep.subr.mxu0 0.0
      %1619 = vmatpush1.xpose.msra.mxu0 %v1600
      %1620 = vmatprep.subr.mxu0 0.0
      %1621 = vmatpush1.xpose.msra.mxu0 %v1602
      %1622 = vmatprep.subr.mxu0 0.0
      %1623 = vmatpush1.xpose.msra.mxu0 %v1604
      %1624 = vmatprep.subr.mxu0 0.0
      %1625 = vmatpush1.xpose.msra.mxu0 %v1606
      %1626 = vmatprep.subr.mxu0 0.0
      %1627 = vmatpush1.xpose.msra.mxu0 %v1608
      %1628 = vmatprep.subr.mxu0 0.0
      %1629 = vmatpush1.xpose.msra.mxu0 %v1610
      %1630 = vmatprep.subr.mxu0 0.0
      %1631 = vmatpush1.xpose.msra.mxu0 0.0
      %1632 = vmatprep.subr.mxu0 0.0
      %1633 = vmatpush1.xpose.msra.mxu0 0.0
      %1634 = vmatprep.subr.mxu0 0.0
      %1635 = vmatpush1.xpose.msra.mxu0 0.0
      %1636 = vmatprep.subr.mxu0 0.0
      %1637 = vmatpush1.xpose.msra.mxu0 0.0
      %1638 = vmatprep.subr.mxu0 0.0
      %1639 = vmatpush1.xpose.msra.mxu0 0.0
      %1640 = vmatprep.subr.mxu0 0.0
      %1641 = vmatpush1.xpose.msra.mxu0 0.0
      %1642 = vmatprep.subr.mxu0 0.0
      %1643 = vmatpush1.xpose.msra.mxu0 0.0
      %1644 = vmatprep.subr.mxu0 0.0
      %1645 = vmatpush1.xpose.msra.mxu0 0.0
      %1646 = vmatprep.subr.mxu0 0.0
      %1647 = vmatpush1.xpose.msra.mxu0 0.0
      %1648 = vmatprep.subr.mxu0 0.0
      %1649 = vmatpush1.xpose.msra.mxu0 0.0
      %1650 = vmatprep.subr.mxu0 0.0
      %1651 = vmatpush1.xpose.msra.mxu0 0.0
      %1652 = vmatprep.subr.mxu0 0.0
      %1653 = vmatpush1.xpose.msra.mxu0 0.0
      %1654 = vmatprep.subr.mxu0 0.0
      %1655 = vmatpush1.xpose.msra.mxu0 0.0
      %1656 = vmatprep.subr.mxu0 0.0
      %1657 = vmatpush1.xpose.msra.mxu0 0.0
      %1658 = vmatprep.subr.mxu0 0.0
      %1659 = vmatpush1.xpose.msra.mxu0 0.0
      %1660 = vmatprep.subr.mxu0 0.0
      %1661 = vmatpush1.xpose.msra.mxu0 0.0
      %1662 = vmatprep.subr.mxu0 0.0
      %1663 = vmatpush1.xpose.msra.mxu0 0.0
      %1664 = vmatprep.subr.mxu0 0.0
      %1665 = vmatpush1.xpose.msra.mxu0 0.0
      %1666 = vmatprep.subr.mxu0 0.0
      %1667 = vmatpush1.xpose.msra.mxu0 0.0
      %1668 = vmatprep.subr.mxu0 0.0
      %1669 = vmatpush1.xpose.msra.mxu0 0.0
      %1670 = vmatprep.subr.mxu0 0.0
      %1671 = vmatpush1.xpose.msra.mxu0 0.0
      %1672 = vmatprep.subr.mxu0 0.0
      %1673 = vmatpush1.xpose.msra.mxu0 0.0
      %1674 = vmatprep.subr.mxu0 0.0
      %1675 = vmatpush1.xpose.msra.mxu0 0.0
      %1676 = vmatprep.mubr.f32.mxu0 0.0
      %1677 = vmatmul.mubr.f32.gmra.mrb[0].mxu0 %v1576
      %v1678 = vpop.f32.mrb[0].mxu0
      %v1679 = vadd.f32 %v1091, %v1678
      %v1680 = vpop.f32.mrb[0].mxu0
      %1681 = vmatprep.mubr.f32.mxu0 0.0
      %1682 = vmatmul.mubr.f32.gmra.mrb[0].mxu0 %v1578
      %v1683 = vpop.f32.mrb[0].mxu0
      %v1684 = vadd.f32 %v1091, %v1683
      %v1685 = vpop.f32.mrb[0].mxu0
      %1686 = vmatprep.mubr.f32.mxu0 0.0
      %1687 = vmatmul.mubr.f32.gmra.mrb[0].mxu0 %v1580
      %v1688 = vpop.f32.mrb[0].mxu0
      %v1689 = vadd.f32 %v1091, %v1688
      %v1690 = vpop.f32.mrb[0].mxu0
      %1691 = vmatprep.mubr.f32.mxu0 0.0
      %1692 = vmatmul.mubr.f32.gmra.mrb[0].mxu0 %v1582
      %v1693 = vpop.f32.mrb[0].mxu0
      %v1694 = vadd.f32 %v1091, %v1693
      %v1695 = vpop.f32.mrb[0].mxu0
      %1696 = vmatprep.mubr.f32.mxu0 0.0
      %1697 = vmatmul.mubr.f32.gmra.mrb[0].mxu0 %v1584
      %v1698 = vpop.f32.mrb[0].mxu0
      %v1699 = vadd.f32 %v1091, %v1698
      %v1700 = vpop.f32.mrb[0].mxu0
      %1701 = vmatprep.mubr.f32.mxu0 0.0
      %1702 = vmatmul.mubr.f32.gmra.mrb[0].mxu0 %v1586
      %v1703 = vpop.f32.mrb[0].mxu0
      %v1704 = vadd.f32 %v1091, %v1703
      %v1705 = vpop.f32.mrb[0].mxu0
      %1706 = vmatprep.mubr.f32.mxu0 0.0
      %1707 = vmatmul.mubr.f32.gmra.mrb[0].mxu0 %v1588
      %v1708 = vpop.f32.mrb[0].mxu0
      %v1709 = vadd.f32 %v1091, %v1708
      %v1710 = vpop.f32.mrb[0].mxu0
      %1711 = vmatprep.mubr.f32.mxu0 0.0
      %1712 = vmatmul.mubr.f32.gmra.mrb[0].mxu0 %v1590
      %v1713 = vpop.f32.mrb[0].mxu0
      %v1714 = vadd.f32 %v1091, %v1713
      %v1715 = vpop.f32.mrb[0].mxu0
      %1716 = vmatprep.mubr.f32.mxu0 0.0
      %1717 = vmatmul.mubr.f32.gmra.mrb[0].mxu0 %v1592
      %v1718 = vpop.f32.mrb[0].mxu0
      %v1719 = vadd.f32 %v1091, %v1718
      %v1720 = vpop.f32.mrb[0].mxu0
      %1721 = vdwg.mxu0
      %v1722 = vsel %vm1267, %v1679, -inf
      %1723 = vmax.xlane.f32.xlu0 %v1722
      %v1724 = vpop.xlane.xlu0 %1723
      %v1725 = vsel %vm1267, %v1684, -inf
      %1726 = vmax.xlane.f32.xlu0 %v1725
      %v1727 = vpop.xlane.xlu0 %1726
      %v1728 = vsel %vm1267, %v1689, -inf
      %1729 = vmax.xlane.f32.xlu0 %v1728
      %v1730 = vpop.xlane.xlu0 %1729
      %v1731 = vsel %vm1267, %v1694, -inf
      %1732 = vmax.xlane.f32.xlu0 %v1731
      %v1733 = vpop.xlane.xlu0 %1732
      %v1734 = vsel %vm1267, %v1699, -inf
      %1735 = vmax.xlane.f32.xlu0 %v1734
      %v1736 = vpop.xlane.xlu0 %1735
      %v1737 = vsel %vm1267, %v1704, -inf
      %1738 = vmax.xlane.f32.xlu0 %v1737
      %v1739 = vpop.xlane.xlu0 %1738
      %v1740 = vsel %vm1267, %v1709, -inf
      %1741 = vmax.xlane.f32.xlu0 %v1740
      %v1742 = vpop.xlane.xlu0 %1741
      %v1743 = vsel %vm1267, %v1714, -inf
      %1744 = vmax.xlane.f32.xlu0 %v1743
      %v1745 = vpop.xlane.xlu0 %1744
      %v1746 = vsel %vm1267, %v1719, -inf
      %1747 = vmax.xlane.f32.xlu0 %v1746
      %v1748 = vpop.xlane.xlu0 %1747
      %v1749 = vsub.f32 %v1679, %v1724
      %v1750 = vsub.f32 %v1684, %v1727
      %v1751 = vsub.f32 %v1689, %v1730
      %v1752 = vsub.f32 %v1694, %v1733
      %v1753 = vsub.f32 %v1699, %v1736
      %v1754 = vsub.f32 %v1704, %v1739
      %v1755 = vsub.f32 %v1709, %v1742
      %v1756 = vsub.f32 %v1714, %v1745
      %v1757 = vsub.f32 %v1719, %v1748
      %v1758 = vmul.f32 %v1749, 1.442695
      %v1759 = vpow.pop %v1758
      %v1760 = vmul.f32 %v1750, 1.442695
      %v1761 = vpow.pop %v1760
      %v1762 = vmul.f32 %v1751, 1.442695
      %v1763 = vpow.pop %v1762
      %v1764 = vmul.f32 %v1752, 1.442695
      %v1765 = vpow.pop %v1764
      %v1766 = vmul.f32 %v1753, 1.442695
      %v1767 = vpow.pop %v1766
      %v1768 = vmul.f32 %v1754, 1.442695
      %v1769 = vpow.pop %v1768
      %v1770 = vmul.f32 %v1755, 1.442695
      %v1771 = vpow.pop %v1770
      %v1772 = vmul.f32 %v1756, 1.442695
      %v1773 = vpow.pop %v1772
      %v1774 = vmul.f32 %v1757, 1.442695
      %v1775 = vpow.pop %v1774
      %v1776 = vsel %vm1267, %v1759, 0.0
      %1777 = vadd.xlane.f32.xlu0 %v1776
      %v1778 = vpop.xlane.xlu0 %1777
      %v1779 = vsel %vm1267, %v1761, 0.0
      %1780 = vadd.xlane.f32.xlu0 %v1779
      %v1781 = vpop.xlane.xlu0 %1780
      %v1782 = vsel %vm1267, %v1763, 0.0
      %1783 = vadd.xlane.f32.xlu0 %v1782
      %v1784 = vpop.xlane.xlu0 %1783
      %v1785 = vsel %vm1267, %v1765, 0.0
      %1786 = vadd.xlane.f32.xlu0 %v1785
      %v1787 = vpop.xlane.xlu0 %1786
      %v1788 = vsel %vm1267, %v1767, 0.0
      %1789 = vadd.xlane.f32.xlu0 %v1788
      %v1790 = vpop.xlane.xlu0 %1789
      %v1791 = vsel %vm1267, %v1769, 0.0
      %1792 = vadd.xlane.f32.xlu0 %v1791
      %v1793 = vpop.xlane.xlu0 %1792
      %v1794 = vsel %vm1267, %v1771, 0.0
      %1795 = vadd.xlane.f32.xlu0 %v1794
      %v1796 = vpop.xlane.xlu0 %1795
      %v1797 = vsel %vm1267, %v1773, 0.0
      %1798 = vadd.xlane.f32.xlu0 %v1797
      %v1799 = vpop.xlane.xlu0 %1798
      %v1800 = vsel %vm1267, %v1775, 0.0
      %1801 = vadd.xlane.f32.xlu0 %v1800
      %v1802 = vpop.xlane.xlu0 %1801
      %v1803 = vrcp.pop %v1778
      %v1804 = vrcp.pop %v1781
      %v1805 = vrcp.pop %v1784
      %v1806 = vrcp.pop %v1787
      %v1807 = vrcp.pop %v1790
      %v1808 = vrcp.pop %v1793
      %v1809 = vrcp.pop %v1796
      %v1810 = vrcp.pop %v1799
      %v1811 = vrcp.pop %v1802
      %1812 = vrot.lane.b32.xlu0 %v1039, 56
      %v1813 = vpop.permute.xlu0 %1812
      %1814 = vrot.lane.b32.xlu0 %v1044, 56
      %v1815 = vpop.permute.xlu0 %1814
      %1816 = vrot.lane.b32.xlu0 %v1049, 56
      %v1817 = vpop.permute.xlu0 %1816
      %1818 = vrot.lane.b32.xlu0 %v1054, 56
      %v1819 = vpop.permute.xlu0 %1818
      %1820 = vrot.lane.b32.xlu0 %v1059, 56
      %v1821 = vpop.permute.xlu0 %1820
      %1822 = vrot.lane.b32.xlu0 %v1064, 56
      %v1823 = vpop.permute.xlu0 %1822
      %1824 = vrot.lane.b32.xlu0 %v1069, 56
      %v1825 = vpop.permute.xlu0 %1824
      %1826 = vrot.lane.b32.xlu0 %v1074, 56
      %v1827 = vpop.permute.xlu0 %1826
      %1828 = vrot.lane.b32.xlu0 %v1079, 56
      %v1829 = vpop.permute.xlu0 %1828
      %v1840 = vsel %vm1267, %v1759, 0
      %v1843 = vsel %vm1267, %v1761, 0
      %v1846 = vsel %vm1267, %v1763, 0
      %v1849 = vsel %vm1267, %v1765, 0
      %v1852 = vsel %vm1267, %v1767, 0
      %v1855 = vsel %vm1267, %v1769, 0
      %v1858 = vsel %vm1267, %v1771, 0
      %v1861 = vsel %vm1267, %v1773, 0
      %v1864 = vsel %vm1267, %v1775, 0
      %1866 = vmatprep.subr.mxu0 0.0
      %1867 = vmatpush1.msra.mxu0 %v1813
      %1868 = vmatprep.subr.mxu0 0.0
      %1869 = vmatpush1.msra.mxu0 %v1815
      %1870 = vmatprep.subr.mxu0 0.0
      %1871 = vmatpush1.msra.mxu0 %v1817
      %1872 = vmatprep.subr.mxu0 0.0
      %1873 = vmatpush1.msra.mxu0 %v1819
      %1874 = vmatprep.subr.mxu0 0.0
      %1875 = vmatpush1.msra.mxu0 %v1821
      %1876 = vmatprep.subr.mxu0 0.0
      %1877 = vmatpush1.msra.mxu0 %v1823
      %1878 = vmatprep.subr.mxu0 0.0
      %1879 = vmatpush1.msra.mxu0 %v1825
      %1880 = vmatprep.subr.mxu0 0.0
      %1881 = vmatpush1.msra.mxu0 %v1827
      %1882 = vmatprep.subr.mxu0 0.0
      %1883 = vmatpush1.msra.mxu0 %v1829
      %1884 = vmatprep.subr.mxu0 0.0
      %1885 = vmatpush1.msra.mxu0 0.0
      %1886 = vmatprep.subr.mxu0 0.0
      %1887 = vmatpush1.msra.mxu0 0.0
      %1888 = vmatprep.subr.mxu0 0.0
      %1889 = vmatpush1.msra.mxu0 0.0
      %1890 = vmatprep.subr.mxu0 0.0
      %1891 = vmatpush1.msra.mxu0 0.0
      %1892 = vmatprep.subr.mxu0 0.0
      %1893 = vmatpush1.msra.mxu0 0.0
      %1894 = vmatprep.subr.mxu0 0.0
      %1895 = vmatpush1.msra.mxu0 0.0
      %1896 = vmatprep.subr.mxu0 0.0
      %1897 = vmatpush1.msra.mxu0 0.0
      %1898 = vmatprep.subr.mxu0 0.0
      %1899 = vmatpush1.msra.mxu0 0.0
      %1900 = vmatprep.subr.mxu0 0.0
      %1901 = vmatpush1.msra.mxu0 0.0
      %1902 = vmatprep.subr.mxu0 0.0
      %1903 = vmatpush1.msra.mxu0 0.0
      %1904 = vmatprep.subr.mxu0 0.0
      %1905 = vmatpush1.msra.mxu0 0.0
      %1906 = vmatprep.subr.mxu0 0.0
      %1907 = vmatpush1.msra.mxu0 0.0
      %1908 = vmatprep.subr.mxu0 0.0
      %1909 = vmatpush1.msra.mxu0 0.0
      %1910 = vmatprep.subr.mxu0 0.0
      %1911 = vmatpush1.msra.mxu0 0.0
      %1912 = vmatprep.subr.mxu0 0.0
      %1913 = vmatpush1.msra.mxu0 0.0
      %1914 = vmatprep.subr.mxu0 0.0
      %1915 = vmatpush1.msra.mxu0 0.0
      %1916 = vmatprep.subr.mxu0 0.0
      %1917 = vmatpush1.msra.mxu0 0.0
      %1918 = vmatprep.subr.mxu0 0.0
      %1919 = vmatpush1.msra.mxu0 0.0
      %1920 = vmatprep.subr.mxu0 0.0
      %1921 = vmatpush1.msra.mxu0 0.0
      %1922 = vmatprep.subr.mxu0 0.0
      %1923 = vmatpush1.msra.mxu0 0.0
      %1924 = vmatprep.subr.mxu0 0.0
      %1925 = vmatpush1.msra.mxu0 0.0
      %1926 = vmatprep.subr.mxu0 0.0
      %1927 = vmatpush1.msra.mxu0 0.0
      %1928 = vmatprep.subr.mxu0 0.0
      %1929 = vmatpush1.msra.mxu0 0.0
      %1930 = vmatprep.mubr.f32.mxu0 0.0
      %1931 = vmatmul.mubr.f32.gmra.mrb[0].mxu0 %v1840
      %v1932 = vpop.f32.mrb[0].mxu0
      %v1933 = vadd.f32 0.0, %v1932
      %v1934 = vpop.f32.mrb[0].mxu0
      %1935 = vmatprep.mubr.f32.mxu0 0.0
      %1936 = vmatmul.mubr.f32.gmra.mrb[0].mxu0 %v1843
      %v1937 = vpop.f32.mrb[0].mxu0
      %v1938 = vadd.f32 0.0, %v1937
      %v1939 = vpop.f32.mrb[0].mxu0
      %1940 = vmatprep.mubr.f32.mxu0 0.0
      %1941 = vmatmul.mubr.f32.gmra.mrb[0].mxu0 %v1846
      %v1942 = vpop.f32.mrb[0].mxu0
      %v1943 = vadd.f32 0.0, %v1942
      %v1944 = vpop.f32.mrb[0].mxu0
      %1945 = vmatprep.mubr.f32.mxu0 0.0
      %1946 = vmatmul.mubr.f32.gmra.mrb[0].mxu0 %v1849
      %v1947 = vpop.f32.mrb[0].mxu0
      %v1948 = vadd.f32 0.0, %v1947
      %v1949 = vpop.f32.mrb[0].mxu0
      %1950 = vmatprep.mubr.f32.mxu0 0.0
      %1951 = vmatmul.mubr.f32.gmra.mrb[0].mxu0 %v1852
      %v1952 = vpop.f32.mrb[0].mxu0
      %v1953 = vadd.f32 0.0, %v1952
      %v1954 = vpop.f32.mrb[0].mxu0
      %1955 = vmatprep.mubr.f32.mxu0 0.0
      %1956 = vmatmul.mubr.f32.gmra.mrb[0].mxu0 %v1855
      %v1957 = vpop.f32.mrb[0].mxu0
      %v1958 = vadd.f32 0.0, %v1957
      %v1959 = vpop.f32.mrb[0].mxu0
      %1960 = vmatprep.mubr.f32.mxu0 0.0
      %1961 = vmatmul.mubr.f32.gmra.mrb[0].mxu0 %v1858
      %v1962 = vpop.f32.mrb[0].mxu0
      %v1963 = vadd.f32 0.0, %v1962
      %v1964 = vpop.f32.mrb[0].mxu0
      %1965 = vmatprep.mubr.f32.mxu0 0.0
      %1966 = vmatmul.mubr.f32.gmra.mrb[0].mxu0 %v1861
      %v1967 = vpop.f32.mrb[0].mxu0
      %v1968 = vadd.f32 0.0, %v1967
      %v1969 = vpop.f32.mrb[0].mxu0
      %1970 = vmatprep.mubr.f32.mxu0 0.0
      %1971 = vmatmul.mubr.f32.gmra.mrb[0].mxu0 %v1864
      %v1972 = vpop.f32.mrb[0].mxu0
      %v1973 = vadd.f32 0.0, %v1972
      %v1974 = vpop.f32.mrb[0].mxu0
      %1975 = vdwg.mxu0
      %v1976 = vmul.f32 %v1933, %v1803
      %v1977 = vmul.f32 %v1938, %v1804
      %v1978 = vmul.f32 %v1943, %v1805
      %v1979 = vmul.f32 %v1948, %v1806
      %v1980 = vmul.f32 %v1953, %v1807
      %v1981 = vmul.f32 %v1958, %v1808
      %v1982 = vmul.f32 %v1963, %v1809
      %v1983 = vmul.f32 %v1968, %v1810
      %v1984 = vmul.f32 %v1973, %v1811
      %v1986 = vsel %vm1120, %v1976, 0
      %v1989 = vsel %vm1120, %v1977, 0
      %v1992 = vsel %vm1120, %v1978, 0
      %v1995 = vsel %vm1120, %v1979, 0
      %v1998 = vsel %vm1120, %v1980, 0
      %v2001 = vsel %vm1120, %v1981, 0
      %v2004 = vsel %vm1120, %v1982, 0
      %v2007 = vsel %vm1120, %v1983, 0
      %v2010 = vsel %vm1120, %v1984, 0
      %2012 = vmatprep.subr.mxu0 0.0
      %2013 = vmatpush1.msra.mxu0 %v1083
      %2014 = vmatprep.subr.mxu0 0.0
      %2015 = vmatpush1.msra.mxu0 0.0
      %2016 = vmatprep.subr.mxu0 0.0
      %2017 = vmatpush1.msra.mxu0 0.0
      %2018 = vmatprep.subr.mxu0 0.0
      %2019 = vmatpush1.msra.mxu0 0.0
      %2020 = vmatprep.subr.mxu0 0.0
      %2021 = vmatpush1.msra.mxu0 0.0
      %2022 = vmatprep.subr.mxu0 0.0
      %2023 = vmatpush1.msra.mxu0 0.0
      %2024 = vmatprep.subr.mxu0 0.0
      %2025 = vmatpush1.msra.mxu0 0.0
      %2026 = vmatprep.subr.mxu0 0.0
      %2027 = vmatpush1.msra.mxu0 0.0
      %2028 = vmatprep.subr.mxu0 0.0
      %2029 = vmatpush1.msra.mxu0 0.0
      %2030 = vmatprep.subr.mxu0 0.0
      %2031 = vmatpush1.msra.mxu0 0.0
      %2032 = vmatprep.subr.mxu0 0.0
      %2033 = vmatpush1.msra.mxu0 0.0
      %2034 = vmatprep.subr.mxu0 0.0
      %2035 = vmatpush1.msra.mxu0 0.0
      %2036 = vmatprep.subr.mxu0 0.0
      %2037 = vmatpush1.msra.mxu0 0.0
      %2038 = vmatprep.subr.mxu0 0.0
      %2039 = vmatpush1.msra.mxu0 0.0
      %2040 = vmatprep.subr.mxu0 0.0
      %2041 = vmatpush1.msra.mxu0 0.0
      %2042 = vmatprep.subr.mxu0 0.0
      %2043 = vmatpush1.msra.mxu0 0.0
      %2044 = vmatprep.subr.mxu0 0.0
      %2045 = vmatpush1.msra.mxu0 0.0
      %2046 = vmatprep.subr.mxu0 0.0
      %2047 = vmatpush1.msra.mxu0 0.0
      %2048 = vmatprep.subr.mxu0 0.0
      %2049 = vmatpush1.msra.mxu0 0.0
      %2050 = vmatprep.subr.mxu0 0.0
      %2051 = vmatpush1.msra.mxu0 0.0
      %2052 = vmatprep.subr.mxu0 0.0
      %2053 = vmatpush1.msra.mxu0 0.0
      %2054 = vmatprep.subr.mxu0 0.0
      %2055 = vmatpush1.msra.mxu0 0.0
      %2056 = vmatprep.subr.mxu0 0.0
      %2057 = vmatpush1.msra.mxu0 0.0
      %2058 = vmatprep.subr.mxu0 0.0
      %2059 = vmatpush1.msra.mxu0 0.0
      %2060 = vmatprep.subr.mxu0 0.0
      %2061 = vmatpush1.msra.mxu0 0.0
      %2062 = vmatprep.subr.mxu0 0.0
      %2063 = vmatpush1.msra.mxu0 0.0
      %2064 = vmatprep.subr.mxu0 0.0
      %2065 = vmatpush1.msra.mxu0 0.0
      %2066 = vmatprep.subr.mxu0 0.0
      %2067 = vmatpush1.msra.mxu0 0.0
      %2068 = vmatprep.subr.mxu0 0.0
      %2069 = vmatpush1.msra.mxu0 0.0
      %2070 = vmatprep.subr.mxu0 0.0
      %2071 = vmatpush1.msra.mxu0 0.0
      %2072 = vmatprep.subr.mxu0 0.0
      %2073 = vmatpush1.msra.mxu0 0.0
      %2074 = vmatprep.subr.mxu0 0.0
      %2075 = vmatpush1.msra.mxu0 0.0
      %2076 = vmatprep.mubr.f32.mxu0 0.0
      %2077 = vmatmul.mubr.f32.gmra.mrb[0].mxu0 %v1986
      %v2078 = vpop.f32.mrb[0].mxu0
      %v2079 = vadd.f32 0.0, %v2078
      %v2080 = vpop.f32.mrb[0].mxu0
      %2081 = vmatprep.mubr.f32.mxu0 0.0
      %2082 = vmatmul.mubr.f32.gmra.mrb[0].mxu0 %v1989
      %v2083 = vpop.f32.mrb[0].mxu0
      %v2084 = vadd.f32 0.0, %v2083
      %v2085 = vpop.f32.mrb[0].mxu0
      %2086 = vmatprep.mubr.f32.mxu0 0.0
      %2087 = vmatmul.mubr.f32.gmra.mrb[0].mxu0 %v1992
      %v2088 = vpop.f32.mrb[0].mxu0
      %v2089 = vadd.f32 0.0, %v2088
      %v2090 = vpop.f32.mrb[0].mxu0
      %2091 = vmatprep.mubr.f32.mxu0 0.0
      %2092 = vmatmul.mubr.f32.gmra.mrb[0].mxu0 %v1995
      %v2093 = vpop.f32.mrb[0].mxu0
      %v2094 = vadd.f32 0.0, %v2093
      %v2095 = vpop.f32.mrb[0].mxu0
      %2096 = vmatprep.mubr.f32.mxu0 0.0
      %2097 = vmatmul.mubr.f32.gmra.mrb[0].mxu0 %v1998
      %v2098 = vpop.f32.mrb[0].mxu0
      %v2099 = vadd.f32 0.0, %v2098
      %v2100 = vpop.f32.mrb[0].mxu0
      %2101 = vmatprep.mubr.f32.mxu0 0.0
      %2102 = vmatmul.mubr.f32.gmra.mrb[0].mxu0 %v2001
      %v2103 = vpop.f32.mrb[0].mxu0
      %v2104 = vadd.f32 0.0, %v2103
      %v2105 = vpop.f32.mrb[0].mxu0
      %2106 = vmatprep.mubr.f32.mxu0 0.0
      %2107 = vmatmul.mubr.f32.gmra.mrb[0].mxu0 %v2004
      %v2108 = vpop.f32.mrb[0].mxu0
      %v2109 = vadd.f32 0.0, %v2108
      %v2110 = vpop.f32.mrb[0].mxu0
      %2111 = vmatprep.mubr.f32.mxu0 0.0
      %2112 = vmatmul.mubr.f32.gmra.mrb[0].mxu0 %v2007
      %v2113 = vpop.f32.mrb[0].mxu0
      %v2114 = vadd.f32 0.0, %v2113
      %v2115 = vpop.f32.mrb[0].mxu0
      %2116 = vmatprep.mubr.f32.mxu0 0.0
      %2117 = vmatmul.mubr.f32.gmra.mrb[0].mxu0 %v2010
      %v2118 = vpop.f32.mrb[0].mxu0
      %v2119 = vadd.f32 0.0, %v2118
      %v2120 = vpop.f32.mrb[0].mxu0
      %2121 = vdwg.mxu0
      %v2123 = vsel %vm1120, %v1531, 0
      %v2126 = vsel %vm1120, %v1532, 0
      %v2129 = vsel %vm1120, %v1533, 0
      %v2132 = vsel %vm1120, %v1534, 0
      %v2135 = vsel %vm1120, %v1535, 0
      %v2138 = vsel %vm1120, %v1536, 0
      %v2141 = vsel %vm1120, %v1537, 0
      %v2144 = vsel %vm1120, %v1538, 0
      %v2147 = vsel %vm1120, %v1539, 0
      %2149 = vmatprep.subr.mxu0 0.0
      %2150 = vmatpush1.msra.mxu0 %v1082
      %2151 = vmatprep.subr.mxu0 0.0
      %2152 = vmatpush1.msra.mxu0 0.0
      %2153 = vmatprep.subr.mxu0 0.0
      %2154 = vmatpush1.msra.mxu0 0.0
      %2155 = vmatprep.subr.mxu0 0.0
      %2156 = vmatpush1.msra.mxu0 0.0
      %2157 = vmatprep.subr.mxu0 0.0
      %2158 = vmatpush1.msra.mxu0 0.0
      %2159 = vmatprep.subr.mxu0 0.0
      %2160 = vmatpush1.msra.mxu0 0.0
      %2161 = vmatprep.subr.mxu0 0.0
      %2162 = vmatpush1.msra.mxu0 0.0
      %2163 = vmatprep.subr.mxu0 0.0
      %2164 = vmatpush1.msra.mxu0 0.0
      %2165 = vmatprep.subr.mxu0 0.0
      %2166 = vmatpush1.msra.mxu0 0.0
      %2167 = vmatprep.subr.mxu0 0.0
      %2168 = vmatpush1.msra.mxu0 0.0
      %2169 = vmatprep.subr.mxu0 0.0
      %2170 = vmatpush1.msra.mxu0 0.0
      %2171 = vmatprep.subr.mxu0 0.0
      %2172 = vmatpush1.msra.mxu0 0.0
      %2173 = vmatprep.subr.mxu0 0.0
      %2174 = vmatpush1.msra.mxu0 0.0
      %2175 = vmatprep.subr.mxu0 0.0
      %2176 = vmatpush1.msra.mxu0 0.0
      %2177 = vmatprep.subr.mxu0 0.0
      %2178 = vmatpush1.msra.mxu0 0.0
      %2179 = vmatprep.subr.mxu0 0.0
      %2180 = vmatpush1.msra.mxu0 0.0
      %2181 = vmatprep.subr.mxu0 0.0
      %2182 = vmatpush1.msra.mxu0 0.0
      %2183 = vmatprep.subr.mxu0 0.0
      %2184 = vmatpush1.msra.mxu0 0.0
      %2185 = vmatprep.subr.mxu0 0.0
      %2186 = vmatpush1.msra.mxu0 0.0
      %2187 = vmatprep.subr.mxu0 0.0
      %2188 = vmatpush1.msra.mxu0 0.0
      %2189 = vmatprep.subr.mxu0 0.0
      %2190 = vmatpush1.msra.mxu0 0.0
      %2191 = vmatprep.subr.mxu0 0.0
      %2192 = vmatpush1.msra.mxu0 0.0
      %2193 = vmatprep.subr.mxu0 0.0
      %2194 = vmatpush1.msra.mxu0 0.0
      %2195 = vmatprep.subr.mxu0 0.0
      %2196 = vmatpush1.msra.mxu0 0.0
      %2197 = vmatprep.subr.mxu0 0.0
      %2198 = vmatpush1.msra.mxu0 0.0
      %2199 = vmatprep.subr.mxu0 0.0
      %2200 = vmatpush1.msra.mxu0 0.0
      %2201 = vmatprep.subr.mxu0 0.0
      %2202 = vmatpush1.msra.mxu0 0.0
      %2203 = vmatprep.subr.mxu0 0.0
      %2204 = vmatpush1.msra.mxu0 0.0
      %2205 = vmatprep.subr.mxu0 0.0
      %2206 = vmatpush1.msra.mxu0 0.0
      %2207 = vmatprep.subr.mxu0 0.0
      %2208 = vmatpush1.msra.mxu0 0.0
      %2209 = vmatprep.subr.mxu0 0.0
      %2210 = vmatpush1.msra.mxu0 0.0
      %2211 = vmatprep.subr.mxu0 0.0
      %2212 = vmatpush1.msra.mxu0 0.0
      %2213 = vmatprep.mubr.f32.mxu0 0.0
      %2214 = vmatmul.mubr.f32.gmra.mrb[0].mxu0 %v2123
      %v2215 = vpop.f32.mrb[0].mxu0
      %v2216 = vadd.f32 %v2079, %v2215
      %v2217 = vpop.f32.mrb[0].mxu0
      %2218 = vmatprep.mubr.f32.mxu0 0.0
      %2219 = vmatmul.mubr.f32.gmra.mrb[0].mxu0 %v2126
      %v2220 = vpop.f32.mrb[0].mxu0
      %v2221 = vadd.f32 %v2084, %v2220
      %v2222 = vpop.f32.mrb[0].mxu0
      %2223 = vmatprep.mubr.f32.mxu0 0.0
      %2224 = vmatmul.mubr.f32.gmra.mrb[0].mxu0 %v2129
      %v2225 = vpop.f32.mrb[0].mxu0
      %v2226 = vadd.f32 %v2089, %v2225
      %v2227 = vpop.f32.mrb[0].mxu0
      %2228 = vmatprep.mubr.f32.mxu0 0.0
      %2229 = vmatmul.mubr.f32.gmra.mrb[0].mxu0 %v2132
      %v2230 = vpop.f32.mrb[0].mxu0
      %v2231 = vadd.f32 %v2094, %v2230
      %v2232 = vpop.f32.mrb[0].mxu0
      %2233 = vmatprep.mubr.f32.mxu0 0.0
      %2234 = vmatmul.mubr.f32.gmra.mrb[0].mxu0 %v2135
      %v2235 = vpop.f32.mrb[0].mxu0
      %v2236 = vadd.f32 %v2099, %v2235
      %v2237 = vpop.f32.mrb[0].mxu0
      %2238 = vmatprep.mubr.f32.mxu0 0.0
      %2239 = vmatmul.mubr.f32.gmra.mrb[0].mxu0 %v2138
      %v2240 = vpop.f32.mrb[0].mxu0
      %v2241 = vadd.f32 %v2104, %v2240
      %v2242 = vpop.f32.mrb[0].mxu0
      %2243 = vmatprep.mubr.f32.mxu0 0.0
      %2244 = vmatmul.mubr.f32.gmra.mrb[0].mxu0 %v2141
      %v2245 = vpop.f32.mrb[0].mxu0
      %v2246 = vadd.f32 %v2109, %v2245
      %v2247 = vpop.f32.mrb[0].mxu0
      %2248 = vmatprep.mubr.f32.mxu0 0.0
      %2249 = vmatmul.mubr.f32.gmra.mrb[0].mxu0 %v2144
      %v2250 = vpop.f32.mrb[0].mxu0
      %v2251 = vadd.f32 %v2114, %v2250
      %v2252 = vpop.f32.mrb[0].mxu0
      %2253 = vmatprep.mubr.f32.mxu0 0.0
      %2254 = vmatmul.mubr.f32.gmra.mrb[0].mxu0 %v2147
      %v2255 = vpop.f32.mrb[0].mxu0
      %v2256 = vadd.f32 %v2119, %v2255
      %v2257 = vpop.f32.mrb[0].mxu0
      %2258 = vdwg.mxu0
      %2259 = vrot.lane.b32.xlu0 %v994, 112
      %v2260 = vpop.permute.xlu0 %2259
      %2261 = vrot.lane.b32.xlu0 %v999, 112
      %v2262 = vpop.permute.xlu0 %2261
      %2263 = vrot.lane.b32.xlu0 %v1004, 112
      %v2264 = vpop.permute.xlu0 %2263
      %2265 = vrot.lane.b32.xlu0 %v1009, 112
      %v2266 = vpop.permute.xlu0 %2265
      %2267 = vrot.lane.b32.xlu0 %v1014, 112
      %v2268 = vpop.permute.xlu0 %2267
      %2269 = vrot.lane.b32.xlu0 %v1019, 112
      %v2270 = vpop.permute.xlu0 %2269
      %2271 = vrot.lane.b32.xlu0 %v1024, 112
      %v2272 = vpop.permute.xlu0 %2271
      %2273 = vrot.lane.b32.xlu0 %v1029, 112
      %v2274 = vpop.permute.xlu0 %2273
      %2275 = vrot.lane.b32.xlu0 %v1034, 112
      %v2276 = vpop.permute.xlu0 %2275
      %2277 = vrot.lane.b32.xlu0 %v994, 80
      %v2278 = vpop.permute.xlu0 %2277
      %2279 = vrot.lane.b32.xlu0 %v999, 80
      %v2280 = vpop.permute.xlu0 %2279
      %2281 = vrot.lane.b32.xlu0 %v1004, 80
      %v2282 = vpop.permute.xlu0 %2281
      %2283 = vrot.lane.b32.xlu0 %v1009, 80
      %v2284 = vpop.permute.xlu0 %2283
      %2285 = vrot.lane.b32.xlu0 %v1014, 80
      %v2286 = vpop.permute.xlu0 %2285
      %2287 = vrot.lane.b32.xlu0 %v1019, 80
      %v2288 = vpop.permute.xlu0 %2287
      %2289 = vrot.lane.b32.xlu0 %v1024, 80
      %v2290 = vpop.permute.xlu0 %2289
      %2291 = vrot.lane.b32.xlu0 %v1029, 80
      %v2292 = vpop.permute.xlu0 %2291
      %2293 = vrot.lane.b32.xlu0 %v1034, 80
      %v2294 = vpop.permute.xlu0 %2293
      %v2295 = vsel %vm1120, %v2260, 0
      %v2297 = vsel %vm1120, %v2262, 0
      %v2299 = vsel %vm1120, %v2264, 0
      %v2301 = vsel %vm1120, %v2266, 0
      %v2303 = vsel %vm1120, %v2268, 0
      %v2305 = vsel %vm1120, %v2270, 0
      %v2307 = vsel %vm1120, %v2272, 0
      %v2309 = vsel %vm1120, %v2274, 0
      %v2311 = vsel %vm1120, %v2276, 0
      %v2313 = vsel %vm1120, %v2278, 0
      %v2315 = vsel %vm1120, %v2280, 0
      %v2317 = vsel %vm1120, %v2282, 0
      %v2319 = vsel %vm1120, %v2284, 0
      %v2321 = vsel %vm1120, %v2286, 0
      %v2323 = vsel %vm1120, %v2288, 0
      %v2325 = vsel %vm1120, %v2290, 0
      %v2327 = vsel %vm1120, %v2292, 0
      %v2329 = vsel %vm1120, %v2294, 0
      %2331 = vmatprep.subr.mxu0 0.0
      %2332 = vmatpush1.xpose.msra.mxu0 %v2313
      %2333 = vmatprep.subr.mxu0 0.0
      %2334 = vmatpush1.xpose.msra.mxu0 %v2315
      %2335 = vmatprep.subr.mxu0 0.0
      %2336 = vmatpush1.xpose.msra.mxu0 %v2317
      %2337 = vmatprep.subr.mxu0 0.0
      %2338 = vmatpush1.xpose.msra.mxu0 %v2319
      %2339 = vmatprep.subr.mxu0 0.0
      %2340 = vmatpush1.xpose.msra.mxu0 %v2321
      %2341 = vmatprep.subr.mxu0 0.0
      %2342 = vmatpush1.xpose.msra.mxu0 %v2323
      %2343 = vmatprep.subr.mxu0 0.0
      %2344 = vmatpush1.xpose.msra.mxu0 %v2325
      %2345 = vmatprep.subr.mxu0 0.0
      %2346 = vmatpush1.xpose.msra.mxu0 %v2327
      %2347 = vmatprep.subr.mxu0 0.0
      %2348 = vmatpush1.xpose.msra.mxu0 %v2329
      %2349 = vmatprep.subr.mxu0 0.0
      %2350 = vmatpush1.xpose.msra.mxu0 0.0
      %2351 = vmatprep.subr.mxu0 0.0
      %2352 = vmatpush1.xpose.msra.mxu0 0.0
      %2353 = vmatprep.subr.mxu0 0.0
      %2354 = vmatpush1.xpose.msra.mxu0 0.0
      %2355 = vmatprep.subr.mxu0 0.0
      %2356 = vmatpush1.xpose.msra.mxu0 0.0
      %2357 = vmatprep.subr.mxu0 0.0
      %2358 = vmatpush1.xpose.msra.mxu0 0.0
      %2359 = vmatprep.subr.mxu0 0.0
      %2360 = vmatpush1.xpose.msra.mxu0 0.0
      %2361 = vmatprep.subr.mxu0 0.0
      %2362 = vmatpush1.xpose.msra.mxu0 0.0
      %2363 = vmatprep.subr.mxu0 0.0
      %2364 = vmatpush1.xpose.msra.mxu0 0.0
      %2365 = vmatprep.subr.mxu0 0.0
      %2366 = vmatpush1.xpose.msra.mxu0 0.0
      %2367 = vmatprep.subr.mxu0 0.0
      %2368 = vmatpush1.xpose.msra.mxu0 0.0
      %2369 = vmatprep.subr.mxu0 0.0
      %2370 = vmatpush1.xpose.msra.mxu0 0.0
      %2371 = vmatprep.subr.mxu0 0.0
      %2372 = vmatpush1.xpose.msra.mxu0 0.0
      %2373 = vmatprep.subr.mxu0 0.0
      %2374 = vmatpush1.xpose.msra.mxu0 0.0
      %2375 = vmatprep.subr.mxu0 0.0
      %2376 = vmatpush1.xpose.msra.mxu0 0.0
      %2377 = vmatprep.subr.mxu0 0.0
      %2378 = vmatpush1.xpose.msra.mxu0 0.0
      %2379 = vmatprep.subr.mxu0 0.0
      %2380 = vmatpush1.xpose.msra.mxu0 0.0
      %2381 = vmatprep.subr.mxu0 0.0
      %2382 = vmatpush1.xpose.msra.mxu0 0.0
      %2383 = vmatprep.subr.mxu0 0.0
      %2384 = vmatpush1.xpose.msra.mxu0 0.0
      %2385 = vmatprep.subr.mxu0 0.0
      %2386 = vmatpush1.xpose.msra.mxu0 0.0
      %2387 = vmatprep.subr.mxu0 0.0
      %2388 = vmatpush1.xpose.msra.mxu0 0.0
      %2389 = vmatprep.subr.mxu0 0.0
      %2390 = vmatpush1.xpose.msra.mxu0 0.0
      %2391 = vmatprep.subr.mxu0 0.0
      %2392 = vmatpush1.xpose.msra.mxu0 0.0
      %2393 = vmatprep.subr.mxu0 0.0
      %2394 = vmatpush1.xpose.msra.mxu0 0.0
      %2395 = vmatprep.mubr.f32.mxu0 0.0
      %2396 = vmatmul.mubr.f32.gmra.mrb[0].mxu0 %v2295
      %v2397 = vpop.f32.mrb[0].mxu0
      %v2398 = vadd.f32 %v1091, %v2397
      %v2399 = vpop.f32.mrb[0].mxu0
      %2400 = vmatprep.mubr.f32.mxu0 0.0
      %2401 = vmatmul.mubr.f32.gmra.mrb[0].mxu0 %v2297
      %v2402 = vpop.f32.mrb[0].mxu0
      %v2403 = vadd.f32 %v1091, %v2402
      %v2404 = vpop.f32.mrb[0].mxu0
      %2405 = vmatprep.mubr.f32.mxu0 0.0
      %2406 = vmatmul.mubr.f32.gmra.mrb[0].mxu0 %v2299
      %v2407 = vpop.f32.mrb[0].mxu0
      %v2408 = vadd.f32 %v1091, %v2407
      %v2409 = vpop.f32.mrb[0].mxu0
      %2410 = vmatprep.mubr.f32.mxu0 0.0
      %2411 = vmatmul.mubr.f32.gmra.mrb[0].mxu0 %v2301
      %v2412 = vpop.f32.mrb[0].mxu0
      %v2413 = vadd.f32 %v1091, %v2412
      %v2414 = vpop.f32.mrb[0].mxu0
      %2415 = vmatprep.mubr.f32.mxu0 0.0
      %2416 = vmatmul.mubr.f32.gmra.mrb[0].mxu0 %v2303
      %v2417 = vpop.f32.mrb[0].mxu0
      %v2418 = vadd.f32 %v1091, %v2417
      %v2419 = vpop.f32.mrb[0].mxu0
      %2420 = vmatprep.mubr.f32.mxu0 0.0
      %2421 = vmatmul.mubr.f32.gmra.mrb[0].mxu0 %v2305
      %v2422 = vpop.f32.mrb[0].mxu0
      %v2423 = vadd.f32 %v1091, %v2422
      %v2424 = vpop.f32.mrb[0].mxu0
      %2425 = vmatprep.mubr.f32.mxu0 0.0
      %2426 = vmatmul.mubr.f32.gmra.mrb[0].mxu0 %v2307
      %v2427 = vpop.f32.mrb[0].mxu0
      %v2428 = vadd.f32 %v1091, %v2427
      %v2429 = vpop.f32.mrb[0].mxu0
      %2430 = vmatprep.mubr.f32.mxu0 0.0
      %2431 = vmatmul.mubr.f32.gmra.mrb[0].mxu0 %v2309
      %v2432 = vpop.f32.mrb[0].mxu0
      %v2433 = vadd.f32 %v1091, %v2432
      %v2434 = vpop.f32.mrb[0].mxu0
      %2435 = vmatprep.mubr.f32.mxu0 0.0
      %2436 = vmatmul.mubr.f32.gmra.mrb[0].mxu0 %v2311
      %v2437 = vpop.f32.mrb[0].mxu0
      %v2438 = vadd.f32 %v1091, %v2437
      %v2439 = vpop.f32.mrb[0].mxu0
      %2440 = vdwg.mxu0
      %v2441 = vsel %vm1267, %v2398, -inf
      %2442 = vmax.xlane.f32.xlu0 %v2441
      %v2443 = vpop.xlane.xlu0 %2442
      %v2444 = vsel %vm1267, %v2403, -inf
      %2445 = vmax.xlane.f32.xlu0 %v2444
      %v2446 = vpop.xlane.xlu0 %2445
      %v2447 = vsel %vm1267, %v2408, -inf
      %2448 = vmax.xlane.f32.xlu0 %v2447
      %v2449 = vpop.xlane.xlu0 %2448
      %v2450 = vsel %vm1267, %v2413, -inf
      %2451 = vmax.xlane.f32.xlu0 %v2450
      %v2452 = vpop.xlane.xlu0 %2451
      %v2453 = vsel %vm1267, %v2418, -inf
      %2454 = vmax.xlane.f32.xlu0 %v2453
      %v2455 = vpop.xlane.xlu0 %2454
      %v2456 = vsel %vm1267, %v2423, -inf
      %2457 = vmax.xlane.f32.xlu0 %v2456
      %v2458 = vpop.xlane.xlu0 %2457
      %v2459 = vsel %vm1267, %v2428, -inf
      %2460 = vmax.xlane.f32.xlu0 %v2459
      %v2461 = vpop.xlane.xlu0 %2460
      %v2462 = vsel %vm1267, %v2433, -inf
      %2463 = vmax.xlane.f32.xlu0 %v2462
      %v2464 = vpop.xlane.xlu0 %2463
      %v2465 = vsel %vm1267, %v2438, -inf
      %2466 = vmax.xlane.f32.xlu0 %v2465
      %v2467 = vpop.xlane.xlu0 %2466
      %v2468 = vsub.f32 %v2398, %v2443
      %v2469 = vsub.f32 %v2403, %v2446
      %v2470 = vsub.f32 %v2408, %v2449
      %v2471 = vsub.f32 %v2413, %v2452
      %v2472 = vsub.f32 %v2418, %v2455
      %v2473 = vsub.f32 %v2423, %v2458
      %v2474 = vsub.f32 %v2428, %v2461
      %v2475 = vsub.f32 %v2433, %v2464
      %v2476 = vsub.f32 %v2438, %v2467
      %v2477 = vmul.f32 %v2468, 1.442695
      %v2478 = vpow.pop %v2477
      %v2479 = vmul.f32 %v2469, 1.442695
      %v2480 = vpow.pop %v2479
      %v2481 = vmul.f32 %v2470, 1.442695
      %v2482 = vpow.pop %v2481
      %v2483 = vmul.f32 %v2471, 1.442695
      %v2484 = vpow.pop %v2483
      %v2485 = vmul.f32 %v2472, 1.442695
      %v2486 = vpow.pop %v2485
      %v2487 = vmul.f32 %v2473, 1.442695
      %v2488 = vpow.pop %v2487
      %v2489 = vmul.f32 %v2474, 1.442695
      %v2490 = vpow.pop %v2489
      %v2491 = vmul.f32 %v2475, 1.442695
      %v2492 = vpow.pop %v2491
      %v2493 = vmul.f32 %v2476, 1.442695
      %v2494 = vpow.pop %v2493
      %v2495 = vsel %vm1267, %v2478, 0.0
      %2496 = vadd.xlane.f32.xlu0 %v2495
      %v2497 = vpop.xlane.xlu0 %2496
      %v2498 = vsel %vm1267, %v2480, 0.0
      %2499 = vadd.xlane.f32.xlu0 %v2498
      %v2500 = vpop.xlane.xlu0 %2499
      %v2501 = vsel %vm1267, %v2482, 0.0
      %2502 = vadd.xlane.f32.xlu0 %v2501
      %v2503 = vpop.xlane.xlu0 %2502
      %v2504 = vsel %vm1267, %v2484, 0.0
      %2505 = vadd.xlane.f32.xlu0 %v2504
      %v2506 = vpop.xlane.xlu0 %2505
      %v2507 = vsel %vm1267, %v2486, 0.0
      %2508 = vadd.xlane.f32.xlu0 %v2507
      %v2509 = vpop.xlane.xlu0 %2508
      %v2510 = vsel %vm1267, %v2488, 0.0
      %2511 = vadd.xlane.f32.xlu0 %v2510
      %v2512 = vpop.xlane.xlu0 %2511
      %v2513 = vsel %vm1267, %v2490, 0.0
      %2514 = vadd.xlane.f32.xlu0 %v2513
      %v2515 = vpop.xlane.xlu0 %2514
      %v2516 = vsel %vm1267, %v2492, 0.0
      %2517 = vadd.xlane.f32.xlu0 %v2516
      %v2518 = vpop.xlane.xlu0 %2517
      %v2519 = vsel %vm1267, %v2494, 0.0
      %2520 = vadd.xlane.f32.xlu0 %v2519
      %v2521 = vpop.xlane.xlu0 %2520
      %v2522 = vrcp.pop %v2497
      %v2523 = vrcp.pop %v2500
      %v2524 = vrcp.pop %v2503
      %v2525 = vrcp.pop %v2506
      %v2526 = vrcp.pop %v2509
      %v2527 = vrcp.pop %v2512
      %v2528 = vrcp.pop %v2515
      %v2529 = vrcp.pop %v2518
      %v2530 = vrcp.pop %v2521
      %2531 = vrot.lane.b32.xlu0 %v1039, 48
      %v2532 = vpop.permute.xlu0 %2531
      %2533 = vrot.lane.b32.xlu0 %v1044, 48
      %v2534 = vpop.permute.xlu0 %2533
      %2535 = vrot.lane.b32.xlu0 %v1049, 48
      %v2536 = vpop.permute.xlu0 %2535
      %2537 = vrot.lane.b32.xlu0 %v1054, 48
      %v2538 = vpop.permute.xlu0 %2537
      %2539 = vrot.lane.b32.xlu0 %v1059, 48
      %v2540 = vpop.permute.xlu0 %2539
      %2541 = vrot.lane.b32.xlu0 %v1064, 48
      %v2542 = vpop.permute.xlu0 %2541
      %2543 = vrot.lane.b32.xlu0 %v1069, 48
      %v2544 = vpop.permute.xlu0 %2543
      %2545 = vrot.lane.b32.xlu0 %v1074, 48
      %v2546 = vpop.permute.xlu0 %2545
      %2547 = vrot.lane.b32.xlu0 %v1079, 48
      %v2548 = vpop.permute.xlu0 %2547
      %v2559 = vsel %vm1267, %v2478, 0
      %v2562 = vsel %vm1267, %v2480, 0
      %v2565 = vsel %vm1267, %v2482, 0
      %v2568 = vsel %vm1267, %v2484, 0
      %v2571 = vsel %vm1267, %v2486, 0
      %v2574 = vsel %vm1267, %v2488, 0
      %v2577 = vsel %vm1267, %v2490, 0
      %v2580 = vsel %vm1267, %v2492, 0
      %v2583 = vsel %vm1267, %v2494, 0
      %2585 = vmatprep.subr.mxu0 0.0
      %2586 = vmatpush1.msra.mxu0 %v2532
      %2587 = vmatprep.subr.mxu0 0.0
      %2588 = vmatpush1.msra.mxu0 %v2534
      %2589 = vmatprep.subr.mxu0 0.0
      %2590 = vmatpush1.msra.mxu0 %v2536
      %2591 = vmatprep.subr.mxu0 0.0
      %2592 = vmatpush1.msra.mxu0 %v2538
      %2593 = vmatprep.subr.mxu0 0.0
      %2594 = vmatpush1.msra.mxu0 %v2540
      %2595 = vmatprep.subr.mxu0 0.0
      %2596 = vmatpush1.msra.mxu0 %v2542
      %2597 = vmatprep.subr.mxu0 0.0
      %2598 = vmatpush1.msra.mxu0 %v2544
      %2599 = vmatprep.subr.mxu0 0.0
      %2600 = vmatpush1.msra.mxu0 %v2546
      %2601 = vmatprep.subr.mxu0 0.0
      %2602 = vmatpush1.msra.mxu0 %v2548
      %2603 = vmatprep.subr.mxu0 0.0
      %2604 = vmatpush1.msra.mxu0 0.0
      %2605 = vmatprep.subr.mxu0 0.0
      %2606 = vmatpush1.msra.mxu0 0.0
      %2607 = vmatprep.subr.mxu0 0.0
      %2608 = vmatpush1.msra.mxu0 0.0
      %2609 = vmatprep.subr.mxu0 0.0
      %2610 = vmatpush1.msra.mxu0 0.0
      %2611 = vmatprep.subr.mxu0 0.0
      %2612 = vmatpush1.msra.mxu0 0.0
      %2613 = vmatprep.subr.mxu0 0.0
      %2614 = vmatpush1.msra.mxu0 0.0
      %2615 = vmatprep.subr.mxu0 0.0
      %2616 = vmatpush1.msra.mxu0 0.0
      %2617 = vmatprep.subr.mxu0 0.0
      %2618 = vmatpush1.msra.mxu0 0.0
      %2619 = vmatprep.subr.mxu0 0.0
      %2620 = vmatpush1.msra.mxu0 0.0
      %2621 = vmatprep.subr.mxu0 0.0
      %2622 = vmatpush1.msra.mxu0 0.0
      %2623 = vmatprep.subr.mxu0 0.0
      %2624 = vmatpush1.msra.mxu0 0.0
      %2625 = vmatprep.subr.mxu0 0.0
      %2626 = vmatpush1.msra.mxu0 0.0
      %2627 = vmatprep.subr.mxu0 0.0
      %2628 = vmatpush1.msra.mxu0 0.0
      %2629 = vmatprep.subr.mxu0 0.0
      %2630 = vmatpush1.msra.mxu0 0.0
      %2631 = vmatprep.subr.mxu0 0.0
      %2632 = vmatpush1.msra.mxu0 0.0
      %2633 = vmatprep.subr.mxu0 0.0
      %2634 = vmatpush1.msra.mxu0 0.0
      %2635 = vmatprep.subr.mxu0 0.0
      %2636 = vmatpush1.msra.mxu0 0.0
      %2637 = vmatprep.subr.mxu0 0.0
      %2638 = vmatpush1.msra.mxu0 0.0
      %2639 = vmatprep.subr.mxu0 0.0
      %2640 = vmatpush1.msra.mxu0 0.0
      %2641 = vmatprep.subr.mxu0 0.0
      %2642 = vmatpush1.msra.mxu0 0.0
      %2643 = vmatprep.subr.mxu0 0.0
      %2644 = vmatpush1.msra.mxu0 0.0
      %2645 = vmatprep.subr.mxu0 0.0
      %2646 = vmatpush1.msra.mxu0 0.0
      %2647 = vmatprep.subr.mxu0 0.0
      %2648 = vmatpush1.msra.mxu0 0.0
      %2649 = vmatprep.mubr.f32.mxu0 0.0
      %2650 = vmatmul.mubr.f32.gmra.mrb[0].mxu0 %v2559
      %v2651 = vpop.f32.mrb[0].mxu0
      %v2652 = vadd.f32 0.0, %v2651
      %v2653 = vpop.f32.mrb[0].mxu0
      %2654 = vmatprep.mubr.f32.mxu0 0.0
      %2655 = vmatmul.mubr.f32.gmra.mrb[0].mxu0 %v2562
      %v2656 = vpop.f32.mrb[0].mxu0
      %v2657 = vadd.f32 0.0, %v2656
      %v2658 = vpop.f32.mrb[0].mxu0
      %2659 = vmatprep.mubr.f32.mxu0 0.0
      %2660 = vmatmul.mubr.f32.gmra.mrb[0].mxu0 %v2565
      %v2661 = vpop.f32.mrb[0].mxu0
      %v2662 = vadd.f32 0.0, %v2661
      %v2663 = vpop.f32.mrb[0].mxu0
      %2664 = vmatprep.mubr.f32.mxu0 0.0
      %2665 = vmatmul.mubr.f32.gmra.mrb[0].mxu0 %v2568
      %v2666 = vpop.f32.mrb[0].mxu0
      %v2667 = vadd.f32 0.0, %v2666
      %v2668 = vpop.f32.mrb[0].mxu0
      %2669 = vmatprep.mubr.f32.mxu0 0.0
      %2670 = vmatmul.mubr.f32.gmra.mrb[0].mxu0 %v2571
      %v2671 = vpop.f32.mrb[0].mxu0
      %v2672 = vadd.f32 0.0, %v2671
      %v2673 = vpop.f32.mrb[0].mxu0
      %2674 = vmatprep.mubr.f32.mxu0 0.0
      %2675 = vmatmul.mubr.f32.gmra.mrb[0].mxu0 %v2574
      %v2676 = vpop.f32.mrb[0].mxu0
      %v2677 = vadd.f32 0.0, %v2676
      %v2678 = vpop.f32.mrb[0].mxu0
      %2679 = vmatprep.mubr.f32.mxu0 0.0
      %2680 = vmatmul.mubr.f32.gmra.mrb[0].mxu0 %v2577
      %v2681 = vpop.f32.mrb[0].mxu0
      %v2682 = vadd.f32 0.0, %v2681
      %v2683 = vpop.f32.mrb[0].mxu0
      %2684 = vmatprep.mubr.f32.mxu0 0.0
      %2685 = vmatmul.mubr.f32.gmra.mrb[0].mxu0 %v2580
      %v2686 = vpop.f32.mrb[0].mxu0
      %v2687 = vadd.f32 0.0, %v2686
      %v2688 = vpop.f32.mrb[0].mxu0
      %2689 = vmatprep.mubr.f32.mxu0 0.0
      %2690 = vmatmul.mubr.f32.gmra.mrb[0].mxu0 %v2583
      %v2691 = vpop.f32.mrb[0].mxu0
      %v2692 = vadd.f32 0.0, %v2691
      %v2693 = vpop.f32.mrb[0].mxu0
      %2694 = vdwg.mxu0
      %v2695 = vmul.f32 %v2652, %v2522
      %v2696 = vmul.f32 %v2657, %v2523
      %v2697 = vmul.f32 %v2662, %v2524
      %v2698 = vmul.f32 %v2667, %v2525
      %v2699 = vmul.f32 %v2672, %v2526
      %v2700 = vmul.f32 %v2677, %v2527
      %v2701 = vmul.f32 %v2682, %v2528
      %v2702 = vmul.f32 %v2687, %v2529
      %v2703 = vmul.f32 %v2692, %v2530
      %v2705 = vsel %vm1120, %v2695, 0
      %v2708 = vsel %vm1120, %v2696, 0
      %v2711 = vsel %vm1120, %v2697, 0
      %v2714 = vsel %vm1120, %v2698, 0
      %v2717 = vsel %vm1120, %v2699, 0
      %v2720 = vsel %vm1120, %v2700, 0
      %v2723 = vsel %vm1120, %v2701, 0
      %v2726 = vsel %vm1120, %v2702, 0
      %v2729 = vsel %vm1120, %v2703, 0
      %2731 = vmatprep.subr.mxu0 0.0
      %2732 = vmatpush1.msra.mxu0 %v1084
      %2733 = vmatprep.subr.mxu0 0.0
      %2734 = vmatpush1.msra.mxu0 0.0
      %2735 = vmatprep.subr.mxu0 0.0
      %2736 = vmatpush1.msra.mxu0 0.0
      %2737 = vmatprep.subr.mxu0 0.0
      %2738 = vmatpush1.msra.mxu0 0.0
      %2739 = vmatprep.subr.mxu0 0.0
      %2740 = vmatpush1.msra.mxu0 0.0
      %2741 = vmatprep.subr.mxu0 0.0
      %2742 = vmatpush1.msra.mxu0 0.0
      %2743 = vmatprep.subr.mxu0 0.0
      %2744 = vmatpush1.msra.mxu0 0.0
      %2745 = vmatprep.subr.mxu0 0.0
      %2746 = vmatpush1.msra.mxu0 0.0
      %2747 = vmatprep.subr.mxu0 0.0
      %2748 = vmatpush1.msra.mxu0 0.0
      %2749 = vmatprep.subr.mxu0 0.0
      %2750 = vmatpush1.msra.mxu0 0.0
      %2751 = vmatprep.subr.mxu0 0.0
      %2752 = vmatpush1.msra.mxu0 0.0
      %2753 = vmatprep.subr.mxu0 0.0
      %2754 = vmatpush1.msra.mxu0 0.0
      %2755 = vmatprep.subr.mxu0 0.0
      %2756 = vmatpush1.msra.mxu0 0.0
      %2757 = vmatprep.subr.mxu0 0.0
      %2758 = vmatpush1.msra.mxu0 0.0
      %2759 = vmatprep.subr.mxu0 0.0
      %2760 = vmatpush1.msra.mxu0 0.0
      %2761 = vmatprep.subr.mxu0 0.0
      %2762 = vmatpush1.msra.mxu0 0.0
      %2763 = vmatprep.subr.mxu0 0.0
      %2764 = vmatpush1.msra.mxu0 0.0
      %2765 = vmatprep.subr.mxu0 0.0
      %2766 = vmatpush1.msra.mxu0 0.0
      %2767 = vmatprep.subr.mxu0 0.0
      %2768 = vmatpush1.msra.mxu0 0.0
      %2769 = vmatprep.subr.mxu0 0.0
      %2770 = vmatpush1.msra.mxu0 0.0
      %2771 = vmatprep.subr.mxu0 0.0
      %2772 = vmatpush1.msra.mxu0 0.0
      %2773 = vmatprep.subr.mxu0 0.0
      %2774 = vmatpush1.msra.mxu0 0.0
      %2775 = vmatprep.subr.mxu0 0.0
      %2776 = vmatpush1.msra.mxu0 0.0
      %2777 = vmatprep.subr.mxu0 0.0
      %2778 = vmatpush1.msra.mxu0 0.0
      %2779 = vmatprep.subr.mxu0 0.0
      %2780 = vmatpush1.msra.mxu0 0.0
      %2781 = vmatprep.subr.mxu0 0.0
      %2782 = vmatpush1.msra.mxu0 0.0
      %2783 = vmatprep.subr.mxu0 0.0
      %2784 = vmatpush1.msra.mxu0 0.0
      %2785 = vmatprep.subr.mxu0 0.0
      %2786 = vmatpush1.msra.mxu0 0.0
      %2787 = vmatprep.subr.mxu0 0.0
      %2788 = vmatpush1.msra.mxu0 0.0
      %2789 = vmatprep.subr.mxu0 0.0
      %2790 = vmatpush1.msra.mxu0 0.0
      %2791 = vmatprep.subr.mxu0 0.0
      %2792 = vmatpush1.msra.mxu0 0.0
      %2793 = vmatprep.subr.mxu0 0.0
      %2794 = vmatpush1.msra.mxu0 0.0
      %2795 = vmatprep.mubr.f32.mxu0 0.0
      %2796 = vmatmul.mubr.f32.gmra.mrb[0].mxu0 %v2705
      %v2797 = vpop.f32.mrb[0].mxu0
      %v2798 = vadd.f32 0.0, %v2797
      %v2799 = vpop.f32.mrb[0].mxu0
      %2800 = vmatprep.mubr.f32.mxu0 0.0
      %2801 = vmatmul.mubr.f32.gmra.mrb[0].mxu0 %v2708
      %v2802 = vpop.f32.mrb[0].mxu0
      %v2803 = vadd.f32 0.0, %v2802
      %v2804 = vpop.f32.mrb[0].mxu0
      %2805 = vmatprep.mubr.f32.mxu0 0.0
      %2806 = vmatmul.mubr.f32.gmra.mrb[0].mxu0 %v2711
      %v2807 = vpop.f32.mrb[0].mxu0
      %v2808 = vadd.f32 0.0, %v2807
      %v2809 = vpop.f32.mrb[0].mxu0
      %2810 = vmatprep.mubr.f32.mxu0 0.0
      %2811 = vmatmul.mubr.f32.gmra.mrb[0].mxu0 %v2714
      %v2812 = vpop.f32.mrb[0].mxu0
      %v2813 = vadd.f32 0.0, %v2812
      %v2814 = vpop.f32.mrb[0].mxu0
      %2815 = vmatprep.mubr.f32.mxu0 0.0
      %2816 = vmatmul.mubr.f32.gmra.mrb[0].mxu0 %v2717
      %v2817 = vpop.f32.mrb[0].mxu0
      %v2818 = vadd.f32 0.0, %v2817
      %v2819 = vpop.f32.mrb[0].mxu0
      %2820 = vmatprep.mubr.f32.mxu0 0.0
      %2821 = vmatmul.mubr.f32.gmra.mrb[0].mxu0 %v2720
      %v2822 = vpop.f32.mrb[0].mxu0
      %v2823 = vadd.f32 0.0, %v2822
      %v2824 = vpop.f32.mrb[0].mxu0
      %2825 = vmatprep.mubr.f32.mxu0 0.0
      %2826 = vmatmul.mubr.f32.gmra.mrb[0].mxu0 %v2723
      %v2827 = vpop.f32.mrb[0].mxu0
      %v2828 = vadd.f32 0.0, %v2827
      %v2829 = vpop.f32.mrb[0].mxu0
      %2830 = vmatprep.mubr.f32.mxu0 0.0
      %2831 = vmatmul.mubr.f32.gmra.mrb[0].mxu0 %v2726
      %v2832 = vpop.f32.mrb[0].mxu0
      %v2833 = vadd.f32 0.0, %v2832
      %v2834 = vpop.f32.mrb[0].mxu0
      %2835 = vmatprep.mubr.f32.mxu0 0.0
      %2836 = vmatmul.mubr.f32.gmra.mrb[0].mxu0 %v2729
      %v2837 = vpop.f32.mrb[0].mxu0
      %v2838 = vadd.f32 0.0, %v2837
      %v2839 = vpop.f32.mrb[0].mxu0
      %2840 = vdwg.mxu0
      %v2841 = vadd.f32 %v2216, %v2798
      %v2842 = vadd.f32 %v2221, %v2803
      %v2843 = vadd.f32 %v2226, %v2808
      %v2844 = vadd.f32 %v2231, %v2813
      %v2845 = vadd.f32 %v2236, %v2818
      %v2846 = vadd.f32 %v2241, %v2823
      %v2847 = vadd.f32 %v2246, %v2828
      %v2848 = vadd.f32 %v2251, %v2833
      %v2849 = vadd.f32 %v2256, %v2838
      %2850 = vrot.lane.b32.xlu0 %v994, 104
      %v2851 = vpop.permute.xlu0 %2850
      %2852 = vrot.lane.b32.xlu0 %v999, 104
      %v2853 = vpop.permute.xlu0 %2852
      %2854 = vrot.lane.b32.xlu0 %v1004, 104
      %v2855 = vpop.permute.xlu0 %2854
      %2856 = vrot.lane.b32.xlu0 %v1009, 104
      %v2857 = vpop.permute.xlu0 %2856
      %2858 = vrot.lane.b32.xlu0 %v1014, 104
      %v2859 = vpop.permute.xlu0 %2858
      %2860 = vrot.lane.b32.xlu0 %v1019, 104
      %v2861 = vpop.permute.xlu0 %2860
      %2862 = vrot.lane.b32.xlu0 %v1024, 104
      %v2863 = vpop.permute.xlu0 %2862
      %2864 = vrot.lane.b32.xlu0 %v1029, 104
      %v2865 = vpop.permute.xlu0 %2864
      %2866 = vrot.lane.b32.xlu0 %v1034, 104
      %v2867 = vpop.permute.xlu0 %2866
      %2868 = vrot.lane.b32.xlu0 %v994, 72
      %v2869 = vpop.permute.xlu0 %2868
      %2870 = vrot.lane.b32.xlu0 %v999, 72
      %v2871 = vpop.permute.xlu0 %2870
      %2872 = vrot.lane.b32.xlu0 %v1004, 72
      %v2873 = vpop.permute.xlu0 %2872
      %2874 = vrot.lane.b32.xlu0 %v1009, 72
      %v2875 = vpop.permute.xlu0 %2874
      %2876 = vrot.lane.b32.xlu0 %v1014, 72
      %v2877 = vpop.permute.xlu0 %2876
      %2878 = vrot.lane.b32.xlu0 %v1019, 72
      %v2879 = vpop.permute.xlu0 %2878
      %2880 = vrot.lane.b32.xlu0 %v1024, 72
      %v2881 = vpop.permute.xlu0 %2880
      %2882 = vrot.lane.b32.xlu0 %v1029, 72
      %v2883 = vpop.permute.xlu0 %2882
      %2884 = vrot.lane.b32.xlu0 %v1034, 72
      %v2885 = vpop.permute.xlu0 %2884
      %v2886 = vsel %vm1120, %v2851, 0
      %v2888 = vsel %vm1120, %v2853, 0
      %v2890 = vsel %vm1120, %v2855, 0
      %v2892 = vsel %vm1120, %v2857, 0
      %v2894 = vsel %vm1120, %v2859, 0
      %v2896 = vsel %vm1120, %v2861, 0
      %v2898 = vsel %vm1120, %v2863, 0
      %v2900 = vsel %vm1120, %v2865, 0
      %v2902 = vsel %vm1120, %v2867, 0
      %v2904 = vsel %vm1120, %v2869, 0
      %v2906 = vsel %vm1120, %v2871, 0
      %v2908 = vsel %vm1120, %v2873, 0
      %v2910 = vsel %vm1120, %v2875, 0
      %v2912 = vsel %vm1120, %v2877, 0
      %v2914 = vsel %vm1120, %v2879, 0
      %v2916 = vsel %vm1120, %v2881, 0
      %v2918 = vsel %vm1120, %v2883, 0
      %v2920 = vsel %vm1120, %v2885, 0
      %2922 = vmatprep.subr.mxu0 0.0
      %2923 = vmatpush1.xpose.msra.mxu0 %v2904
      %2924 = vmatprep.subr.mxu0 0.0
      %2925 = vmatpush1.xpose.msra.mxu0 %v2906
      %2926 = vmatprep.subr.mxu0 0.0
      %2927 = vmatpush1.xpose.msra.mxu0 %v2908
      %2928 = vmatprep.subr.mxu0 0.0
      %2929 = vmatpush1.xpose.msra.mxu0 %v2910
      %2930 = vmatprep.subr.mxu0 0.0
      %2931 = vmatpush1.xpose.msra.mxu0 %v2912
      %2932 = vmatprep.subr.mxu0 0.0
      %2933 = vmatpush1.xpose.msra.mxu0 %v2914
      %2934 = vmatprep.subr.mxu0 0.0
      %2935 = vmatpush1.xpose.msra.mxu0 %v2916
      %2936 = vmatprep.subr.mxu0 0.0
      %2937 = vmatpush1.xpose.msra.mxu0 %v2918
      %2938 = vmatprep.subr.mxu0 0.0
      %2939 = vmatpush1.xpose.msra.mxu0 %v2920
      %2940 = vmatprep.subr.mxu0 0.0
      %2941 = vmatpush1.xpose.msra.mxu0 0.0
      %2942 = vmatprep.subr.mxu0 0.0
      %2943 = vmatpush1.xpose.msra.mxu0 0.0
      %2944 = vmatprep.subr.mxu0 0.0
      %2945 = vmatpush1.xpose.msra.mxu0 0.0
      %2946 = vmatprep.subr.mxu0 0.0
      %2947 = vmatpush1.xpose.msra.mxu0 0.0
      %2948 = vmatprep.subr.mxu0 0.0
      %2949 = vmatpush1.xpose.msra.mxu0 0.0
      %2950 = vmatprep.subr.mxu0 0.0
      %2951 = vmatpush1.xpose.msra.mxu0 0.0
      %2952 = vmatprep.subr.mxu0 0.0
      %2953 = vmatpush1.xpose.msra.mxu0 0.0
      %2954 = vmatprep.subr.mxu0 0.0
      %2955 = vmatpush1.xpose.msra.mxu0 0.0
      %2956 = vmatprep.subr.mxu0 0.0
      %2957 = vmatpush1.xpose.msra.mxu0 0.0
      %2958 = vmatprep.subr.mxu0 0.0
      %2959 = vmatpush1.xpose.msra.mxu0 0.0
      %2960 = vmatprep.subr.mxu0 0.0
      %2961 = vmatpush1.xpose.msra.mxu0 0.0
      %2962 = vmatprep.subr.mxu0 0.0
      %2963 = vmatpush1.xpose.msra.mxu0 0.0
      %2964 = vmatprep.subr.mxu0 0.0
      %2965 = vmatpush1.xpose.msra.mxu0 0.0
      %2966 = vmatprep.subr.mxu0 0.0
      %2967 = vmatpush1.xpose.msra.mxu0 0.0
      %2968 = vmatprep.subr.mxu0 0.0
      %2969 = vmatpush1.xpose.msra.mxu0 0.0
      %2970 = vmatprep.subr.mxu0 0.0
      %2971 = vmatpush1.xpose.msra.mxu0 0.0
      %2972 = vmatprep.subr.mxu0 0.0
      %2973 = vmatpush1.xpose.msra.mxu0 0.0
      %2974 = vmatprep.subr.mxu0 0.0
      %2975 = vmatpush1.xpose.msra.mxu0 0.0
      %2976 = vmatprep.subr.mxu0 0.0
      %2977 = vmatpush1.xpose.msra.mxu0 0.0
      %2978 = vmatprep.subr.mxu0 0.0
      %2979 = vmatpush1.xpose.msra.mxu0 0.0
      %2980 = vmatprep.subr.mxu0 0.0
      %2981 = vmatpush1.xpose.msra.mxu0 0.0
      %2982 = vmatprep.subr.mxu0 0.0
      %2983 = vmatpush1.xpose.msra.mxu0 0.0
      %2984 = vmatprep.subr.mxu0 0.0
      %2985 = vmatpush1.xpose.msra.mxu0 0.0
      %2986 = vmatprep.mubr.f32.mxu0 0.0
      %2987 = vmatmul.mubr.f32.gmra.mrb[0].mxu0 %v2886
      %v2988 = vpop.f32.mrb[0].mxu0
      %v2989 = vadd.f32 %v1091, %v2988
      %v2990 = vpop.f32.mrb[0].mxu0
      %2991 = vmatprep.mubr.f32.mxu0 0.0
      %2992 = vmatmul.mubr.f32.gmra.mrb[0].mxu0 %v2888
      %v2993 = vpop.f32.mrb[0].mxu0
      %v2994 = vadd.f32 %v1091, %v2993
      %v2995 = vpop.f32.mrb[0].mxu0
      %2996 = vmatprep.mubr.f32.mxu0 0.0
      %2997 = vmatmul.mubr.f32.gmra.mrb[0].mxu0 %v2890
      %v2998 = vpop.f32.mrb[0].mxu0
      %v2999 = vadd.f32 %v1091, %v2998
      %v3000 = vpop.f32.mrb[0].mxu0
      %3001 = vmatprep.mubr.f32.mxu0 0.0
      %3002 = vmatmul.mubr.f32.gmra.mrb[0].mxu0 %v2892
      %v3003 = vpop.f32.mrb[0].mxu0
      %v3004 = vadd.f32 %v1091, %v3003
      %v3005 = vpop.f32.mrb[0].mxu0
      %3006 = vmatprep.mubr.f32.mxu0 0.0
      %3007 = vmatmul.mubr.f32.gmra.mrb[0].mxu0 %v2894
      %v3008 = vpop.f32.mrb[0].mxu0
      %v3009 = vadd.f32 %v1091, %v3008
      %v3010 = vpop.f32.mrb[0].mxu0
      %3011 = vmatprep.mubr.f32.mxu0 0.0
      %3012 = vmatmul.mubr.f32.gmra.mrb[0].mxu0 %v2896
      %v3013 = vpop.f32.mrb[0].mxu0
      %v3014 = vadd.f32 %v1091, %v3013
      %v3015 = vpop.f32.mrb[0].mxu0
      %3016 = vmatprep.mubr.f32.mxu0 0.0
      %3017 = vmatmul.mubr.f32.gmra.mrb[0].mxu0 %v2898
      %v3018 = vpop.f32.mrb[0].mxu0
      %v3019 = vadd.f32 %v1091, %v3018
      %v3020 = vpop.f32.mrb[0].mxu0
      %3021 = vmatprep.mubr.f32.mxu0 0.0
      %3022 = vmatmul.mubr.f32.gmra.mrb[0].mxu0 %v2900
      %v3023 = vpop.f32.mrb[0].mxu0
      %v3024 = vadd.f32 %v1091, %v3023
      %v3025 = vpop.f32.mrb[0].mxu0
      %3026 = vmatprep.mubr.f32.mxu0 0.0
      %3027 = vmatmul.mubr.f32.gmra.mrb[0].mxu0 %v2902
      %v3028 = vpop.f32.mrb[0].mxu0
      %v3029 = vadd.f32 %v1091, %v3028
      %v3030 = vpop.f32.mrb[0].mxu0
      %3031 = vdwg.mxu0
      %v3032 = vsel %vm1267, %v2989, -inf
      %3033 = vmax.xlane.f32.xlu0 %v3032
      %v3034 = vpop.xlane.xlu0 %3033
      %v3035 = vsel %vm1267, %v2994, -inf
      %3036 = vmax.xlane.f32.xlu0 %v3035
      %v3037 = vpop.xlane.xlu0 %3036
      %v3038 = vsel %vm1267, %v2999, -inf
      %3039 = vmax.xlane.f32.xlu0 %v3038
      %v3040 = vpop.xlane.xlu0 %3039
      %v3041 = vsel %vm1267, %v3004, -inf
      %3042 = vmax.xlane.f32.xlu0 %v3041
      %v3043 = vpop.xlane.xlu0 %3042
      %v3044 = vsel %vm1267, %v3009, -inf
      %3045 = vmax.xlane.f32.xlu0 %v3044
      %v3046 = vpop.xlane.xlu0 %3045
      %v3047 = vsel %vm1267, %v3014, -inf
      %3048 = vmax.xlane.f32.xlu0 %v3047
      %v3049 = vpop.xlane.xlu0 %3048
      %v3050 = vsel %vm1267, %v3019, -inf
      %3051 = vmax.xlane.f32.xlu0 %v3050
      %v3052 = vpop.xlane.xlu0 %3051
      %v3053 = vsel %vm1267, %v3024, -inf
      %3054 = vmax.xlane.f32.xlu0 %v3053
      %v3055 = vpop.xlane.xlu0 %3054
      %v3056 = vsel %vm1267, %v3029, -inf
      %3057 = vmax.xlane.f32.xlu0 %v3056
      %v3058 = vpop.xlane.xlu0 %3057
      %v3059 = vsub.f32 %v2989, %v3034
      %v3060 = vsub.f32 %v2994, %v3037
      %v3061 = vsub.f32 %v2999, %v3040
      %v3062 = vsub.f32 %v3004, %v3043
      %v3063 = vsub.f32 %v3009, %v3046
      %v3064 = vsub.f32 %v3014, %v3049
      %v3065 = vsub.f32 %v3019, %v3052
      %v3066 = vsub.f32 %v3024, %v3055
      %v3067 = vsub.f32 %v3029, %v3058
      %v3068 = vmul.f32 %v3059, 1.442695
      %v3069 = vpow.pop %v3068
      %v3070 = vmul.f32 %v3060, 1.442695
      %v3071 = vpow.pop %v3070
      %v3072 = vmul.f32 %v3061, 1.442695
      %v3073 = vpow.pop %v3072
      %v3074 = vmul.f32 %v3062, 1.442695
      %v3075 = vpow.pop %v3074
      %v3076 = vmul.f32 %v3063, 1.442695
      %v3077 = vpow.pop %v3076
      %v3078 = vmul.f32 %v3064, 1.442695
      %v3079 = vpow.pop %v3078
      %v3080 = vmul.f32 %v3065, 1.442695
      %v3081 = vpow.pop %v3080
      %v3082 = vmul.f32 %v3066, 1.442695
      %v3083 = vpow.pop %v3082
      %v3084 = vmul.f32 %v3067, 1.442695
      %v3085 = vpow.pop %v3084
      %v3086 = vsel %vm1267, %v3069, 0.0
      %3087 = vadd.xlane.f32.xlu0 %v3086
      %v3088 = vpop.xlane.xlu0 %3087
      %v3089 = vsel %vm1267, %v3071, 0.0
      %3090 = vadd.xlane.f32.xlu0 %v3089
      %v3091 = vpop.xlane.xlu0 %3090
      %v3092 = vsel %vm1267, %v3073, 0.0
      %3093 = vadd.xlane.f32.xlu0 %v3092
      %v3094 = vpop.xlane.xlu0 %3093
      %v3095 = vsel %vm1267, %v3075, 0.0
      %3096 = vadd.xlane.f32.xlu0 %v3095
      %v3097 = vpop.xlane.xlu0 %3096
      %v3098 = vsel %vm1267, %v3077, 0.0
      %3099 = vadd.xlane.f32.xlu0 %v3098
      %v3100 = vpop.xlane.xlu0 %3099
      %v3101 = vsel %vm1267, %v3079, 0.0
      %3102 = vadd.xlane.f32.xlu0 %v3101
      %v3103 = vpop.xlane.xlu0 %3102
      %v3104 = vsel %vm1267, %v3081, 0.0
      %3105 = vadd.xlane.f32.xlu0 %v3104
      %v3106 = vpop.xlane.xlu0 %3105
      %v3107 = vsel %vm1267, %v3083, 0.0
      %3108 = vadd.xlane.f32.xlu0 %v3107
      %v3109 = vpop.xlane.xlu0 %3108
      %v3110 = vsel %vm1267, %v3085, 0.0
      %3111 = vadd.xlane.f32.xlu0 %v3110
      %v3112 = vpop.xlane.xlu0 %3111
      %v3113 = vrcp.pop %v3088
      %v3114 = vrcp.pop %v3091
      %v3115 = vrcp.pop %v3094
      %v3116 = vrcp.pop %v3097
      %v3117 = vrcp.pop %v3100
      %v3118 = vrcp.pop %v3103
      %v3119 = vrcp.pop %v3106
      %v3120 = vrcp.pop %v3109
      %v3121 = vrcp.pop %v3112
      %3122 = vrot.lane.b32.xlu0 %v1039, 40
      %v3123 = vpop.permute.xlu0 %3122
      %3124 = vrot.lane.b32.xlu0 %v1044, 40
      %v3125 = vpop.permute.xlu0 %3124
      %3126 = vrot.lane.b32.xlu0 %v1049, 40
      %v3127 = vpop.permute.xlu0 %3126
      %3128 = vrot.lane.b32.xlu0 %v1054, 40
      %v3129 = vpop.permute.xlu0 %3128
      %3130 = vrot.lane.b32.xlu0 %v1059, 40
      %v3131 = vpop.permute.xlu0 %3130
      %3132 = vrot.lane.b32.xlu0 %v1064, 40
      %v3133 = vpop.permute.xlu0 %3132
      %3134 = vrot.lane.b32.xlu0 %v1069, 40
      %v3135 = vpop.permute.xlu0 %3134
      %3136 = vrot.lane.b32.xlu0 %v1074, 40
      %v3137 = vpop.permute.xlu0 %3136
      %3138 = vrot.lane.b32.xlu0 %v1079, 40
      %v3139 = vpop.permute.xlu0 %3138
      %v3150 = vsel %vm1267, %v3069, 0
      %v3153 = vsel %vm1267, %v3071, 0
      %v3156 = vsel %vm1267, %v3073, 0
      %v3159 = vsel %vm1267, %v3075, 0
      %v3162 = vsel %vm1267, %v3077, 0
      %v3165 = vsel %vm1267, %v3079, 0
      %v3168 = vsel %vm1267, %v3081, 0
      %v3171 = vsel %vm1267, %v3083, 0
      %v3174 = vsel %vm1267, %v3085, 0
      %3176 = vmatprep.subr.mxu0 0.0
      %3177 = vmatpush1.msra.mxu0 %v3123
      %3178 = vmatprep.subr.mxu0 0.0
      %3179 = vmatpush1.msra.mxu0 %v3125
      %3180 = vmatprep.subr.mxu0 0.0
      %3181 = vmatpush1.msra.mxu0 %v3127
      %3182 = vmatprep.subr.mxu0 0.0
      %3183 = vmatpush1.msra.mxu0 %v3129
      %3184 = vmatprep.subr.mxu0 0.0
      %3185 = vmatpush1.msra.mxu0 %v3131
      %3186 = vmatprep.subr.mxu0 0.0
      %3187 = vmatpush1.msra.mxu0 %v3133
      %3188 = vmatprep.subr.mxu0 0.0
      %3189 = vmatpush1.msra.mxu0 %v3135
      %3190 = vmatprep.subr.mxu0 0.0
      %3191 = vmatpush1.msra.mxu0 %v3137
      %3192 = vmatprep.subr.mxu0 0.0
      %3193 = vmatpush1.msra.mxu0 %v3139
      %3194 = vmatprep.subr.mxu0 0.0
      %3195 = vmatpush1.msra.mxu0 0.0
      %3196 = vmatprep.subr.mxu0 0.0
      %3197 = vmatpush1.msra.mxu0 0.0
      %3198 = vmatprep.subr.mxu0 0.0
      %3199 = vmatpush1.msra.mxu0 0.0
      %3200 = vmatprep.subr.mxu0 0.0
      %3201 = vmatpush1.msra.mxu0 0.0
      %3202 = vmatprep.subr.mxu0 0.0
      %3203 = vmatpush1.msra.mxu0 0.0
      %3204 = vmatprep.subr.mxu0 0.0
      %3205 = vmatpush1.msra.mxu0 0.0
      %3206 = vmatprep.subr.mxu0 0.0
      %3207 = vmatpush1.msra.mxu0 0.0
      %3208 = vmatprep.subr.mxu0 0.0
      %3209 = vmatpush1.msra.mxu0 0.0
      %3210 = vmatprep.subr.mxu0 0.0
      %3211 = vmatpush1.msra.mxu0 0.0
      %3212 = vmatprep.subr.mxu0 0.0
      %3213 = vmatpush1.msra.mxu0 0.0
      %3214 = vmatprep.subr.mxu0 0.0
      %3215 = vmatpush1.msra.mxu0 0.0
      %3216 = vmatprep.subr.mxu0 0.0
      %3217 = vmatpush1.msra.mxu0 0.0
      %3218 = vmatprep.subr.mxu0 0.0
      %3219 = vmatpush1.msra.mxu0 0.0
      %3220 = vmatprep.subr.mxu0 0.0
      %3221 = vmatpush1.msra.mxu0 0.0
      %3222 = vmatprep.subr.mxu0 0.0
      %3223 = vmatpush1.msra.mxu0 0.0
      %3224 = vmatprep.subr.mxu0 0.0
      %3225 = vmatpush1.msra.mxu0 0.0
      %3226 = vmatprep.subr.mxu0 0.0
      %3227 = vmatpush1.msra.mxu0 0.0
      %3228 = vmatprep.subr.mxu0 0.0
      %3229 = vmatpush1.msra.mxu0 0.0
      %3230 = vmatprep.subr.mxu0 0.0
      %3231 = vmatpush1.msra.mxu0 0.0
      %3232 = vmatprep.subr.mxu0 0.0
      %3233 = vmatpush1.msra.mxu0 0.0
      %3234 = vmatprep.subr.mxu0 0.0
      %3235 = vmatpush1.msra.mxu0 0.0
      %3236 = vmatprep.subr.mxu0 0.0
      %3237 = vmatpush1.msra.mxu0 0.0
      %3238 = vmatprep.subr.mxu0 0.0
      %3239 = vmatpush1.msra.mxu0 0.0
      %3240 = vmatprep.mubr.f32.mxu0 0.0
      %3241 = vmatmul.mubr.f32.gmra.mrb[0].mxu0 %v3150
      %v3242 = vpop.f32.mrb[0].mxu0
      %v3243 = vadd.f32 0.0, %v3242
      %v3244 = vpop.f32.mrb[0].mxu0
      %3245 = vmatprep.mubr.f32.mxu0 0.0
      %3246 = vmatmul.mubr.f32.gmra.mrb[0].mxu0 %v3153
      %v3247 = vpop.f32.mrb[0].mxu0
      %v3248 = vadd.f32 0.0, %v3247
      %v3249 = vpop.f32.mrb[0].mxu0
      %3250 = vmatprep.mubr.f32.mxu0 0.0
      %3251 = vmatmul.mubr.f32.gmra.mrb[0].mxu0 %v3156
      %v3252 = vpop.f32.mrb[0].mxu0
      %v3253 = vadd.f32 0.0, %v3252
      %v3254 = vpop.f32.mrb[0].mxu0
      %3255 = vmatprep.mubr.f32.mxu0 0.0
      %3256 = vmatmul.mubr.f32.gmra.mrb[0].mxu0 %v3159
      %v3257 = vpop.f32.mrb[0].mxu0
      %v3258 = vadd.f32 0.0, %v3257
      %v3259 = vpop.f32.mrb[0].mxu0
      %3260 = vmatprep.mubr.f32.mxu0 0.0
      %3261 = vmatmul.mubr.f32.gmra.mrb[0].mxu0 %v3162
      %v3262 = vpop.f32.mrb[0].mxu0
      %v3263 = vadd.f32 0.0, %v3262
      %v3264 = vpop.f32.mrb[0].mxu0
      %3265 = vmatprep.mubr.f32.mxu0 0.0
      %3266 = vmatmul.mubr.f32.gmra.mrb[0].mxu0 %v3165
      %v3267 = vpop.f32.mrb[0].mxu0
      %v3268 = vadd.f32 0.0, %v3267
      %v3269 = vpop.f32.mrb[0].mxu0
      %3270 = vmatprep.mubr.f32.mxu0 0.0
      %3271 = vmatmul.mubr.f32.gmra.mrb[0].mxu0 %v3168
      %v3272 = vpop.f32.mrb[0].mxu0
      %v3273 = vadd.f32 0.0, %v3272
      %v3274 = vpop.f32.mrb[0].mxu0
      %3275 = vmatprep.mubr.f32.mxu0 0.0
      %3276 = vmatmul.mubr.f32.gmra.mrb[0].mxu0 %v3171
      %v3277 = vpop.f32.mrb[0].mxu0
      %v3278 = vadd.f32 0.0, %v3277
      %v3279 = vpop.f32.mrb[0].mxu0
      %3280 = vmatprep.mubr.f32.mxu0 0.0
      %3281 = vmatmul.mubr.f32.gmra.mrb[0].mxu0 %v3174
      %v3282 = vpop.f32.mrb[0].mxu0
      %v3283 = vadd.f32 0.0, %v3282
      %v3284 = vpop.f32.mrb[0].mxu0
      %3285 = vdwg.mxu0
      %v3286 = vmul.f32 %v3243, %v3113
      %v3287 = vmul.f32 %v3248, %v3114
      %v3288 = vmul.f32 %v3253, %v3115
      %v3289 = vmul.f32 %v3258, %v3116
      %v3290 = vmul.f32 %v3263, %v3117
      %v3291 = vmul.f32 %v3268, %v3118
      %v3292 = vmul.f32 %v3273, %v3119
      %v3293 = vmul.f32 %v3278, %v3120
      %v3294 = vmul.f32 %v3283, %v3121
      %v3296 = vsel %vm1120, %v3286, 0
      %v3299 = vsel %vm1120, %v3287, 0
      %v3302 = vsel %vm1120, %v3288, 0
      %v3305 = vsel %vm1120, %v3289, 0
      %v3308 = vsel %vm1120, %v3290, 0
      %v3311 = vsel %vm1120, %v3291, 0
      %v3314 = vsel %vm1120, %v3292, 0
      %v3317 = vsel %vm1120, %v3293, 0
      %v3320 = vsel %vm1120, %v3294, 0
      %3322 = vmatprep.subr.mxu0 0.0
      %3323 = vmatpush1.msra.mxu0 %v1085
      %3324 = vmatprep.subr.mxu0 0.0
      %3325 = vmatpush1.msra.mxu0 0.0
      %3326 = vmatprep.subr.mxu0 0.0
      %3327 = vmatpush1.msra.mxu0 0.0
      %3328 = vmatprep.subr.mxu0 0.0
      %3329 = vmatpush1.msra.mxu0 0.0
      %3330 = vmatprep.subr.mxu0 0.0
      %3331 = vmatpush1.msra.mxu0 0.0
      %3332 = vmatprep.subr.mxu0 0.0
      %3333 = vmatpush1.msra.mxu0 0.0
      %3334 = vmatprep.subr.mxu0 0.0
      %3335 = vmatpush1.msra.mxu0 0.0
      %3336 = vmatprep.subr.mxu0 0.0
      %3337 = vmatpush1.msra.mxu0 0.0
      %3338 = vmatprep.subr.mxu0 0.0
      %3339 = vmatpush1.msra.mxu0 0.0
      %3340 = vmatprep.subr.mxu0 0.0
      %3341 = vmatpush1.msra.mxu0 0.0
      %3342 = vmatprep.subr.mxu0 0.0
      %3343 = vmatpush1.msra.mxu0 0.0
      %3344 = vmatprep.subr.mxu0 0.0
      %3345 = vmatpush1.msra.mxu0 0.0
      %3346 = vmatprep.subr.mxu0 0.0
      %3347 = vmatpush1.msra.mxu0 0.0
      %3348 = vmatprep.subr.mxu0 0.0
      %3349 = vmatpush1.msra.mxu0 0.0
      %3350 = vmatprep.subr.mxu0 0.0
      %3351 = vmatpush1.msra.mxu0 0.0
      %3352 = vmatprep.subr.mxu0 0.0
      %3353 = vmatpush1.msra.mxu0 0.0
      %3354 = vmatprep.subr.mxu0 0.0
      %3355 = vmatpush1.msra.mxu0 0.0
      %3356 = vmatprep.subr.mxu0 0.0
      %3357 = vmatpush1.msra.mxu0 0.0
      %3358 = vmatprep.subr.mxu0 0.0
      %3359 = vmatpush1.msra.mxu0 0.0
      %3360 = vmatprep.subr.mxu0 0.0
      %3361 = vmatpush1.msra.mxu0 0.0
      %3362 = vmatprep.subr.mxu0 0.0
      %3363 = vmatpush1.msra.mxu0 0.0
      %3364 = vmatprep.subr.mxu0 0.0
      %3365 = vmatpush1.msra.mxu0 0.0
      %3366 = vmatprep.subr.mxu0 0.0
      %3367 = vmatpush1.msra.mxu0 0.0
      %3368 = vmatprep.subr.mxu0 0.0
      %3369 = vmatpush1.msra.mxu0 0.0
      %3370 = vmatprep.subr.mxu0 0.0
      %3371 = vmatpush1.msra.mxu0 0.0
      %3372 = vmatprep.subr.mxu0 0.0
      %3373 = vmatpush1.msra.mxu0 0.0
      %3374 = vmatprep.subr.mxu0 0.0
      %3375 = vmatpush1.msra.mxu0 0.0
      %3376 = vmatprep.subr.mxu0 0.0
      %3377 = vmatpush1.msra.mxu0 0.0
      %3378 = vmatprep.subr.mxu0 0.0
      %3379 = vmatpush1.msra.mxu0 0.0
      %3380 = vmatprep.subr.mxu0 0.0
      %3381 = vmatpush1.msra.mxu0 0.0
      %3382 = vmatprep.subr.mxu0 0.0
      %3383 = vmatpush1.msra.mxu0 0.0
      %3384 = vmatprep.subr.mxu0 0.0
      %3385 = vmatpush1.msra.mxu0 0.0
      %3386 = vmatprep.mubr.f32.mxu0 0.0
      %3387 = vmatmul.mubr.f32.gmra.mrb[0].mxu0 %v3296
      %v3388 = vpop.f32.mrb[0].mxu0
      %v3389 = vadd.f32 0.0, %v3388
      %v3390 = vpop.f32.mrb[0].mxu0
      %3391 = vmatprep.mubr.f32.mxu0 0.0
      %3392 = vmatmul.mubr.f32.gmra.mrb[0].mxu0 %v3299
      %v3393 = vpop.f32.mrb[0].mxu0
      %v3394 = vadd.f32 0.0, %v3393
      %v3395 = vpop.f32.mrb[0].mxu0
      %3396 = vmatprep.mubr.f32.mxu0 0.0
      %3397 = vmatmul.mubr.f32.gmra.mrb[0].mxu0 %v3302
      %v3398 = vpop.f32.mrb[0].mxu0
      %v3399 = vadd.f32 0.0, %v3398
      %v3400 = vpop.f32.mrb[0].mxu0
      %3401 = vmatprep.mubr.f32.mxu0 0.0
      %3402 = vmatmul.mubr.f32.gmra.mrb[0].mxu0 %v3305
      %v3403 = vpop.f32.mrb[0].mxu0
      %v3404 = vadd.f32 0.0, %v3403
      %v3405 = vpop.f32.mrb[0].mxu0
      %3406 = vmatprep.mubr.f32.mxu0 0.0
      %3407 = vmatmul.mubr.f32.gmra.mrb[0].mxu0 %v3308
      %v3408 = vpop.f32.mrb[0].mxu0
      %v3409 = vadd.f32 0.0, %v3408
      %v3410 = vpop.f32.mrb[0].mxu0
      %3411 = vmatprep.mubr.f32.mxu0 0.0
      %3412 = vmatmul.mubr.f32.gmra.mrb[0].mxu0 %v3311
      %v3413 = vpop.f32.mrb[0].mxu0
      %v3414 = vadd.f32 0.0, %v3413
      %v3415 = vpop.f32.mrb[0].mxu0
      %3416 = vmatprep.mubr.f32.mxu0 0.0
      %3417 = vmatmul.mubr.f32.gmra.mrb[0].mxu0 %v3314
      %v3418 = vpop.f32.mrb[0].mxu0
      %v3419 = vadd.f32 0.0, %v3418
      %v3420 = vpop.f32.mrb[0].mxu0
      %3421 = vmatprep.mubr.f32.mxu0 0.0
      %3422 = vmatmul.mubr.f32.gmra.mrb[0].mxu0 %v3317
      %v3423 = vpop.f32.mrb[0].mxu0
      %v3424 = vadd.f32 0.0, %v3423
      %v3425 = vpop.f32.mrb[0].mxu0
      %3426 = vmatprep.mubr.f32.mxu0 0.0
      %3427 = vmatmul.mubr.f32.gmra.mrb[0].mxu0 %v3320
      %v3428 = vpop.f32.mrb[0].mxu0
      %v3429 = vadd.f32 0.0, %v3428
      %v3430 = vpop.f32.mrb[0].mxu0
      %3431 = vdwg.mxu0
      %v3432 = vadd.f32 %v2841, %v3389
      %v3433 = vadd.f32 %v2842, %v3394
      %v3434 = vadd.f32 %v2843, %v3399
      %v3435 = vadd.f32 %v2844, %v3404
      %v3436 = vadd.f32 %v2845, %v3409
      %v3437 = vadd.f32 %v2846, %v3414
      %v3438 = vadd.f32 %v2847, %v3419
      %v3439 = vadd.f32 %v2848, %v3424
      %v3440 = vadd.f32 %v2849, %v3429
      %v3441 = vadd.f32 %v841, %v3432
      %v3442 = vadd.f32 %v842, %v3433
      %v3443 = vadd.f32 %v843, %v3434
      %v3444 = vadd.f32 %v844, %v3435
      %v3445 = vadd.f32 %v845, %v3436
      %v3446 = vadd.f32 %v846, %v3437
      %v3447 = vadd.f32 %v847, %v3438
      %v3448 = vadd.f32 %v848, %v3439
      %v3449 = vadd.f32 %v839, %v3440
      %v3450 = vld [vmem:[%s11] sm:$0x1]
      %v3452 = vlaneseq
      %v3453 = vshrl.u32 %v3452, 7
      %v3454 = vsub.s32 0, %v3453
      %v3455 = vrot.slane %v3450, %v3454
      %v3457 = vadd.f32 %v3441, %v3455
      %v3458 = vadd.f32 %v3442, %v3455
      %v3459 = vadd.f32 %v3443, %v3455
      %v3460 = vadd.f32 %v3444, %v3455
      %v3461 = vadd.f32 %v3445, %v3455
      %v3462 = vadd.f32 %v3446, %v3455
      %v3463 = vadd.f32 %v3447, %v3455
      %v3464 = vadd.f32 %v3448, %v3455
      %v3465 = vadd.f32 %v3449, %v3455
      %v3466 = vld [vmem:[%s12] sm:$0x1]
      %v3467 = vld [vmem:[%s13] sm:$0x1]
      %v3468 = vsel %vm809, %v3457, 0.0
      %3469 = vadd.xlane.f32.xlu0 %v3468
      %v3470 = vpop.xlane.xlu0 %3469
      %v3471 = vsel %vm809, %v3458, 0.0
      %3472 = vadd.xlane.f32.xlu0 %v3471
      %v3473 = vpop.xlane.xlu0 %3472
      %v3474 = vsel %vm809, %v3459, 0.0
      %3475 = vadd.xlane.f32.xlu0 %v3474
      %v3476 = vpop.xlane.xlu0 %3475
      %v3477 = vsel %vm809, %v3460, 0.0
      %3478 = vadd.xlane.f32.xlu0 %v3477
      %v3479 = vpop.xlane.xlu0 %3478
      %v3480 = vsel %vm809, %v3461, 0.0
      %3481 = vadd.xlane.f32.xlu0 %v3480
      %v3482 = vpop.xlane.xlu0 %3481
      %v3483 = vsel %vm809, %v3462, 0.0
      %3484 = vadd.xlane.f32.xlu0 %v3483
      %v3485 = vpop.xlane.xlu0 %3484
      %v3486 = vsel %vm809, %v3463, 0.0
      %3487 = vadd.xlane.f32.xlu0 %v3486
      %v3488 = vpop.xlane.xlu0 %3487
      %v3489 = vsel %vm809, %v3464, 0.0
      %3490 = vadd.xlane.f32.xlu0 %v3489
      %v3491 = vpop.xlane.xlu0 %3490
      %v3492 = vsel %vm809, %v3465, 0.0
      %3493 = vadd.xlane.f32.xlu0 %v3492
      %v3494 = vpop.xlane.xlu0 %3493
      %v3495 = vmul.f32 %v3470, %v813
      %v3496 = vmul.f32 %v3473, %v813
      %v3497 = vmul.f32 %v3476, %v813
      %v3498 = vmul.f32 %v3479, %v813
      %v3499 = vmul.f32 %v3482, %v813
      %v3500 = vmul.f32 %v3485, %v813
      %v3501 = vmul.f32 %v3488, %v813
      %v3502 = vmul.f32 %v3491, %v813
      %v3503 = vmul.f32 %v3494, %v813
      %v3504 = vmul.f32 %v3457, %v3457
      %v3505 = vmul.f32 %v3458, %v3458
      %v3506 = vmul.f32 %v3459, %v3459
      %v3507 = vmul.f32 %v3460, %v3460
      %v3508 = vmul.f32 %v3461, %v3461
      %v3509 = vmul.f32 %v3462, %v3462
      %v3510 = vmul.f32 %v3463, %v3463
      %v3511 = vmul.f32 %v3464, %v3464
      %v3512 = vmul.f32 %v3465, %v3465
      %v3513 = vsel %vm809, %v3504, 0.0
      %3514 = vadd.xlane.f32.xlu0 %v3513
      %v3515 = vpop.xlane.xlu0 %3514
      %v3516 = vsel %vm809, %v3505, 0.0
      %3517 = vadd.xlane.f32.xlu0 %v3516
      %v3518 = vpop.xlane.xlu0 %3517
      %v3519 = vsel %vm809, %v3506, 0.0
      %3520 = vadd.xlane.f32.xlu0 %v3519
      %v3521 = vpop.xlane.xlu0 %3520
      %v3522 = vsel %vm809, %v3507, 0.0
      %3523 = vadd.xlane.f32.xlu0 %v3522
      %v3524 = vpop.xlane.xlu0 %3523
      %v3525 = vsel %vm809, %v3508, 0.0
      %3526 = vadd.xlane.f32.xlu0 %v3525
      %v3527 = vpop.xlane.xlu0 %3526
      %v3528 = vsel %vm809, %v3509, 0.0
      %3529 = vadd.xlane.f32.xlu0 %v3528
      %v3530 = vpop.xlane.xlu0 %3529
      %v3531 = vsel %vm809, %v3510, 0.0
      %3532 = vadd.xlane.f32.xlu0 %v3531
      %v3533 = vpop.xlane.xlu0 %3532
      %v3534 = vsel %vm809, %v3511, 0.0
      %3535 = vadd.xlane.f32.xlu0 %v3534
      %v3536 = vpop.xlane.xlu0 %3535
      %v3537 = vsel %vm809, %v3512, 0.0
      %3538 = vadd.xlane.f32.xlu0 %v3537
      %v3539 = vpop.xlane.xlu0 %3538
      %v3540 = vmul.f32 %v3515, %v813
      %v3541 = vmul.f32 %v3518, %v813
      %v3542 = vmul.f32 %v3521, %v813
      %v3543 = vmul.f32 %v3524, %v813
      %v3544 = vmul.f32 %v3527, %v813
      %v3545 = vmul.f32 %v3530, %v813
      %v3546 = vmul.f32 %v3533, %v813
      %v3547 = vmul.f32 %v3536, %v813
      %v3548 = vmul.f32 %v3539, %v813
      %v3549 = vmul.f32 %v3495, %v3495
      %v3550 = vmul.f32 %v3496, %v3496
      %v3551 = vmul.f32 %v3497, %v3497
      %v3552 = vmul.f32 %v3498, %v3498
      %v3553 = vmul.f32 %v3499, %v3499
      %v3554 = vmul.f32 %v3500, %v3500
      %v3555 = vmul.f32 %v3501, %v3501
      %v3556 = vmul.f32 %v3502, %v3502
      %v3557 = vmul.f32 %v3503, %v3503
      %v3558 = vsub.f32 %v3540, %v3549
      %v3559 = vsub.f32 %v3541, %v3550
      %v3560 = vsub.f32 %v3542, %v3551
      %v3561 = vsub.f32 %v3543, %v3552
      %v3562 = vsub.f32 %v3544, %v3553
      %v3563 = vsub.f32 %v3545, %v3554
      %v3564 = vsub.f32 %v3546, %v3555
      %v3565 = vsub.f32 %v3547, %v3556
      %v3566 = vsub.f32 %v3548, %v3557
      %v3567 = vsub.f32 %v3457, %v3495
      %v3568 = vsub.f32 %v3458, %v3496
      %v3569 = vsub.f32 %v3459, %v3497
      %v3570 = vsub.f32 %v3460, %v3498
      %v3571 = vsub.f32 %v3461, %v3499
      %v3572 = vsub.f32 %v3462, %v3500
      %v3573 = vsub.f32 %v3463, %v3501
      %v3574 = vsub.f32 %v3464, %v3502
      %v3575 = vsub.f32 %v3465, %v3503
      %v3576 = vadd.f32 %v3558, 1e-05
      %v3577 = vadd.f32 %v3559, 1e-05
      %v3578 = vadd.f32 %v3560, 1e-05
      %v3579 = vadd.f32 %v3561, 1e-05
      %v3580 = vadd.f32 %v3562, 1e-05
      %v3581 = vadd.f32 %v3563, 1e-05
      %v3582 = vadd.f32 %v3564, 1e-05
      %v3583 = vadd.f32 %v3565, 1e-05
      %v3584 = vadd.f32 %v3566, 1e-05
      %v3585 = vrsqrt.pop %v3576
      %v3586 = vrsqrt.pop %v3577
      %v3587 = vrsqrt.pop %v3578
      %v3588 = vrsqrt.pop %v3579
      %v3589 = vrsqrt.pop %v3580
      %v3590 = vrsqrt.pop %v3581
      %v3591 = vrsqrt.pop %v3582
      %v3592 = vrsqrt.pop %v3583
      %v3593 = vrsqrt.pop %v3584
      %v3594 = vmul.f32 %v3567, %v3585
      %v3595 = vmul.f32 %v3568, %v3586
      %v3596 = vmul.f32 %v3569, %v3587
      %v3597 = vmul.f32 %v3570, %v3588
      %v3598 = vmul.f32 %v3571, %v3589
      %v3599 = vmul.f32 %v3572, %v3590
      %v3600 = vmul.f32 %v3573, %v3591
      %v3601 = vmul.f32 %v3574, %v3592
      %v3602 = vmul.f32 %v3575, %v3593
      %v3604 = vlaneseq
      %v3605 = vshrl.u32 %v3604, 7
      %v3606 = vsub.s32 0, %v3605
      %v3607 = vrot.slane %v3466, %v3606
      %v3609 = vmul.f32 %v3594, %v3607
      %v3610 = vmul.f32 %v3595, %v3607
      %v3611 = vmul.f32 %v3596, %v3607
      %v3612 = vmul.f32 %v3597, %v3607
      %v3613 = vmul.f32 %v3598, %v3607
      %v3614 = vmul.f32 %v3599, %v3607
      %v3615 = vmul.f32 %v3600, %v3607
      %v3616 = vmul.f32 %v3601, %v3607
      %v3617 = vmul.f32 %v3602, %v3607
      %v3619 = vlaneseq
      %v3620 = vshrl.u32 %v3619, 7
      %v3621 = vsub.s32 0, %v3620
      %v3622 = vrot.slane %v3467, %v3621
      %v3624 = vadd.f32 %v3609, %v3622
      %v3625 = vadd.f32 %v3610, %v3622
      %v3626 = vadd.f32 %v3611, %v3622
      %v3627 = vadd.f32 %v3612, %v3622
      %v3628 = vadd.f32 %v3613, %v3622
      %v3629 = vadd.f32 %v3614, %v3622
      %v3630 = vadd.f32 %v3615, %v3622
      %v3631 = vadd.f32 %v3616, %v3622
      %v3632 = vadd.f32 %v3617, %v3622
      %v3633 = vld [vmem:[%s14] sm:$0xff]
      %v3634 = vld [vmem:[%s14 + $0x8] sm:$0xff]
      %v3635 = vld [vmem:[%s14 + $0x10] sm:$0xff]
      %v3636 = vld [vmem:[%s14 + $0x18] sm:$0xff]
      %v3637 = vld [vmem:[%s15] sm:$0x1]
      %v3639 = vlaneseq
      %v3640 = vshrl.u32 %v3639, 7
      %v3641 = vsub.s32 0, %v3640
      %v3642 = vrot.slane %v3637, %v3641
      %v3645 = vsel %vm809, %v3624, 0
      %v3648 = vsel %vm809, %v3625, 0
      %v3651 = vsel %vm809, %v3626, 0
      %v3654 = vsel %vm809, %v3627, 0
      %v3657 = vsel %vm809, %v3628, 0
      %v3660 = vsel %vm809, %v3629, 0
      %v3663 = vsel %vm809, %v3630, 0
      %v3666 = vsel %vm809, %v3631, 0
      %v3669 = vsel %vm809, %v3632, 0
      %3671 = vmatprep.subr.mxu0 0.0
      %3672 = vmatpush1.msra.mxu0 %v3633
      %3673 = vmatprep.subr.mxu0 0.0
      %3674 = vmatpush1.msra.mxu0 %v3634
      %3675 = vmatprep.subr.mxu0 0.0
      %3676 = vmatpush1.msra.mxu0 %v3635
      %3677 = vmatprep.subr.mxu0 0.0
      %3678 = vmatpush1.msra.mxu0 %v3636
      %3679 = vmatprep.subr.mxu0 0.0
      %3680 = vmatpush1.msra.mxu0 0.0
      %3681 = vmatprep.subr.mxu0 0.0
      %3682 = vmatpush1.msra.mxu0 0.0
      %3683 = vmatprep.subr.mxu0 0.0
      %3684 = vmatpush1.msra.mxu0 0.0
      %3685 = vmatprep.subr.mxu0 0.0
      %3686 = vmatpush1.msra.mxu0 0.0
      %3687 = vmatprep.subr.mxu0 0.0
      %3688 = vmatpush1.msra.mxu0 0.0
      %3689 = vmatprep.subr.mxu0 0.0
      %3690 = vmatpush1.msra.mxu0 0.0
      %3691 = vmatprep.subr.mxu0 0.0
      %3692 = vmatpush1.msra.mxu0 0.0
      %3693 = vmatprep.subr.mxu0 0.0
      %3694 = vmatpush1.msra.mxu0 0.0
      %3695 = vmatprep.subr.mxu0 0.0
      %3696 = vmatpush1.msra.mxu0 0.0
      %3697 = vmatprep.subr.mxu0 0.0
      %3698 = vmatpush1.msra.mxu0 0.0
      %3699 = vmatprep.subr.mxu0 0.0
      %3700 = vmatpush1.msra.mxu0 0.0
      %3701 = vmatprep.subr.mxu0 0.0
      %3702 = vmatpush1.msra.mxu0 0.0
      %3703 = vmatprep.subr.mxu0 0.0
      %3704 = vmatpush1.msra.mxu0 0.0
      %3705 = vmatprep.subr.mxu0 0.0
      %3706 = vmatpush1.msra.mxu0 0.0
      %3707 = vmatprep.subr.mxu0 0.0
      %3708 = vmatpush1.msra.mxu0 0.0
      %3709 = vmatprep.subr.mxu0 0.0
      %3710 = vmatpush1.msra.mxu0 0.0
      %3711 = vmatprep.subr.mxu0 0.0
      %3712 = vmatpush1.msra.mxu0 0.0
      %3713 = vmatprep.subr.mxu0 0.0
      %3714 = vmatpush1.msra.mxu0 0.0
      %3715 = vmatprep.subr.mxu0 0.0
      %3716 = vmatpush1.msra.mxu0 0.0
      %3717 = vmatprep.subr.mxu0 0.0
      %3718 = vmatpush1.msra.mxu0 0.0
      %3719 = vmatprep.subr.mxu0 0.0
      %3720 = vmatpush1.msra.mxu0 0.0
      %3721 = vmatprep.subr.mxu0 0.0
      %3722 = vmatpush1.msra.mxu0 0.0
      %3723 = vmatprep.subr.mxu0 0.0
      %3724 = vmatpush1.msra.mxu0 0.0
      %3725 = vmatprep.subr.mxu0 0.0
      %3726 = vmatpush1.msra.mxu0 0.0
      %3727 = vmatprep.subr.mxu0 0.0
      %3728 = vmatpush1.msra.mxu0 0.0
      %3729 = vmatprep.subr.mxu0 0.0
      %3730 = vmatpush1.msra.mxu0 0.0
      %3731 = vmatprep.subr.mxu0 0.0
      %3732 = vmatpush1.msra.mxu0 0.0
      %3733 = vmatprep.subr.mxu0 0.0
      %3734 = vmatpush1.msra.mxu0 0.0
      %3735 = vmatprep.mubr.f32.mxu0 0.0
      %3736 = vmatmul.mubr.f32.gmra.mrb[0].mxu0 %v3645
      %v3737 = vpop.f32.mrb[0].mxu0
      %v3738 = vadd.f32 %v3642, %v3737
      %v3739 = vpop.f32.mrb[0].mxu0
      %3740 = vmatprep.mubr.f32.mxu0 0.0
      %3741 = vmatmul.mubr.f32.gmra.mrb[0].mxu0 %v3648
      %v3742 = vpop.f32.mrb[0].mxu0
      %v3743 = vadd.f32 %v3642, %v3742
      %v3744 = vpop.f32.mrb[0].mxu0
      %3745 = vmatprep.mubr.f32.mxu0 0.0
      %3746 = vmatmul.mubr.f32.gmra.mrb[0].mxu0 %v3651
      %v3747 = vpop.f32.mrb[0].mxu0
      %v3748 = vadd.f32 %v3642, %v3747
      %v3749 = vpop.f32.mrb[0].mxu0
      %3750 = vmatprep.mubr.f32.mxu0 0.0
      %3751 = vmatmul.mubr.f32.gmra.mrb[0].mxu0 %v3654
      %v3752 = vpop.f32.mrb[0].mxu0
      %v3753 = vadd.f32 %v3642, %v3752
      %v3754 = vpop.f32.mrb[0].mxu0
      %3755 = vmatprep.mubr.f32.mxu0 0.0
      %3756 = vmatmul.mubr.f32.gmra.mrb[0].mxu0 %v3657
      %v3757 = vpop.f32.mrb[0].mxu0
      %v3758 = vadd.f32 %v3642, %v3757
      %v3759 = vpop.f32.mrb[0].mxu0
      %3760 = vmatprep.mubr.f32.mxu0 0.0
      %3761 = vmatmul.mubr.f32.gmra.mrb[0].mxu0 %v3660
      %v3762 = vpop.f32.mrb[0].mxu0
      %v3763 = vadd.f32 %v3642, %v3762
      %v3764 = vpop.f32.mrb[0].mxu0
      %3765 = vmatprep.mubr.f32.mxu0 0.0
      %3766 = vmatmul.mubr.f32.gmra.mrb[0].mxu0 %v3663
      %v3767 = vpop.f32.mrb[0].mxu0
      %v3768 = vadd.f32 %v3642, %v3767
      %v3769 = vpop.f32.mrb[0].mxu0
      %3770 = vmatprep.mubr.f32.mxu0 0.0
      %3771 = vmatmul.mubr.f32.gmra.mrb[0].mxu0 %v3666
      %v3772 = vpop.f32.mrb[0].mxu0
      %v3773 = vadd.f32 %v3642, %v3772
      %v3774 = vpop.f32.mrb[0].mxu0
      %3775 = vmatprep.mubr.f32.mxu0 0.0
      %3776 = vmatmul.mubr.f32.gmra.mrb[0].mxu0 %v3669
      %v3777 = vpop.f32.mrb[0].mxu0
      %v3778 = vadd.f32 %v3642, %v3777
      %v3779 = vpop.f32.mrb[0].mxu0
      %3780 = vdwg.mxu0
      %v3781 = vmax.f32 %v3738, 0.0
      %v3782 = vmax.f32 %v3743, 0.0
      %v3783 = vmax.f32 %v3748, 0.0
      %v3784 = vmax.f32 %v3753, 0.0
      %v3785 = vmax.f32 %v3758, 0.0
      %v3786 = vmax.f32 %v3763, 0.0
      %v3787 = vmax.f32 %v3768, 0.0
      %v3788 = vmax.f32 %v3773, 0.0
      %v3789 = vmax.f32 %v3778, 0.0
      %v3790 = vld [vmem:[%s16] sm:$0xff]
      %v3791 = vld [vmem:[%s16 + $0x8] sm:$0xff]
      %v3792 = vld [vmem:[%s16 + $0x10] sm:$0xff]
      %v3793 = vld [vmem:[%s16 + $0x18] sm:$0xff]
      %v3794 = vld [vmem:[%s16 + $0x20] sm:$0xff]
      %v3795 = vld [vmem:[%s16 + $0x28] sm:$0xff]
      %v3796 = vld [vmem:[%s16 + $0x30] sm:$0xff]
      %v3797 = vld [vmem:[%s16 + $0x38] sm:$0xff]
      %vm3798 = vcmask 523264
      %v3800 = vsel %vm3798, %v3781, 0
      %v3803 = vsel %vm3798, %v3782, 0
      %v3806 = vsel %vm3798, %v3783, 0
      %v3809 = vsel %vm3798, %v3784, 0
      %v3812 = vsel %vm3798, %v3785, 0
      %v3815 = vsel %vm3798, %v3786, 0
      %v3818 = vsel %vm3798, %v3787, 0
      %v3821 = vsel %vm3798, %v3788, 0
      %v3824 = vsel %vm3798, %v3789, 0
      %3826 = vmatprep.subr.mxu0 0.0
      %3827 = vmatpush1.msra.mxu0 %v3790
      %3828 = vmatprep.subr.mxu0 0.0
      %3829 = vmatpush1.msra.mxu0 %v3791
      %3830 = vmatprep.subr.mxu0 0.0
      %3831 = vmatpush1.msra.mxu0 %v3792
      %3832 = vmatprep.subr.mxu0 0.0
      %3833 = vmatpush1.msra.mxu0 %v3793
      %3834 = vmatprep.subr.mxu0 0.0
      %3835 = vmatpush1.msra.mxu0 %v3794
      %3836 = vmatprep.subr.mxu0 0.0
      %3837 = vmatpush1.msra.mxu0 %v3795
      %3838 = vmatprep.subr.mxu0 0.0
      %3839 = vmatpush1.msra.mxu0 %v3796
      %3840 = vmatprep.subr.mxu0 0.0
      %3841 = vmatpush1.msra.mxu0 %v3797
      %3842 = vmatprep.subr.mxu0 0.0
      %3843 = vmatpush1.msra.mxu0 0.0
      %3844 = vmatprep.subr.mxu0 0.0
      %3845 = vmatpush1.msra.mxu0 0.0
      %3846 = vmatprep.subr.mxu0 0.0
      %3847 = vmatpush1.msra.mxu0 0.0
      %3848 = vmatprep.subr.mxu0 0.0
      %3849 = vmatpush1.msra.mxu0 0.0
      %3850 = vmatprep.subr.mxu0 0.0
      %3851 = vmatpush1.msra.mxu0 0.0
      %3852 = vmatprep.subr.mxu0 0.0
      %3853 = vmatpush1.msra.mxu0 0.0
      %3854 = vmatprep.subr.mxu0 0.0
      %3855 = vmatpush1.msra.mxu0 0.0
      %3856 = vmatprep.subr.mxu0 0.0
      %3857 = vmatpush1.msra.mxu0 0.0
      %3858 = vmatprep.subr.mxu0 0.0
      %3859 = vmatpush1.msra.mxu0 0.0
      %3860 = vmatprep.subr.mxu0 0.0
      %3861 = vmatpush1.msra.mxu0 0.0
      %3862 = vmatprep.subr.mxu0 0.0
      %3863 = vmatpush1.msra.mxu0 0.0
      %3864 = vmatprep.subr.mxu0 0.0
      %3865 = vmatpush1.msra.mxu0 0.0
      %3866 = vmatprep.subr.mxu0 0.0
      %3867 = vmatpush1.msra.mxu0 0.0
      %3868 = vmatprep.subr.mxu0 0.0
      %3869 = vmatpush1.msra.mxu0 0.0
      %3870 = vmatprep.subr.mxu0 0.0
      %3871 = vmatpush1.msra.mxu0 0.0
      %3872 = vmatprep.subr.mxu0 0.0
      %3873 = vmatpush1.msra.mxu0 0.0
      %3874 = vmatprep.subr.mxu0 0.0
      %3875 = vmatpush1.msra.mxu0 0.0
      %3876 = vmatprep.subr.mxu0 0.0
      %3877 = vmatpush1.msra.mxu0 0.0
      %3878 = vmatprep.subr.mxu0 0.0
      %3879 = vmatpush1.msra.mxu0 0.0
      %3880 = vmatprep.subr.mxu0 0.0
      %3881 = vmatpush1.msra.mxu0 0.0
      %3882 = vmatprep.subr.mxu0 0.0
      %3883 = vmatpush1.msra.mxu0 0.0
      %3884 = vmatprep.subr.mxu0 0.0
      %3885 = vmatpush1.msra.mxu0 0.0
      %3886 = vmatprep.subr.mxu0 0.0
      %3887 = vmatpush1.msra.mxu0 0.0
      %3888 = vmatprep.subr.mxu0 0.0
      %3889 = vmatpush1.msra.mxu0 0.0
      %3890 = vmatprep.mubr.f32.mxu0 0.0
      %3891 = vmatmul.mubr.f32.gmra.mrb[0].mxu0 %v3800
      %v3892 = vpop.f32.mrb[0].mxu0
      %v3893 = vadd.f32 0.0, %v3892
      %v3894 = vpop.f32.mrb[0].mxu0
      %3895 = vmatprep.mubr.f32.mxu0 0.0
      %3896 = vmatmul.mubr.f32.gmra.mrb[0].mxu0 %v3803
      %v3897 = vpop.f32.mrb[0].mxu0
      %v3898 = vadd.f32 0.0, %v3897
      %v3899 = vpop.f32.mrb[0].mxu0
      %3900 = vmatprep.mubr.f32.mxu0 0.0
      %3901 = vmatmul.mubr.f32.gmra.mrb[0].mxu0 %v3806
      %v3902 = vpop.f32.mrb[0].mxu0
      %v3903 = vadd.f32 0.0, %v3902
      %v3904 = vpop.f32.mrb[0].mxu0
      %3905 = vmatprep.mubr.f32.mxu0 0.0
      %3906 = vmatmul.mubr.f32.gmra.mrb[0].mxu0 %v3809
      %v3907 = vpop.f32.mrb[0].mxu0
      %v3908 = vadd.f32 0.0, %v3907
      %v3909 = vpop.f32.mrb[0].mxu0
      %3910 = vmatprep.mubr.f32.mxu0 0.0
      %3911 = vmatmul.mubr.f32.gmra.mrb[0].mxu0 %v3812
      %v3912 = vpop.f32.mrb[0].mxu0
      %v3913 = vadd.f32 0.0, %v3912
      %v3914 = vpop.f32.mrb[0].mxu0
      %3915 = vmatprep.mubr.f32.mxu0 0.0
      %3916 = vmatmul.mubr.f32.gmra.mrb[0].mxu0 %v3815
      %v3917 = vpop.f32.mrb[0].mxu0
      %v3918 = vadd.f32 0.0, %v3917
      %v3919 = vpop.f32.mrb[0].mxu0
      %3920 = vmatprep.mubr.f32.mxu0 0.0
      %3921 = vmatmul.mubr.f32.gmra.mrb[0].mxu0 %v3818
      %v3922 = vpop.f32.mrb[0].mxu0
      %v3923 = vadd.f32 0.0, %v3922
      %v3924 = vpop.f32.mrb[0].mxu0
      %3925 = vmatprep.mubr.f32.mxu0 0.0
      %3926 = vmatmul.mubr.f32.gmra.mrb[0].mxu0 %v3821
      %v3927 = vpop.f32.mrb[0].mxu0
      %v3928 = vadd.f32 0.0, %v3927
      %v3929 = vpop.f32.mrb[0].mxu0
      %3930 = vmatprep.mubr.f32.mxu0 0.0
      %3931 = vmatmul.mubr.f32.gmra.mrb[0].mxu0 %v3824
      %v3932 = vpop.f32.mrb[0].mxu0
      %v3933 = vadd.f32 0.0, %v3932
      %v3934 = vpop.f32.mrb[0].mxu0
      %3935 = vdwg.mxu0
      %v3936 = vadd.f32 %v3624, %v3893
      %v3937 = vadd.f32 %v3625, %v3898
      %v3938 = vadd.f32 %v3626, %v3903
      %v3939 = vadd.f32 %v3627, %v3908
      %v3940 = vadd.f32 %v3628, %v3913
      %v3941 = vadd.f32 %v3629, %v3918
      %v3942 = vadd.f32 %v3630, %v3923
      %v3943 = vadd.f32 %v3631, %v3928
      %v3944 = vadd.f32 %v3632, %v3933
      %v3945 = vld [vmem:[%s17] sm:$0x1]
      %v3947 = vlaneseq
      %v3948 = vshrl.u32 %v3947, 7
      %v3949 = vsub.s32 0, %v3948
      %v3950 = vrot.slane %v3945, %v3949
      %v3952 = vadd.f32 %v3936, %v3950
      %v3953 = vadd.f32 %v3937, %v3950
      %v3954 = vadd.f32 %v3938, %v3950
      %v3955 = vadd.f32 %v3939, %v3950
      %v3956 = vadd.f32 %v3940, %v3950
      %v3957 = vadd.f32 %v3941, %v3950
      %v3958 = vadd.f32 %v3942, %v3950
      %v3959 = vadd.f32 %v3943, %v3950
      %v3960 = vadd.f32 %v3944, %v3950
      %v3961 = vld [vmem:[%s18] sm:$0x1]
      %v3962 = vld [vmem:[%s19] sm:$0x1]
      %v3963 = vsel %vm809, %v3952, 0.0
      %3964 = vadd.xlane.f32.xlu0 %v3963
      %v3965 = vpop.xlane.xlu0 %3964
      %v3966 = vsel %vm809, %v3953, 0.0
      %3967 = vadd.xlane.f32.xlu0 %v3966
      %v3968 = vpop.xlane.xlu0 %3967
      %v3969 = vsel %vm809, %v3954, 0.0
      %3970 = vadd.xlane.f32.xlu0 %v3969
      %v3971 = vpop.xlane.xlu0 %3970
      %v3972 = vsel %vm809, %v3955, 0.0
      %3973 = vadd.xlane.f32.xlu0 %v3972
      %v3974 = vpop.xlane.xlu0 %3973
      %v3975 = vsel %vm809, %v3956, 0.0
      %3976 = vadd.xlane.f32.xlu0 %v3975
      %v3977 = vpop.xlane.xlu0 %3976
      %v3978 = vsel %vm809, %v3957, 0.0
      %3979 = vadd.xlane.f32.xlu0 %v3978
      %v3980 = vpop.xlane.xlu0 %3979
      %v3981 = vsel %vm809, %v3958, 0.0
      %3982 = vadd.xlane.f32.xlu0 %v3981
      %v3983 = vpop.xlane.xlu0 %3982
      %v3984 = vsel %vm809, %v3959, 0.0
      %3985 = vadd.xlane.f32.xlu0 %v3984
      %v3986 = vpop.xlane.xlu0 %3985
      %v3987 = vsel %vm809, %v3960, 0.0
      %3988 = vadd.xlane.f32.xlu0 %v3987
      %v3989 = vpop.xlane.xlu0 %3988
      %v3990 = vmul.f32 %v3965, %v813
      %v3991 = vmul.f32 %v3968, %v813
      %v3992 = vmul.f32 %v3971, %v813
      %v3993 = vmul.f32 %v3974, %v813
      %v3994 = vmul.f32 %v3977, %v813
      %v3995 = vmul.f32 %v3980, %v813
      %v3996 = vmul.f32 %v3983, %v813
      %v3997 = vmul.f32 %v3986, %v813
      %v3998 = vmul.f32 %v3989, %v813
      %v3999 = vmul.f32 %v3952, %v3952
      %v4000 = vmul.f32 %v3953, %v3953
      %v4001 = vmul.f32 %v3954, %v3954
      %v4002 = vmul.f32 %v3955, %v3955
      %v4003 = vmul.f32 %v3956, %v3956
      %v4004 = vmul.f32 %v3957, %v3957
      %v4005 = vmul.f32 %v3958, %v3958
      %v4006 = vmul.f32 %v3959, %v3959
      %v4007 = vmul.f32 %v3960, %v3960
      %v4008 = vsel %vm809, %v3999, 0.0
      %4009 = vadd.xlane.f32.xlu0 %v4008
      %v4010 = vpop.xlane.xlu0 %4009
      %v4011 = vsel %vm809, %v4000, 0.0
      %4012 = vadd.xlane.f32.xlu0 %v4011
      %v4013 = vpop.xlane.xlu0 %4012
      %v4014 = vsel %vm809, %v4001, 0.0
      %4015 = vadd.xlane.f32.xlu0 %v4014
      %v4016 = vpop.xlane.xlu0 %4015
      %v4017 = vsel %vm809, %v4002, 0.0
      %4018 = vadd.xlane.f32.xlu0 %v4017
      %v4019 = vpop.xlane.xlu0 %4018
      %v4020 = vsel %vm809, %v4003, 0.0
      %4021 = vadd.xlane.f32.xlu0 %v4020
      %v4022 = vpop.xlane.xlu0 %4021
      %v4023 = vsel %vm809, %v4004, 0.0
      %4024 = vadd.xlane.f32.xlu0 %v4023
      %v4025 = vpop.xlane.xlu0 %4024
      %v4026 = vsel %vm809, %v4005, 0.0
      %4027 = vadd.xlane.f32.xlu0 %v4026
      %v4028 = vpop.xlane.xlu0 %4027
      %v4029 = vsel %vm809, %v4006, 0.0
      %4030 = vadd.xlane.f32.xlu0 %v4029
      %v4031 = vpop.xlane.xlu0 %4030
      %v4032 = vsel %vm809, %v4007, 0.0
      %4033 = vadd.xlane.f32.xlu0 %v4032
      %v4034 = vpop.xlane.xlu0 %4033
      %v4035 = vmul.f32 %v4010, %v813
      %v4036 = vmul.f32 %v4013, %v813
      %v4037 = vmul.f32 %v4016, %v813
      %v4038 = vmul.f32 %v4019, %v813
      %v4039 = vmul.f32 %v4022, %v813
      %v4040 = vmul.f32 %v4025, %v813
      %v4041 = vmul.f32 %v4028, %v813
      %v4042 = vmul.f32 %v4031, %v813
      %v4043 = vmul.f32 %v4034, %v813
      %v4044 = vmul.f32 %v3990, %v3990
      %v4045 = vmul.f32 %v3991, %v3991
      %v4046 = vmul.f32 %v3992, %v3992
      %v4047 = vmul.f32 %v3993, %v3993
      %v4048 = vmul.f32 %v3994, %v3994
      %v4049 = vmul.f32 %v3995, %v3995
      %v4050 = vmul.f32 %v3996, %v3996
      %v4051 = vmul.f32 %v3997, %v3997
      %v4052 = vmul.f32 %v3998, %v3998
      %v4053 = vsub.f32 %v4035, %v4044
      %v4054 = vsub.f32 %v4036, %v4045
      %v4055 = vsub.f32 %v4037, %v4046
      %v4056 = vsub.f32 %v4038, %v4047
      %v4057 = vsub.f32 %v4039, %v4048
      %v4058 = vsub.f32 %v4040, %v4049
      %v4059 = vsub.f32 %v4041, %v4050
      %v4060 = vsub.f32 %v4042, %v4051
      %v4061 = vsub.f32 %v4043, %v4052
      %v4062 = vsub.f32 %v3952, %v3990
      %v4063 = vsub.f32 %v3953, %v3991
      %v4064 = vsub.f32 %v3954, %v3992
      %v4065 = vsub.f32 %v3955, %v3993
      %v4066 = vsub.f32 %v3956, %v3994
      %v4067 = vsub.f32 %v3957, %v3995
      %v4068 = vsub.f32 %v3958, %v3996
      %v4069 = vsub.f32 %v3959, %v3997
      %v4070 = vsub.f32 %v3960, %v3998
      %v4071 = vadd.f32 %v4053, 1e-05
      %v4072 = vadd.f32 %v4054, 1e-05
      %v4073 = vadd.f32 %v4055, 1e-05
      %v4074 = vadd.f32 %v4056, 1e-05
      %v4075 = vadd.f32 %v4057, 1e-05
      %v4076 = vadd.f32 %v4058, 1e-05
      %v4077 = vadd.f32 %v4059, 1e-05
      %v4078 = vadd.f32 %v4060, 1e-05
      %v4079 = vadd.f32 %v4061, 1e-05
      %v4080 = vrsqrt.pop %v4071
      %v4081 = vrsqrt.pop %v4072
      %v4082 = vrsqrt.pop %v4073
      %v4083 = vrsqrt.pop %v4074
      %v4084 = vrsqrt.pop %v4075
      %v4085 = vrsqrt.pop %v4076
      %v4086 = vrsqrt.pop %v4077
      %v4087 = vrsqrt.pop %v4078
      %v4088 = vrsqrt.pop %v4079
      %v4089 = vmul.f32 %v4062, %v4080
      %v4090 = vmul.f32 %v4063, %v4081
      %v4091 = vmul.f32 %v4064, %v4082
      %v4092 = vmul.f32 %v4065, %v4083
      %v4093 = vmul.f32 %v4066, %v4084
      %v4094 = vmul.f32 %v4067, %v4085
      %v4095 = vmul.f32 %v4068, %v4086
      %v4096 = vmul.f32 %v4069, %v4087
      %v4097 = vmul.f32 %v4070, %v4088
      %v4099 = vlaneseq
      %v4100 = vshrl.u32 %v4099, 7
      %v4101 = vsub.s32 0, %v4100
      %v4102 = vrot.slane %v3961, %v4101
      %v4104 = vmul.f32 %v4089, %v4102
      %v4105 = vmul.f32 %v4090, %v4102
      %v4106 = vmul.f32 %v4091, %v4102
      %v4107 = vmul.f32 %v4092, %v4102
      %v4108 = vmul.f32 %v4093, %v4102
      %v4109 = vmul.f32 %v4094, %v4102
      %v4110 = vmul.f32 %v4095, %v4102
      %v4111 = vmul.f32 %v4096, %v4102
      %v4112 = vmul.f32 %v4097, %v4102
      %v4114 = vlaneseq
      %v4115 = vshrl.u32 %v4114, 7
      %v4116 = vsub.s32 0, %v4115
      %v4117 = vrot.slane %v3962, %v4116
      %v4119 = vadd.f32 %v4104, %v4117
      %v4120 = vadd.f32 %v4105, %v4117
      %v4121 = vadd.f32 %v4106, %v4117
      %v4122 = vadd.f32 %v4107, %v4117
      %v4123 = vadd.f32 %v4108, %v4117
      %v4124 = vadd.f32 %v4109, %v4117
      %v4125 = vadd.f32 %v4110, %v4117
      %v4126 = vadd.f32 %v4111, %v4117
      %v4127 = vadd.f32 %v4112, %v4117
      %4128 = vst.msk [vmem:[%s714] sm:$0xff] %vm809, %v4119
      %4129 = vst.msk [vmem:[%s714 + $0x8] sm:$0xff] %vm809, %v4120
      %4130 = vst.msk [vmem:[%s714 + $0x10] sm:$0xff] %vm809, %v4121
      %4131 = vst.msk [vmem:[%s714 + $0x18] sm:$0xff] %vm809, %v4122
      %4132 = vst.msk [vmem:[%s714 + $0x20] sm:$0xff] %vm809, %v4123
      %4133 = vst.msk [vmem:[%s714 + $0x28] sm:$0xff] %vm809, %v4124
      %4134 = vst.msk [vmem:[%s714 + $0x30] sm:$0xff] %vm809, %v4125
      %4135 = vst.msk [vmem:[%s714 + $0x38] sm:$0xff] %vm809, %v4126
      %4136 = vst.msk [vmem:[%s714 + $0x40] sm:$0xff] %vm809, %v4127
      %p4137 = scmp.lt.s32.totalorder %s33, 1
      %s4138 = scalar_select %p4137, %s33, 1
      %s4139 = smul.addr %s4138, 9
      %s4140 = smul.addr %s4139, 8
      %s4141 = scalar_lea.vmem %s20, %s4140
      %p4142 = scmp.lt.s32.totalorder %s33, 1
      %s4143 = scalar_select %p4142, %s33, 1
      %s4144 = smul.addr %s4143, 8
      %s4145 = scalar_lea.vmem %s21, %s4144
      // Predicated region
      $region101: #{are_encoder_forward.3} parent=99 // pred_check
        %p4146 = pneg %p491
      $region102: #{are_encoder_forward.3} parent=99 // pred_check_branch
        %4148 = sbr.rel (%p4146) target = $region104
      $region103: #{are_encoder_forward.3} parent=99 // pred_region
        _
      $region104: #{are_encoder_forward.3} parent=99 // pred_fallthru
        _
      // Predicated region
      $region105: #{are_encoder_forward.3} parent=99 // pred_check
        %p4149 = pneg %p517
      $region106: #{are_encoder_forward.3} parent=99 // pred_check_branch
        %4151 = sbr.rel (%p4149) target = $region108
      $region107: #{are_encoder_forward.3} parent=99 // pred_region
        _
      $region108: #{are_encoder_forward.3} parent=99 // pred_fallthru
        _
    $region100: #{are_encoder_forward.3} parent=5 // pred_fallthru
      _
    %p4152 = scmp.le.s32.totalorder 2, %s28
    // Predicated region
    $region109: #{are_encoder_forward.3} parent=5 // pred_check
      %p4153 = pneg %p4152
    $region110: #{are_encoder_forward.3} parent=5 // pred_check_branch
      %4155 = sbr.rel (%p4153) target = $region112
    $region111: #{are_encoder_forward.3} parent=5 // pred_region
      %s4156 = ssub.s32 %s28, 2
      // Predicated region
      $region113: #{are_encoder_forward.3} parent=111 // pred_check
        %p4157 = pneg %p497
      $region114: #{are_encoder_forward.3} parent=111 // pred_check_branch
        %4159 = sbr.rel (%p4157) target = $region116
      $region115: #{are_encoder_forward.3} parent=111 // pred_region
        %p4160 = scmp.lt.s32.totalorder %s34, 1
        %s4161 = scalar_select %p4160, %s34, 1
        %s4162 = smul.addr %s4161, 9
        %s4163 = smul.addr %s4162, 8
        %s4164 = scalar_lea.vmem %s20, %s4163
      $region116: #{are_encoder_forward.3} parent=111 // pred_fallthru
        _
      // Predicated region
      $region117: #{are_encoder_forward.3} parent=111 // pred_check
        %p4165 = pneg %p523
      $region118: #{are_encoder_forward.3} parent=111 // pred_check_branch
        %4167 = sbr.rel (%p4165) target = $region120
      $region119: #{are_encoder_forward.3} parent=111 // pred_region
        %p4168 = scmp.lt.s32.totalorder %s34, 1
        %s4169 = scalar_select %p4168, %s34, 1
        %s4170 = smul.addr %s4169, 8
        %s4171 = scalar_lea.vmem %s21, %s4170
      $region120: #{are_encoder_forward.3} parent=111 // pred_fallthru
        _
    $region112: #{are_encoder_forward.3} parent=5 // pred_fallthru
      _
  $region6: #{are_encoder_forward.3} parent=0 // loop_footer
    %s32 = sadd.s32 1, %s28
  $region7: #{are_encoder_forward.3} parent=0 // loop_footer_branch
    %27 = sbr.rel target = $region3
  $region8: #{are_encoder_forward.3} parent=0 // loop_exit
    _

// kernel: are_encoder_forward.2
$region0: #{are_encoder_forward.2}
  #allocation0 [shape = 'u32[]', space=smem, size = 0x4, offset = 0x4, fixed_abs, tag = 'smem constant byte address 0x4 - core index']
  #allocation1 [shape = 'u32[144,128]{1,0:T(1,128)}', space=vmem, size = 0x12000, scoped, tag = 'internal scratch']
  %s0 = inlined_call_operand.vmem [shape: f32[2,66,32], index: 0, kind: input, shape index: {}]
  %s1 = inlined_call_operand.vmem [shape: f32[2,66,32], index: 1, kind: input, shape index: {}]
  %s2 = inlined_call_operand.vmem [shape: f32[2,8,48], index: 2, kind: input, shape index: {}]
  %s3 = inlined_call_operand.vmem [shape: f32[2,1,80], index: 3, kind: input, shape index: {}]
  %s4 = inlined_call_operand.vmem [shape: f32[48,32], index: 4, kind: input, shape index: {}]
  %s5 = inlined_call_operand.vmem [shape: f32[1,32], index: 5, kind: input, shape index: {}]
  %s6 = inlined_call_operand.vmem [shape: f32[1,32], index: 6, kind: input, shape index: {}]
  %s7 = inlined_call_operand.vmem [shape: f32[1,32], index: 7, kind: input, shape index: {}]
  %s8 = inlined_call_operand.vmem [shape: f32[32,96], index: 8, kind: input, shape index: {}]
  %s9 = inlined_call_operand.vmem [shape: f32[1,96], index: 9, kind: input, shape index: {}]
  %s10 = inlined_call_operand.vmem [shape: f32[32,32], index: 10, kind: input, shape index: {}]
  %s11 = inlined_call_operand.vmem [shape: f32[1,32], index: 11, kind: input, shape index: {}]
  %s12 = inlined_call_operand.vmem [shape: f32[1,32], index: 12, kind: input, shape index: {}]
  %s13 = inlined_call_operand.vmem [shape: f32[1,32], index: 13, kind: input, shape index: {}]
  %s14 = inlined_call_operand.vmem [shape: f32[32,64], index: 14, kind: input, shape index: {}]
  %s15 = inlined_call_operand.vmem [shape: f32[1,64], index: 15, kind: input, shape index: {}]
  %s16 = inlined_call_operand.vmem [shape: f32[64,32], index: 16, kind: input, shape index: {}]
  %s17 = inlined_call_operand.vmem [shape: f32[1,32], index: 17, kind: input, shape index: {}]
  %s18 = inlined_call_operand.vmem [shape: f32[1,32], index: 18, kind: input, shape index: {}]
  %s19 = inlined_call_operand.vmem [shape: f32[1,32], index: 19, kind: input, shape index: {}]
  %s20 = inlined_call_operand.vmem [shape: f32[2,80,32], index: 20, kind: output, shape index: {0}]
  %s21 = inlined_call_operand.hbm [shape: f32[2,8,32], index: 21, kind: output, shape index: {1}]
  %22 = xla_tuple %s20, %s21
  %s23 = sld [smem:[#allocation0]]
  $region121: #{are_encoder_forward.2} parent=0
    _
  %s25 = ssub.s32 1, %s23
  %s26 = scalar_select 0, %s25, %s23
  $region1: #{are_encoder_forward.2} parent=0
    #allocation2 [shape = 'u8[8192]{0}', space=vmem, size = 0x2000, scoped, tag = 'output window, operand 1']
    #allocation3 [shape = 's32[2]{0}', space=sflag, size = 0x8, scoped, tag = 'scoped memory for are_encoder_forward.2']
    %27 = vsyncpa [#allocation3], 0
    %s28 = scalar_lea.sflag [#allocation3], 1
    %29 = vsyncpa %s28, 0
    loop: start=0, step=1, limit=4
    $region2: #{are_encoder_forward.2} parent=1 // loop_pre_header
      _
    $region3: #{are_encoder_forward.2} parent=1 // loop_header
      %s31 = sphi 0, %s35
      %p32 = scmp.ge.s32.totalorder %s31, 4
      %s41 = sphi 0, %s43
      %s44 = sphi 0, %s41
      %s45 = sphi 0, %s44
      %s61 = sphi 0, %s45
      %s67 = sphi 0, %s69
      %s70 = sphi 0, %s67
      %s71 = sphi 0, %s70
      %s87 = sphi 0, %s71
      %s93 = sphi 0, %s95
      %s96 = sphi 0, %s93
      %s97 = sphi 0, %s96
      %s113 = sphi 0, %s97
      %s119 = sphi 0, %s121
      %s122 = sphi 0, %s119
      %s123 = sphi 0, %s122
      %s139 = sphi 0, %s123
      %s143 = sphi 0, %s143
      %s145 = sphi 0, %s143
      %s146 = sphi 0, %s145
      %s160 = sphi 0, %s146
      %s164 = sphi 0, %s164
      %s166 = sphi 0, %s164
      %s167 = sphi 0, %s166
      %s181 = sphi 0, %s167
      %s185 = sphi 0, %s185
      %s187 = sphi 0, %s185
      %s188 = sphi 0, %s187
      %s202 = sphi 0, %s188
      %s206 = sphi 0, %s206
      %s208 = sphi 0, %s206
      %s209 = sphi 0, %s208
      %s223 = sphi 0, %s209
      %s227 = sphi 0, %s227
      %s229 = sphi 0, %s227
      %s230 = sphi 0, %s229
      %s244 = sphi 0, %s230
      %s248 = sphi 0, %s248
      %s250 = sphi 0, %s248
      %s251 = sphi 0, %s250
      %s265 = sphi 0, %s251
      %s269 = sphi 0, %s269
      %s271 = sphi 0, %s269
      %s272 = sphi 0, %s271
      %s286 = sphi 0, %s272
      %s290 = sphi 0, %s290
      %s292 = sphi 0, %s290
      %s293 = sphi 0, %s292
      %s307 = sphi 0, %s293
      %s311 = sphi 0, %s311
      %s313 = sphi 0, %s311
      %s314 = sphi 0, %s313
      %s328 = sphi 0, %s314
      %s332 = sphi 0, %s332
      %s334 = sphi 0, %s332
      %s335 = sphi 0, %s334
      %s349 = sphi 0, %s335
      %s353 = sphi 0, %s353
      %s355 = sphi 0, %s353
      %s356 = sphi 0, %s355
      %s370 = sphi 0, %s356
      %s374 = sphi 0, %s374
      %s376 = sphi 0, %s374
      %s377 = sphi 0, %s376
      %s391 = sphi 0, %s377
      %s395 = sphi 0, %s395
      %s397 = sphi 0, %s395
      %s398 = sphi 0, %s397
      %s412 = sphi 0, %s398
      %s416 = sphi 0, %s416
      %s418 = sphi 0, %s416
      %s419 = sphi 0, %s418
      %s433 = sphi 0, %s419
      %s437 = sphi 0, %s437
      %s439 = sphi 0, %s437
      %s440 = sphi 0, %s439
      %s454 = sphi 0, %s440
      %s458 = sphi 0, %s458
      %s460 = sphi 0, %s458
      %s461 = sphi 0, %s460
      %s475 = sphi 0, %s461
      %s481 = sphi 0, %s483
      %s484 = sphi 0, %s481
      %s485 = sphi 0, %s484
      %s501 = sphi 0, %s485
      %s507 = sphi 0, %s509
      %s510 = sphi 0, %s507
      %s511 = sphi 0, %s510
      %s527 = sphi 0, %s511
    $region4: #{are_encoder_forward.2} parent=1 // loop_header_branch
      %34 = sbr.rel (%p32) target = $region8
    $region5: #{are_encoder_forward.2} parent=1 // loop_body
      %s36 = ssub.s32 %s31, 1
      %s37 = ssub.s32 %s31, 2
      %s38 = sadd.s32 %s31, 1
      %s39 = ssub.s32 %s31, %s38
      %p40 = scmp.eq.s32.totalorder %s39, 0
      %s42 = sadd.s32 %s41, 1
      %s43 = scalar_select %p40, %s41, %s42
      %p46 = pneg %p40
      %p47 = scmp.eq.s32.totalorder %s31, 1
      %p48 = por %p46, %p47
      %p49 = scmp.ne.s32.totalorder %s41, %s44
      %p50 = scmp.eq.s32.totalorder %s31, 0
      %p51 = por %p49, %p50
      %p52 = scmp.ne.s32.totalorder %s41, %s44
      %p53 = scmp.eq.s32.totalorder %s36, 1
      %p54 = por %p52, %p53
      %p55 = scmp.ne.s32.totalorder %s44, %s45
      %p56 = scmp.eq.s32.totalorder %s36, 0
      %p57 = por %p55, %p56
      %p58 = scmp.ne.s32.totalorder %s44, %s45
      %p59 = scmp.eq.s32.totalorder %s37, 1
      %p60 = por %p58, %p59
      %p62 = scmp.ne.s32.totalorder %s45, %s61
      %p63 = scmp.eq.s32.totalorder %s37, 0
      %p64 = por %p62, %p63
      %s65 = ssub.s32 %s31, %s38
      %p66 = scmp.eq.s32.totalorder %s65, 0
      %s68 = sadd.s32 %s67, 1
      %s69 = scalar_select %p66, %s67, %s68
      %p72 = pneg %p66
      %p73 = scmp.eq.s32.totalorder %s31, 1
      %p74 = por %p72, %p73
      %p75 = scmp.ne.s32.totalorder %s67, %s70
      %p76 = scmp.eq.s32.totalorder %s31, 0
      %p77 = por %p75, %p76
      %p78 = scmp.ne.s32.totalorder %s67, %s70
      %p79 = scmp.eq.s32.totalorder %s36, 1
      %p80 = por %p78, %p79
      %p81 = scmp.ne.s32.totalorder %s70, %s71
      %p82 = scmp.eq.s32.totalorder %s36, 0
      %p83 = por %p81, %p82
      %p84 = scmp.ne.s32.totalorder %s70, %s71
      %p85 = scmp.eq.s32.totalorder %s37, 1
      %p86 = por %p84, %p85
      %p88 = scmp.ne.s32.totalorder %s71, %s87
      %p89 = scmp.eq.s32.totalorder %s37, 0
      %p90 = por %p88, %p89
      %s91 = ssub.s32 %s31, %s38
      %p92 = scmp.eq.s32.totalorder %s91, 0
      %s94 = sadd.s32 %s93, 1
      %s95 = scalar_select %p92, %s93, %s94
      %p98 = pneg %p92
      %p99 = scmp.eq.s32.totalorder %s31, 1
      %p100 = por %p98, %p99
      %p101 = scmp.ne.s32.totalorder %s93, %s96
      %p102 = scmp.eq.s32.totalorder %s31, 0
      %p103 = por %p101, %p102
      %p104 = scmp.ne.s32.totalorder %s93, %s96
      %p105 = scmp.eq.s32.totalorder %s36, 1
      %p106 = por %p104, %p105
      %p107 = scmp.ne.s32.totalorder %s96, %s97
      %p108 = scmp.eq.s32.totalorder %s36, 0
      %p109 = por %p107, %p108
      %p110 = scmp.ne.s32.totalorder %s96, %s97
      %p111 = scmp.eq.s32.totalorder %s37, 1
      %p112 = por %p110, %p111
      %p114 = scmp.ne.s32.totalorder %s97, %s113
      %p115 = scmp.eq.s32.totalorder %s37, 0
      %p116 = por %p114, %p115
      %s117 = ssub.s32 %s31, %s38
      %p118 = scmp.eq.s32.totalorder %s117, 0
      %s120 = sadd.s32 %s119, 1
      %s121 = scalar_select %p118, %s119, %s120
      %p124 = pneg %p118
      %p125 = scmp.eq.s32.totalorder %s31, 1
      %p126 = por %p124, %p125
      %p127 = scmp.ne.s32.totalorder %s119, %s122
      %p128 = scmp.eq.s32.totalorder %s31, 0
      %p129 = por %p127, %p128
      %p130 = scmp.ne.s32.totalorder %s119, %s122
      %p131 = scmp.eq.s32.totalorder %s36, 1
      %p132 = por %p130, %p131
      %p133 = scmp.ne.s32.totalorder %s122, %s123
      %p134 = scmp.eq.s32.totalorder %s36, 0
      %p135 = por %p133, %p134
      %p136 = scmp.ne.s32.totalorder %s122, %s123
      %p137 = scmp.eq.s32.totalorder %s37, 1
      %p138 = por %p136, %p137
      %p140 = scmp.ne.s32.totalorder %s123, %s139
      %p141 = scmp.eq.s32.totalorder %s37, 0
      %p142 = por %p140, %p141
      %s144 = sadd.s32 %s143, 1
      %p147 = scmp.eq.s32.totalorder %s31, 1
      %p148 = scmp.ne.s32.totalorder %s143, %s145
      %p149 = scmp.eq.s32.totalorder %s31, 0
      %p150 = por %p148, %p149
      %p151 = scmp.ne.s32.totalorder %s143, %s145
      %p152 = scmp.eq.s32.totalorder %s36, 1
      %p153 = por %p151, %p152
      %p154 = scmp.ne.s32.totalorder %s145, %s146
      %p155 = scmp.eq.s32.totalorder %s36, 0
      %p156 = por %p154, %p155
      %p157 = scmp.ne.s32.totalorder %s145, %s146
      %p158 = scmp.eq.s32.totalorder %s37, 1
      %p159 = por %p157, %p158
      %p161 = scmp.ne.s32.totalorder %s146, %s160
      %p162 = scmp.eq.s32.totalorder %s37, 0
      %p163 = por %p161, %p162
      %s165 = sadd.s32 %s164, 1
      %p168 = scmp.eq.s32.totalorder %s31, 1
      %p169 = scmp.ne.s32.totalorder %s164, %s166
      %p170 = scmp.eq.s32.totalorder %s31, 0
      %p171 = por %p169, %p170
      %p172 = scmp.ne.s32.totalorder %s164, %s166
      %p173 = scmp.eq.s32.totalorder %s36, 1
      %p174 = por %p172, %p173
      %p175 = scmp.ne.s32.totalorder %s166, %s167
      %p176 = scmp.eq.s32.totalorder %s36, 0
      %p177 = por %p175, %p176
      %p178 = scmp.ne.s32.totalorder %s166, %s167
      %p179 = scmp.eq.s32.totalorder %s37, 1
      %p180 = por %p178, %p179
      %p182 = scmp.ne.s32.totalorder %s167, %s181
      %p183 = scmp.eq.s32.totalorder %s37, 0
      %p184 = por %p182, %p183
      %s186 = sadd.s32 %s185, 1
      %p189 = scmp.eq.s32.totalorder %s31, 1
      %p190 = scmp.ne.s32.totalorder %s185, %s187
      %p191 = scmp.eq.s32.totalorder %s31, 0
      %p192 = por %p190, %p191
      %p193 = scmp.ne.s32.totalorder %s185, %s187
      %p194 = scmp.eq.s32.totalorder %s36, 1
      %p195 = por %p193, %p194
      %p196 = scmp.ne.s32.totalorder %s187, %s188
      %p197 = scmp.eq.s32.totalorder %s36, 0
      %p198 = por %p196, %p197
      %p199 = scmp.ne.s32.totalorder %s187, %s188
      %p200 = scmp.eq.s32.totalorder %s37, 1
      %p201 = por %p199, %p200
      %p203 = scmp.ne.s32.totalorder %s188, %s202
      %p204 = scmp.eq.s32.totalorder %s37, 0
      %p205 = por %p203, %p204
      %s207 = sadd.s32 %s206, 1
      %p210 = scmp.eq.s32.totalorder %s31, 1
      %p211 = scmp.ne.s32.totalorder %s206, %s208
      %p212 = scmp.eq.s32.totalorder %s31, 0
      %p213 = por %p211, %p212
      %p214 = scmp.ne.s32.totalorder %s206, %s208
      %p215 = scmp.eq.s32.totalorder %s36, 1
      %p216 = por %p214, %p215
      %p217 = scmp.ne.s32.totalorder %s208, %s209
      %p218 = scmp.eq.s32.totalorder %s36, 0
      %p219 = por %p217, %p218
      %p220 = scmp.ne.s32.totalorder %s208, %s209
      %p221 = scmp.eq.s32.totalorder %s37, 1
      %p222 = por %p220, %p221
      %p224 = scmp.ne.s32.totalorder %s209, %s223
      %p225 = scmp.eq.s32.totalorder %s37, 0
      %p226 = por %p224, %p225
      %s228 = sadd.s32 %s227, 1
      %p231 = scmp.eq.s32.totalorder %s31, 1
      %p232 = scmp.ne.s32.totalorder %s227, %s229
      %p233 = scmp.eq.s32.totalorder %s31, 0
      %p234 = por %p232, %p233
      %p235 = scmp.ne.s32.totalorder %s227, %s229
      %p236 = scmp.eq.s32.totalorder %s36, 1
      %p237 = por %p235, %p236
      %p238 = scmp.ne.s32.totalorder %s229, %s230
      %p239 = scmp.eq.s32.totalorder %s36, 0
      %p240 = por %p238, %p239
      %p241 = scmp.ne.s32.totalorder %s229, %s230
      %p242 = scmp.eq.s32.totalorder %s37, 1
      %p243 = por %p241, %p242
      %p245 = scmp.ne.s32.totalorder %s230, %s244
      %p246 = scmp.eq.s32.totalorder %s37, 0
      %p247 = por %p245, %p246
      %s249 = sadd.s32 %s248, 1
      %p252 = scmp.eq.s32.totalorder %s31, 1
      %p253 = scmp.ne.s32.totalorder %s248, %s250
      %p254 = scmp.eq.s32.totalorder %s31, 0
      %p255 = por %p253, %p254
      %p256 = scmp.ne.s32.totalorder %s248, %s250
      %p257 = scmp.eq.s32.totalorder %s36, 1
      %p258 = por %p256, %p257
      %p259 = scmp.ne.s32.totalorder %s250, %s251
      %p260 = scmp.eq.s32.totalorder %s36, 0
      %p261 = por %p259, %p260
      %p262 = scmp.ne.s32.totalorder %s250, %s251
      %p263 = scmp.eq.s32.totalorder %s37, 1
      %p264 = por %p262, %p263
      %p266 = scmp.ne.s32.totalorder %s251, %s265
      %p267 = scmp.eq.s32.totalorder %s37, 0
      %p268 = por %p266, %p267
      %s270 = sadd.s32 %s269, 1
      %p273 = scmp.eq.s32.totalorder %s31, 1
      %p274 = scmp.ne.s32.totalorder %s269, %s271
      %p275 = scmp.eq.s32.totalorder %s31, 0
      %p276 = por %p274, %p275
      %p277 = scmp.ne.s32.totalorder %s269, %s271
      %p278 = scmp.eq.s32.totalorder %s36, 1
      %p279 = por %p277, %p278
      %p280 = scmp.ne.s32.totalorder %s271, %s272
      %p281 = scmp.eq.s32.totalorder %s36, 0
      %p282 = por %p280, %p281
      %p283 = scmp.ne.s32.totalorder %s271, %s272
      %p284 = scmp.eq.s32.totalorder %s37, 1
      %p285 = por %p283, %p284
      %p287 = scmp.ne.s32.totalorder %s272, %s286
      %p288 = scmp.eq.s32.totalorder %s37, 0
      %p289 = por %p287, %p288
      %s291 = sadd.s32 %s290, 1
      %p294 = scmp.eq.s32.totalorder %s31, 1
      %p295 = scmp.ne.s32.totalorder %s290, %s292
      %p296 = scmp.eq.s32.totalorder %s31, 0
      %p297 = por %p295, %p296
      %p298 = scmp.ne.s32.totalorder %s290, %s292
      %p299 = scmp.eq.s32.totalorder %s36, 1
      %p300 = por %p298, %p299
      %p301 = scmp.ne.s32.totalorder %s292, %s293
      %p302 = scmp.eq.s32.totalorder %s36, 0
      %p303 = por %p301, %p302
      %p304 = scmp.ne.s32.totalorder %s292, %s293
      %p305 = scmp.eq.s32.totalorder %s37, 1
      %p306 = por %p304, %p305
      %p308 = scmp.ne.s32.totalorder %s293, %s307
      %p309 = scmp.eq.s32.totalorder %s37, 0
      %p310 = por %p308, %p309
      %s312 = sadd.s32 %s311, 1
      %p315 = scmp.eq.s32.totalorder %s31, 1
      %p316 = scmp.ne.s32.totalorder %s311, %s313
      %p317 = scmp.eq.s32.totalorder %s31, 0
      %p318 = por %p316, %p317
      %p319 = scmp.ne.s32.totalorder %s311, %s313
      %p320 = scmp.eq.s32.totalorder %s36, 1
      %p321 = por %p319, %p320
      %p322 = scmp.ne.s32.totalorder %s313, %s314
      %p323 = scmp.eq.s32.totalorder %s36, 0
      %p324 = por %p322, %p323
      %p325 = scmp.ne.s32.totalorder %s313, %s314
      %p326 = scmp.eq.s32.totalorder %s37, 1
      %p327 = por %p325, %p326
      %p329 = scmp.ne.s32.totalorder %s314, %s328
      %p330 = scmp.eq.s32.totalorder %s37, 0
      %p331 = por %p329, %p330
      %s333 = sadd.s32 %s332, 1
      %p336 = scmp.eq.s32.totalorder %s31, 1
      %p337 = scmp.ne.s32.totalorder %s332, %s334
      %p338 = scmp.eq.s32.totalorder %s31, 0
      %p339 = por %p337, %p338
      %p340 = scmp.ne.s32.totalorder %s332, %s334
      %p341 = scmp.eq.s32.totalorder %s36, 1
      %p342 = por %p340, %p341
      %p343 = scmp.ne.s32.totalorder %s334, %s335
      %p344 = scmp.eq.s32.totalorder %s36, 0
      %p345 = por %p343, %p344
      %p346 = scmp.ne.s32.totalorder %s334, %s335
      %p347 = scmp.eq.s32.totalorder %s37, 1
      %p348 = por %p346, %p347
      %p350 = scmp.ne.s32.totalorder %s335, %s349
      %p351 = scmp.eq.s32.totalorder %s37, 0
      %p352 = por %p350, %p351
      %s354 = sadd.s32 %s353, 1
      %p357 = scmp.eq.s32.totalorder %s31, 1
      %p358 = scmp.ne.s32.totalorder %s353, %s355
      %p359 = scmp.eq.s32.totalorder %s31, 0
      %p360 = por %p358, %p359
      %p361 = scmp.ne.s32.totalorder %s353, %s355
      %p362 = scmp.eq.s32.totalorder %s36, 1
      %p363 = por %p361, %p362
      %p364 = scmp.ne.s32.totalorder %s355, %s356
      %p365 = scmp.eq.s32.totalorder %s36, 0
      %p366 = por %p364, %p365
      %p367 = scmp.ne.s32.totalorder %s355, %s356
      %p368 = scmp.eq.s32.totalorder %s37, 1
      %p369 = por %p367, %p368
      %p371 = scmp.ne.s32.totalorder %s356, %s370
      %p372 = scmp.eq.s32.totalorder %s37, 0
      %p373 = por %p371, %p372
      %s375 = sadd.s32 %s374, 1
      %p378 = scmp.eq.s32.totalorder %s31, 1
      %p379 = scmp.ne.s32.totalorder %s374, %s376
      %p380 = scmp.eq.s32.totalorder %s31, 0
      %p381 = por %p379, %p380
      %p382 = scmp.ne.s32.totalorder %s374, %s376
      %p383 = scmp.eq.s32.totalorder %s36, 1
      %p384 = por %p382, %p383
      %p385 = scmp.ne.s32.totalorder %s376, %s377
      %p386 = scmp.eq.s32.totalorder %s36, 0
      %p387 = por %p385, %p386
      %p388 = scmp.ne.s32.totalorder %s376, %s377
      %p389 = scmp.eq.s32.totalorder %s37, 1
      %p390 = por %p388, %p389
      %p392 = scmp.ne.s32.totalorder %s377, %s391
      %p393 = scmp.eq.s32.totalorder %s37, 0
      %p394 = por %p392, %p393
      %s396 = sadd.s32 %s395, 1
      %p399 = scmp.eq.s32.totalorder %s31, 1
      %p400 = scmp.ne.s32.totalorder %s395, %s397
      %p401 = scmp.eq.s32.totalorder %s31, 0
      %p402 = por %p400, %p401
      %p403 = scmp.ne.s32.totalorder %s395, %s397
      %p404 = scmp.eq.s32.totalorder %s36, 1
      %p405 = por %p403, %p404
      %p406 = scmp.ne.s32.totalorder %s397, %s398
      %p407 = scmp.eq.s32.totalorder %s36, 0
      %p408 = por %p406, %p407
      %p409 = scmp.ne.s32.totalorder %s397, %s398
      %p410 = scmp.eq.s32.totalorder %s37, 1
      %p411 = por %p409, %p410
      %p413 = scmp.ne.s32.totalorder %s398, %s412
      %p414 = scmp.eq.s32.totalorder %s37, 0
      %p415 = por %p413, %p414
      %s417 = sadd.s32 %s416, 1
      %p420 = scmp.eq.s32.totalorder %s31, 1
      %p421 = scmp.ne.s32.totalorder %s416, %s418
      %p422 = scmp.eq.s32.totalorder %s31, 0
      %p423 = por %p421, %p422
      %p424 = scmp.ne.s32.totalorder %s416, %s418
      %p425 = scmp.eq.s32.totalorder %s36, 1
      %p426 = por %p424, %p425
      %p427 = scmp.ne.s32.totalorder %s418, %s419
      %p428 = scmp.eq.s32.totalorder %s36, 0
      %p429 = por %p427, %p428
      %p430 = scmp.ne.s32.totalorder %s418, %s419
      %p431 = scmp.eq.s32.totalorder %s37, 1
      %p432 = por %p430, %p431
      %p434 = scmp.ne.s32.totalorder %s419, %s433
      %p435 = scmp.eq.s32.totalorder %s37, 0
      %p436 = por %p434, %p435
      %s438 = sadd.s32 %s437, 1
      %p441 = scmp.eq.s32.totalorder %s31, 1
      %p442 = scmp.ne.s32.totalorder %s437, %s439
      %p443 = scmp.eq.s32.totalorder %s31, 0
      %p444 = por %p442, %p443
      %p445 = scmp.ne.s32.totalorder %s437, %s439
      %p446 = scmp.eq.s32.totalorder %s36, 1
      %p447 = por %p445, %p446
      %p448 = scmp.ne.s32.totalorder %s439, %s440
      %p449 = scmp.eq.s32.totalorder %s36, 0
      %p450 = por %p448, %p449
      %p451 = scmp.ne.s32.totalorder %s439, %s440
      %p452 = scmp.eq.s32.totalorder %s37, 1
      %p453 = por %p451, %p452
      %p455 = scmp.ne.s32.totalorder %s440, %s454
      %p456 = scmp.eq.s32.totalorder %s37, 0
      %p457 = por %p455, %p456
      %s459 = sadd.s32 %s458, 1
      %p462 = scmp.eq.s32.totalorder %s31, 1
      %p463 = scmp.ne.s32.totalorder %s458, %s460
      %p464 = scmp.eq.s32.totalorder %s31, 0
      %p465 = por %p463, %p464
      %p466 = scmp.ne.s32.totalorder %s458, %s460
      %p467 = scmp.eq.s32.totalorder %s36, 1
      %p468 = por %p466, %p467
      %p469 = scmp.ne.s32.totalorder %s460, %s461
      %p470 = scmp.eq.s32.totalorder %s36, 0
      %p471 = por %p469, %p470
      %p472 = scmp.ne.s32.totalorder %s460, %s461
      %p473 = scmp.eq.s32.totalorder %s37, 1
      %p474 = por %p472, %p473
      %p476 = scmp.ne.s32.totalorder %s461, %s475
      %p477 = scmp.eq.s32.totalorder %s37, 0
      %p478 = por %p476, %p477
      %s479 = ssub.s32 %s31, %s38
      %p480 = scmp.eq.s32.totalorder %s479, 0
      %s482 = sadd.s32 %s481, 1
      %s483 = scalar_select %p480, %s481, %s482
      %p486 = pneg %p480
      %p487 = scmp.eq.s32.totalorder %s31, 1
      %p488 = por %p486, %p487
      %p489 = scmp.ne.s32.totalorder %s481, %s484
      %p490 = scmp.eq.s32.totalorder %s31, 0
      %p491 = por %p489, %p490
      %p492 = scmp.ne.s32.totalorder %s481, %s484
      %p493 = scmp.eq.s32.totalorder %s36, 1
      %p494 = por %p492, %p493
      %p495 = scmp.ne.s32.totalorder %s484, %s485
      %p496 = scmp.eq.s32.totalorder %s36, 0
      %p497 = por %p495, %p496
      %p498 = scmp.ne.s32.totalorder %s484, %s485
      %p499 = scmp.eq.s32.totalorder %s37, 1
      %p500 = por %p498, %p499
      %p502 = scmp.ne.s32.totalorder %s485, %s501
      %p503 = scmp.eq.s32.totalorder %s37, 0
      %p504 = por %p502, %p503
      %s505 = ssub.s32 %s31, %s38
      %p506 = scmp.eq.s32.totalorder %s505, 0
      %s508 = sadd.s32 %s507, 1
      %s509 = scalar_select %p506, %s507, %s508
      %p512 = pneg %p506
      %p513 = scmp.eq.s32.totalorder %s31, 1
      %p514 = por %p512, %p513
      %p515 = scmp.ne.s32.totalorder %s507, %s510
      %p516 = scmp.eq.s32.totalorder %s31, 0
      %p517 = por %p515, %p516
      %p518 = scmp.ne.s32.totalorder %s507, %s510
      %p519 = scmp.eq.s32.totalorder %s36, 1
      %p520 = por %p518, %p519
      %p521 = scmp.ne.s32.totalorder %s510, %s511
      %p522 = scmp.eq.s32.totalorder %s36, 0
      %p523 = por %p521, %p522
      %p524 = scmp.ne.s32.totalorder %s510, %s511
      %p525 = scmp.eq.s32.totalorder %s37, 1
      %p526 = por %p524, %p525
      %p528 = scmp.ne.s32.totalorder %s511, %s527
      %p529 = scmp.eq.s32.totalorder %s37, 0
      %p530 = por %p528, %p529
      %p531 = scmp.le.s32.totalorder 1, %s31
      %p532 = scmp.lt.s32.totalorder %s31, 3
      %p533 = pnand %p531, %p532
      %p534 = pneg %p533
      // Predicated region
      $region9: #{are_encoder_forward.2} parent=5 // pred_check
        _
      $region10: #{are_encoder_forward.2} parent=5 // pred_check_branch
        %536 = sbr.rel (%p533) target = $region12
      $region11: #{are_encoder_forward.2} parent=5 // pred_region
        %s537 = ssub.s32 %s31, 1
        // Predicated region
        $region13: #{are_encoder_forward.2} parent=11 // pred_check
          %p538 = pneg %p156
        $region14: #{are_encoder_forward.2} parent=11 // pred_check_branch
          %540 = sbr.rel (%p538) target = $region16
        $region15: #{are_encoder_forward.2} parent=11 // pred_region
          _
        $region16: #{are_encoder_forward.2} parent=11 // pred_fallthru
          _
        // Predicated region
        $region17: #{are_encoder_forward.2} parent=11 // pred_check
          %p541 = pneg %p177
        $region18: #{are_encoder_forward.2} parent=11 // pred_check_branch
          %543 = sbr.rel (%p541) target = $region20
        $region19: #{are_encoder_forward.2} parent=11 // pred_region
          _
        $region20: #{are_encoder_forward.2} parent=11 // pred_fallthru
          _
        // Predicated region
        $region21: #{are_encoder_forward.2} parent=11 // pred_check
          %p544 = pneg %p198
        $region22: #{are_encoder_forward.2} parent=11 // pred_check_branch
          %546 = sbr.rel (%p544) target = $region24
        $region23: #{are_encoder_forward.2} parent=11 // pred_region
          _
        $region24: #{are_encoder_forward.2} parent=11 // pred_fallthru
          _
        // Predicated region
        $region25: #{are_encoder_forward.2} parent=11 // pred_check
          %p547 = pneg %p219
        $region26: #{are_encoder_forward.2} parent=11 // pred_check_branch
          %549 = sbr.rel (%p547) target = $region28
        $region27: #{are_encoder_forward.2} parent=11 // pred_region
          _
        $region28: #{are_encoder_forward.2} parent=11 // pred_fallthru
          _
        // Predicated region
        $region29: #{are_encoder_forward.2} parent=11 // pred_check
          %p550 = pneg %p240
        $region30: #{are_encoder_forward.2} parent=11 // pred_check_branch
          %552 = sbr.rel (%p550) target = $region32
        $region31: #{are_encoder_forward.2} parent=11 // pred_region
          _
        $region32: #{are_encoder_forward.2} parent=11 // pred_fallthru
          _
        // Predicated region
        $region33: #{are_encoder_forward.2} parent=11 // pred_check
          %p553 = pneg %p261
        $region34: #{are_encoder_forward.2} parent=11 // pred_check_branch
          %555 = sbr.rel (%p553) target = $region36
        $region35: #{are_encoder_forward.2} parent=11 // pred_region
          _
        $region36: #{are_encoder_forward.2} parent=11 // pred_fallthru
          _
        // Predicated region
        $region37: #{are_encoder_forward.2} parent=11 // pred_check
          %p556 = pneg %p282
        $region38: #{are_encoder_forward.2} parent=11 // pred_check_branch
          %558 = sbr.rel (%p556) target = $region40
        $region39: #{are_encoder_forward.2} parent=11 // pred_region
          _
        $region40: #{are_encoder_forward.2} parent=11 // pred_fallthru
          _
        // Predicated region
        $region41: #{are_encoder_forward.2} parent=11 // pred_check
          %p559 = pneg %p303
        $region42: #{are_encoder_forward.2} parent=11 // pred_check_branch
          %561 = sbr.rel (%p559) target = $region44
        $region43: #{are_encoder_forward.2} parent=11 // pred_region
          _
        $region44: #{are_encoder_forward.2} parent=11 // pred_fallthru
          _
        // Predicated region
        $region45: #{are_encoder_forward.2} parent=11 // pred_check
          %p562 = pneg %p324
        $region46: #{are_encoder_forward.2} parent=11 // pred_check_branch
          %564 = sbr.rel (%p562) target = $region48
        $region47: #{are_encoder_forward.2} parent=11 // pred_region
          _
        $region48: #{are_encoder_forward.2} parent=11 // pred_fallthru
          _
        // Predicated region
        $region49: #{are_encoder_forward.2} parent=11 // pred_check
          %p565 = pneg %p345
        $region50: #{are_encoder_forward.2} parent=11 // pred_check_branch
          %567 = sbr.rel (%p565) target = $region52
        $region51: #{are_encoder_forward.2} parent=11 // pred_region
          _
        $region52: #{are_encoder_forward.2} parent=11 // pred_fallthru
          _
        // Predicated region
        $region53: #{are_encoder_forward.2} parent=11 // pred_check
          %p568 = pneg %p366
        $region54: #{are_encoder_forward.2} parent=11 // pred_check_branch
          %570 = sbr.rel (%p568) target = $region56
        $region55: #{are_encoder_forward.2} parent=11 // pred_region
          _
        $region56: #{are_encoder_forward.2} parent=11 // pred_fallthru
          _
        // Predicated region
        $region57: #{are_encoder_forward.2} parent=11 // pred_check
          %p571 = pneg %p387
        $region58: #{are_encoder_forward.2} parent=11 // pred_check_branch
          %573 = sbr.rel (%p571) target = $region60
        $region59: #{are_encoder_forward.2} parent=11 // pred_region
          _
        $region60: #{are_encoder_forward.2} parent=11 // pred_fallthru
          _
        // Predicated region
        $region61: #{are_encoder_forward.2} parent=11 // pred_check
          %p574 = pneg %p408
        $region62: #{are_encoder_forward.2} parent=11 // pred_check_branch
          %576 = sbr.rel (%p574) target = $region64
        $region63: #{are_encoder_forward.2} parent=11 // pred_region
          _
        $region64: #{are_encoder_forward.2} parent=11 // pred_fallthru
          _
        // Predicated region
        $region65: #{are_encoder_forward.2} parent=11 // pred_check
          %p577 = pneg %p429
        $region66: #{are_encoder_forward.2} parent=11 // pred_check_branch
          %579 = sbr.rel (%p577) target = $region68
        $region67: #{are_encoder_forward.2} parent=11 // pred_region
          _
        $region68: #{are_encoder_forward.2} parent=11 // pred_fallthru
          _
        // Predicated region
        $region69: #{are_encoder_forward.2} parent=11 // pred_check
          %p580 = pneg %p450
        $region70: #{are_encoder_forward.2} parent=11 // pred_check_branch
          %582 = sbr.rel (%p580) target = $region72
        $region71: #{are_encoder_forward.2} parent=11 // pred_region
          _
        $region72: #{are_encoder_forward.2} parent=11 // pred_fallthru
          _
        // Predicated region
        $region73: #{are_encoder_forward.2} parent=11 // pred_check
          %p583 = pneg %p471
        $region74: #{are_encoder_forward.2} parent=11 // pred_check_branch
          %585 = sbr.rel (%p583) target = $region76
        $region75: #{are_encoder_forward.2} parent=11 // pred_region
          _
        $region76: #{are_encoder_forward.2} parent=11 // pred_fallthru
          _
      $region12: #{are_encoder_forward.2} parent=5 // pred_fallthru
        _
      %p586 = scmp.lt.s32.totalorder %s31, 2
      // Predicated region
      $region77: #{are_encoder_forward.2} parent=5 // pred_check
        %p587 = pneg %p586
      $region78: #{are_encoder_forward.2} parent=5 // pred_check_branch
        %589 = sbr.rel (%p587) target = $region80
      $region79: #{are_encoder_forward.2} parent=5 // pred_region
        // Predicated region
        $region81: #{are_encoder_forward.2} parent=79 // pred_check
          %p590 = pneg %p51
        $region82: #{are_encoder_forward.2} parent=79 // pred_check_branch
          %592 = sbr.rel (%p590) target = $region84
        $region83: #{are_encoder_forward.2} parent=79 // pred_region
          %p593 = scmp.lt.s32.totalorder %s31, 1
          %s594 = scalar_select %p593, %s31, 1
          %s595 = smul.addr %s594, 9
          %s596 = smul.addr %s595, 8
          %s597 = scalar_lea.vmem %s0, %s596
        $region84: #{are_encoder_forward.2} parent=79 // pred_fallthru
          _
        // Predicated region
        $region85: #{are_encoder_forward.2} parent=79 // pred_check
          %p598 = pneg %p77
        $region86: #{are_encoder_forward.2} parent=79 // pred_check_branch
          %600 = sbr.rel (%p598) target = $region88
        $region87: #{are_encoder_forward.2} parent=79 // pred_region
          %p601 = scmp.lt.s32.totalorder %s31, 1
          %s602 = scalar_select %p601, %s31, 1
          %s603 = smul.addr %s602, 9
          %s604 = smul.addr %s603, 8
          %s605 = scalar_lea.vmem %s1, %s604
        $region88: #{are_encoder_forward.2} parent=79 // pred_fallthru
          _
        // Predicated region
        $region89: #{are_encoder_forward.2} parent=79 // pred_check
          %p606 = pneg %p103
        $region90: #{are_encoder_forward.2} parent=79 // pred_check_branch
          %608 = sbr.rel (%p606) target = $region92
        $region91: #{are_encoder_forward.2} parent=79 // pred_region
          %p609 = scmp.lt.s32.totalorder %s31, 1
          %s610 = scalar_select %p609, %s31, 1
          %s611 = smul.addr %s610, 8
          %s612 = scalar_lea.vmem %s2, %s611
        $region92: #{are_encoder_forward.2} parent=79 // pred_fallthru
          _
        // Predicated region
        $region93: #{are_encoder_forward.2} parent=79 // pred_check
          %p613 = pneg %p129
        $region94: #{are_encoder_forward.2} parent=79 // pred_check_branch
          %615 = sbr.rel (%p613) target = $region96
        $region95: #{are_encoder_forward.2} parent=79 // pred_region
          %p616 = scmp.lt.s32.totalorder %s31, 1
          %s617 = scalar_select %p616, %s31, 1
          %s618 = scalar_lea.vmem %s3, %s617
        $region96: #{are_encoder_forward.2} parent=79 // pred_fallthru
          _
      $region80: #{are_encoder_forward.2} parent=5 // pred_fallthru
        _
      %p619 = scmp.le.s32.totalorder 1, %s31
      %p620 = scmp.lt.s32.totalorder %s31, 3
      %p621 = pnand %p619, %p620
      %p622 = pneg %p621
      // Predicated region
      $region97: #{are_encoder_forward.2} parent=5 // pred_check
        _
      $region98: #{are_encoder_forward.2} parent=5 // pred_check_branch
        %624 = sbr.rel (%p621) target = $region100
      $region99: #{are_encoder_forward.2} parent=5 // pred_region
        %s625 = ssub.s32 %s31, 1
        %p626 = scmp.lt.s32.totalorder %s36, 1
        %s627 = scalar_select %p626, %s36, 1
        %s628 = smul.addr %s627, 9
        %s629 = smul.addr %s628, 8
        %s630 = scalar_lea.vmem %s0, %s629
        %p631 = pneg %p57
        %p632 = pneg %p54
        %p633 = scmp.lt.s32.totalorder %s36, 1
        %s634 = scalar_select %p633, %s36, 1
        %s635 = smul.addr %s634, 9
        %s636 = smul.addr %s635, 8
        %s637 = scalar_lea.vmem %s1, %s636
        %p638 = pneg %p83
        %p639 = pneg %p80
        %p640 = scmp.lt.s32.totalorder %s36, 1
        %s641 = scalar_select %p640, %s36, 1
        %s642 = smul.addr %s641, 8
        %s643 = scalar_lea.vmem %s2, %s642
        %p644 = pneg %p109
        %p645 = pneg %p106
        %p646 = scmp.lt.s32.totalorder %s36, 1
        %s647 = scalar_select %p646, %s36, 1
        %s648 = scalar_lea.vmem %s3, %s647
        %p649 = pneg %p135
        %p650 = pneg %p132
        %p651 = pneg %p156
        %p652 = pneg %p153
        %p653 = pneg %p177
        %p654 = pneg %p174
        %p655 = pneg %p198
        %p656 = pneg %p195
        %p657 = pneg %p219
        %p658 = pneg %p216
        %p659 = pneg %p240
        %p660 = pneg %p237
        %p661 = pneg %p261
        %p662 = pneg %p258
        %p663 = pneg %p282
        %p664 = pneg %p279
        %p665 = pneg %p303
        %p666 = pneg %p300
        %p667 = pneg %p324
        %p668 = pneg %p321
        %p669 = pneg %p345
        %p670 = pneg %p342
        %p671 = pneg %p366
        %p672 = pneg %p363
        %p673 = pneg %p387
        %p674 = pneg %p384
        %p675 = pneg %p408
        %p676 = pneg %p405
        %p677 = pneg %p429
        %p678 = pneg %p426
        %p679 = pneg %p450
        %p680 = pneg %p447
        %p681 = pneg %p471
        %p682 = pneg %p468
        %p683 = pneg %p497
        %p684 = pneg %p494
        %p685 = scmp.lt.s32.totalorder %s36, 1
        %s686 = scalar_select %p685, %s36, 1
        %s687 = smul.addr %s686, 10
        %s688 = smul.addr %s687, 8
        %s689 = scalar_lea.vmem %s20, %s688
        %p690 = pneg %p523
        %p691 = pneg %p520
        %s692 = sand.u32 %s510, 1
        %s693 = scalar_lea.sflag [#allocation3], %s692
        %s694 = sand.u32 %s510, 1
        %s695 = smul.addr %s694, 8
        %s696 = scalar_lea.vmem [#allocation2], %s695
        %p697 = scmp.lt.s32.totalorder %s36, 1
        %s698 = scalar_select %p697, %s36, 1
        %s699 = smul.addr %s698, 9
        %s700 = smul.addr %s699, 8
        %s701 = scalar_lea.vmem %s0, %s700
        %p702 = scmp.lt.s32.totalorder %s36, 1
        %s703 = scalar_select %p702, %s36, 1
        %s704 = smul.addr %s703, 9
        %s705 = smul.addr %s704, 8
        %s706 = scalar_lea.vmem %s1, %s705
        %p707 = scmp.lt.s32.totalorder %s36, 1
        %s708 = scalar_select %p707, %s36, 1
        %s709 = smul.addr %s708, 8
        %s710 = scalar_lea.vmem %s2, %s709
        %p711 = scmp.lt.s32.totalorder %s36, 1
        %s712 = scalar_select %p711, %s36, 1
        %s713 = scalar_lea.vmem %s3, %s712
        %p714 = scmp.lt.s32.totalorder %s36, 1
        %s715 = scalar_select %p714, %s36, 1
        %s716 = smul.addr %s715, 10
        %s717 = smul.addr %s716, 8
        %s718 = scalar_lea.vmem %s20, %s717
        %v719 = vld [vmem:[%s710] sm:$0xff]
        %v720 = vld [vmem:[%s4] sm:$0xff]
        %v721 = vld [vmem:[%s4 + $0x8] sm:$0xff]
        %v722 = vld [vmem:[%s4 + $0x10] sm:$0xff]
        %v723 = vld [vmem:[%s4 + $0x18] sm:$0xff]
        %v724 = vld [vmem:[%s4 + $0x20] sm:$0xff]
        %v725 = vld [vmem:[%s4 + $0x28] sm:$0xff]
        %v726 = vld [vmem:[%s5] sm:$0x1]
        %v728 = vlaneseq
        %v729 = vshrl.u32 %v728, 7
        %v730 = vsub.s32 0, %v729
        %v731 = vrot.slane %v726, %v730
        %vm733 = vcmask 392192
        %v735 = vsel %vm733, %v719, 0
        %737 = vmatprep.subr.mxu0 0.0
        %738 = vmatpush1.msra.mxu0 %v720
        %739 = vmatprep.subr.mxu0 0.0
        %740 = vmatpush1.msra.mxu0 %v721
        %741 = vmatprep.subr.mxu0 0.0
        %742 = vmatpush1.msra.mxu0 %v722
        %743 = vmatprep.subr.mxu0 0.0
        %744 = vmatpush1.msra.mxu0 %v723
        %745 = vmatprep.subr.mxu0 0.0
        %746 = vmatpush1.msra.mxu0 %v724
        %747 = vmatprep.subr.mxu0 0.0
        %748 = vmatpush1.msra.mxu0 %v725
        %749 = vmatprep.subr.mxu0 0.0
        %750 = vmatpush1.msra.mxu0 0.0
        %751 = vmatprep.subr.mxu0 0.0
        %752 = vmatpush1.msra.mxu0 0.0
        %753 = vmatprep.subr.mxu0 0.0
        %754 = vmatpush1.msra.mxu0 0.0
        %755 = vmatprep.subr.mxu0 0.0
        %756 = vmatpush1.msra.mxu0 0.0
        %757 = vmatprep.subr.mxu0 0.0
        %758 = vmatpush1.msra.mxu0 0.0
        %759 = vmatprep.subr.mxu0 0.0
        %760 = vmatpush1.msra.mxu0 0.0
        %761 = vmatprep.subr.mxu0 0.0
        %762 = vmatpush1.msra.mxu0 0.0
        %763 = vmatprep.subr.mxu0 0.0
        %764 = vmatpush1.msra.mxu0 0.0
        %765 = vmatprep.subr.mxu0 0.0
        %766 = vmatpush1.msra.mxu0 0.0
        %767 = vmatprep.subr.mxu0 0.0
        %768 = vmatpush1.msra.mxu0 0.0
        %769 = vmatprep.subr.mxu0 0.0
        %770 = vmatpush1.msra.mxu0 0.0
        %771 = vmatprep.subr.mxu0 0.0
        %772 = vmatpush1.msra.mxu0 0.0
        %773 = vmatprep.subr.mxu0 0.0
        %774 = vmatpush1.msra.mxu0 0.0
        %775 = vmatprep.subr.mxu0 0.0
        %776 = vmatpush1.msra.mxu0 0.0
        %777 = vmatprep.subr.mxu0 0.0
        %778 = vmatpush1.msra.mxu0 0.0
        %779 = vmatprep.subr.mxu0 0.0
        %780 = vmatpush1.msra.mxu0 0.0
        %781 = vmatprep.subr.mxu0 0.0
        %782 = vmatpush1.msra.mxu0 0.0
        %783 = vmatprep.subr.mxu0 0.0
        %784 = vmatpush1.msra.mxu0 0.0
        %785 = vmatprep.subr.mxu0 0.0
        %786 = vmatpush1.msra.mxu0 0.0
        %787 = vmatprep.subr.mxu0 0.0
        %788 = vmatpush1.msra.mxu0 0.0
        %789 = vmatprep.subr.mxu0 0.0
        %790 = vmatpush1.msra.mxu0 0.0
        %791 = vmatprep.subr.mxu0 0.0
        %792 = vmatpush1.msra.mxu0 0.0
        %793 = vmatprep.subr.mxu0 0.0
        %794 = vmatpush1.msra.mxu0 0.0
        %795 = vmatprep.subr.mxu0 0.0
        %796 = vmatpush1.msra.mxu0 0.0
        %797 = vmatprep.subr.mxu0 0.0
        %798 = vmatpush1.msra.mxu0 0.0
        %799 = vmatprep.subr.mxu0 0.0
        %800 = vmatpush1.msra.mxu0 0.0
        %801 = vmatprep.mubr.f32.mxu0 0.0
        %802 = vmatmul.mubr.f32.gmra.mrb[0].mxu0 %v735
        %v803 = vpop.f32.mrb[0].mxu0
        %v804 = vadd.f32 %v731, %v803
        %v805 = vpop.f32.mrb[0].mxu0
        %806 = vdwg.mxu0
        %v807 = vld [vmem:[%s6] sm:$0x1]
        %v808 = vld [vmem:[%s7] sm:$0x1]
        %vm809 = vcmask 261120
        %v810 = vsel %vm809, %v804, 0.0
        %811 = vadd.xlane.f32.xlu0 %v810
        %v812 = vpop.xlane.xlu0 %811
        %v813 = vrcp.pop 32.0
        %v814 = vmul.f32 %v812, %v813
        %v815 = vmul.f32 %v804, %v804
        %v816 = vsel %vm809, %v815, 0.0
        %817 = vadd.xlane.f32.xlu0 %v816
        %v818 = vpop.xlane.xlu0 %817
        %v819 = vmul.f32 %v818, %v813
        %v820 = vmul.f32 %v814, %v814
        %v821 = vsub.f32 %v819, %v820
        %v822 = vsub.f32 %v804, %v814
        %v823 = vadd.f32 %v821, 1e-05
        %v824 = vrsqrt.pop %v823
        %v825 = vmul.f32 %v822, %v824
        %v827 = vlaneseq
        %v828 = vshrl.u32 %v827, 7
        %v829 = vsub.s32 0, %v828
        %v830 = vrot.slane %v807, %v829
        %v832 = vmul.f32 %v825, %v830
        %v834 = vlaneseq
        %v835 = vshrl.u32 %v834, 7
        %v836 = vsub.s32 0, %v835
        %v837 = vrot.slane %v808, %v836
        %v839 = vadd.f32 %v832, %v837
        %840 = vst.msk [vmem:[%s696] sm:$0xff] %vm809, %v839
        %v841 = vld [vmem:[%s701] sm:$0xff]
        %v842 = vld [vmem:[%s701 + $0x8] sm:$0xff]
        %v843 = vld [vmem:[%s701 + $0x10] sm:$0xff]
        %v844 = vld [vmem:[%s701 + $0x18] sm:$0xff]
        %v845 = vld [vmem:[%s701 + $0x20] sm:$0xff]
        %v846 = vld [vmem:[%s701 + $0x28] sm:$0xff]
        %v847 = vld [vmem:[%s701 + $0x30] sm:$0xff]
        %v848 = vld [vmem:[%s701 + $0x38] sm:$0xff]
        %v849 = vld [vmem:[%s701 + $0x40] sm:$0x3]
        %v850 = vld [vmem:[%s706] sm:$0xff]
        %v851 = vld [vmem:[%s706 + $0x8] sm:$0xff]
        %v852 = vld [vmem:[%s706 + $0x10] sm:$0xff]
        %v853 = vld [vmem:[%s706 + $0x18] sm:$0xff]
        %v854 = vld [vmem:[%s706 + $0x20] sm:$0xff]
        %v855 = vld [vmem:[%s706 + $0x28] sm:$0xff]
        %v856 = vld [vmem:[%s706 + $0x30] sm:$0xff]
        %v857 = vld [vmem:[%s706 + $0x38] sm:$0xff]
        %v858 = vld [vmem:[%s706 + $0x40] sm:$0x3]
        %v859 = vadd.f32 %v841, %v850
        %v860 = vadd.f32 %v842, %v851
        %v861 = vadd.f32 %v843, %v852
        %v862 = vadd.f32 %v844, %v853
        %v863 = vadd.f32 %v845, %v854
        %v864 = vadd.f32 %v846, %v855
        %v865 = vadd.f32 %v847, %v856
        %v866 = vadd.f32 %v848, %v857
        %v867 = vadd.f32 %v849, %v858
        %v869 = vrot.slane %v839, 6
        %vm871 = vcmask 1041408
        %v872 = vsel %vm871, %v849, %v869
        %v873 = vsel %vm871, %v869, 0.0
        %v874 = vsel %vm871, %v867, %v869
        %v875 = vld [vmem:[%s8] sm:$0xff]
        %v876 = vld [vmem:[%s8 + $0x8] sm:$0xff]
        %v877 = vld [vmem:[%s8 + $0x10] sm:$0xff]
        %v878 = vld [vmem:[%s8 + $0x18] sm:$0xff]
        %v879 = vld [vmem:[%s9] sm:$0x1]
        %v881 = vlaneseq
        %v882 = vshrl.u32 %v881, 7
        %v883 = vsub.s32 0, %v882
        %v884 = vrot.slane %v879, %v883
        %v887 = vsel %vm809, %v859, 0
        %v890 = vsel %vm809, %v860, 0
        %v893 = vsel %vm809, %v861, 0
        %v896 = vsel %vm809, %v862, 0
        %v899 = vsel %vm809, %v863, 0
        %v902 = vsel %vm809, %v864, 0
        %v905 = vsel %vm809, %v865, 0
        %v908 = vsel %vm809, %v866, 0
        %v911 = vsel %vm809, %v874, 0
        %v914 = vsel %vm809, %v873, 0
        %v917 = vsel %vm809, %v841, 0
        %v920 = vsel %vm809, %v842, 0
        %v923 = vsel %vm809, %v843, 0
        %v926 = vsel %vm809, %v844, 0
        %v929 = vsel %vm809, %v845, 0
        %v932 = vsel %vm809, %v846, 0
        %v935 = vsel %vm809, %v847, 0
        %v938 = vsel %vm809, %v848, 0
        %v941 = vsel %vm809, %v872, 0
        %943 = vmatprep.subr.mxu0 0.0
        %944 = vmatpush1.msra.mxu0 %v875
        %945 = vmatprep.subr.mxu0 0.0
        %946 = vmatpush1.msra.mxu0 %v876
        %947 = vmatprep.subr.mxu0 0.0
        %948 = vmatpush1.msra.mxu0 %v877
        %949 = vmatprep.subr.mxu0 0.0
        %950 = vmatpush1.msra.mxu0 %v878
        %951 = vmatprep.subr.mxu0 0.0
        %952 = vmatpush1.msra.mxu0 0.0
        %953 = vmatprep.subr.mxu0 0.0
        %954 = vmatpush1.msra.mxu0 0.0
        %955 = vmatprep.subr.mxu0 0.0
        %956 = vmatpush1.msra.mxu0 0.0
        %957 = vmatprep.subr.mxu0 0.0
        %958 = vmatpush1.msra.mxu0 0.0
        %959 = vmatprep.subr.mxu0 0.0
        %960 = vmatpush1.msra.mxu0 0.0
        %961 = vmatprep.subr.mxu0 0.0
        %962 = vmatpush1.msra.mxu0 0.0
        %963 = vmatprep.subr.mxu0 0.0
        %964 = vmatpush1.msra.mxu0 0.0
        %965 = vmatprep.subr.mxu0 0.0
        %966 = vmatpush1.msra.mxu0 0.0
        %967 = vmatprep.subr.mxu0 0.0
        %968 = vmatpush1.msra.mxu0 0.0
        %969 = vmatprep.subr.mxu0 0.0
        %970 = vmatpush1.msra.mxu0 0.0
        %971 = vmatprep.subr.mxu0 0.0
        %972 = vmatpush1.msra.mxu0 0.0
        %973 = vmatprep.subr.mxu0 0.0
        %974 = vmatpush1.msra.mxu0 0.0
        %975 = vmatprep.subr.mxu0 0.0
        %976 = vmatpush1.msra.mxu0 0.0
        %977 = vmatprep.subr.mxu0 0.0
        %978 = vmatpush1.msra.mxu0 0.0
        %979 = vmatprep.subr.mxu0 0.0
        %980 = vmatpush1.msra.mxu0 0.0
        %981 = vmatprep.subr.mxu0 0.0
        %982 = vmatpush1.msra.mxu0 0.0
        %983 = vmatprep.subr.mxu0 0.0
        %984 = vmatpush1.msra.mxu0 0.0
        %985 = vmatprep.subr.mxu0 0.0
        %986 = vmatpush1.msra.mxu0 0.0
        %987 = vmatprep.subr.mxu0 0.0
        %988 = vmatpush1.msra.mxu0 0.0
        %989 = vmatprep.subr.mxu0 0.0
        %990 = vmatpush1.msra.mxu0 0.0
        %991 = vmatprep.subr.mxu0 0.0
        %992 = vmatpush1.msra.mxu0 0.0
        %993 = vmatprep.subr.mxu0 0.0
        %994 = vmatpush1.msra.mxu0 0.0
        %995 = vmatprep.subr.mxu0 0.0
        %996 = vmatpush1.msra.mxu0 0.0
        %997 = vmatprep.subr.mxu0 0.0
        %998 = vmatpush1.msra.mxu0 0.0
        %999 = vmatprep.subr.mxu0 0.0
        %1000 = vmatpush1.msra.mxu0 0.0
        %1001 = vmatprep.subr.mxu0 0.0
        %1002 = vmatpush1.msra.mxu0 0.0
        %1003 = vmatprep.subr.mxu0 0.0
        %1004 = vmatpush1.msra.mxu0 0.0
        %1005 = vmatprep.subr.mxu0 0.0
        %1006 = vmatpush1.msra.mxu0 0.0
        %1007 = vmatprep.mubr.f32.mxu0 0.0
        %1008 = vmatmul.mubr.f32.gmra.mrb[0].mxu0 %v887
        %v1009 = vpop.f32.mrb[0].mxu0
        %v1010 = vadd.f32 %v884, %v1009
        %v1011 = vpop.f32.mrb[0].mxu0
        %1012 = vmatprep.mubr.f32.mxu0 0.0
        %1013 = vmatmul.mubr.f32.gmra.mrb[0].mxu0 %v890
        %v1014 = vpop.f32.mrb[0].mxu0
        %v1015 = vadd.f32 %v884, %v1014
        %v1016 = vpop.f32.mrb[0].mxu0
        %1017 = vmatprep.mubr.f32.mxu0 0.0
        %1018 = vmatmul.mubr.f32.gmra.mrb[0].mxu0 %v893
        %v1019 = vpop.f32.mrb[0].mxu0
        %v1020 = vadd.f32 %v884, %v1019
        %v1021 = vpop.f32.mrb[0].mxu0
        %1022 = vmatprep.mubr.f32.mxu0 0.0
        %1023 = vmatmul.mubr.f32.gmra.mrb[0].mxu0 %v896
        %v1024 = vpop.f32.mrb[0].mxu0
        %v1025 = vadd.f32 %v884, %v1024
        %v1026 = vpop.f32.mrb[0].mxu0
        %1027 = vmatprep.mubr.f32.mxu0 0.0
        %1028 = vmatmul.mubr.f32.gmra.mrb[0].mxu0 %v899
        %v1029 = vpop.f32.mrb[0].mxu0
        %v1030 = vadd.f32 %v884, %v1029
        %v1031 = vpop.f32.mrb[0].mxu0
        %1032 = vmatprep.mubr.f32.mxu0 0.0
        %1033 = vmatmul.mubr.f32.gmra.mrb[0].mxu0 %v902
        %v1034 = vpop.f32.mrb[0].mxu0
        %v1035 = vadd.f32 %v884, %v1034
        %v1036 = vpop.f32.mrb[0].mxu0
        %1037 = vmatprep.mubr.f32.mxu0 0.0
        %1038 = vmatmul.mubr.f32.gmra.mrb[0].mxu0 %v905
        %v1039 = vpop.f32.mrb[0].mxu0
        %v1040 = vadd.f32 %v884, %v1039
        %v1041 = vpop.f32.mrb[0].mxu0
        %1042 = vmatprep.mubr.f32.mxu0 0.0
        %1043 = vmatmul.mubr.f32.gmra.mrb[0].mxu0 %v908
        %v1044 = vpop.f32.mrb[0].mxu0
        %v1045 = vadd.f32 %v884, %v1044
        %v1046 = vpop.f32.mrb[0].mxu0
        %1047 = vmatprep.mubr.f32.mxu0 0.0
        %1048 = vmatmul.mubr.f32.gmra.mrb[0].mxu0 %v911
        %v1049 = vpop.f32.mrb[0].mxu0
        %v1050 = vadd.f32 %v884, %v1049
        %v1051 = vpop.f32.mrb[0].mxu0
        %1052 = vmatprep.mubr.f32.mxu0 0.0
        %1053 = vmatmul.mubr.f32.gmra.mrb[0].mxu0 %v914
        %v1054 = vpop.f32.mrb[0].mxu0
        %v1055 = vadd.f32 %v884, %v1054
        %v1056 = vpop.f32.mrb[0].mxu0
        %1057 = vmatprep.mubr.f32.mxu0 0.0
        %1058 = vmatmul.mubr.f32.gmra.mrb[0].mxu0 %v917
        %v1059 = vpop.f32.mrb[0].mxu0
        %v1060 = vadd.f32 %v884, %v1059
        %v1061 = vpop.f32.mrb[0].mxu0
        %1062 = vmatprep.mubr.f32.mxu0 0.0
        %1063 = vmatmul.mubr.f32.gmra.mrb[0].mxu0 %v920
        %v1064 = vpop.f32.mrb[0].mxu0
        %v1065 = vadd.f32 %v884, %v1064
        %v1066 = vpop.f32.mrb[0].mxu0
        %1067 = vmatprep.mubr.f32.mxu0 0.0
        %1068 = vmatmul.mubr.f32.gmra.mrb[0].mxu0 %v923
        %v1069 = vpop.f32.mrb[0].mxu0
        %v1070 = vadd.f32 %v884, %v1069
        %v1071 = vpop.f32.mrb[0].mxu0
        %1072 = vmatprep.mubr.f32.mxu0 0.0
        %1073 = vmatmul.mubr.f32.gmra.mrb[0].mxu0 %v926
        %v1074 = vpop.f32.mrb[0].mxu0
        %v1075 = vadd.f32 %v884, %v1074
        %v1076 = vpop.f32.mrb[0].mxu0
        %1077 = vmatprep.mubr.f32.mxu0 0.0
        %1078 = vmatmul.mubr.f32.gmra.mrb[0].mxu0 %v929
        %v1079 = vpop.f32.mrb[0].mxu0
        %v1080 = vadd.f32 %v884, %v1079
        %v1081 = vpop.f32.mrb[0].mxu0
        %1082 = vmatprep.mubr.f32.mxu0 0.0
        %1083 = vmatmul.mubr.f32.gmra.mrb[0].mxu0 %v932
        %v1084 = vpop.f32.mrb[0].mxu0
        %v1085 = vadd.f32 %v884, %v1084
        %v1086 = vpop.f32.mrb[0].mxu0
        %1087 = vmatprep.mubr.f32.mxu0 0.0
        %1088 = vmatmul.mubr.f32.gmra.mrb[0].mxu0 %v935
        %v1089 = vpop.f32.mrb[0].mxu0
        %v1090 = vadd.f32 %v884, %v1089
        %v1091 = vpop.f32.mrb[0].mxu0
        %1092 = vmatprep.mubr.f32.mxu0 0.0
        %1093 = vmatmul.mubr.f32.gmra.mrb[0].mxu0 %v938
        %v1094 = vpop.f32.mrb[0].mxu0
        %v1095 = vadd.f32 %v884, %v1094
        %v1096 = vpop.f32.mrb[0].mxu0
        %1097 = vmatprep.mubr.f32.mxu0 0.0
        %1098 = vmatmul.mubr.f32.gmra.mrb[0].mxu0 %v941
        %v1099 = vpop.f32.mrb[0].mxu0
        %v1100 = vadd.f32 %v884, %v1099
        %v1101 = vpop.f32.mrb[0].mxu0
        %1102 = vmatprep.mubr.f32.mxu0 0.0
        %1103 = vmatmul.mubr.f32.gmra.mrb[0].mxu0 %v914
        %v1104 = vpop.f32.mrb[0].mxu0
        %v1105 = vadd.f32 %v884, %v1104
        %v1106 = vpop.f32.mrb[0].mxu0
        %1107 = vdwg.mxu0
        %v1108 = vld [vmem:[%s10] sm:$0xff]
        %v1109 = vld [vmem:[%s10 + $0x8] sm:$0xff]
        %v1110 = vld [vmem:[%s10 + $0x10] sm:$0xff]
        %v1111 = vld [vmem:[%s10 + $0x18] sm:$0xff]
        %v1112 = vld [vmem:[%s713] sm:$0x1]
        %v1114 = vlaneseq
        %v1115 = vshrl.u32 %v1114, 7
        %v1116 = vsub.s32 0, %v1115
        %v1117 = vrot.slane %v1112, %v1116
        %1129 = vrot.lane.b32.xlu0 %v1010, 96
        %v1130 = vpop.permute.xlu0 %1129
        %1131 = vrot.lane.b32.xlu0 %v1015, 96
        %v1132 = vpop.permute.xlu0 %1131
        %1133 = vrot.lane.b32.xlu0 %v1020, 96
        %v1134 = vpop.permute.xlu0 %1133
        %1135 = vrot.lane.b32.xlu0 %v1025, 96
        %v1136 = vpop.permute.xlu0 %1135
        %1137 = vrot.lane.b32.xlu0 %v1030, 96
        %v1138 = vpop.permute.xlu0 %1137
        %1139 = vrot.lane.b32.xlu0 %v1035, 96
        %v1140 = vpop.permute.xlu0 %1139
        %1141 = vrot.lane.b32.xlu0 %v1040, 96
        %v1142 = vpop.permute.xlu0 %1141
        %1143 = vrot.lane.b32.xlu0 %v1045, 96
        %v1144 = vpop.permute.xlu0 %1143
        %1145 = vrot.lane.b32.xlu0 %v1050, 96
        %v1146 = vpop.permute.xlu0 %1145
        %1147 = vrot.lane.b32.xlu0 %v1055, 96
        %v1148 = vpop.permute.xlu0 %1147
        %vm1149 = vcmask 64512
        %v1150 = vsel %vm1149, %v1010, 0
        %v1152 = vsel %vm1149, %v1015, 0
        %v1154 = vsel %vm1149, %v1020, 0
        %v1156 = vsel %vm1149, %v1025, 0
        %v1158 = vsel %vm1149, %v1030, 0
        %v1160 = vsel %vm1149, %v1035, 0
        %v1162 = vsel %vm1149, %v1040, 0
        %v1164 = vsel %vm1149, %v1045, 0
        %v1166 = vsel %vm1149, %v1050, 0
        %v1168 = vsel %vm1149, %v1055, 0
        %v1170 = vsel %vm1149, %v1130, 0
        %v1172 = vsel %vm1149, %v1132, 0
        %v1174 = vsel %vm1149, %v1134, 0
        %v1176 = vsel %vm1149, %v1136, 0
        %v1178 = vsel %vm1149, %v1138, 0
        %v1180 = vsel %vm1149, %v1140, 0
        %v1182 = vsel %vm1149, %v1142, 0
        %v1184 = vsel %vm1149, %v1144, 0
        %v1186 = vsel %vm1149, %v1146, 0
        %v1188 = vsel %vm1149, %v1148, 0
        %1190 = vmatprep.subr.mxu0 0.0
        %1191 = vmatpush1.xpose.msra.mxu0 %v1170
        %1192 = vmatprep.subr.mxu0 0.0
        %1193 = vmatpush1.xpose.msra.mxu0 %v1172
        %1194 = vmatprep.subr.mxu0 0.0
        %1195 = vmatpush1.xpose.msra.mxu0 %v1174
        %1196 = vmatprep.subr.mxu0 0.0
        %1197 = vmatpush1.xpose.msra.mxu0 %v1176
        %1198 = vmatprep.subr.mxu0 0.0
        %1199 = vmatpush1.xpose.msra.mxu0 %v1178
        %1200 = vmatprep.subr.mxu0 0.0
        %1201 = vmatpush1.xpose.msra.mxu0 %v1180
        %1202 = vmatprep.subr.mxu0 0.0
        %1203 = vmatpush1.xpose.msra.mxu0 %v1182
        %1204 = vmatprep.subr.mxu0 0.0
        %1205 = vmatpush1.xpose.msra.mxu0 %v1184
        %1206 = vmatprep.subr.mxu0 0.0
        %1207 = vmatpush1.xpose.msra.mxu0 %v1186
        %1208 = vmatprep.subr.mxu0 0.0
        %1209 = vmatpush1.xpose.msra.mxu0 %v1188
        %1210 = vmatprep.subr.mxu0 0.0
        %1211 = vmatpush1.xpose.msra.mxu0 0.0
        %1212 = vmatprep.subr.mxu0 0.0
        %1213 = vmatpush1.xpose.msra.mxu0 0.0
        %1214 = vmatprep.subr.mxu0 0.0
        %1215 = vmatpush1.xpose.msra.mxu0 0.0
        %1216 = vmatprep.subr.mxu0 0.0
        %1217 = vmatpush1.xpose.msra.mxu0 0.0
        %1218 = vmatprep.subr.mxu0 0.0
        %1219 = vmatpush1.xpose.msra.mxu0 0.0
        %1220 = vmatprep.subr.mxu0 0.0
        %1221 = vmatpush1.xpose.msra.mxu0 0.0
        %1222 = vmatprep.subr.mxu0 0.0
        %1223 = vmatpush1.xpose.msra.mxu0 0.0
        %1224 = vmatprep.subr.mxu0 0.0
        %1225 = vmatpush1.xpose.msra.mxu0 0.0
        %1226 = vmatprep.subr.mxu0 0.0
        %1227 = vmatpush1.xpose.msra.mxu0 0.0
        %1228 = vmatprep.subr.mxu0 0.0
        %1229 = vmatpush1.xpose.msra.mxu0 0.0
        %1230 = vmatprep.subr.mxu0 0.0
        %1231 = vmatpush1.xpose.msra.mxu0 0.0
        %1232 = vmatprep.subr.mxu0 0.0
        %1233 = vmatpush1.xpose.msra.mxu0 0.0
        %1234 = vmatprep.subr.mxu0 0.0
        %1235 = vmatpush1.xpose.msra.mxu0 0.0
        %1236 = vmatprep.subr.mxu0 0.0
        %1237 = vmatpush1.xpose.msra.mxu0 0.0
        %1238 = vmatprep.subr.mxu0 0.0
        %1239 = vmatpush1.xpose.msra.mxu0 0.0
        %1240 = vmatprep.subr.mxu0 0.0
        %1241 = vmatpush1.xpose.msra.mxu0 0.0
        %1242 = vmatprep.subr.mxu0 0.0
        %1243 = vmatpush1.xpose.msra.mxu0 0.0
        %1244 = vmatprep.subr.mxu0 0.0
        %1245 = vmatpush1.xpose.msra.mxu0 0.0
        %1246 = vmatprep.subr.mxu0 0.0
        %1247 = vmatpush1.xpose.msra.mxu0 0.0
        %1248 = vmatprep.subr.mxu0 0.0
        %1249 = vmatpush1.xpose.msra.mxu0 0.0
        %1250 = vmatprep.subr.mxu0 0.0
        %1251 = vmatpush1.xpose.msra.mxu0 0.0
        %1252 = vmatprep.subr.mxu0 0.0
        %1253 = vmatpush1.xpose.msra.mxu0 0.0
        %1254 = vmatprep.mubr.f32.mxu0 0.0
        %1255 = vmatmul.mubr.f32.gmra.mrb[0].mxu0 %v1150
        %v1256 = vpop.f32.mrb[0].mxu0
        %v1257 = vadd.f32 %v1117, %v1256
        %v1258 = vpop.f32.mrb[0].mxu0
        %1259 = vmatprep.mubr.f32.mxu0 0.0
        %1260 = vmatmul.mubr.f32.gmra.mrb[0].mxu0 %v1152
        %v1261 = vpop.f32.mrb[0].mxu0
        %v1262 = vadd.f32 %v1117, %v1261
        %v1263 = vpop.f32.mrb[0].mxu0
        %1264 = vmatprep.mubr.f32.mxu0 0.0
        %1265 = vmatmul.mubr.f32.gmra.mrb[0].mxu0 %v1154
        %v1266 = vpop.f32.mrb[0].mxu0
        %v1267 = vadd.f32 %v1117, %v1266
        %v1268 = vpop.f32.mrb[0].mxu0
        %1269 = vmatprep.mubr.f32.mxu0 0.0
        %1270 = vmatmul.mubr.f32.gmra.mrb[0].mxu0 %v1156
        %v1271 = vpop.f32.mrb[0].mxu0
        %v1272 = vadd.f32 %v1117, %v1271
        %v1273 = vpop.f32.mrb[0].mxu0
        %1274 = vmatprep.mubr.f32.mxu0 0.0
        %1275 = vmatmul.mubr.f32.gmra.mrb[0].mxu0 %v1158
        %v1276 = vpop.f32.mrb[0].mxu0
        %v1277 = vadd.f32 %v1117, %v1276
        %v1278 = vpop.f32.mrb[0].mxu0
        %1279 = vmatprep.mubr.f32.mxu0 0.0
        %1280 = vmatmul.mubr.f32.gmra.mrb[0].mxu0 %v1160
        %v1281 = vpop.f32.mrb[0].mxu0
        %v1282 = vadd.f32 %v1117, %v1281
        %v1283 = vpop.f32.mrb[0].mxu0
        %1284 = vmatprep.mubr.f32.mxu0 0.0
        %1285 = vmatmul.mubr.f32.gmra.mrb[0].mxu0 %v1162
        %v1286 = vpop.f32.mrb[0].mxu0
        %v1287 = vadd.f32 %v1117, %v1286
        %v1288 = vpop.f32.mrb[0].mxu0
        %1289 = vmatprep.mubr.f32.mxu0 0.0
        %1290 = vmatmul.mubr.f32.gmra.mrb[0].mxu0 %v1164
        %v1291 = vpop.f32.mrb[0].mxu0
        %v1292 = vadd.f32 %v1117, %v1291
        %v1293 = vpop.f32.mrb[0].mxu0
        %1294 = vmatprep.mubr.f32.mxu0 0.0
        %1295 = vmatmul.mubr.f32.gmra.mrb[0].mxu0 %v1166
        %v1296 = vpop.f32.mrb[0].mxu0
        %v1297 = vadd.f32 %v1117, %v1296
        %v1298 = vpop.f32.mrb[0].mxu0
        %1299 = vmatprep.mubr.f32.mxu0 0.0
        %1300 = vmatmul.mubr.f32.gmra.mrb[0].mxu0 %v1168
        %v1301 = vpop.f32.mrb[0].mxu0
        %v1302 = vadd.f32 %v1117, %v1301
        %v1303 = vpop.f32.mrb[0].mxu0
        %1304 = vdwg.mxu0
        %vm1305 = vcmask 654336
        %v1306 = vsel %vm1305, %v1257, -inf
        %1307 = vmax.xlane.f32.xlu0 %v1306
        %v1308 = vpop.xlane.xlu0 %1307
        %v1309 = vsel %vm1305, %v1262, -inf
        %1310 = vmax.xlane.f32.xlu0 %v1309
        %v1311 = vpop.xlane.xlu0 %1310
        %v1312 = vsel %vm1305, %v1267, -inf
        %1313 = vmax.xlane.f32.xlu0 %v1312
        %v1314 = vpop.xlane.xlu0 %1313
        %v1315 = vsel %vm1305, %v1272, -inf
        %1316 = vmax.xlane.f32.xlu0 %v1315
        %v1317 = vpop.xlane.xlu0 %1316
        %v1318 = vsel %vm1305, %v1277, -inf
        %1319 = vmax.xlane.f32.xlu0 %v1318
        %v1320 = vpop.xlane.xlu0 %1319
        %v1321 = vsel %vm1305, %v1282, -inf
        %1322 = vmax.xlane.f32.xlu0 %v1321
        %v1323 = vpop.xlane.xlu0 %1322
        %v1324 = vsel %vm1305, %v1287, -inf
        %1325 = vmax.xlane.f32.xlu0 %v1324
        %v1326 = vpop.xlane.xlu0 %1325
        %v1327 = vsel %vm1305, %v1292, -inf
        %1328 = vmax.xlane.f32.xlu0 %v1327
        %v1329 = vpop.xlane.xlu0 %1328
        %v1330 = vsel %vm1305, %v1297, -inf
        %1331 = vmax.xlane.f32.xlu0 %v1330
        %v1332 = vpop.xlane.xlu0 %1331
        %v1333 = vsel %vm1305, %v1302, -inf
        %1334 = vmax.xlane.f32.xlu0 %v1333
        %v1335 = vpop.xlane.xlu0 %1334
        %v1336 = vsub.f32 %v1257, %v1308
        %v1337 = vsub.f32 %v1262, %v1311
        %v1338 = vsub.f32 %v1267, %v1314
        %v1339 = vsub.f32 %v1272, %v1317
        %v1340 = vsub.f32 %v1277, %v1320
        %v1341 = vsub.f32 %v1282, %v1323
        %v1342 = vsub.f32 %v1287, %v1326
        %v1343 = vsub.f32 %v1292, %v1329
        %v1344 = vsub.f32 %v1297, %v1332
        %v1345 = vsub.f32 %v1302, %v1335
        %v1346 = vmul.f32 %v1336, 1.442695
        %v1347 = vpow.pop %v1346
        %v1348 = vmul.f32 %v1337, 1.442695
        %v1349 = vpow.pop %v1348
        %v1350 = vmul.f32 %v1338, 1.442695
        %v1351 = vpow.pop %v1350
        %v1352 = vmul.f32 %v1339, 1.442695
        %v1353 = vpow.pop %v1352
        %v1354 = vmul.f32 %v1340, 1.442695
        %v1355 = vpow.pop %v1354
        %v1356 = vmul.f32 %v1341, 1.442695
        %v1357 = vpow.pop %v1356
        %v1358 = vmul.f32 %v1342, 1.442695
        %v1359 = vpow.pop %v1358
        %v1360 = vmul.f32 %v1343, 1.442695
        %v1361 = vpow.pop %v1360
        %v1362 = vmul.f32 %v1344, 1.442695
        %v1363 = vpow.pop %v1362
        %v1364 = vmul.f32 %v1345, 1.442695
        %v1365 = vpow.pop %v1364
        %v1366 = vsel %vm1305, %v1347, 0.0
        %1367 = vadd.xlane.f32.xlu0 %v1366
        %v1368 = vpop.xlane.xlu0 %1367
        %v1369 = vsel %vm1305, %v1349, 0.0
        %1370 = vadd.xlane.f32.xlu0 %v1369
        %v1371 = vpop.xlane.xlu0 %1370
        %v1372 = vsel %vm1305, %v1351, 0.0
        %1373 = vadd.xlane.f32.xlu0 %v1372
        %v1374 = vpop.xlane.xlu0 %1373
        %v1375 = vsel %vm1305, %v1353, 0.0
        %1376 = vadd.xlane.f32.xlu0 %v1375
        %v1377 = vpop.xlane.xlu0 %1376
        %v1378 = vsel %vm1305, %v1355, 0.0
        %1379 = vadd.xlane.f32.xlu0 %v1378
        %v1380 = vpop.xlane.xlu0 %1379
        %v1381 = vsel %vm1305, %v1357, 0.0
        %1382 = vadd.xlane.f32.xlu0 %v1381
        %v1383 = vpop.xlane.xlu0 %1382
        %v1384 = vsel %vm1305, %v1359, 0.0
        %1385 = vadd.xlane.f32.xlu0 %v1384
        %v1386 = vpop.xlane.xlu0 %1385
        %v1387 = vsel %vm1305, %v1361, 0.0
        %1388 = vadd.xlane.f32.xlu0 %v1387
        %v1389 = vpop.xlane.xlu0 %1388
        %v1390 = vsel %vm1305, %v1363, 0.0
        %1391 = vadd.xlane.f32.xlu0 %v1390
        %v1392 = vpop.xlane.xlu0 %1391
        %v1393 = vsel %vm1305, %v1365, 0.0
        %1394 = vadd.xlane.f32.xlu0 %v1393
        %v1395 = vpop.xlane.xlu0 %1394
        %v1396 = vrcp.pop %v1368
        %v1397 = vrcp.pop %v1371
        %v1398 = vrcp.pop %v1374
        %v1399 = vrcp.pop %v1377
        %v1400 = vrcp.pop %v1380
        %v1401 = vrcp.pop %v1383
        %v1402 = vrcp.pop %v1386
        %v1403 = vrcp.pop %v1389
        %v1404 = vrcp.pop %v1392
        %v1405 = vrcp.pop %v1395
        %1416 = vrot.lane.b32.xlu0 %v1060, 64
        %v1417 = vpop.permute.xlu0 %1416
        %1418 = vrot.lane.b32.xlu0 %v1065, 64
        %v1419 = vpop.permute.xlu0 %1418
        %1420 = vrot.lane.b32.xlu0 %v1070, 64
        %v1421 = vpop.permute.xlu0 %1420
        %1422 = vrot.lane.b32.xlu0 %v1075, 64
        %v1423 = vpop.permute.xlu0 %1422
        %1424 = vrot.lane.b32.xlu0 %v1080, 64
        %v1425 = vpop.permute.xlu0 %1424
        %1426 = vrot.lane.b32.xlu0 %v1085, 64
        %v1427 = vpop.permute.xlu0 %1426
        %1428 = vrot.lane.b32.xlu0 %v1090, 64
        %v1429 = vpop.permute.xlu0 %1428
        %1430 = vrot.lane.b32.xlu0 %v1095, 64
        %v1431 = vpop.permute.xlu0 %1430
        %1432 = vrot.lane.b32.xlu0 %v1100, 64
        %v1433 = vpop.permute.xlu0 %1432
        %1434 = vrot.lane.b32.xlu0 %v1105, 64
        %v1435 = vpop.permute.xlu0 %1434
        %v1447 = vsel %vm1305, %v1347, 0
        %v1450 = vsel %vm1305, %v1349, 0
        %v1453 = vsel %vm1305, %v1351, 0
        %v1456 = vsel %vm1305, %v1353, 0
        %v1459 = vsel %vm1305, %v1355, 0
        %v1462 = vsel %vm1305, %v1357, 0
        %v1465 = vsel %vm1305, %v1359, 0
        %v1468 = vsel %vm1305, %v1361, 0
        %v1471 = vsel %vm1305, %v1363, 0
        %v1474 = vsel %vm1305, %v1365, 0
        %1476 = vmatprep.subr.mxu0 0.0
        %1477 = vmatpush1.msra.mxu0 %v1417
        %1478 = vmatprep.subr.mxu0 0.0
        %1479 = vmatpush1.msra.mxu0 %v1419
        %1480 = vmatprep.subr.mxu0 0.0
        %1481 = vmatpush1.msra.mxu0 %v1421
        %1482 = vmatprep.subr.mxu0 0.0
        %1483 = vmatpush1.msra.mxu0 %v1423
        %1484 = vmatprep.subr.mxu0 0.0
        %1485 = vmatpush1.msra.mxu0 %v1425
        %1486 = vmatprep.subr.mxu0 0.0
        %1487 = vmatpush1.msra.mxu0 %v1427
        %1488 = vmatprep.subr.mxu0 0.0
        %1489 = vmatpush1.msra.mxu0 %v1429
        %1490 = vmatprep.subr.mxu0 0.0
        %1491 = vmatpush1.msra.mxu0 %v1431
        %1492 = vmatprep.subr.mxu0 0.0
        %1493 = vmatpush1.msra.mxu0 %v1433
        %1494 = vmatprep.subr.mxu0 0.0
        %1495 = vmatpush1.msra.mxu0 %v1435
        %1496 = vmatprep.subr.mxu0 0.0
        %1497 = vmatpush1.msra.mxu0 0.0
        %1498 = vmatprep.subr.mxu0 0.0
        %1499 = vmatpush1.msra.mxu0 0.0
        %1500 = vmatprep.subr.mxu0 0.0
        %1501 = vmatpush1.msra.mxu0 0.0
        %1502 = vmatprep.subr.mxu0 0.0
        %1503 = vmatpush1.msra.mxu0 0.0
        %1504 = vmatprep.subr.mxu0 0.0
        %1505 = vmatpush1.msra.mxu0 0.0
        %1506 = vmatprep.subr.mxu0 0.0
        %1507 = vmatpush1.msra.mxu0 0.0
        %1508 = vmatprep.subr.mxu0 0.0
        %1509 = vmatpush1.msra.mxu0 0.0
        %1510 = vmatprep.subr.mxu0 0.0
        %1511 = vmatpush1.msra.mxu0 0.0
        %1512 = vmatprep.subr.mxu0 0.0
        %1513 = vmatpush1.msra.mxu0 0.0
        %1514 = vmatprep.subr.mxu0 0.0
        %1515 = vmatpush1.msra.mxu0 0.0
        %1516 = vmatprep.subr.mxu0 0.0
        %1517 = vmatpush1.msra.mxu0 0.0
        %1518 = vmatprep.subr.mxu0 0.0
        %1519 = vmatpush1.msra.mxu0 0.0
        %1520 = vmatprep.subr.mxu0 0.0
        %1521 = vmatpush1.msra.mxu0 0.0
        %1522 = vmatprep.subr.mxu0 0.0
        %1523 = vmatpush1.msra.mxu0 0.0
        %1524 = vmatprep.subr.mxu0 0.0
        %1525 = vmatpush1.msra.mxu0 0.0
        %1526 = vmatprep.subr.mxu0 0.0
        %1527 = vmatpush1.msra.mxu0 0.0
        %1528 = vmatprep.subr.mxu0 0.0
        %1529 = vmatpush1.msra.mxu0 0.0
        %1530 = vmatprep.subr.mxu0 0.0
        %1531 = vmatpush1.msra.mxu0 0.0
        %1532 = vmatprep.subr.mxu0 0.0
        %1533 = vmatpush1.msra.mxu0 0.0
        %1534 = vmatprep.subr.mxu0 0.0
        %1535 = vmatpush1.msra.mxu0 0.0
        %1536 = vmatprep.subr.mxu0 0.0
        %1537 = vmatpush1.msra.mxu0 0.0
        %1538 = vmatprep.subr.mxu0 0.0
        %1539 = vmatpush1.msra.mxu0 0.0
        %1540 = vmatprep.mubr.f32.mxu0 0.0
        %1541 = vmatmul.mubr.f32.gmra.mrb[0].mxu0 %v1447
        %v1542 = vpop.f32.mrb[0].mxu0
        %v1543 = vadd.f32 0.0, %v1542
        %v1544 = vpop.f32.mrb[0].mxu0
        %1545 = vmatprep.mubr.f32.mxu0 0.0
        %1546 = vmatmul.mubr.f32.gmra.mrb[0].mxu0 %v1450
        %v1547 = vpop.f32.mrb[0].mxu0
        %v1548 = vadd.f32 0.0, %v1547
        %v1549 = vpop.f32.mrb[0].mxu0
        %1550 = vmatprep.mubr.f32.mxu0 0.0
        %1551 = vmatmul.mubr.f32.gmra.mrb[0].mxu0 %v1453
        %v1552 = vpop.f32.mrb[0].mxu0
        %v1553 = vadd.f32 0.0, %v1552
        %v1554 = vpop.f32.mrb[0].mxu0
        %1555 = vmatprep.mubr.f32.mxu0 0.0
        %1556 = vmatmul.mubr.f32.gmra.mrb[0].mxu0 %v1456
        %v1557 = vpop.f32.mrb[0].mxu0
        %v1558 = vadd.f32 0.0, %v1557
        %v1559 = vpop.f32.mrb[0].mxu0
        %1560 = vmatprep.mubr.f32.mxu0 0.0
        %1561 = vmatmul.mubr.f32.gmra.mrb[0].mxu0 %v1459
        %v1562 = vpop.f32.mrb[0].mxu0
        %v1563 = vadd.f32 0.0, %v1562
        %v1564 = vpop.f32.mrb[0].mxu0
        %1565 = vmatprep.mubr.f32.mxu0 0.0
        %1566 = vmatmul.mubr.f32.gmra.mrb[0].mxu0 %v1462
        %v1567 = vpop.f32.mrb[0].mxu0
        %v1568 = vadd.f32 0.0, %v1567
        %v1569 = vpop.f32.mrb[0].mxu0
        %1570 = vmatprep.mubr.f32.mxu0 0.0
        %1571 = vmatmul.mubr.f32.gmra.mrb[0].mxu0 %v1465
        %v1572 = vpop.f32.mrb[0].mxu0
        %v1573 = vadd.f32 0.0, %v1572
        %v1574 = vpop.f32.mrb[0].mxu0
        %1575 = vmatprep.mubr.f32.mxu0 0.0
        %1576 = vmatmul.mubr.f32.gmra.mrb[0].mxu0 %v1468
        %v1577 = vpop.f32.mrb[0].mxu0
        %v1578 = vadd.f32 0.0, %v1577
        %v1579 = vpop.f32.mrb[0].mxu0
        %1580 = vmatprep.mubr.f32.mxu0 0.0
        %1581 = vmatmul.mubr.f32.gmra.mrb[0].mxu0 %v1471
        %v1582 = vpop.f32.mrb[0].mxu0
        %v1583 = vadd.f32 0.0, %v1582
        %v1584 = vpop.f32.mrb[0].mxu0
        %1585 = vmatprep.mubr.f32.mxu0 0.0
        %1586 = vmatmul.mubr.f32.gmra.mrb[0].mxu0 %v1474
        %v1587 = vpop.f32.mrb[0].mxu0
        %v1588 = vadd.f32 0.0, %v1587
        %v1589 = vpop.f32.mrb[0].mxu0
        %1590 = vdwg.mxu0
        %v1591 = vmul.f32 %v1543, %v1396
        %v1592 = vmul.f32 %v1548, %v1397
        %v1593 = vmul.f32 %v1553, %v1398
        %v1594 = vmul.f32 %v1558, %v1399
        %v1595 = vmul.f32 %v1563, %v1400
        %v1596 = vmul.f32 %v1568, %v1401
        %v1597 = vmul.f32 %v1573, %v1402
        %v1598 = vmul.f32 %v1578, %v1403
        %v1599 = vmul.f32 %v1583, %v1404
        %v1600 = vmul.f32 %v1588, %v1405
        %1601 = vrot.lane.b32.xlu0 %v1010, 120
        %v1602 = vpop.permute.xlu0 %1601
        %1603 = vrot.lane.b32.xlu0 %v1015, 120
        %v1604 = vpop.permute.xlu0 %1603
        %1605 = vrot.lane.b32.xlu0 %v1020, 120
        %v1606 = vpop.permute.xlu0 %1605
        %1607 = vrot.lane.b32.xlu0 %v1025, 120
        %v1608 = vpop.permute.xlu0 %1607
        %1609 = vrot.lane.b32.xlu0 %v1030, 120
        %v1610 = vpop.permute.xlu0 %1609
        %1611 = vrot.lane.b32.xlu0 %v1035, 120
        %v1612 = vpop.permute.xlu0 %1611
        %1613 = vrot.lane.b32.xlu0 %v1040, 120
        %v1614 = vpop.permute.xlu0 %1613
        %1615 = vrot.lane.b32.xlu0 %v1045, 120
        %v1616 = vpop.permute.xlu0 %1615
        %1617 = vrot.lane.b32.xlu0 %v1050, 120
        %v1618 = vpop.permute.xlu0 %1617
        %1619 = vrot.lane.b32.xlu0 %v1055, 120
        %v1620 = vpop.permute.xlu0 %1619
        %1621 = vrot.lane.b32.xlu0 %v1010, 88
        %v1622 = vpop.permute.xlu0 %1621
        %1623 = vrot.lane.b32.xlu0 %v1015, 88
        %v1624 = vpop.permute.xlu0 %1623
        %1625 = vrot.lane.b32.xlu0 %v1020, 88
        %v1626 = vpop.permute.xlu0 %1625
        %1627 = vrot.lane.b32.xlu0 %v1025, 88
        %v1628 = vpop.permute.xlu0 %1627
        %1629 = vrot.lane.b32.xlu0 %v1030, 88
        %v1630 = vpop.permute.xlu0 %1629
        %1631 = vrot.lane.b32.xlu0 %v1035, 88
        %v1632 = vpop.permute.xlu0 %1631
        %1633 = vrot.lane.b32.xlu0 %v1040, 88
        %v1634 = vpop.permute.xlu0 %1633
        %1635 = vrot.lane.b32.xlu0 %v1045, 88
        %v1636 = vpop.permute.xlu0 %1635
        %1637 = vrot.lane.b32.xlu0 %v1050, 88
        %v1638 = vpop.permute.xlu0 %1637
        %1639 = vrot.lane.b32.xlu0 %v1055, 88
        %v1640 = vpop.permute.xlu0 %1639
        %v1641 = vsel %vm1149, %v1602, 0
        %v1643 = vsel %vm1149, %v1604, 0
        %v1645 = vsel %vm1149, %v1606, 0
        %v1647 = vsel %vm1149, %v1608, 0
        %v1649 = vsel %vm1149, %v1610, 0
        %v1651 = vsel %vm1149, %v1612, 0
        %v1653 = vsel %vm1149, %v1614, 0
        %v1655 = vsel %vm1149, %v1616, 0
        %v1657 = vsel %vm1149, %v1618, 0
        %v1659 = vsel %vm1149, %v1620, 0
        %v1661 = vsel %vm1149, %v1622, 0
        %v1663 = vsel %vm1149, %v1624, 0
        %v1665 = vsel %vm1149, %v1626, 0
        %v1667 = vsel %vm1149, %v1628, 0
        %v1669 = vsel %vm1149, %v1630, 0
        %v1671 = vsel %vm1149, %v1632, 0
        %v1673 = vsel %vm1149, %v1634, 0
        %v1675 = vsel %vm1149, %v1636, 0
        %v1677 = vsel %vm1149, %v1638, 0
        %v1679 = vsel %vm1149, %v1640, 0
        %1681 = vmatprep.subr.mxu0 0.0
        %1682 = vmatpush1.xpose.msra.mxu0 %v1661
        %1683 = vmatprep.subr.mxu0 0.0
        %1684 = vmatpush1.xpose.msra.mxu0 %v1663
        %1685 = vmatprep.subr.mxu0 0.0
        %1686 = vmatpush1.xpose.msra.mxu0 %v1665
        %1687 = vmatprep.subr.mxu0 0.0
        %1688 = vmatpush1.xpose.msra.mxu0 %v1667
        %1689 = vmatprep.subr.mxu0 0.0
        %1690 = vmatpush1.xpose.msra.mxu0 %v1669
        %1691 = vmatprep.subr.mxu0 0.0
        %1692 = vmatpush1.xpose.msra.mxu0 %v1671
        %1693 = vmatprep.subr.mxu0 0.0
        %1694 = vmatpush1.xpose.msra.mxu0 %v1673
        %1695 = vmatprep.subr.mxu0 0.0
        %1696 = vmatpush1.xpose.msra.mxu0 %v1675
        %1697 = vmatprep.subr.mxu0 0.0
        %1698 = vmatpush1.xpose.msra.mxu0 %v1677
        %1699 = vmatprep.subr.mxu0 0.0
        %1700 = vmatpush1.xpose.msra.mxu0 %v1679
        %1701 = vmatprep.subr.mxu0 0.0
        %1702 = vmatpush1.xpose.msra.mxu0 0.0
        %1703 = vmatprep.subr.mxu0 0.0
        %1704 = vmatpush1.xpose.msra.mxu0 0.0
        %1705 = vmatprep.subr.mxu0 0.0
        %1706 = vmatpush1.xpose.msra.mxu0 0.0
        %1707 = vmatprep.subr.mxu0 0.0
        %1708 = vmatpush1.xpose.msra.mxu0 0.0
        %1709 = vmatprep.subr.mxu0 0.0
        %1710 = vmatpush1.xpose.msra.mxu0 0.0
        %1711 = vmatprep.subr.mxu0 0.0
        %1712 = vmatpush1.xpose.msra.mxu0 0.0
        %1713 = vmatprep.subr.mxu0 0.0
        %1714 = vmatpush1.xpose.msra.mxu0 0.0
        %1715 = vmatprep.subr.mxu0 0.0
        %1716 = vmatpush1.xpose.msra.mxu0 0.0
        %1717 = vmatprep.subr.mxu0 0.0
        %1718 = vmatpush1.xpose.msra.mxu0 0.0
        %1719 = vmatprep.subr.mxu0 0.0
        %1720 = vmatpush1.xpose.msra.mxu0 0.0
        %1721 = vmatprep.subr.mxu0 0.0
        %1722 = vmatpush1.xpose.msra.mxu0 0.0
        %1723 = vmatprep.subr.mxu0 0.0
        %1724 = vmatpush1.xpose.msra.mxu0 0.0
        %1725 = vmatprep.subr.mxu0 0.0
        %1726 = vmatpush1.xpose.msra.mxu0 0.0
        %1727 = vmatprep.subr.mxu0 0.0
        %1728 = vmatpush1.xpose.msra.mxu0 0.0
        %1729 = vmatprep.subr.mxu0 0.0
        %1730 = vmatpush1.xpose.msra.mxu0 0.0
        %1731 = vmatprep.subr.mxu0 0.0
        %1732 = vmatpush1.xpose.msra.mxu0 0.0
        %1733 = vmatprep.subr.mxu0 0.0
        %1734 = vmatpush1.xpose.msra.mxu0 0.0
        %1735 = vmatprep.subr.mxu0 0.0
        %1736 = vmatpush1.xpose.msra.mxu0 0.0
        %1737 = vmatprep.subr.mxu0 0.0
        %1738 = vmatpush1.xpose.msra.mxu0 0.0
        %1739 = vmatprep.subr.mxu0 0.0
        %1740 = vmatpush1.xpose.msra.mxu0 0.0
        %1741 = vmatprep.subr.mxu0 0.0
        %1742 = vmatpush1.xpose.msra.mxu0 0.0
        %1743 = vmatprep.subr.mxu0 0.0
        %1744 = vmatpush1.xpose.msra.mxu0 0.0
        %1745 = vmatprep.mubr.f32.mxu0 0.0
        %1746 = vmatmul.mubr.f32.gmra.mrb[0].mxu0 %v1641
        %v1747 = vpop.f32.mrb[0].mxu0
        %v1748 = vadd.f32 %v1117, %v1747
        %v1749 = vpop.f32.mrb[0].mxu0
        %1750 = vmatprep.mubr.f32.mxu0 0.0
        %1751 = vmatmul.mubr.f32.gmra.mrb[0].mxu0 %v1643
        %v1752 = vpop.f32.mrb[0].mxu0
        %v1753 = vadd.f32 %v1117, %v1752
        %v1754 = vpop.f32.mrb[0].mxu0
        %1755 = vmatprep.mubr.f32.mxu0 0.0
        %1756 = vmatmul.mubr.f32.gmra.mrb[0].mxu0 %v1645
        %v1757 = vpop.f32.mrb[0].mxu0
        %v1758 = vadd.f32 %v1117, %v1757
        %v1759 = vpop.f32.mrb[0].mxu0
        %1760 = vmatprep.mubr.f32.mxu0 0.0
        %1761 = vmatmul.mubr.f32.gmra.mrb[0].mxu0 %v1647
        %v1762 = vpop.f32.mrb[0].mxu0
        %v1763 = vadd.f32 %v1117, %v1762
        %v1764 = vpop.f32.mrb[0].mxu0
        %1765 = vmatprep.mubr.f32.mxu0 0.0
        %1766 = vmatmul.mubr.f32.gmra.mrb[0].mxu0 %v1649
        %v1767 = vpop.f32.mrb[0].mxu0
        %v1768 = vadd.f32 %v1117, %v1767
        %v1769 = vpop.f32.mrb[0].mxu0
        %1770 = vmatprep.mubr.f32.mxu0 0.0
        %1771 = vmatmul.mubr.f32.gmra.mrb[0].mxu0 %v1651
        %v1772 = vpop.f32.mrb[0].mxu0
        %v1773 = vadd.f32 %v1117, %v1772
        %v1774 = vpop.f32.mrb[0].mxu0
        %1775 = vmatprep.mubr.f32.mxu0 0.0
        %1776 = vmatmul.mubr.f32.gmra.mrb[0].mxu0 %v1653
        %v1777 = vpop.f32.mrb[0].mxu0
        %v1778 = vadd.f32 %v1117, %v1777
        %v1779 = vpop.f32.mrb[0].mxu0
        %1780 = vmatprep.mubr.f32.mxu0 0.0
        %1781 = vmatmul.mubr.f32.gmra.mrb[0].mxu0 %v1655
        %v1782 = vpop.f32.mrb[0].mxu0
        %v1783 = vadd.f32 %v1117, %v1782
        %v1784 = vpop.f32.mrb[0].mxu0
        %1785 = vmatprep.mubr.f32.mxu0 0.0
        %1786 = vmatmul.mubr.f32.gmra.mrb[0].mxu0 %v1657
        %v1787 = vpop.f32.mrb[0].mxu0
        %v1788 = vadd.f32 %v1117, %v1787
        %v1789 = vpop.f32.mrb[0].mxu0
        %1790 = vmatprep.mubr.f32.mxu0 0.0
        %1791 = vmatmul.mubr.f32.gmra.mrb[0].mxu0 %v1659
        %v1792 = vpop.f32.mrb[0].mxu0
        %v1793 = vadd.f32 %v1117, %v1792
        %v1794 = vpop.f32.mrb[0].mxu0
        %1795 = vdwg.mxu0
        %v1796 = vsel %vm1305, %v1748, -inf
        %1797 = vmax.xlane.f32.xlu0 %v1796
        %v1798 = vpop.xlane.xlu0 %1797
        %v1799 = vsel %vm1305, %v1753, -inf
        %1800 = vmax.xlane.f32.xlu0 %v1799
        %v1801 = vpop.xlane.xlu0 %1800
        %v1802 = vsel %vm1305, %v1758, -inf
        %1803 = vmax.xlane.f32.xlu0 %v1802
        %v1804 = vpop.xlane.xlu0 %1803
        %v1805 = vsel %vm1305, %v1763, -inf
        %1806 = vmax.xlane.f32.xlu0 %v1805
        %v1807 = vpop.xlane.xlu0 %1806
        %v1808 = vsel %vm1305, %v1768, -inf
        %1809 = vmax.xlane.f32.xlu0 %v1808
        %v1810 = vpop.xlane.xlu0 %1809
        %v1811 = vsel %vm1305, %v1773, -inf
        %1812 = vmax.xlane.f32.xlu0 %v1811
        %v1813 = vpop.xlane.xlu0 %1812
        %v1814 = vsel %vm1305, %v1778, -inf
        %1815 = vmax.xlane.f32.xlu0 %v1814
        %v1816 = vpop.xlane.xlu0 %1815
        %v1817 = vsel %vm1305, %v1783, -inf
        %1818 = vmax.xlane.f32.xlu0 %v1817
        %v1819 = vpop.xlane.xlu0 %1818
        %v1820 = vsel %vm1305, %v1788, -inf
        %1821 = vmax.xlane.f32.xlu0 %v1820
        %v1822 = vpop.xlane.xlu0 %1821
        %v1823 = vsel %vm1305, %v1793, -inf
        %1824 = vmax.xlane.f32.xlu0 %v1823
        %v1825 = vpop.xlane.xlu0 %1824
        %v1826 = vsub.f32 %v1748, %v1798
        %v1827 = vsub.f32 %v1753, %v1801
        %v1828 = vsub.f32 %v1758, %v1804
        %v1829 = vsub.f32 %v1763, %v1807
        %v1830 = vsub.f32 %v1768, %v1810
        %v1831 = vsub.f32 %v1773, %v1813
        %v1832 = vsub.f32 %v1778, %v1816
        %v1833 = vsub.f32 %v1783, %v1819
        %v1834 = vsub.f32 %v1788, %v1822
        %v1835 = vsub.f32 %v1793, %v1825
        %v1836 = vmul.f32 %v1826, 1.442695
        %v1837 = vpow.pop %v1836
        %v1838 = vmul.f32 %v1827, 1.442695
        %v1839 = vpow.pop %v1838
        %v1840 = vmul.f32 %v1828, 1.442695
        %v1841 = vpow.pop %v1840
        %v1842 = vmul.f32 %v1829, 1.442695
        %v1843 = vpow.pop %v1842
        %v1844 = vmul.f32 %v1830, 1.442695
        %v1845 = vpow.pop %v1844
        %v1846 = vmul.f32 %v1831, 1.442695
        %v1847 = vpow.pop %v1846
        %v1848 = vmul.f32 %v1832, 1.442695
        %v1849 = vpow.pop %v1848
        %v1850 = vmul.f32 %v1833, 1.442695
        %v1851 = vpow.pop %v1850
        %v1852 = vmul.f32 %v1834, 1.442695
        %v1853 = vpow.pop %v1852
        %v1854 = vmul.f32 %v1835, 1.442695
        %v1855 = vpow.pop %v1854
        %v1856 = vsel %vm1305, %v1837, 0.0
        %1857 = vadd.xlane.f32.xlu0 %v1856
        %v1858 = vpop.xlane.xlu0 %1857
        %v1859 = vsel %vm1305, %v1839, 0.0
        %1860 = vadd.xlane.f32.xlu0 %v1859
        %v1861 = vpop.xlane.xlu0 %1860
        %v1862 = vsel %vm1305, %v1841, 0.0
        %1863 = vadd.xlane.f32.xlu0 %v1862
        %v1864 = vpop.xlane.xlu0 %1863
        %v1865 = vsel %vm1305, %v1843, 0.0
        %1866 = vadd.xlane.f32.xlu0 %v1865
        %v1867 = vpop.xlane.xlu0 %1866
        %v1868 = vsel %vm1305, %v1845, 0.0
        %1869 = vadd.xlane.f32.xlu0 %v1868
        %v1870 = vpop.xlane.xlu0 %1869
        %v1871 = vsel %vm1305, %v1847, 0.0
        %1872 = vadd.xlane.f32.xlu0 %v1871
        %v1873 = vpop.xlane.xlu0 %1872
        %v1874 = vsel %vm1305, %v1849, 0.0
        %1875 = vadd.xlane.f32.xlu0 %v1874
        %v1876 = vpop.xlane.xlu0 %1875
        %v1877 = vsel %vm1305, %v1851, 0.0
        %1878 = vadd.xlane.f32.xlu0 %v1877
        %v1879 = vpop.xlane.xlu0 %1878
        %v1880 = vsel %vm1305, %v1853, 0.0
        %1881 = vadd.xlane.f32.xlu0 %v1880
        %v1882 = vpop.xlane.xlu0 %1881
        %v1883 = vsel %vm1305, %v1855, 0.0
        %1884 = vadd.xlane.f32.xlu0 %v1883
        %v1885 = vpop.xlane.xlu0 %1884
        %v1886 = vrcp.pop %v1858
        %v1887 = vrcp.pop %v1861
        %v1888 = vrcp.pop %v1864
        %v1889 = vrcp.pop %v1867
        %v1890 = vrcp.pop %v1870
        %v1891 = vrcp.pop %v1873
        %v1892 = vrcp.pop %v1876
        %v1893 = vrcp.pop %v1879
        %v1894 = vrcp.pop %v1882
        %v1895 = vrcp.pop %v1885
        %1896 = vrot.lane.b32.xlu0 %v1060, 56
        %v1897 = vpop.permute.xlu0 %1896
        %1898 = vrot.lane.b32.xlu0 %v1065, 56
        %v1899 = vpop.permute.xlu0 %1898
        %1900 = vrot.lane.b32.xlu0 %v1070, 56
        %v1901 = vpop.permute.xlu0 %1900
        %1902 = vrot.lane.b32.xlu0 %v1075, 56
        %v1903 = vpop.permute.xlu0 %1902
        %1904 = vrot.lane.b32.xlu0 %v1080, 56
        %v1905 = vpop.permute.xlu0 %1904
        %1906 = vrot.lane.b32.xlu0 %v1085, 56
        %v1907 = vpop.permute.xlu0 %1906
        %1908 = vrot.lane.b32.xlu0 %v1090, 56
        %v1909 = vpop.permute.xlu0 %1908
        %1910 = vrot.lane.b32.xlu0 %v1095, 56
        %v1911 = vpop.permute.xlu0 %1910
        %1912 = vrot.lane.b32.xlu0 %v1100, 56
        %v1913 = vpop.permute.xlu0 %1912
        %1914 = vrot.lane.b32.xlu0 %v1105, 56
        %v1915 = vpop.permute.xlu0 %1914
        %v1927 = vsel %vm1305, %v1837, 0
        %v1930 = vsel %vm1305, %v1839, 0
        %v1933 = vsel %vm1305, %v1841, 0
        %v1936 = vsel %vm1305, %v1843, 0
        %v1939 = vsel %vm1305, %v1845, 0
        %v1942 = vsel %vm1305, %v1847, 0
        %v1945 = vsel %vm1305, %v1849, 0
        %v1948 = vsel %vm1305, %v1851, 0
        %v1951 = vsel %vm1305, %v1853, 0
        %v1954 = vsel %vm1305, %v1855, 0
        %1956 = vmatprep.subr.mxu0 0.0
        %1957 = vmatpush1.msra.mxu0 %v1897
        %1958 = vmatprep.subr.mxu0 0.0
        %1959 = vmatpush1.msra.mxu0 %v1899
        %1960 = vmatprep.subr.mxu0 0.0
        %1961 = vmatpush1.msra.mxu0 %v1901
        %1962 = vmatprep.subr.mxu0 0.0
        %1963 = vmatpush1.msra.mxu0 %v1903
        %1964 = vmatprep.subr.mxu0 0.0
        %1965 = vmatpush1.msra.mxu0 %v1905
        %1966 = vmatprep.subr.mxu0 0.0
        %1967 = vmatpush1.msra.mxu0 %v1907
        %1968 = vmatprep.subr.mxu0 0.0
        %1969 = vmatpush1.msra.mxu0 %v1909
        %1970 = vmatprep.subr.mxu0 0.0
        %1971 = vmatpush1.msra.mxu0 %v1911
        %1972 = vmatprep.subr.mxu0 0.0
        %1973 = vmatpush1.msra.mxu0 %v1913
        %1974 = vmatprep.subr.mxu0 0.0
        %1975 = vmatpush1.msra.mxu0 %v1915
        %1976 = vmatprep.subr.mxu0 0.0
        %1977 = vmatpush1.msra.mxu0 0.0
        %1978 = vmatprep.subr.mxu0 0.0
        %1979 = vmatpush1.msra.mxu0 0.0
        %1980 = vmatprep.subr.mxu0 0.0
        %1981 = vmatpush1.msra.mxu0 0.0
        %1982 = vmatprep.subr.mxu0 0.0
        %1983 = vmatpush1.msra.mxu0 0.0
        %1984 = vmatprep.subr.mxu0 0.0
        %1985 = vmatpush1.msra.mxu0 0.0
        %1986 = vmatprep.subr.mxu0 0.0
        %1987 = vmatpush1.msra.mxu0 0.0
        %1988 = vmatprep.subr.mxu0 0.0
        %1989 = vmatpush1.msra.mxu0 0.0
        %1990 = vmatprep.subr.mxu0 0.0
        %1991 = vmatpush1.msra.mxu0 0.0
        %1992 = vmatprep.subr.mxu0 0.0
        %1993 = vmatpush1.msra.mxu0 0.0
        %1994 = vmatprep.subr.mxu0 0.0
        %1995 = vmatpush1.msra.mxu0 0.0
        %1996 = vmatprep.subr.mxu0 0.0
        %1997 = vmatpush1.msra.mxu0 0.0
        %1998 = vmatprep.subr.mxu0 0.0
        %1999 = vmatpush1.msra.mxu0 0.0
        %2000 = vmatprep.subr.mxu0 0.0
        %2001 = vmatpush1.msra.mxu0 0.0
        %2002 = vmatprep.subr.mxu0 0.0
        %2003 = vmatpush1.msra.mxu0 0.0
        %2004 = vmatprep.subr.mxu0 0.0
        %2005 = vmatpush1.msra.mxu0 0.0
        %2006 = vmatprep.subr.mxu0 0.0
        %2007 = vmatpush1.msra.mxu0 0.0
        %2008 = vmatprep.subr.mxu0 0.0
        %2009 = vmatpush1.msra.mxu0 0.0
        %2010 = vmatprep.subr.mxu0 0.0
        %2011 = vmatpush1.msra.mxu0 0.0
        %2012 = vmatprep.subr.mxu0 0.0
        %2013 = vmatpush1.msra.mxu0 0.0
        %2014 = vmatprep.subr.mxu0 0.0
        %2015 = vmatpush1.msra.mxu0 0.0
        %2016 = vmatprep.subr.mxu0 0.0
        %2017 = vmatpush1.msra.mxu0 0.0
        %2018 = vmatprep.subr.mxu0 0.0
        %2019 = vmatpush1.msra.mxu0 0.0
        %2020 = vmatprep.mubr.f32.mxu0 0.0
        %2021 = vmatmul.mubr.f32.gmra.mrb[0].mxu0 %v1927
        %v2022 = vpop.f32.mrb[0].mxu0
        %v2023 = vadd.f32 0.0, %v2022
        %v2024 = vpop.f32.mrb[0].mxu0
        %2025 = vmatprep.mubr.f32.mxu0 0.0
        %2026 = vmatmul.mubr.f32.gmra.mrb[0].mxu0 %v1930
        %v2027 = vpop.f32.mrb[0].mxu0
        %v2028 = vadd.f32 0.0, %v2027
        %v2029 = vpop.f32.mrb[0].mxu0
        %2030 = vmatprep.mubr.f32.mxu0 0.0
        %2031 = vmatmul.mubr.f32.gmra.mrb[0].mxu0 %v1933
        %v2032 = vpop.f32.mrb[0].mxu0
        %v2033 = vadd.f32 0.0, %v2032
        %v2034 = vpop.f32.mrb[0].mxu0
        %2035 = vmatprep.mubr.f32.mxu0 0.0
        %2036 = vmatmul.mubr.f32.gmra.mrb[0].mxu0 %v1936
        %v2037 = vpop.f32.mrb[0].mxu0
        %v2038 = vadd.f32 0.0, %v2037
        %v2039 = vpop.f32.mrb[0].mxu0
        %2040 = vmatprep.mubr.f32.mxu0 0.0
        %2041 = vmatmul.mubr.f32.gmra.mrb[0].mxu0 %v1939
        %v2042 = vpop.f32.mrb[0].mxu0
        %v2043 = vadd.f32 0.0, %v2042
        %v2044 = vpop.f32.mrb[0].mxu0
        %2045 = vmatprep.mubr.f32.mxu0 0.0
        %2046 = vmatmul.mubr.f32.gmra.mrb[0].mxu0 %v1942
        %v2047 = vpop.f32.mrb[0].mxu0
        %v2048 = vadd.f32 0.0, %v2047
        %v2049 = vpop.f32.mrb[0].mxu0
        %2050 = vmatprep.mubr.f32.mxu0 0.0
        %2051 = vmatmul.mubr.f32.gmra.mrb[0].mxu0 %v1945
        %v2052 = vpop.f32.mrb[0].mxu0
        %v2053 = vadd.f32 0.0, %v2052
        %v2054 = vpop.f32.mrb[0].mxu0
        %2055 = vmatprep.mubr.f32.mxu0 0.0
        %2056 = vmatmul.mubr.f32.gmra.mrb[0].mxu0 %v1948
        %v2057 = vpop.f32.mrb[0].mxu0
        %v2058 = vadd.f32 0.0, %v2057
        %v2059 = vpop.f32.mrb[0].mxu0
        %2060 = vmatprep.mubr.f32.mxu0 0.0
        %2061 = vmatmul.mubr.f32.gmra.mrb[0].mxu0 %v1951
        %v2062 = vpop.f32.mrb[0].mxu0
        %v2063 = vadd.f32 0.0, %v2062
        %v2064 = vpop.f32.mrb[0].mxu0
        %2065 = vmatprep.mubr.f32.mxu0 0.0
        %2066 = vmatmul.mubr.f32.gmra.mrb[0].mxu0 %v1954
        %v2067 = vpop.f32.mrb[0].mxu0
        %v2068 = vadd.f32 0.0, %v2067
        %v2069 = vpop.f32.mrb[0].mxu0
        %2070 = vdwg.mxu0
        %v2071 = vmul.f32 %v2023, %v1886
        %v2072 = vmul.f32 %v2028, %v1887
        %v2073 = vmul.f32 %v2033, %v1888
        %v2074 = vmul.f32 %v2038, %v1889
        %v2075 = vmul.f32 %v2043, %v1890
        %v2076 = vmul.f32 %v2048, %v1891
        %v2077 = vmul.f32 %v2053, %v1892
        %v2078 = vmul.f32 %v2058, %v1893
        %v2079 = vmul.f32 %v2063, %v1894
        %v2080 = vmul.f32 %v2068, %v1895
        %v2082 = vsel %vm1149, %v2071, 0
        %v2085 = vsel %vm1149, %v2072, 0
        %v2088 = vsel %vm1149, %v2073, 0
        %v2091 = vsel %vm1149, %v2074, 0
        %v2094 = vsel %vm1149, %v2075, 0
        %v2097 = vsel %vm1149, %v2076, 0
        %v2100 = vsel %vm1149, %v2077, 0
        %v2103 = vsel %vm1149, %v2078, 0
        %v2106 = vsel %vm1149, %v2079, 0
        %v2109 = vsel %vm1149, %v2080, 0
        %2111 = vmatprep.subr.mxu0 0.0
        %2112 = vmatpush1.msra.mxu0 %v1109
        %2113 = vmatprep.subr.mxu0 0.0
        %2114 = vmatpush1.msra.mxu0 0.0
        %2115 = vmatprep.subr.mxu0 0.0
        %2116 = vmatpush1.msra.mxu0 0.0
        %2117 = vmatprep.subr.mxu0 0.0
        %2118 = vmatpush1.msra.mxu0 0.0
        %2119 = vmatprep.subr.mxu0 0.0
        %2120 = vmatpush1.msra.mxu0 0.0
        %2121 = vmatprep.subr.mxu0 0.0
        %2122 = vmatpush1.msra.mxu0 0.0
        %2123 = vmatprep.subr.mxu0 0.0
        %2124 = vmatpush1.msra.mxu0 0.0
        %2125 = vmatprep.subr.mxu0 0.0
        %2126 = vmatpush1.msra.mxu0 0.0
        %2127 = vmatprep.subr.mxu0 0.0
        %2128 = vmatpush1.msra.mxu0 0.0
        %2129 = vmatprep.subr.mxu0 0.0
        %2130 = vmatpush1.msra.mxu0 0.0
        %2131 = vmatprep.subr.mxu0 0.0
        %2132 = vmatpush1.msra.mxu0 0.0
        %2133 = vmatprep.subr.mxu0 0.0
        %2134 = vmatpush1.msra.mxu0 0.0
        %2135 = vmatprep.subr.mxu0 0.0
        %2136 = vmatpush1.msra.mxu0 0.0
        %2137 = vmatprep.subr.mxu0 0.0
        %2138 = vmatpush1.msra.mxu0 0.0
        %2139 = vmatprep.subr.mxu0 0.0
        %2140 = vmatpush1.msra.mxu0 0.0
        %2141 = vmatprep.subr.mxu0 0.0
        %2142 = vmatpush1.msra.mxu0 0.0
        %2143 = vmatprep.subr.mxu0 0.0
        %2144 = vmatpush1.msra.mxu0 0.0
        %2145 = vmatprep.subr.mxu0 0.0
        %2146 = vmatpush1.msra.mxu0 0.0
        %2147 = vmatprep.subr.mxu0 0.0
        %2148 = vmatpush1.msra.mxu0 0.0
        %2149 = vmatprep.subr.mxu0 0.0
        %2150 = vmatpush1.msra.mxu0 0.0
        %2151 = vmatprep.subr.mxu0 0.0
        %2152 = vmatpush1.msra.mxu0 0.0
        %2153 = vmatprep.subr.mxu0 0.0
        %2154 = vmatpush1.msra.mxu0 0.0
        %2155 = vmatprep.subr.mxu0 0.0
        %2156 = vmatpush1.msra.mxu0 0.0
        %2157 = vmatprep.subr.mxu0 0.0
        %2158 = vmatpush1.msra.mxu0 0.0
        %2159 = vmatprep.subr.mxu0 0.0
        %2160 = vmatpush1.msra.mxu0 0.0
        %2161 = vmatprep.subr.mxu0 0.0
        %2162 = vmatpush1.msra.mxu0 0.0
        %2163 = vmatprep.subr.mxu0 0.0
        %2164 = vmatpush1.msra.mxu0 0.0
        %2165 = vmatprep.subr.mxu0 0.0
        %2166 = vmatpush1.msra.mxu0 0.0
        %2167 = vmatprep.subr.mxu0 0.0
        %2168 = vmatpush1.msra.mxu0 0.0
        %2169 = vmatprep.subr.mxu0 0.0
        %2170 = vmatpush1.msra.mxu0 0.0
        %2171 = vmatprep.subr.mxu0 0.0
        %2172 = vmatpush1.msra.mxu0 0.0
        %2173 = vmatprep.subr.mxu0 0.0
        %2174 = vmatpush1.msra.mxu0 0.0
        %2175 = vmatprep.mubr.f32.mxu0 0.0
        %2176 = vmatmul.mubr.f32.gmra.mrb[0].mxu0 %v2082
        %v2177 = vpop.f32.mrb[0].mxu0
        %v2178 = vadd.f32 0.0, %v2177
        %v2179 = vpop.f32.mrb[0].mxu0
        %2180 = vmatprep.mubr.f32.mxu0 0.0
        %2181 = vmatmul.mubr.f32.gmra.mrb[0].mxu0 %v2085
        %v2182 = vpop.f32.mrb[0].mxu0
        %v2183 = vadd.f32 0.0, %v2182
        %v2184 = vpop.f32.mrb[0].mxu0
        %2185 = vmatprep.mubr.f32.mxu0 0.0
        %2186 = vmatmul.mubr.f32.gmra.mrb[0].mxu0 %v2088
        %v2187 = vpop.f32.mrb[0].mxu0
        %v2188 = vadd.f32 0.0, %v2187
        %v2189 = vpop.f32.mrb[0].mxu0
        %2190 = vmatprep.mubr.f32.mxu0 0.0
        %2191 = vmatmul.mubr.f32.gmra.mrb[0].mxu0 %v2091
        %v2192 = vpop.f32.mrb[0].mxu0
        %v2193 = vadd.f32 0.0, %v2192
        %v2194 = vpop.f32.mrb[0].mxu0
        %2195 = vmatprep.mubr.f32.mxu0 0.0
        %2196 = vmatmul.mubr.f32.gmra.mrb[0].mxu0 %v2094
        %v2197 = vpop.f32.mrb[0].mxu0
        %v2198 = vadd.f32 0.0, %v2197
        %v2199 = vpop.f32.mrb[0].mxu0
        %2200 = vmatprep.mubr.f32.mxu0 0.0
        %2201 = vmatmul.mubr.f32.gmra.mrb[0].mxu0 %v2097
        %v2202 = vpop.f32.mrb[0].mxu0
        %v2203 = vadd.f32 0.0, %v2202
        %v2204 = vpop.f32.mrb[0].mxu0
        %2205 = vmatprep.mubr.f32.mxu0 0.0
        %2206 = vmatmul.mubr.f32.gmra.mrb[0].mxu0 %v2100
        %v2207 = vpop.f32.mrb[0].mxu0
        %v2208 = vadd.f32 0.0, %v2207
        %v2209 = vpop.f32.mrb[0].mxu0
        %2210 = vmatprep.mubr.f32.mxu0 0.0
        %2211 = vmatmul.mubr.f32.gmra.mrb[0].mxu0 %v2103
        %v2212 = vpop.f32.mrb[0].mxu0
        %v2213 = vadd.f32 0.0, %v2212
        %v2214 = vpop.f32.mrb[0].mxu0
        %2215 = vmatprep.mubr.f32.mxu0 0.0
        %2216 = vmatmul.mubr.f32.gmra.mrb[0].mxu0 %v2106
        %v2217 = vpop.f32.mrb[0].mxu0
        %v2218 = vadd.f32 0.0, %v2217
        %v2219 = vpop.f32.mrb[0].mxu0
        %2220 = vmatprep.mubr.f32.mxu0 0.0
        %2221 = vmatmul.mubr.f32.gmra.mrb[0].mxu0 %v2109
        %v2222 = vpop.f32.mrb[0].mxu0
        %v2223 = vadd.f32 0.0, %v2222
        %v2224 = vpop.f32.mrb[0].mxu0
        %2225 = vdwg.mxu0
        %v2227 = vsel %vm1149, %v1591, 0
        %v2230 = vsel %vm1149, %v1592, 0
        %v2233 = vsel %vm1149, %v1593, 0
        %v2236 = vsel %vm1149, %v1594, 0
        %v2239 = vsel %vm1149, %v1595, 0
        %v2242 = vsel %vm1149, %v1596, 0
        %v2245 = vsel %vm1149, %v1597, 0
        %v2248 = vsel %vm1149, %v1598, 0
        %v2251 = vsel %vm1149, %v1599, 0
        %v2254 = vsel %vm1149, %v1600, 0
        %2256 = vmatprep.subr.mxu0 0.0
        %2257 = vmatpush1.msra.mxu0 %v1108
        %2258 = vmatprep.subr.mxu0 0.0
        %2259 = vmatpush1.msra.mxu0 0.0
        %2260 = vmatprep.subr.mxu0 0.0
        %2261 = vmatpush1.msra.mxu0 0.0
        %2262 = vmatprep.subr.mxu0 0.0
        %2263 = vmatpush1.msra.mxu0 0.0
        %2264 = vmatprep.subr.mxu0 0.0
        %2265 = vmatpush1.msra.mxu0 0.0
        %2266 = vmatprep.subr.mxu0 0.0
        %2267 = vmatpush1.msra.mxu0 0.0
        %2268 = vmatprep.subr.mxu0 0.0
        %2269 = vmatpush1.msra.mxu0 0.0
        %2270 = vmatprep.subr.mxu0 0.0
        %2271 = vmatpush1.msra.mxu0 0.0
        %2272 = vmatprep.subr.mxu0 0.0
        %2273 = vmatpush1.msra.mxu0 0.0
        %2274 = vmatprep.subr.mxu0 0.0
        %2275 = vmatpush1.msra.mxu0 0.0
        %2276 = vmatprep.subr.mxu0 0.0
        %2277 = vmatpush1.msra.mxu0 0.0
        %2278 = vmatprep.subr.mxu0 0.0
        %2279 = vmatpush1.msra.mxu0 0.0
        %2280 = vmatprep.subr.mxu0 0.0
        %2281 = vmatpush1.msra.mxu0 0.0
        %2282 = vmatprep.subr.mxu0 0.0
        %2283 = vmatpush1.msra.mxu0 0.0
        %2284 = vmatprep.subr.mxu0 0.0
        %2285 = vmatpush1.msra.mxu0 0.0
        %2286 = vmatprep.subr.mxu0 0.0
        %2287 = vmatpush1.msra.mxu0 0.0
        %2288 = vmatprep.subr.mxu0 0.0
        %2289 = vmatpush1.msra.mxu0 0.0
        %2290 = vmatprep.subr.mxu0 0.0
        %2291 = vmatpush1.msra.mxu0 0.0
        %2292 = vmatprep.subr.mxu0 0.0
        %2293 = vmatpush1.msra.mxu0 0.0
        %2294 = vmatprep.subr.mxu0 0.0
        %2295 = vmatpush1.msra.mxu0 0.0
        %2296 = vmatprep.subr.mxu0 0.0
        %2297 = vmatpush1.msra.mxu0 0.0
        %2298 = vmatprep.subr.mxu0 0.0
        %2299 = vmatpush1.msra.mxu0 0.0
        %2300 = vmatprep.subr.mxu0 0.0
        %2301 = vmatpush1.msra.mxu0 0.0
        %2302 = vmatprep.subr.mxu0 0.0
        %2303 = vmatpush1.msra.mxu0 0.0
        %2304 = vmatprep.subr.mxu0 0.0
        %2305 = vmatpush1.msra.mxu0 0.0
        %2306 = vmatprep.subr.mxu0 0.0
        %2307 = vmatpush1.msra.mxu0 0.0
        %2308 = vmatprep.subr.mxu0 0.0
        %2309 = vmatpush1.msra.mxu0 0.0
        %2310 = vmatprep.subr.mxu0 0.0
        %2311 = vmatpush1.msra.mxu0 0.0
        %2312 = vmatprep.subr.mxu0 0.0
        %2313 = vmatpush1.msra.mxu0 0.0
        %2314 = vmatprep.subr.mxu0 0.0
        %2315 = vmatpush1.msra.mxu0 0.0
        %2316 = vmatprep.subr.mxu0 0.0
        %2317 = vmatpush1.msra.mxu0 0.0
        %2318 = vmatprep.subr.mxu0 0.0
        %2319 = vmatpush1.msra.mxu0 0.0
        %2320 = vmatprep.mubr.f32.mxu0 0.0
        %2321 = vmatmul.mubr.f32.gmra.mrb[0].mxu0 %v2227
        %v2322 = vpop.f32.mrb[0].mxu0
        %v2323 = vadd.f32 %v2178, %v2322
        %v2324 = vpop.f32.mrb[0].mxu0
        %2325 = vmatprep.mubr.f32.mxu0 0.0
        %2326 = vmatmul.mubr.f32.gmra.mrb[0].mxu0 %v2230
        %v2327 = vpop.f32.mrb[0].mxu0
        %v2328 = vadd.f32 %v2183, %v2327
        %v2329 = vpop.f32.mrb[0].mxu0
        %2330 = vmatprep.mubr.f32.mxu0 0.0
        %2331 = vmatmul.mubr.f32.gmra.mrb[0].mxu0 %v2233
        %v2332 = vpop.f32.mrb[0].mxu0
        %v2333 = vadd.f32 %v2188, %v2332
        %v2334 = vpop.f32.mrb[0].mxu0
        %2335 = vmatprep.mubr.f32.mxu0 0.0
        %2336 = vmatmul.mubr.f32.gmra.mrb[0].mxu0 %v2236
        %v2337 = vpop.f32.mrb[0].mxu0
        %v2338 = vadd.f32 %v2193, %v2337
        %v2339 = vpop.f32.mrb[0].mxu0
        %2340 = vmatprep.mubr.f32.mxu0 0.0
        %2341 = vmatmul.mubr.f32.gmra.mrb[0].mxu0 %v2239
        %v2342 = vpop.f32.mrb[0].mxu0
        %v2343 = vadd.f32 %v2198, %v2342
        %v2344 = vpop.f32.mrb[0].mxu0
        %2345 = vmatprep.mubr.f32.mxu0 0.0
        %2346 = vmatmul.mubr.f32.gmra.mrb[0].mxu0 %v2242
        %v2347 = vpop.f32.mrb[0].mxu0
        %v2348 = vadd.f32 %v2203, %v2347
        %v2349 = vpop.f32.mrb[0].mxu0
        %2350 = vmatprep.mubr.f32.mxu0 0.0
        %2351 = vmatmul.mubr.f32.gmra.mrb[0].mxu0 %v2245
        %v2352 = vpop.f32.mrb[0].mxu0
        %v2353 = vadd.f32 %v2208, %v2352
        %v2354 = vpop.f32.mrb[0].mxu0
        %2355 = vmatprep.mubr.f32.mxu0 0.0
        %2356 = vmatmul.mubr.f32.gmra.mrb[0].mxu0 %v2248
        %v2357 = vpop.f32.mrb[0].mxu0
        %v2358 = vadd.f32 %v2213, %v2357
        %v2359 = vpop.f32.mrb[0].mxu0
        %2360 = vmatprep.mubr.f32.mxu0 0.0
        %2361 = vmatmul.mubr.f32.gmra.mrb[0].mxu0 %v2251
        %v2362 = vpop.f32.mrb[0].mxu0
        %v2363 = vadd.f32 %v2218, %v2362
        %v2364 = vpop.f32.mrb[0].mxu0
        %2365 = vmatprep.mubr.f32.mxu0 0.0
        %2366 = vmatmul.mubr.f32.gmra.mrb[0].mxu0 %v2254
        %v2367 = vpop.f32.mrb[0].mxu0
        %v2368 = vadd.f32 %v2223, %v2367
        %v2369 = vpop.f32.mrb[0].mxu0
        %2370 = vdwg.mxu0
        %2371 = vrot.lane.b32.xlu0 %v1010, 112
        %v2372 = vpop.permute.xlu0 %2371
        %2373 = vrot.lane.b32.xlu0 %v1015, 112
        %v2374 = vpop.permute.xlu0 %2373
        %2375 = vrot.lane.b32.xlu0 %v1020, 112
        %v2376 = vpop.permute.xlu0 %2375
        %2377 = vrot.lane.b32.xlu0 %v1025, 112
        %v2378 = vpop.permute.xlu0 %2377
        %2379 = vrot.lane.b32.xlu0 %v1030, 112
        %v2380 = vpop.permute.xlu0 %2379
        %2381 = vrot.lane.b32.xlu0 %v1035, 112
        %v2382 = vpop.permute.xlu0 %2381
        %2383 = vrot.lane.b32.xlu0 %v1040, 112
        %v2384 = vpop.permute.xlu0 %2383
        %2385 = vrot.lane.b32.xlu0 %v1045, 112
        %v2386 = vpop.permute.xlu0 %2385
        %2387 = vrot.lane.b32.xlu0 %v1050, 112
        %v2388 = vpop.permute.xlu0 %2387
        %2389 = vrot.lane.b32.xlu0 %v1055, 112
        %v2390 = vpop.permute.xlu0 %2389
        %2391 = vrot.lane.b32.xlu0 %v1010, 80
        %v2392 = vpop.permute.xlu0 %2391
        %2393 = vrot.lane.b32.xlu0 %v1015, 80
        %v2394 = vpop.permute.xlu0 %2393
        %2395 = vrot.lane.b32.xlu0 %v1020, 80
        %v2396 = vpop.permute.xlu0 %2395
        %2397 = vrot.lane.b32.xlu0 %v1025, 80
        %v2398 = vpop.permute.xlu0 %2397
        %2399 = vrot.lane.b32.xlu0 %v1030, 80
        %v2400 = vpop.permute.xlu0 %2399
        %2401 = vrot.lane.b32.xlu0 %v1035, 80
        %v2402 = vpop.permute.xlu0 %2401
        %2403 = vrot.lane.b32.xlu0 %v1040, 80
        %v2404 = vpop.permute.xlu0 %2403
        %2405 = vrot.lane.b32.xlu0 %v1045, 80
        %v2406 = vpop.permute.xlu0 %2405
        %2407 = vrot.lane.b32.xlu0 %v1050, 80
        %v2408 = vpop.permute.xlu0 %2407
        %2409 = vrot.lane.b32.xlu0 %v1055, 80
        %v2410 = vpop.permute.xlu0 %2409
        %v2411 = vsel %vm1149, %v2372, 0
        %v2413 = vsel %vm1149, %v2374, 0
        %v2415 = vsel %vm1149, %v2376, 0
        %v2417 = vsel %vm1149, %v2378, 0
        %v2419 = vsel %vm1149, %v2380, 0
        %v2421 = vsel %vm1149, %v2382, 0
        %v2423 = vsel %vm1149, %v2384, 0
        %v2425 = vsel %vm1149, %v2386, 0
        %v2427 = vsel %vm1149, %v2388, 0
        %v2429 = vsel %vm1149, %v2390, 0
        %v2431 = vsel %vm1149, %v2392, 0
        %v2433 = vsel %vm1149, %v2394, 0
        %v2435 = vsel %vm1149, %v2396, 0
        %v2437 = vsel %vm1149, %v2398, 0
        %v2439 = vsel %vm1149, %v2400, 0
        %v2441 = vsel %vm1149, %v2402, 0
        %v2443 = vsel %vm1149, %v2404, 0
        %v2445 = vsel %vm1149, %v2406, 0
        %v2447 = vsel %vm1149, %v2408, 0
        %v2449 = vsel %vm1149, %v2410, 0
        %2451 = vmatprep.subr.mxu0 0.0
        %2452 = vmatpush1.xpose.msra.mxu0 %v2431
        %2453 = vmatprep.subr.mxu0 0.0
        %2454 = vmatpush1.xpose.msra.mxu0 %v2433
        %2455 = vmatprep.subr.mxu0 0.0
        %2456 = vmatpush1.xpose.msra.mxu0 %v2435
        %2457 = vmatprep.subr.mxu0 0.0
        %2458 = vmatpush1.xpose.msra.mxu0 %v2437
        %2459 = vmatprep.subr.mxu0 0.0
        %2460 = vmatpush1.xpose.msra.mxu0 %v2439
        %2461 = vmatprep.subr.mxu0 0.0
        %2462 = vmatpush1.xpose.msra.mxu0 %v2441
        %2463 = vmatprep.subr.mxu0 0.0
        %2464 = vmatpush1.xpose.msra.mxu0 %v2443
        %2465 = vmatprep.subr.mxu0 0.0
        %2466 = vmatpush1.xpose.msra.mxu0 %v2445
        %2467 = vmatprep.subr.mxu0 0.0
        %2468 = vmatpush1.xpose.msra.mxu0 %v2447
        %2469 = vmatprep.subr.mxu0 0.0
        %2470 = vmatpush1.xpose.msra.mxu0 %v2449
        %2471 = vmatprep.subr.mxu0 0.0
        %2472 = vmatpush1.xpose.msra.mxu0 0.0
        %2473 = vmatprep.subr.mxu0 0.0
        %2474 = vmatpush1.xpose.msra.mxu0 0.0
        %2475 = vmatprep.subr.mxu0 0.0
        %2476 = vmatpush1.xpose.msra.mxu0 0.0
        %2477 = vmatprep.subr.mxu0 0.0
        %2478 = vmatpush1.xpose.msra.mxu0 0.0
        %2479 = vmatprep.subr.mxu0 0.0
        %2480 = vmatpush1.xpose.msra.mxu0 0.0
        %2481 = vmatprep.subr.mxu0 0.0
        %2482 = vmatpush1.xpose.msra.mxu0 0.0
        %2483 = vmatprep.subr.mxu0 0.0
        %2484 = vmatpush1.xpose.msra.mxu0 0.0
        %2485 = vmatprep.subr.mxu0 0.0
        %2486 = vmatpush1.xpose.msra.mxu0 0.0
        %2487 = vmatprep.subr.mxu0 0.0
        %2488 = vmatpush1.xpose.msra.mxu0 0.0
        %2489 = vmatprep.subr.mxu0 0.0
        %2490 = vmatpush1.xpose.msra.mxu0 0.0
        %2491 = vmatprep.subr.mxu0 0.0
        %2492 = vmatpush1.xpose.msra.mxu0 0.0
        %2493 = vmatprep.subr.mxu0 0.0
        %2494 = vmatpush1.xpose.msra.mxu0 0.0
        %2495 = vmatprep.subr.mxu0 0.0
        %2496 = vmatpush1.xpose.msra.mxu0 0.0
        %2497 = vmatprep.subr.mxu0 0.0
        %2498 = vmatpush1.xpose.msra.mxu0 0.0
        %2499 = vmatprep.subr.mxu0 0.0
        %2500 = vmatpush1.xpose.msra.mxu0 0.0
        %2501 = vmatprep.subr.mxu0 0.0
        %2502 = vmatpush1.xpose.msra.mxu0 0.0
        %2503 = vmatprep.subr.mxu0 0.0
        %2504 = vmatpush1.xpose.msra.mxu0 0.0
        %2505 = vmatprep.subr.mxu0 0.0
        %2506 = vmatpush1.xpose.msra.mxu0 0.0
        %2507 = vmatprep.subr.mxu0 0.0
        %2508 = vmatpush1.xpose.msra.mxu0 0.0
        %2509 = vmatprep.subr.mxu0 0.0
        %2510 = vmatpush1.xpose.msra.mxu0 0.0
        %2511 = vmatprep.subr.mxu0 0.0
        %2512 = vmatpush1.xpose.msra.mxu0 0.0
        %2513 = vmatprep.subr.mxu0 0.0
        %2514 = vmatpush1.xpose.msra.mxu0 0.0
        %2515 = vmatprep.mubr.f32.mxu0 0.0
        %2516 = vmatmul.mubr.f32.gmra.mrb[0].mxu0 %v2411
        %v2517 = vpop.f32.mrb[0].mxu0
        %v2518 = vadd.f32 %v1117, %v2517
        %v2519 = vpop.f32.mrb[0].mxu0
        %2520 = vmatprep.mubr.f32.mxu0 0.0
        %2521 = vmatmul.mubr.f32.gmra.mrb[0].mxu0 %v2413
        %v2522 = vpop.f32.mrb[0].mxu0
        %v2523 = vadd.f32 %v1117, %v2522
        %v2524 = vpop.f32.mrb[0].mxu0
        %2525 = vmatprep.mubr.f32.mxu0 0.0
        %2526 = vmatmul.mubr.f32.gmra.mrb[0].mxu0 %v2415
        %v2527 = vpop.f32.mrb[0].mxu0
        %v2528 = vadd.f32 %v1117, %v2527
        %v2529 = vpop.f32.mrb[0].mxu0
        %2530 = vmatprep.mubr.f32.mxu0 0.0
        %2531 = vmatmul.mubr.f32.gmra.mrb[0].mxu0 %v2417
        %v2532 = vpop.f32.mrb[0].mxu0
        %v2533 = vadd.f32 %v1117, %v2532
        %v2534 = vpop.f32.mrb[0].mxu0
        %2535 = vmatprep.mubr.f32.mxu0 0.0
        %2536 = vmatmul.mubr.f32.gmra.mrb[0].mxu0 %v2419
        %v2537 = vpop.f32.mrb[0].mxu0
        %v2538 = vadd.f32 %v1117, %v2537
        %v2539 = vpop.f32.mrb[0].mxu0
        %2540 = vmatprep.mubr.f32.mxu0 0.0
        %2541 = vmatmul.mubr.f32.gmra.mrb[0].mxu0 %v2421
        %v2542 = vpop.f32.mrb[0].mxu0
        %v2543 = vadd.f32 %v1117, %v2542
        %v2544 = vpop.f32.mrb[0].mxu0
        %2545 = vmatprep.mubr.f32.mxu0 0.0
        %2546 = vmatmul.mubr.f32.gmra.mrb[0].mxu0 %v2423
        %v2547 = vpop.f32.mrb[0].mxu0
        %v2548 = vadd.f32 %v1117, %v2547
        %v2549 = vpop.f32.mrb[0].mxu0
        %2550 = vmatprep.mubr.f32.mxu0 0.0
        %2551 = vmatmul.mubr.f32.gmra.mrb[0].mxu0 %v2425
        %v2552 = vpop.f32.mrb[0].mxu0
        %v2553 = vadd.f32 %v1117, %v2552
        %v2554 = vpop.f32.mrb[0].mxu0
        %2555 = vmatprep.mubr.f32.mxu0 0.0
        %2556 = vmatmul.mubr.f32.gmra.mrb[0].mxu0 %v2427
        %v2557 = vpop.f32.mrb[0].mxu0
        %v2558 = vadd.f32 %v1117, %v2557
        %v2559 = vpop.f32.mrb[0].mxu0
        %2560 = vmatprep.mubr.f32.mxu0 0.0
        %2561 = vmatmul.mubr.f32.gmra.mrb[0].mxu0 %v2429
        %v2562 = vpop.f32.mrb[0].mxu0
        %v2563 = vadd.f32 %v1117, %v2562
        %v2564 = vpop.f32.mrb[0].mxu0
        %2565 = vdwg.mxu0
        %v2566 = vsel %vm1305, %v2518, -inf
        %2567 = vmax.xlane.f32.xlu0 %v2566
        %v2568 = vpop.xlane.xlu0 %2567
        %v2569 = vsel %vm1305, %v2523, -inf
        %2570 = vmax.xlane.f32.xlu0 %v2569
        %v2571 = vpop.xlane.xlu0 %2570
        %v2572 = vsel %vm1305, %v2528, -inf
        %2573 = vmax.xlane.f32.xlu0 %v2572
        %v2574 = vpop.xlane.xlu0 %2573
        %v2575 = vsel %vm1305, %v2533, -inf
        %2576 = vmax.xlane.f32.xlu0 %v2575
        %v2577 = vpop.xlane.xlu0 %2576
        %v2578 = vsel %vm1305, %v2538, -inf
        %2579 = vmax.xlane.f32.xlu0 %v2578
        %v2580 = vpop.xlane.xlu0 %2579
        %v2581 = vsel %vm1305, %v2543, -inf
        %2582 = vmax.xlane.f32.xlu0 %v2581
        %v2583 = vpop.xlane.xlu0 %2582
        %v2584 = vsel %vm1305, %v2548, -inf
        %2585 = vmax.xlane.f32.xlu0 %v2584
        %v2586 = vpop.xlane.xlu0 %2585
        %v2587 = vsel %vm1305, %v2553, -inf
        %2588 = vmax.xlane.f32.xlu0 %v2587
        %v2589 = vpop.xlane.xlu0 %2588
        %v2590 = vsel %vm1305, %v2558, -inf
        %2591 = vmax.xlane.f32.xlu0 %v2590
        %v2592 = vpop.xlane.xlu0 %2591
        %v2593 = vsel %vm1305, %v2563, -inf
        %2594 = vmax.xlane.f32.xlu0 %v2593
        %v2595 = vpop.xlane.xlu0 %2594
        %v2596 = vsub.f32 %v2518, %v2568
        %v2597 = vsub.f32 %v2523, %v2571
        %v2598 = vsub.f32 %v2528, %v2574
        %v2599 = vsub.f32 %v2533, %v2577
        %v2600 = vsub.f32 %v2538, %v2580
        %v2601 = vsub.f32 %v2543, %v2583
        %v2602 = vsub.f32 %v2548, %v2586
        %v2603 = vsub.f32 %v2553, %v2589
        %v2604 = vsub.f32 %v2558, %v2592
        %v2605 = vsub.f32 %v2563, %v2595
        %v2606 = vmul.f32 %v2596, 1.442695
        %v2607 = vpow.pop %v2606
        %v2608 = vmul.f32 %v2597, 1.442695
        %v2609 = vpow.pop %v2608
        %v2610 = vmul.f32 %v2598, 1.442695
        %v2611 = vpow.pop %v2610
        %v2612 = vmul.f32 %v2599, 1.442695
        %v2613 = vpow.pop %v2612
        %v2614 = vmul.f32 %v2600, 1.442695
        %v2615 = vpow.pop %v2614
        %v2616 = vmul.f32 %v2601, 1.442695
        %v2617 = vpow.pop %v2616
        %v2618 = vmul.f32 %v2602, 1.442695
        %v2619 = vpow.pop %v2618
        %v2620 = vmul.f32 %v2603, 1.442695
        %v2621 = vpow.pop %v2620
        %v2622 = vmul.f32 %v2604, 1.442695
        %v2623 = vpow.pop %v2622
        %v2624 = vmul.f32 %v2605, 1.442695
        %v2625 = vpow.pop %v2624
        %v2626 = vsel %vm1305, %v2607, 0.0
        %2627 = vadd.xlane.f32.xlu0 %v2626
        %v2628 = vpop.xlane.xlu0 %2627
        %v2629 = vsel %vm1305, %v2609, 0.0
        %2630 = vadd.xlane.f32.xlu0 %v2629
        %v2631 = vpop.xlane.xlu0 %2630
        %v2632 = vsel %vm1305, %v2611, 0.0
        %2633 = vadd.xlane.f32.xlu0 %v2632
        %v2634 = vpop.xlane.xlu0 %2633
        %v2635 = vsel %vm1305, %v2613, 0.0
        %2636 = vadd.xlane.f32.xlu0 %v2635
        %v2637 = vpop.xlane.xlu0 %2636
        %v2638 = vsel %vm1305, %v2615, 0.0
        %2639 = vadd.xlane.f32.xlu0 %v2638
        %v2640 = vpop.xlane.xlu0 %2639
        %v2641 = vsel %vm1305, %v2617, 0.0
        %2642 = vadd.xlane.f32.xlu0 %v2641
        %v2643 = vpop.xlane.xlu0 %2642
        %v2644 = vsel %vm1305, %v2619, 0.0
        %2645 = vadd.xlane.f32.xlu0 %v2644
        %v2646 = vpop.xlane.xlu0 %2645
        %v2647 = vsel %vm1305, %v2621, 0.0
        %2648 = vadd.xlane.f32.xlu0 %v2647
        %v2649 = vpop.xlane.xlu0 %2648
        %v2650 = vsel %vm1305, %v2623, 0.0
        %2651 = vadd.xlane.f32.xlu0 %v2650
        %v2652 = vpop.xlane.xlu0 %2651
        %v2653 = vsel %vm1305, %v2625, 0.0
        %2654 = vadd.xlane.f32.xlu0 %v2653
        %v2655 = vpop.xlane.xlu0 %2654
        %v2656 = vrcp.pop %v2628
        %v2657 = vrcp.pop %v2631
        %v2658 = vrcp.pop %v2634
        %v2659 = vrcp.pop %v2637
        %v2660 = vrcp.pop %v2640
        %v2661 = vrcp.pop %v2643
        %v2662 = vrcp.pop %v2646
        %v2663 = vrcp.pop %v2649
        %v2664 = vrcp.pop %v2652
        %v2665 = vrcp.pop %v2655
        %2666 = vrot.lane.b32.xlu0 %v1060, 48
        %v2667 = vpop.permute.xlu0 %2666
        %2668 = vrot.lane.b32.xlu0 %v1065, 48
        %v2669 = vpop.permute.xlu0 %2668
        %2670 = vrot.lane.b32.xlu0 %v1070, 48
        %v2671 = vpop.permute.xlu0 %2670
        %2672 = vrot.lane.b32.xlu0 %v1075, 48
        %v2673 = vpop.permute.xlu0 %2672
        %2674 = vrot.lane.b32.xlu0 %v1080, 48
        %v2675 = vpop.permute.xlu0 %2674
        %2676 = vrot.lane.b32.xlu0 %v1085, 48
        %v2677 = vpop.permute.xlu0 %2676
        %2678 = vrot.lane.b32.xlu0 %v1090, 48
        %v2679 = vpop.permute.xlu0 %2678
        %2680 = vrot.lane.b32.xlu0 %v1095, 48
        %v2681 = vpop.permute.xlu0 %2680
        %2682 = vrot.lane.b32.xlu0 %v1100, 48
        %v2683 = vpop.permute.xlu0 %2682
        %2684 = vrot.lane.b32.xlu0 %v1105, 48
        %v2685 = vpop.permute.xlu0 %2684
        %v2697 = vsel %vm1305, %v2607, 0
        %v2700 = vsel %vm1305, %v2609, 0
        %v2703 = vsel %vm1305, %v2611, 0
        %v2706 = vsel %vm1305, %v2613, 0
        %v2709 = vsel %vm1305, %v2615, 0
        %v2712 = vsel %vm1305, %v2617, 0
        %v2715 = vsel %vm1305, %v2619, 0
        %v2718 = vsel %vm1305, %v2621, 0
        %v2721 = vsel %vm1305, %v2623, 0
        %v2724 = vsel %vm1305, %v2625, 0
        %2726 = vmatprep.subr.mxu0 0.0
        %2727 = vmatpush1.msra.mxu0 %v2667
        %2728 = vmatprep.subr.mxu0 0.0
        %2729 = vmatpush1.msra.mxu0 %v2669
        %2730 = vmatprep.subr.mxu0 0.0
        %2731 = vmatpush1.msra.mxu0 %v2671
        %2732 = vmatprep.subr.mxu0 0.0
        %2733 = vmatpush1.msra.mxu0 %v2673
        %2734 = vmatprep.subr.mxu0 0.0
        %2735 = vmatpush1.msra.mxu0 %v2675
        %2736 = vmatprep.subr.mxu0 0.0
        %2737 = vmatpush1.msra.mxu0 %v2677
        %2738 = vmatprep.subr.mxu0 0.0
        %2739 = vmatpush1.msra.mxu0 %v2679
        %2740 = vmatprep.subr.mxu0 0.0
        %2741 = vmatpush1.msra.mxu0 %v2681
        %2742 = vmatprep.subr.mxu0 0.0
        %2743 = vmatpush1.msra.mxu0 %v2683
        %2744 = vmatprep.subr.mxu0 0.0
        %2745 = vmatpush1.msra.mxu0 %v2685
        %2746 = vmatprep.subr.mxu0 0.0
        %2747 = vmatpush1.msra.mxu0 0.0
        %2748 = vmatprep.subr.mxu0 0.0
        %2749 = vmatpush1.msra.mxu0 0.0
        %2750 = vmatprep.subr.mxu0 0.0
        %2751 = vmatpush1.msra.mxu0 0.0
        %2752 = vmatprep.subr.mxu0 0.0
        %2753 = vmatpush1.msra.mxu0 0.0
        %2754 = vmatprep.subr.mxu0 0.0
        %2755 = vmatpush1.msra.mxu0 0.0
        %2756 = vmatprep.subr.mxu0 0.0
        %2757 = vmatpush1.msra.mxu0 0.0
        %2758 = vmatprep.subr.mxu0 0.0
        %2759 = vmatpush1.msra.mxu0 0.0
        %2760 = vmatprep.subr.mxu0 0.0
        %2761 = vmatpush1.msra.mxu0 0.0
        %2762 = vmatprep.subr.mxu0 0.0
        %2763 = vmatpush1.msra.mxu0 0.0
        %2764 = vmatprep.subr.mxu0 0.0
        %2765 = vmatpush1.msra.mxu0 0.0
        %2766 = vmatprep.subr.mxu0 0.0
        %2767 = vmatpush1.msra.mxu0 0.0
        %2768 = vmatprep.subr.mxu0 0.0
        %2769 = vmatpush1.msra.mxu0 0.0
        %2770 = vmatprep.subr.mxu0 0.0
        %2771 = vmatpush1.msra.mxu0 0.0
        %2772 = vmatprep.subr.mxu0 0.0
        %2773 = vmatpush1.msra.mxu0 0.0
        %2774 = vmatprep.subr.mxu0 0.0
        %2775 = vmatpush1.msra.mxu0 0.0
        %2776 = vmatprep.subr.mxu0 0.0
        %2777 = vmatpush1.msra.mxu0 0.0
        %2778 = vmatprep.subr.mxu0 0.0
        %2779 = vmatpush1.msra.mxu0 0.0
        %2780 = vmatprep.subr.mxu0 0.0
        %2781 = vmatpush1.msra.mxu0 0.0
        %2782 = vmatprep.subr.mxu0 0.0
        %2783 = vmatpush1.msra.mxu0 0.0
        %2784 = vmatprep.subr.mxu0 0.0
        %2785 = vmatpush1.msra.mxu0 0.0
        %2786 = vmatprep.subr.mxu0 0.0
        %2787 = vmatpush1.msra.mxu0 0.0
        %2788 = vmatprep.subr.mxu0 0.0
        %2789 = vmatpush1.msra.mxu0 0.0
        %2790 = vmatprep.mubr.f32.mxu0 0.0
        %2791 = vmatmul.mubr.f32.gmra.mrb[0].mxu0 %v2697
        %v2792 = vpop.f32.mrb[0].mxu0
        %v2793 = vadd.f32 0.0, %v2792
        %v2794 = vpop.f32.mrb[0].mxu0
        %2795 = vmatprep.mubr.f32.mxu0 0.0
        %2796 = vmatmul.mubr.f32.gmra.mrb[0].mxu0 %v2700
        %v2797 = vpop.f32.mrb[0].mxu0
        %v2798 = vadd.f32 0.0, %v2797
        %v2799 = vpop.f32.mrb[0].mxu0
        %2800 = vmatprep.mubr.f32.mxu0 0.0
        %2801 = vmatmul.mubr.f32.gmra.mrb[0].mxu0 %v2703
        %v2802 = vpop.f32.mrb[0].mxu0
        %v2803 = vadd.f32 0.0, %v2802
        %v2804 = vpop.f32.mrb[0].mxu0
        %2805 = vmatprep.mubr.f32.mxu0 0.0
        %2806 = vmatmul.mubr.f32.gmra.mrb[0].mxu0 %v2706
        %v2807 = vpop.f32.mrb[0].mxu0
        %v2808 = vadd.f32 0.0, %v2807
        %v2809 = vpop.f32.mrb[0].mxu0
        %2810 = vmatprep.mubr.f32.mxu0 0.0
        %2811 = vmatmul.mubr.f32.gmra.mrb[0].mxu0 %v2709
        %v2812 = vpop.f32.mrb[0].mxu0
        %v2813 = vadd.f32 0.0, %v2812
        %v2814 = vpop.f32.mrb[0].mxu0
        %2815 = vmatprep.mubr.f32.mxu0 0.0
        %2816 = vmatmul.mubr.f32.gmra.mrb[0].mxu0 %v2712
        %v2817 = vpop.f32.mrb[0].mxu0
        %v2818 = vadd.f32 0.0, %v2817
        %v2819 = vpop.f32.mrb[0].mxu0
        %2820 = vmatprep.mubr.f32.mxu0 0.0
        %2821 = vmatmul.mubr.f32.gmra.mrb[0].mxu0 %v2715
        %v2822 = vpop.f32.mrb[0].mxu0
        %v2823 = vadd.f32 0.0, %v2822
        %v2824 = vpop.f32.mrb[0].mxu0
        %2825 = vmatprep.mubr.f32.mxu0 0.0
        %2826 = vmatmul.mubr.f32.gmra.mrb[0].mxu0 %v2718
        %v2827 = vpop.f32.mrb[0].mxu0
        %v2828 = vadd.f32 0.0, %v2827
        %v2829 = vpop.f32.mrb[0].mxu0
        %2830 = vmatprep.mubr.f32.mxu0 0.0
        %2831 = vmatmul.mubr.f32.gmra.mrb[0].mxu0 %v2721
        %v2832 = vpop.f32.mrb[0].mxu0
        %v2833 = vadd.f32 0.0, %v2832
        %v2834 = vpop.f32.mrb[0].mxu0
        %2835 = vmatprep.mubr.f32.mxu0 0.0
        %2836 = vmatmul.mubr.f32.gmra.mrb[0].mxu0 %v2724
        %v2837 = vpop.f32.mrb[0].mxu0
        %v2838 = vadd.f32 0.0, %v2837
        %v2839 = vpop.f32.mrb[0].mxu0
        %2840 = vdwg.mxu0
        %v2841 = vmul.f32 %v2793, %v2656
        %v2842 = vmul.f32 %v2798, %v2657
        %v2843 = vmul.f32 %v2803, %v2658
        %v2844 = vmul.f32 %v2808, %v2659
        %v2845 = vmul.f32 %v2813, %v2660
        %v2846 = vmul.f32 %v2818, %v2661
        %v2847 = vmul.f32 %v2823, %v2662
        %v2848 = vmul.f32 %v2828, %v2663
        %v2849 = vmul.f32 %v2833, %v2664
        %v2850 = vmul.f32 %v2838, %v2665
        %v2852 = vsel %vm1149, %v2841, 0
        %v2855 = vsel %vm1149, %v2842, 0
        %v2858 = vsel %vm1149, %v2843, 0
        %v2861 = vsel %vm1149, %v2844, 0
        %v2864 = vsel %vm1149, %v2845, 0
        %v2867 = vsel %vm1149, %v2846, 0
        %v2870 = vsel %vm1149, %v2847, 0
        %v2873 = vsel %vm1149, %v2848, 0
        %v2876 = vsel %vm1149, %v2849, 0
        %v2879 = vsel %vm1149, %v2850, 0
        %2881 = vmatprep.subr.mxu0 0.0
        %2882 = vmatpush1.msra.mxu0 %v1110
        %2883 = vmatprep.subr.mxu0 0.0
        %2884 = vmatpush1.msra.mxu0 0.0
        %2885 = vmatprep.subr.mxu0 0.0
        %2886 = vmatpush1.msra.mxu0 0.0
        %2887 = vmatprep.subr.mxu0 0.0
        %2888 = vmatpush1.msra.mxu0 0.0
        %2889 = vmatprep.subr.mxu0 0.0
        %2890 = vmatpush1.msra.mxu0 0.0
        %2891 = vmatprep.subr.mxu0 0.0
        %2892 = vmatpush1.msra.mxu0 0.0
        %2893 = vmatprep.subr.mxu0 0.0
        %2894 = vmatpush1.msra.mxu0 0.0
        %2895 = vmatprep.subr.mxu0 0.0
        %2896 = vmatpush1.msra.mxu0 0.0
        %2897 = vmatprep.subr.mxu0 0.0
        %2898 = vmatpush1.msra.mxu0 0.0
        %2899 = vmatprep.subr.mxu0 0.0
        %2900 = vmatpush1.msra.mxu0 0.0
        %2901 = vmatprep.subr.mxu0 0.0
        %2902 = vmatpush1.msra.mxu0 0.0
        %2903 = vmatprep.subr.mxu0 0.0
        %2904 = vmatpush1.msra.mxu0 0.0
        %2905 = vmatprep.subr.mxu0 0.0
        %2906 = vmatpush1.msra.mxu0 0.0
        %2907 = vmatprep.subr.mxu0 0.0
        %2908 = vmatpush1.msra.mxu0 0.0
        %2909 = vmatprep.subr.mxu0 0.0
        %2910 = vmatpush1.msra.mxu0 0.0
        %2911 = vmatprep.subr.mxu0 0.0
        %2912 = vmatpush1.msra.mxu0 0.0
        %2913 = vmatprep.subr.mxu0 0.0
        %2914 = vmatpush1.msra.mxu0 0.0
        %2915 = vmatprep.subr.mxu0 0.0
        %2916 = vmatpush1.msra.mxu0 0.0
        %2917 = vmatprep.subr.mxu0 0.0
        %2918 = vmatpush1.msra.mxu0 0.0
        %2919 = vmatprep.subr.mxu0 0.0
        %2920 = vmatpush1.msra.mxu0 0.0
        %2921 = vmatprep.subr.mxu0 0.0
        %2922 = vmatpush1.msra.mxu0 0.0
        %2923 = vmatprep.subr.mxu0 0.0
        %2924 = vmatpush1.msra.mxu0 0.0
        %2925 = vmatprep.subr.mxu0 0.0
        %2926 = vmatpush1.msra.mxu0 0.0
        %2927 = vmatprep.subr.mxu0 0.0
        %2928 = vmatpush1.msra.mxu0 0.0
        %2929 = vmatprep.subr.mxu0 0.0
        %2930 = vmatpush1.msra.mxu0 0.0
        %2931 = vmatprep.subr.mxu0 0.0
        %2932 = vmatpush1.msra.mxu0 0.0
        %2933 = vmatprep.subr.mxu0 0.0
        %2934 = vmatpush1.msra.mxu0 0.0
        %2935 = vmatprep.subr.mxu0 0.0
        %2936 = vmatpush1.msra.mxu0 0.0
        %2937 = vmatprep.subr.mxu0 0.0
        %2938 = vmatpush1.msra.mxu0 0.0
        %2939 = vmatprep.subr.mxu0 0.0
        %2940 = vmatpush1.msra.mxu0 0.0
        %2941 = vmatprep.subr.mxu0 0.0
        %2942 = vmatpush1.msra.mxu0 0.0
        %2943 = vmatprep.subr.mxu0 0.0
        %2944 = vmatpush1.msra.mxu0 0.0
        %2945 = vmatprep.mubr.f32.mxu0 0.0
        %2946 = vmatmul.mubr.f32.gmra.mrb[0].mxu0 %v2852
        %v2947 = vpop.f32.mrb[0].mxu0
        %v2948 = vadd.f32 0.0, %v2947
        %v2949 = vpop.f32.mrb[0].mxu0
        %2950 = vmatprep.mubr.f32.mxu0 0.0
        %2951 = vmatmul.mubr.f32.gmra.mrb[0].mxu0 %v2855
        %v2952 = vpop.f32.mrb[0].mxu0
        %v2953 = vadd.f32 0.0, %v2952
        %v2954 = vpop.f32.mrb[0].mxu0
        %2955 = vmatprep.mubr.f32.mxu0 0.0
        %2956 = vmatmul.mubr.f32.gmra.mrb[0].mxu0 %v2858
        %v2957 = vpop.f32.mrb[0].mxu0
        %v2958 = vadd.f32 0.0, %v2957
        %v2959 = vpop.f32.mrb[0].mxu0
        %2960 = vmatprep.mubr.f32.mxu0 0.0
        %2961 = vmatmul.mubr.f32.gmra.mrb[0].mxu0 %v2861
        %v2962 = vpop.f32.mrb[0].mxu0
        %v2963 = vadd.f32 0.0, %v2962
        %v2964 = vpop.f32.mrb[0].mxu0
        %2965 = vmatprep.mubr.f32.mxu0 0.0
        %2966 = vmatmul.mubr.f32.gmra.mrb[0].mxu0 %v2864
        %v2967 = vpop.f32.mrb[0].mxu0
        %v2968 = vadd.f32 0.0, %v2967
        %v2969 = vpop.f32.mrb[0].mxu0
        %2970 = vmatprep.mubr.f32.mxu0 0.0
        %2971 = vmatmul.mubr.f32.gmra.mrb[0].mxu0 %v2867
        %v2972 = vpop.f32.mrb[0].mxu0
        %v2973 = vadd.f32 0.0, %v2972
        %v2974 = vpop.f32.mrb[0].mxu0
        %2975 = vmatprep.mubr.f32.mxu0 0.0
        %2976 = vmatmul.mubr.f32.gmra.mrb[0].mxu0 %v2870
        %v2977 = vpop.f32.mrb[0].mxu0
        %v2978 = vadd.f32 0.0, %v2977
        %v2979 = vpop.f32.mrb[0].mxu0
        %2980 = vmatprep.mubr.f32.mxu0 0.0
        %2981 = vmatmul.mubr.f32.gmra.mrb[0].mxu0 %v2873
        %v2982 = vpop.f32.mrb[0].mxu0
        %v2983 = vadd.f32 0.0, %v2982
        %v2984 = vpop.f32.mrb[0].mxu0
        %2985 = vmatprep.mubr.f32.mxu0 0.0
        %2986 = vmatmul.mubr.f32.gmra.mrb[0].mxu0 %v2876
        %v2987 = vpop.f32.mrb[0].mxu0
        %v2988 = vadd.f32 0.0, %v2987
        %v2989 = vpop.f32.mrb[0].mxu0
        %2990 = vmatprep.mubr.f32.mxu0 0.0
        %2991 = vmatmul.mubr.f32.gmra.mrb[0].mxu0 %v2879
        %v2992 = vpop.f32.mrb[0].mxu0
        %v2993 = vadd.f32 0.0, %v2992
        %v2994 = vpop.f32.mrb[0].mxu0
        %2995 = vdwg.mxu0
        %v2996 = vadd.f32 %v2323, %v2948
        %v2997 = vadd.f32 %v2328, %v2953
        %v2998 = vadd.f32 %v2333, %v2958
        %v2999 = vadd.f32 %v2338, %v2963
        %v3000 = vadd.f32 %v2343, %v2968
        %v3001 = vadd.f32 %v2348, %v2973
        %v3002 = vadd.f32 %v2353, %v2978
        %v3003 = vadd.f32 %v2358, %v2983
        %v3004 = vadd.f32 %v2363, %v2988
        %v3005 = vadd.f32 %v2368, %v2993
        %3006 = vrot.lane.b32.xlu0 %v1010, 104
        %v3007 = vpop.permute.xlu0 %3006
        %3008 = vrot.lane.b32.xlu0 %v1015, 104
        %v3009 = vpop.permute.xlu0 %3008
        %3010 = vrot.lane.b32.xlu0 %v1020, 104
        %v3011 = vpop.permute.xlu0 %3010
        %3012 = vrot.lane.b32.xlu0 %v1025, 104
        %v3013 = vpop.permute.xlu0 %3012
        %3014 = vrot.lane.b32.xlu0 %v1030, 104
        %v3015 = vpop.permute.xlu0 %3014
        %3016 = vrot.lane.b32.xlu0 %v1035, 104
        %v3017 = vpop.permute.xlu0 %3016
        %3018 = vrot.lane.b32.xlu0 %v1040, 104
        %v3019 = vpop.permute.xlu0 %3018
        %3020 = vrot.lane.b32.xlu0 %v1045, 104
        %v3021 = vpop.permute.xlu0 %3020
        %3022 = vrot.lane.b32.xlu0 %v1050, 104
        %v3023 = vpop.permute.xlu0 %3022
        %3024 = vrot.lane.b32.xlu0 %v1055, 104
        %v3025 = vpop.permute.xlu0 %3024
        %3026 = vrot.lane.b32.xlu0 %v1010, 72
        %v3027 = vpop.permute.xlu0 %3026
        %3028 = vrot.lane.b32.xlu0 %v1015, 72
        %v3029 = vpop.permute.xlu0 %3028
        %3030 = vrot.lane.b32.xlu0 %v1020, 72
        %v3031 = vpop.permute.xlu0 %3030
        %3032 = vrot.lane.b32.xlu0 %v1025, 72
        %v3033 = vpop.permute.xlu0 %3032
        %3034 = vrot.lane.b32.xlu0 %v1030, 72
        %v3035 = vpop.permute.xlu0 %3034
        %3036 = vrot.lane.b32.xlu0 %v1035, 72
        %v3037 = vpop.permute.xlu0 %3036
        %3038 = vrot.lane.b32.xlu0 %v1040, 72
        %v3039 = vpop.permute.xlu0 %3038
        %3040 = vrot.lane.b32.xlu0 %v1045, 72
        %v3041 = vpop.permute.xlu0 %3040
        %3042 = vrot.lane.b32.xlu0 %v1050, 72
        %v3043 = vpop.permute.xlu0 %3042
        %3044 = vrot.lane.b32.xlu0 %v1055, 72
        %v3045 = vpop.permute.xlu0 %3044
        %v3046 = vsel %vm1149, %v3007, 0
        %v3048 = vsel %vm1149, %v3009, 0
        %v3050 = vsel %vm1149, %v3011, 0
        %v3052 = vsel %vm1149, %v3013, 0
        %v3054 = vsel %vm1149, %v3015, 0
        %v3056 = vsel %vm1149, %v3017, 0
        %v3058 = vsel %vm1149, %v3019, 0
        %v3060 = vsel %vm1149, %v3021, 0
        %v3062 = vsel %vm1149, %v3023, 0
        %v3064 = vsel %vm1149, %v3025, 0
        %v3066 = vsel %vm1149, %v3027, 0
        %v3068 = vsel %vm1149, %v3029, 0
        %v3070 = vsel %vm1149, %v3031, 0
        %v3072 = vsel %vm1149, %v3033, 0
        %v3074 = vsel %vm1149, %v3035, 0
        %v3076 = vsel %vm1149, %v3037, 0
        %v3078 = vsel %vm1149, %v3039, 0
        %v3080 = vsel %vm1149, %v3041, 0
        %v3082 = vsel %vm1149, %v3043, 0
        %v3084 = vsel %vm1149, %v3045, 0
        %3086 = vmatprep.subr.mxu0 0.0
        %3087 = vmatpush1.xpose.msra.mxu0 %v3066
        %3088 = vmatprep.subr.mxu0 0.0
        %3089 = vmatpush1.xpose.msra.mxu0 %v3068
        %3090 = vmatprep.subr.mxu0 0.0
        %3091 = vmatpush1.xpose.msra.mxu0 %v3070
        %3092 = vmatprep.subr.mxu0 0.0
        %3093 = vmatpush1.xpose.msra.mxu0 %v3072
        %3094 = vmatprep.subr.mxu0 0.0
        %3095 = vmatpush1.xpose.msra.mxu0 %v3074
        %3096 = vmatprep.subr.mxu0 0.0
        %3097 = vmatpush1.xpose.msra.mxu0 %v3076
        %3098 = vmatprep.subr.mxu0 0.0
        %3099 = vmatpush1.xpose.msra.mxu0 %v3078
        %3100 = vmatprep.subr.mxu0 0.0
        %3101 = vmatpush1.xpose.msra.mxu0 %v3080
        %3102 = vmatprep.subr.mxu0 0.0
        %3103 = vmatpush1.xpose.msra.mxu0 %v3082
        %3104 = vmatprep.subr.mxu0 0.0
        %3105 = vmatpush1.xpose.msra.mxu0 %v3084
        %3106 = vmatprep.subr.mxu0 0.0
        %3107 = vmatpush1.xpose.msra.mxu0 0.0
        %3108 = vmatprep.subr.mxu0 0.0
        %3109 = vmatpush1.xpose.msra.mxu0 0.0
        %3110 = vmatprep.subr.mxu0 0.0
        %3111 = vmatpush1.xpose.msra.mxu0 0.0
        %3112 = vmatprep.subr.mxu0 0.0
        %3113 = vmatpush1.xpose.msra.mxu0 0.0
        %3114 = vmatprep.subr.mxu0 0.0
        %3115 = vmatpush1.xpose.msra.mxu0 0.0
        %3116 = vmatprep.subr.mxu0 0.0
        %3117 = vmatpush1.xpose.msra.mxu0 0.0
        %3118 = vmatprep.subr.mxu0 0.0
        %3119 = vmatpush1.xpose.msra.mxu0 0.0
        %3120 = vmatprep.subr.mxu0 0.0
        %3121 = vmatpush1.xpose.msra.mxu0 0.0
        %3122 = vmatprep.subr.mxu0 0.0
        %3123 = vmatpush1.xpose.msra.mxu0 0.0
        %3124 = vmatprep.subr.mxu0 0.0
        %3125 = vmatpush1.xpose.msra.mxu0 0.0
        %3126 = vmatprep.subr.mxu0 0.0
        %3127 = vmatpush1.xpose.msra.mxu0 0.0
        %3128 = vmatprep.subr.mxu0 0.0
        %3129 = vmatpush1.xpose.msra.mxu0 0.0
        %3130 = vmatprep.subr.mxu0 0.0
        %3131 = vmatpush1.xpose.msra.mxu0 0.0
        %3132 = vmatprep.subr.mxu0 0.0
        %3133 = vmatpush1.xpose.msra.mxu0 0.0
        %3134 = vmatprep.subr.mxu0 0.0
        %3135 = vmatpush1.xpose.msra.mxu0 0.0
        %3136 = vmatprep.subr.mxu0 0.0
        %3137 = vmatpush1.xpose.msra.mxu0 0.0
        %3138 = vmatprep.subr.mxu0 0.0
        %3139 = vmatpush1.xpose.msra.mxu0 0.0
        %3140 = vmatprep.subr.mxu0 0.0
        %3141 = vmatpush1.xpose.msra.mxu0 0.0
        %3142 = vmatprep.subr.mxu0 0.0
        %3143 = vmatpush1.xpose.msra.mxu0 0.0
        %3144 = vmatprep.subr.mxu0 0.0
        %3145 = vmatpush1.xpose.msra.mxu0 0.0
        %3146 = vmatprep.subr.mxu0 0.0
        %3147 = vmatpush1.xpose.msra.mxu0 0.0
        %3148 = vmatprep.subr.mxu0 0.0
        %3149 = vmatpush1.xpose.msra.mxu0 0.0
        %3150 = vmatprep.mubr.f32.mxu0 0.0
        %3151 = vmatmul.mubr.f32.gmra.mrb[0].mxu0 %v3046
        %v3152 = vpop.f32.mrb[0].mxu0
        %v3153 = vadd.f32 %v1117, %v3152
        %v3154 = vpop.f32.mrb[0].mxu0
        %3155 = vmatprep.mubr.f32.mxu0 0.0
        %3156 = vmatmul.mubr.f32.gmra.mrb[0].mxu0 %v3048
        %v3157 = vpop.f32.mrb[0].mxu0
        %v3158 = vadd.f32 %v1117, %v3157
        %v3159 = vpop.f32.mrb[0].mxu0
        %3160 = vmatprep.mubr.f32.mxu0 0.0
        %3161 = vmatmul.mubr.f32.gmra.mrb[0].mxu0 %v3050
        %v3162 = vpop.f32.mrb[0].mxu0
        %v3163 = vadd.f32 %v1117, %v3162
        %v3164 = vpop.f32.mrb[0].mxu0
        %3165 = vmatprep.mubr.f32.mxu0 0.0
        %3166 = vmatmul.mubr.f32.gmra.mrb[0].mxu0 %v3052
        %v3167 = vpop.f32.mrb[0].mxu0
        %v3168 = vadd.f32 %v1117, %v3167
        %v3169 = vpop.f32.mrb[0].mxu0
        %3170 = vmatprep.mubr.f32.mxu0 0.0
        %3171 = vmatmul.mubr.f32.gmra.mrb[0].mxu0 %v3054
        %v3172 = vpop.f32.mrb[0].mxu0
        %v3173 = vadd.f32 %v1117, %v3172
        %v3174 = vpop.f32.mrb[0].mxu0
        %3175 = vmatprep.mubr.f32.mxu0 0.0
        %3176 = vmatmul.mubr.f32.gmra.mrb[0].mxu0 %v3056
        %v3177 = vpop.f32.mrb[0].mxu0
        %v3178 = vadd.f32 %v1117, %v3177
        %v3179 = vpop.f32.mrb[0].mxu0
        %3180 = vmatprep.mubr.f32.mxu0 0.0
        %3181 = vmatmul.mubr.f32.gmra.mrb[0].mxu0 %v3058
        %v3182 = vpop.f32.mrb[0].mxu0
        %v3183 = vadd.f32 %v1117, %v3182
        %v3184 = vpop.f32.mrb[0].mxu0
        %3185 = vmatprep.mubr.f32.mxu0 0.0
        %3186 = vmatmul.mubr.f32.gmra.mrb[0].mxu0 %v3060
        %v3187 = vpop.f32.mrb[0].mxu0
        %v3188 = vadd.f32 %v1117, %v3187
        %v3189 = vpop.f32.mrb[0].mxu0
        %3190 = vmatprep.mubr.f32.mxu0 0.0
        %3191 = vmatmul.mubr.f32.gmra.mrb[0].mxu0 %v3062
        %v3192 = vpop.f32.mrb[0].mxu0
        %v3193 = vadd.f32 %v1117, %v3192
        %v3194 = vpop.f32.mrb[0].mxu0
        %3195 = vmatprep.mubr.f32.mxu0 0.0
        %3196 = vmatmul.mubr.f32.gmra.mrb[0].mxu0 %v3064
        %v3197 = vpop.f32.mrb[0].mxu0
        %v3198 = vadd.f32 %v1117, %v3197
        %v3199 = vpop.f32.mrb[0].mxu0
        %3200 = vdwg.mxu0
        %v3201 = vsel %vm1305, %v3153, -inf
        %3202 = vmax.xlane.f32.xlu0 %v3201
        %v3203 = vpop.xlane.xlu0 %3202
        %v3204 = vsel %vm1305, %v3158, -inf
        %3205 = vmax.xlane.f32.xlu0 %v3204
        %v3206 = vpop.xlane.xlu0 %3205
        %v3207 = vsel %vm1305, %v3163, -inf
        %3208 = vmax.xlane.f32.xlu0 %v3207
        %v3209 = vpop.xlane.xlu0 %3208
        %v3210 = vsel %vm1305, %v3168, -inf
        %3211 = vmax.xlane.f32.xlu0 %v3210
        %v3212 = vpop.xlane.xlu0 %3211
        %v3213 = vsel %vm1305, %v3173, -inf
        %3214 = vmax.xlane.f32.xlu0 %v3213
        %v3215 = vpop.xlane.xlu0 %3214
        %v3216 = vsel %vm1305, %v3178, -inf
        %3217 = vmax.xlane.f32.xlu0 %v3216
        %v3218 = vpop.xlane.xlu0 %3217
        %v3219 = vsel %vm1305, %v3183, -inf
        %3220 = vmax.xlane.f32.xlu0 %v3219
        %v3221 = vpop.xlane.xlu0 %3220
        %v3222 = vsel %vm1305, %v3188, -inf
        %3223 = vmax.xlane.f32.xlu0 %v3222
        %v3224 = vpop.xlane.xlu0 %3223
        %v3225 = vsel %vm1305, %v3193, -inf
        %3226 = vmax.xlane.f32.xlu0 %v3225
        %v3227 = vpop.xlane.xlu0 %3226
        %v3228 = vsel %vm1305, %v3198, -inf
        %3229 = vmax.xlane.f32.xlu0 %v3228
        %v3230 = vpop.xlane.xlu0 %3229
        %v3231 = vsub.f32 %v3153, %v3203
        %v3232 = vsub.f32 %v3158, %v3206
        %v3233 = vsub.f32 %v3163, %v3209
        %v3234 = vsub.f32 %v3168, %v3212
        %v3235 = vsub.f32 %v3173, %v3215
        %v3236 = vsub.f32 %v3178, %v3218
        %v3237 = vsub.f32 %v3183, %v3221
        %v3238 = vsub.f32 %v3188, %v3224
        %v3239 = vsub.f32 %v3193, %v3227
        %v3240 = vsub.f32 %v3198, %v3230
        %v3241 = vmul.f32 %v3231, 1.442695
        %v3242 = vpow.pop %v3241
        %v3243 = vmul.f32 %v3232, 1.442695
        %v3244 = vpow.pop %v3243
        %v3245 = vmul.f32 %v3233, 1.442695
        %v3246 = vpow.pop %v3245
        %v3247 = vmul.f32 %v3234, 1.442695
        %v3248 = vpow.pop %v3247
        %v3249 = vmul.f32 %v3235, 1.442695
        %v3250 = vpow.pop %v3249
        %v3251 = vmul.f32 %v3236, 1.442695
        %v3252 = vpow.pop %v3251
        %v3253 = vmul.f32 %v3237, 1.442695
        %v3254 = vpow.pop %v3253
        %v3255 = vmul.f32 %v3238, 1.442695
        %v3256 = vpow.pop %v3255
        %v3257 = vmul.f32 %v3239, 1.442695
        %v3258 = vpow.pop %v3257
        %v3259 = vmul.f32 %v3240, 1.442695
        %v3260 = vpow.pop %v3259
        %v3261 = vsel %vm1305, %v3242, 0.0
        %3262 = vadd.xlane.f32.xlu0 %v3261
        %v3263 = vpop.xlane.xlu0 %3262
        %v3264 = vsel %vm1305, %v3244, 0.0
        %3265 = vadd.xlane.f32.xlu0 %v3264
        %v3266 = vpop.xlane.xlu0 %3265
        %v3267 = vsel %vm1305, %v3246, 0.0
        %3268 = vadd.xlane.f32.xlu0 %v3267
        %v3269 = vpop.xlane.xlu0 %3268
        %v3270 = vsel %vm1305, %v3248, 0.0
        %3271 = vadd.xlane.f32.xlu0 %v3270
        %v3272 = vpop.xlane.xlu0 %3271
        %v3273 = vsel %vm1305, %v3250, 0.0
        %3274 = vadd.xlane.f32.xlu0 %v3273
        %v3275 = vpop.xlane.xlu0 %3274
        %v3276 = vsel %vm1305, %v3252, 0.0
        %3277 = vadd.xlane.f32.xlu0 %v3276
        %v3278 = vpop.xlane.xlu0 %3277
        %v3279 = vsel %vm1305, %v3254, 0.0
        %3280 = vadd.xlane.f32.xlu0 %v3279
        %v3281 = vpop.xlane.xlu0 %3280
        %v3282 = vsel %vm1305, %v3256, 0.0
        %3283 = vadd.xlane.f32.xlu0 %v3282
        %v3284 = vpop.xlane.xlu0 %3283
        %v3285 = vsel %vm1305, %v3258, 0.0
        %3286 = vadd.xlane.f32.xlu0 %v3285
        %v3287 = vpop.xlane.xlu0 %3286
        %v3288 = vsel %vm1305, %v3260, 0.0
        %3289 = vadd.xlane.f32.xlu0 %v3288
        %v3290 = vpop.xlane.xlu0 %3289
        %v3291 = vrcp.pop %v3263
        %v3292 = vrcp.pop %v3266
        %v3293 = vrcp.pop %v3269
        %v3294 = vrcp.pop %v3272
        %v3295 = vrcp.pop %v3275
        %v3296 = vrcp.pop %v3278
        %v3297 = vrcp.pop %v3281
        %v3298 = vrcp.pop %v3284
        %v3299 = vrcp.pop %v3287
        %v3300 = vrcp.pop %v3290
        %3301 = vrot.lane.b32.xlu0 %v1060, 40
        %v3302 = vpop.permute.xlu0 %3301
        %3303 = vrot.lane.b32.xlu0 %v1065, 40
        %v3304 = vpop.permute.xlu0 %3303
        %3305 = vrot.lane.b32.xlu0 %v1070, 40
        %v3306 = vpop.permute.xlu0 %3305
        %3307 = vrot.lane.b32.xlu0 %v1075, 40
        %v3308 = vpop.permute.xlu0 %3307
        %3309 = vrot.lane.b32.xlu0 %v1080, 40
        %v3310 = vpop.permute.xlu0 %3309
        %3311 = vrot.lane.b32.xlu0 %v1085, 40
        %v3312 = vpop.permute.xlu0 %3311
        %3313 = vrot.lane.b32.xlu0 %v1090, 40
        %v3314 = vpop.permute.xlu0 %3313
        %3315 = vrot.lane.b32.xlu0 %v1095, 40
        %v3316 = vpop.permute.xlu0 %3315
        %3317 = vrot.lane.b32.xlu0 %v1100, 40
        %v3318 = vpop.permute.xlu0 %3317
        %3319 = vrot.lane.b32.xlu0 %v1105, 40
        %v3320 = vpop.permute.xlu0 %3319
        %v3332 = vsel %vm1305, %v3242, 0
        %v3335 = vsel %vm1305, %v3244, 0
        %v3338 = vsel %vm1305, %v3246, 0
        %v3341 = vsel %vm1305, %v3248, 0
        %v3344 = vsel %vm1305, %v3250, 0
        %v3347 = vsel %vm1305, %v3252, 0
        %v3350 = vsel %vm1305, %v3254, 0
        %v3353 = vsel %vm1305, %v3256, 0
        %v3356 = vsel %vm1305, %v3258, 0
        %v3359 = vsel %vm1305, %v3260, 0
        %3361 = vmatprep.subr.mxu0 0.0
        %3362 = vmatpush1.msra.mxu0 %v3302
        %3363 = vmatprep.subr.mxu0 0.0
        %3364 = vmatpush1.msra.mxu0 %v3304
        %3365 = vmatprep.subr.mxu0 0.0
        %3366 = vmatpush1.msra.mxu0 %v3306
        %3367 = vmatprep.subr.mxu0 0.0
        %3368 = vmatpush1.msra.mxu0 %v3308
        %3369 = vmatprep.subr.mxu0 0.0
        %3370 = vmatpush1.msra.mxu0 %v3310
        %3371 = vmatprep.subr.mxu0 0.0
        %3372 = vmatpush1.msra.mxu0 %v3312
        %3373 = vmatprep.subr.mxu0 0.0
        %3374 = vmatpush1.msra.mxu0 %v3314
        %3375 = vmatprep.subr.mxu0 0.0
        %3376 = vmatpush1.msra.mxu0 %v3316
        %3377 = vmatprep.subr.mxu0 0.0
        %3378 = vmatpush1.msra.mxu0 %v3318
        %3379 = vmatprep.subr.mxu0 0.0
        %3380 = vmatpush1.msra.mxu0 %v3320
        %3381 = vmatprep.subr.mxu0 0.0
        %3382 = vmatpush1.msra.mxu0 0.0
        %3383 = vmatprep.subr.mxu0 0.0
        %3384 = vmatpush1.msra.mxu0 0.0
        %3385 = vmatprep.subr.mxu0 0.0
        %3386 = vmatpush1.msra.mxu0 0.0
        %3387 = vmatprep.subr.mxu0 0.0
        %3388 = vmatpush1.msra.mxu0 0.0
        %3389 = vmatprep.subr.mxu0 0.0
        %3390 = vmatpush1.msra.mxu0 0.0
        %3391 = vmatprep.subr.mxu0 0.0
        %3392 = vmatpush1.msra.mxu0 0.0
        %3393 = vmatprep.subr.mxu0 0.0
        %3394 = vmatpush1.msra.mxu0 0.0
        %3395 = vmatprep.subr.mxu0 0.0
        %3396 = vmatpush1.msra.mxu0 0.0
        %3397 = vmatprep.subr.mxu0 0.0
        %3398 = vmatpush1.msra.mxu0 0.0
        %3399 = vmatprep.subr.mxu0 0.0
        %3400 = vmatpush1.msra.mxu0 0.0
        %3401 = vmatprep.subr.mxu0 0.0
        %3402 = vmatpush1.msra.mxu0 0.0
        %3403 = vmatprep.subr.mxu0 0.0
        %3404 = vmatpush1.msra.mxu0 0.0
        %3405 = vmatprep.subr.mxu0 0.0
        %3406 = vmatpush1.msra.mxu0 0.0
        %3407 = vmatprep.subr.mxu0 0.0
        %3408 = vmatpush1.msra.mxu0 0.0
        %3409 = vmatprep.subr.mxu0 0.0
        %3410 = vmatpush1.msra.mxu0 0.0
        %3411 = vmatprep.subr.mxu0 0.0
        %3412 = vmatpush1.msra.mxu0 0.0
        %3413 = vmatprep.subr.mxu0 0.0
        %3414 = vmatpush1.msra.mxu0 0.0
        %3415 = vmatprep.subr.mxu0 0.0
        %3416 = vmatpush1.msra.mxu0 0.0
        %3417 = vmatprep.subr.mxu0 0.0
        %3418 = vmatpush1.msra.mxu0 0.0
        %3419 = vmatprep.subr.mxu0 0.0
        %3420 = vmatpush1.msra.mxu0 0.0
        %3421 = vmatprep.subr.mxu0 0.0
        %3422 = vmatpush1.msra.mxu0 0.0
        %3423 = vmatprep.subr.mxu0 0.0
        %3424 = vmatpush1.msra.mxu0 0.0
        %3425 = vmatprep.mubr.f32.mxu0 0.0
        %3426 = vmatmul.mubr.f32.gmra.mrb[0].mxu0 %v3332
        %v3427 = vpop.f32.mrb[0].mxu0
        %v3428 = vadd.f32 0.0, %v3427
        %v3429 = vpop.f32.mrb[0].mxu0
        %3430 = vmatprep.mubr.f32.mxu0 0.0
        %3431 = vmatmul.mubr.f32.gmra.mrb[0].mxu0 %v3335
        %v3432 = vpop.f32.mrb[0].mxu0
        %v3433 = vadd.f32 0.0, %v3432
        %v3434 = vpop.f32.mrb[0].mxu0
        %3435 = vmatprep.mubr.f32.mxu0 0.0
        %3436 = vmatmul.mubr.f32.gmra.mrb[0].mxu0 %v3338
        %v3437 = vpop.f32.mrb[0].mxu0
        %v3438 = vadd.f32 0.0, %v3437
        %v3439 = vpop.f32.mrb[0].mxu0
        %3440 = vmatprep.mubr.f32.mxu0 0.0
        %3441 = vmatmul.mubr.f32.gmra.mrb[0].mxu0 %v3341
        %v3442 = vpop.f32.mrb[0].mxu0
        %v3443 = vadd.f32 0.0, %v3442
        %v3444 = vpop.f32.mrb[0].mxu0
        %3445 = vmatprep.mubr.f32.mxu0 0.0
        %3446 = vmatmul.mubr.f32.gmra.mrb[0].mxu0 %v3344
        %v3447 = vpop.f32.mrb[0].mxu0
        %v3448 = vadd.f32 0.0, %v3447
        %v3449 = vpop.f32.mrb[0].mxu0
        %3450 = vmatprep.mubr.f32.mxu0 0.0
        %3451 = vmatmul.mubr.f32.gmra.mrb[0].mxu0 %v3347
        %v3452 = vpop.f32.mrb[0].mxu0
        %v3453 = vadd.f32 0.0, %v3452
        %v3454 = vpop.f32.mrb[0].mxu0
        %3455 = vmatprep.mubr.f32.mxu0 0.0
        %3456 = vmatmul.mubr.f32.gmra.mrb[0].mxu0 %v3350
        %v3457 = vpop.f32.mrb[0].mxu0
        %v3458 = vadd.f32 0.0, %v3457
        %v3459 = vpop.f32.mrb[0].mxu0
        %3460 = vmatprep.mubr.f32.mxu0 0.0
        %3461 = vmatmul.mubr.f32.gmra.mrb[0].mxu0 %v3353
        %v3462 = vpop.f32.mrb[0].mxu0
        %v3463 = vadd.f32 0.0, %v3462
        %v3464 = vpop.f32.mrb[0].mxu0
        %3465 = vmatprep.mubr.f32.mxu0 0.0
        %3466 = vmatmul.mubr.f32.gmra.mrb[0].mxu0 %v3356
        %v3467 = vpop.f32.mrb[0].mxu0
        %v3468 = vadd.f32 0.0, %v3467
        %v3469 = vpop.f32.mrb[0].mxu0
        %3470 = vmatprep.mubr.f32.mxu0 0.0
        %3471 = vmatmul.mubr.f32.gmra.mrb[0].mxu0 %v3359
        %v3472 = vpop.f32.mrb[0].mxu0
        %v3473 = vadd.f32 0.0, %v3472
        %v3474 = vpop.f32.mrb[0].mxu0
        %3475 = vdwg.mxu0
        %v3476 = vmul.f32 %v3428, %v3291
        %v3477 = vmul.f32 %v3433, %v3292
        %v3478 = vmul.f32 %v3438, %v3293
        %v3479 = vmul.f32 %v3443, %v3294
        %v3480 = vmul.f32 %v3448, %v3295
        %v3481 = vmul.f32 %v3453, %v3296
        %v3482 = vmul.f32 %v3458, %v3297
        %v3483 = vmul.f32 %v3463, %v3298
        %v3484 = vmul.f32 %v3468, %v3299
        %v3485 = vmul.f32 %v3473, %v3300
        %v3487 = vsel %vm1149, %v3476, 0
        %v3490 = vsel %vm1149, %v3477, 0
        %v3493 = vsel %vm1149, %v3478, 0
        %v3496 = vsel %vm1149, %v3479, 0
        %v3499 = vsel %vm1149, %v3480, 0
        %v3502 = vsel %vm1149, %v3481, 0
        %v3505 = vsel %vm1149, %v3482, 0
        %v3508 = vsel %vm1149, %v3483, 0
        %v3511 = vsel %vm1149, %v3484, 0
        %v3514 = vsel %vm1149, %v3485, 0
        %3516 = vmatprep.subr.mxu0 0.0
        %3517 = vmatpush1.msra.mxu0 %v1111
        %3518 = vmatprep.subr.mxu0 0.0
        %3519 = vmatpush1.msra.mxu0 0.0
        %3520 = vmatprep.subr.mxu0 0.0
        %3521 = vmatpush1.msra.mxu0 0.0
        %3522 = vmatprep.subr.mxu0 0.0
        %3523 = vmatpush1.msra.mxu0 0.0
        %3524 = vmatprep.subr.mxu0 0.0
        %3525 = vmatpush1.msra.mxu0 0.0
        %3526 = vmatprep.subr.mxu0 0.0
        %3527 = vmatpush1.msra.mxu0 0.0
        %3528 = vmatprep.subr.mxu0 0.0
        %3529 = vmatpush1.msra.mxu0 0.0
        %3530 = vmatprep.subr.mxu0 0.0
        %3531 = vmatpush1.msra.mxu0 0.0
        %3532 = vmatprep.subr.mxu0 0.0
        %3533 = vmatpush1.msra.mxu0 0.0
        %3534 = vmatprep.subr.mxu0 0.0
        %3535 = vmatpush1.msra.mxu0 0.0
        %3536 = vmatprep.subr.mxu0 0.0
        %3537 = vmatpush1.msra.mxu0 0.0
        %3538 = vmatprep.subr.mxu0 0.0
        %3539 = vmatpush1.msra.mxu0 0.0
        %3540 = vmatprep.subr.mxu0 0.0
        %3541 = vmatpush1.msra.mxu0 0.0
        %3542 = vmatprep.subr.mxu0 0.0
        %3543 = vmatpush1.msra.mxu0 0.0
        %3544 = vmatprep.subr.mxu0 0.0
        %3545 = vmatpush1.msra.mxu0 0.0
        %3546 = vmatprep.subr.mxu0 0.0
        %3547 = vmatpush1.msra.mxu0 0.0
        %3548 = vmatprep.subr.mxu0 0.0
        %3549 = vmatpush1.msra.mxu0 0.0
        %3550 = vmatprep.subr.mxu0 0.0
        %3551 = vmatpush1.msra.mxu0 0.0
        %3552 = vmatprep.subr.mxu0 0.0
        %3553 = vmatpush1.msra.mxu0 0.0
        %3554 = vmatprep.subr.mxu0 0.0
        %3555 = vmatpush1.msra.mxu0 0.0
        %3556 = vmatprep.subr.mxu0 0.0
        %3557 = vmatpush1.msra.mxu0 0.0
        %3558 = vmatprep.subr.mxu0 0.0
        %3559 = vmatpush1.msra.mxu0 0.0
        %3560 = vmatprep.subr.mxu0 0.0
        %3561 = vmatpush1.msra.mxu0 0.0
        %3562 = vmatprep.subr.mxu0 0.0
        %3563 = vmatpush1.msra.mxu0 0.0
        %3564 = vmatprep.subr.mxu0 0.0
        %3565 = vmatpush1.msra.mxu0 0.0
        %3566 = vmatprep.subr.mxu0 0.0
        %3567 = vmatpush1.msra.mxu0 0.0
        %3568 = vmatprep.subr.mxu0 0.0
        %3569 = vmatpush1.msra.mxu0 0.0
        %3570 = vmatprep.subr.mxu0 0.0
        %3571 = vmatpush1.msra.mxu0 0.0
        %3572 = vmatprep.subr.mxu0 0.0
        %3573 = vmatpush1.msra.mxu0 0.0
        %3574 = vmatprep.subr.mxu0 0.0
        %3575 = vmatpush1.msra.mxu0 0.0
        %3576 = vmatprep.subr.mxu0 0.0
        %3577 = vmatpush1.msra.mxu0 0.0
        %3578 = vmatprep.subr.mxu0 0.0
        %3579 = vmatpush1.msra.mxu0 0.0
        %3580 = vmatprep.mubr.f32.mxu0 0.0
        %3581 = vmatmul.mubr.f32.gmra.mrb[0].mxu0 %v3487
        %v3582 = vpop.f32.mrb[0].mxu0
        %v3583 = vadd.f32 0.0, %v3582
        %v3584 = vpop.f32.mrb[0].mxu0
        %3585 = vmatprep.mubr.f32.mxu0 0.0
        %3586 = vmatmul.mubr.f32.gmra.mrb[0].mxu0 %v3490
        %v3587 = vpop.f32.mrb[0].mxu0
        %v3588 = vadd.f32 0.0, %v3587
        %v3589 = vpop.f32.mrb[0].mxu0
        %3590 = vmatprep.mubr.f32.mxu0 0.0
        %3591 = vmatmul.mubr.f32.gmra.mrb[0].mxu0 %v3493
        %v3592 = vpop.f32.mrb[0].mxu0
        %v3593 = vadd.f32 0.0, %v3592
        %v3594 = vpop.f32.mrb[0].mxu0
        %3595 = vmatprep.mubr.f32.mxu0 0.0
        %3596 = vmatmul.mubr.f32.gmra.mrb[0].mxu0 %v3496
        %v3597 = vpop.f32.mrb[0].mxu0
        %v3598 = vadd.f32 0.0, %v3597
        %v3599 = vpop.f32.mrb[0].mxu0
        %3600 = vmatprep.mubr.f32.mxu0 0.0
        %3601 = vmatmul.mubr.f32.gmra.mrb[0].mxu0 %v3499
        %v3602 = vpop.f32.mrb[0].mxu0
        %v3603 = vadd.f32 0.0, %v3602
        %v3604 = vpop.f32.mrb[0].mxu0
        %3605 = vmatprep.mubr.f32.mxu0 0.0
        %3606 = vmatmul.mubr.f32.gmra.mrb[0].mxu0 %v3502
        %v3607 = vpop.f32.mrb[0].mxu0
        %v3608 = vadd.f32 0.0, %v3607
        %v3609 = vpop.f32.mrb[0].mxu0
        %3610 = vmatprep.mubr.f32.mxu0 0.0
        %3611 = vmatmul.mubr.f32.gmra.mrb[0].mxu0 %v3505
        %v3612 = vpop.f32.mrb[0].mxu0
        %v3613 = vadd.f32 0.0, %v3612
        %v3614 = vpop.f32.mrb[0].mxu0
        %3615 = vmatprep.mubr.f32.mxu0 0.0
        %3616 = vmatmul.mubr.f32.gmra.mrb[0].mxu0 %v3508
        %v3617 = vpop.f32.mrb[0].mxu0
        %v3618 = vadd.f32 0.0, %v3617
        %v3619 = vpop.f32.mrb[0].mxu0
        %3620 = vmatprep.mubr.f32.mxu0 0.0
        %3621 = vmatmul.mubr.f32.gmra.mrb[0].mxu0 %v3511
        %v3622 = vpop.f32.mrb[0].mxu0
        %v3623 = vadd.f32 0.0, %v3622
        %v3624 = vpop.f32.mrb[0].mxu0
        %3625 = vmatprep.mubr.f32.mxu0 0.0
        %3626 = vmatmul.mubr.f32.gmra.mrb[0].mxu0 %v3514
        %v3627 = vpop.f32.mrb[0].mxu0
        %v3628 = vadd.f32 0.0, %v3627
        %v3629 = vpop.f32.mrb[0].mxu0
        %3630 = vdwg.mxu0
        %v3631 = vadd.f32 %v2996, %v3583
        %v3632 = vadd.f32 %v2997, %v3588
        %v3633 = vadd.f32 %v2998, %v3593
        %v3634 = vadd.f32 %v2999, %v3598
        %v3635 = vadd.f32 %v3000, %v3603
        %v3636 = vadd.f32 %v3001, %v3608
        %v3637 = vadd.f32 %v3002, %v3613
        %v3638 = vadd.f32 %v3003, %v3618
        %v3639 = vadd.f32 %v3004, %v3623
        %v3640 = vadd.f32 %v3005, %v3628
        %v3641 = vadd.f32 %v841, %v3631
        %v3642 = vadd.f32 %v842, %v3632
        %v3643 = vadd.f32 %v843, %v3633
        %v3644 = vadd.f32 %v844, %v3634
        %v3645 = vadd.f32 %v845, %v3635
        %v3646 = vadd.f32 %v846, %v3636
        %v3647 = vadd.f32 %v847, %v3637
        %v3648 = vadd.f32 %v848, %v3638
        %v3649 = vadd.f32 %v872, %v3639
        %v3650 = vadd.f32 %v873, %v3640
        %v3651 = vld [vmem:[%s11] sm:$0x1]
        %v3653 = vlaneseq
        %v3654 = vshrl.u32 %v3653, 7
        %v3655 = vsub.s32 0, %v3654
        %v3656 = vrot.slane %v3651, %v3655
        %v3658 = vadd.f32 %v3641, %v3656
        %v3659 = vadd.f32 %v3642, %v3656
        %v3660 = vadd.f32 %v3643, %v3656
        %v3661 = vadd.f32 %v3644, %v3656
        %v3662 = vadd.f32 %v3645, %v3656
        %v3663 = vadd.f32 %v3646, %v3656
        %v3664 = vadd.f32 %v3647, %v3656
        %v3665 = vadd.f32 %v3648, %v3656
        %v3666 = vadd.f32 %v3649, %v3656
        %v3667 = vadd.f32 %v3650, %v3656
        %v3668 = vld [vmem:[%s12] sm:$0x1]
        %v3669 = vld [vmem:[%s13] sm:$0x1]
        %v3670 = vsel %vm809, %v3658, 0.0
        %3671 = vadd.xlane.f32.xlu0 %v3670
        %v3672 = vpop.xlane.xlu0 %3671
        %v3673 = vsel %vm809, %v3659, 0.0
        %3674 = vadd.xlane.f32.xlu0 %v3673
        %v3675 = vpop.xlane.xlu0 %3674
        %v3676 = vsel %vm809, %v3660, 0.0
        %3677 = vadd.xlane.f32.xlu0 %v3676
        %v3678 = vpop.xlane.xlu0 %3677
        %v3679 = vsel %vm809, %v3661, 0.0
        %3680 = vadd.xlane.f32.xlu0 %v3679
        %v3681 = vpop.xlane.xlu0 %3680
        %v3682 = vsel %vm809, %v3662, 0.0
        %3683 = vadd.xlane.f32.xlu0 %v3682
        %v3684 = vpop.xlane.xlu0 %3683
        %v3685 = vsel %vm809, %v3663, 0.0
        %3686 = vadd.xlane.f32.xlu0 %v3685
        %v3687 = vpop.xlane.xlu0 %3686
        %v3688 = vsel %vm809, %v3664, 0.0
        %3689 = vadd.xlane.f32.xlu0 %v3688
        %v3690 = vpop.xlane.xlu0 %3689
        %v3691 = vsel %vm809, %v3665, 0.0
        %3692 = vadd.xlane.f32.xlu0 %v3691
        %v3693 = vpop.xlane.xlu0 %3692
        %v3694 = vsel %vm809, %v3666, 0.0
        %3695 = vadd.xlane.f32.xlu0 %v3694
        %v3696 = vpop.xlane.xlu0 %3695
        %v3697 = vsel %vm809, %v3667, 0.0
        %3698 = vadd.xlane.f32.xlu0 %v3697
        %v3699 = vpop.xlane.xlu0 %3698
        %v3700 = vmul.f32 %v3672, %v813
        %v3701 = vmul.f32 %v3675, %v813
        %v3702 = vmul.f32 %v3678, %v813
        %v3703 = vmul.f32 %v3681, %v813
        %v3704 = vmul.f32 %v3684, %v813
        %v3705 = vmul.f32 %v3687, %v813
        %v3706 = vmul.f32 %v3690, %v813
        %v3707 = vmul.f32 %v3693, %v813
        %v3708 = vmul.f32 %v3696, %v813
        %v3709 = vmul.f32 %v3699, %v813
        %v3710 = vmul.f32 %v3658, %v3658
        %v3711 = vmul.f32 %v3659, %v3659
        %v3712 = vmul.f32 %v3660, %v3660
        %v3713 = vmul.f32 %v3661, %v3661
        %v3714 = vmul.f32 %v3662, %v3662
        %v3715 = vmul.f32 %v3663, %v3663
        %v3716 = vmul.f32 %v3664, %v3664
        %v3717 = vmul.f32 %v3665, %v3665
        %v3718 = vmul.f32 %v3666, %v3666
        %v3719 = vmul.f32 %v3667, %v3667
        %v3720 = vsel %vm809, %v3710, 0.0
        %3721 = vadd.xlane.f32.xlu0 %v3720
        %v3722 = vpop.xlane.xlu0 %3721
        %v3723 = vsel %vm809, %v3711, 0.0
        %3724 = vadd.xlane.f32.xlu0 %v3723
        %v3725 = vpop.xlane.xlu0 %3724
        %v3726 = vsel %vm809, %v3712, 0.0
        %3727 = vadd.xlane.f32.xlu0 %v3726
        %v3728 = vpop.xlane.xlu0 %3727
        %v3729 = vsel %vm809, %v3713, 0.0
        %3730 = vadd.xlane.f32.xlu0 %v3729
        %v3731 = vpop.xlane.xlu0 %3730
        %v3732 = vsel %vm809, %v3714, 0.0
        %3733 = vadd.xlane.f32.xlu0 %v3732
        %v3734 = vpop.xlane.xlu0 %3733
        %v3735 = vsel %vm809, %v3715, 0.0
        %3736 = vadd.xlane.f32.xlu0 %v3735
        %v3737 = vpop.xlane.xlu0 %3736
        %v3738 = vsel %vm809, %v3716, 0.0
        %3739 = vadd.xlane.f32.xlu0 %v3738
        %v3740 = vpop.xlane.xlu0 %3739
        %v3741 = vsel %vm809, %v3717, 0.0
        %3742 = vadd.xlane.f32.xlu0 %v3741
        %v3743 = vpop.xlane.xlu0 %3742
        %v3744 = vsel %vm809, %v3718, 0.0
        %3745 = vadd.xlane.f32.xlu0 %v3744
        %v3746 = vpop.xlane.xlu0 %3745
        %v3747 = vsel %vm809, %v3719, 0.0
        %3748 = vadd.xlane.f32.xlu0 %v3747
        %v3749 = vpop.xlane.xlu0 %3748
        %v3750 = vmul.f32 %v3722, %v813
        %v3751 = vmul.f32 %v3725, %v813
        %v3752 = vmul.f32 %v3728, %v813
        %v3753 = vmul.f32 %v3731, %v813
        %v3754 = vmul.f32 %v3734, %v813
        %v3755 = vmul.f32 %v3737, %v813
        %v3756 = vmul.f32 %v3740, %v813
        %v3757 = vmul.f32 %v3743, %v813
        %v3758 = vmul.f32 %v3746, %v813
        %v3759 = vmul.f32 %v3749, %v813
        %v3760 = vmul.f32 %v3700, %v3700
        %v3761 = vmul.f32 %v3701, %v3701
        %v3762 = vmul.f32 %v3702, %v3702
        %v3763 = vmul.f32 %v3703, %v3703
        %v3764 = vmul.f32 %v3704, %v3704
        %v3765 = vmul.f32 %v3705, %v3705
        %v3766 = vmul.f32 %v3706, %v3706
        %v3767 = vmul.f32 %v3707, %v3707
        %v3768 = vmul.f32 %v3708, %v3708
        %v3769 = vmul.f32 %v3709, %v3709
        %v3770 = vsub.f32 %v3750, %v3760
        %v3771 = vsub.f32 %v3751, %v3761
        %v3772 = vsub.f32 %v3752, %v3762
        %v3773 = vsub.f32 %v3753, %v3763
        %v3774 = vsub.f32 %v3754, %v3764
        %v3775 = vsub.f32 %v3755, %v3765
        %v3776 = vsub.f32 %v3756, %v3766
        %v3777 = vsub.f32 %v3757, %v3767
        %v3778 = vsub.f32 %v3758, %v3768
        %v3779 = vsub.f32 %v3759, %v3769
        %v3780 = vsub.f32 %v3658, %v3700
        %v3781 = vsub.f32 %v3659, %v3701
        %v3782 = vsub.f32 %v3660, %v3702
        %v3783 = vsub.f32 %v3661, %v3703
        %v3784 = vsub.f32 %v3662, %v3704
        %v3785 = vsub.f32 %v3663, %v3705
        %v3786 = vsub.f32 %v3664, %v3706
        %v3787 = vsub.f32 %v3665, %v3707
        %v3788 = vsub.f32 %v3666, %v3708
        %v3789 = vsub.f32 %v3667, %v3709
        %v3790 = vadd.f32 %v3770, 1e-05
        %v3791 = vadd.f32 %v3771, 1e-05
        %v3792 = vadd.f32 %v3772, 1e-05
        %v3793 = vadd.f32 %v3773, 1e-05
        %v3794 = vadd.f32 %v3774, 1e-05
        %v3795 = vadd.f32 %v3775, 1e-05
        %v3796 = vadd.f32 %v3776, 1e-05
        %v3797 = vadd.f32 %v3777, 1e-05
        %v3798 = vadd.f32 %v3778, 1e-05
        %v3799 = vadd.f32 %v3779, 1e-05
        %v3800 = vrsqrt.pop %v3790
        %v3801 = vrsqrt.pop %v3791
        %v3802 = vrsqrt.pop %v3792
        %v3803 = vrsqrt.pop %v3793
        %v3804 = vrsqrt.pop %v3794
        %v3805 = vrsqrt.pop %v3795
        %v3806 = vrsqrt.pop %v3796
        %v3807 = vrsqrt.pop %v3797
        %v3808 = vrsqrt.pop %v3798
        %v3809 = vrsqrt.pop %v3799
        %v3810 = vmul.f32 %v3780, %v3800
        %v3811 = vmul.f32 %v3781, %v3801
        %v3812 = vmul.f32 %v3782, %v3802
        %v3813 = vmul.f32 %v3783, %v3803
        %v3814 = vmul.f32 %v3784, %v3804
        %v3815 = vmul.f32 %v3785, %v3805
        %v3816 = vmul.f32 %v3786, %v3806
        %v3817 = vmul.f32 %v3787, %v3807
        %v3818 = vmul.f32 %v3788, %v3808
        %v3819 = vmul.f32 %v3789, %v3809
        %v3821 = vlaneseq
        %v3822 = vshrl.u32 %v3821, 7
        %v3823 = vsub.s32 0, %v3822
        %v3824 = vrot.slane %v3668, %v3823
        %v3826 = vmul.f32 %v3810, %v3824
        %v3827 = vmul.f32 %v3811, %v3824
        %v3828 = vmul.f32 %v3812, %v3824
        %v3829 = vmul.f32 %v3813, %v3824
        %v3830 = vmul.f32 %v3814, %v3824
        %v3831 = vmul.f32 %v3815, %v3824
        %v3832 = vmul.f32 %v3816, %v3824
        %v3833 = vmul.f32 %v3817, %v3824
        %v3834 = vmul.f32 %v3818, %v3824
        %v3835 = vmul.f32 %v3819, %v3824
        %v3837 = vlaneseq
        %v3838 = vshrl.u32 %v3837, 7
        %v3839 = vsub.s32 0, %v3838
        %v3840 = vrot.slane %v3669, %v3839
        %v3842 = vadd.f32 %v3826, %v3840
        %v3843 = vadd.f32 %v3827, %v3840
        %v3844 = vadd.f32 %v3828, %v3840
        %v3845 = vadd.f32 %v3829, %v3840
        %v3846 = vadd.f32 %v3830, %v3840
        %v3847 = vadd.f32 %v3831, %v3840
        %v3848 = vadd.f32 %v3832, %v3840
        %v3849 = vadd.f32 %v3833, %v3840
        %v3850 = vadd.f32 %v3834, %v3840
        %v3851 = vadd.f32 %v3835, %v3840
        %v3852 = vld [vmem:[%s14] sm:$0xff]
        %v3853 = vld [vmem:[%s14 + $0x8] sm:$0xff]
        %v3854 = vld [vmem:[%s14 + $0x10] sm:$0xff]
        %v3855 = vld [vmem:[%s14 + $0x18] sm:$0xff]
        %v3856 = vld [vmem:[%s15] sm:$0x1]
        %v3858 = vlaneseq
        %v3859 = vshrl.u32 %v3858, 7
        %v3860 = vsub.s32 0, %v3859
        %v3861 = vrot.slane %v3856, %v3860
        %v3864 = vsel %vm809, %v3842, 0
        %v3867 = vsel %vm809, %v3843, 0
        %v3870 = vsel %vm809, %v3844, 0
        %v3873 = vsel %vm809, %v3845, 0
        %v3876 = vsel %vm809, %v3846, 0
        %v3879 = vsel %vm809, %v3847, 0
        %v3882 = vsel %vm809, %v3848, 0
        %v3885 = vsel %vm809, %v3849, 0
        %v3888 = vsel %vm809, %v3850, 0
        %v3891 = vsel %vm809, %v3851, 0
        %3893 = vmatprep.subr.mxu0 0.0
        %3894 = vmatpush1.msra.mxu0 %v3852
        %3895 = vmatprep.subr.mxu0 0.0
        %3896 = vmatpush1.msra.mxu0 %v3853
        %3897 = vmatprep.subr.mxu0 0.0
        %3898 = vmatpush1.msra.mxu0 %v3854
        %3899 = vmatprep.subr.mxu0 0.0
        %3900 = vmatpush1.msra.mxu0 %v3855
        %3901 = vmatprep.subr.mxu0 0.0
        %3902 = vmatpush1.msra.mxu0 0.0
        %3903 = vmatprep.subr.mxu0 0.0
        %3904 = vmatpush1.msra.mxu0 0.0
        %3905 = vmatprep.subr.mxu0 0.0
        %3906 = vmatpush1.msra.mxu0 0.0
        %3907 = vmatprep.subr.mxu0 0.0
        %3908 = vmatpush1.msra.mxu0 0.0
        %3909 = vmatprep.subr.mxu0 0.0
        %3910 = vmatpush1.msra.mxu0 0.0
        %3911 = vmatprep.subr.mxu0 0.0
        %3912 = vmatpush1.msra.mxu0 0.0
        %3913 = vmatprep.subr.mxu0 0.0
        %3914 = vmatpush1.msra.mxu0 0.0
        %3915 = vmatprep.subr.mxu0 0.0
        %3916 = vmatpush1.msra.mxu0 0.0
        %3917 = vmatprep.subr.mxu0 0.0
        %3918 = vmatpush1.msra.mxu0 0.0
        %3919 = vmatprep.subr.mxu0 0.0
        %3920 = vmatpush1.msra.mxu0 0.0
        %3921 = vmatprep.subr.mxu0 0.0
        %3922 = vmatpush1.msra.mxu0 0.0
        %3923 = vmatprep.subr.mxu0 0.0
        %3924 = vmatpush1.msra.mxu0 0.0
        %3925 = vmatprep.subr.mxu0 0.0
        %3926 = vmatpush1.msra.mxu0 0.0
        %3927 = vmatprep.subr.mxu0 0.0
        %3928 = vmatpush1.msra.mxu0 0.0
        %3929 = vmatprep.subr.mxu0 0.0
        %3930 = vmatpush1.msra.mxu0 0.0
        %3931 = vmatprep.subr.mxu0 0.0
        %3932 = vmatpush1.msra.mxu0 0.0
        %3933 = vmatprep.subr.mxu0 0.0
        %3934 = vmatpush1.msra.mxu0 0.0
        %3935 = vmatprep.subr.mxu0 0.0
        %3936 = vmatpush1.msra.mxu0 0.0
        %3937 = vmatprep.subr.mxu0 0.0
        %3938 = vmatpush1.msra.mxu0 0.0
        %3939 = vmatprep.subr.mxu0 0.0
        %3940 = vmatpush1.msra.mxu0 0.0
        %3941 = vmatprep.subr.mxu0 0.0
        %3942 = vmatpush1.msra.mxu0 0.0
        %3943 = vmatprep.subr.mxu0 0.0
        %3944 = vmatpush1.msra.mxu0 0.0
        %3945 = vmatprep.subr.mxu0 0.0
        %3946 = vmatpush1.msra.mxu0 0.0
        %3947 = vmatprep.subr.mxu0 0.0
        %3948 = vmatpush1.msra.mxu0 0.0
        %3949 = vmatprep.subr.mxu0 0.0
        %3950 = vmatpush1.msra.mxu0 0.0
        %3951 = vmatprep.subr.mxu0 0.0
        %3952 = vmatpush1.msra.mxu0 0.0
        %3953 = vmatprep.subr.mxu0 0.0
        %3954 = vmatpush1.msra.mxu0 0.0
        %3955 = vmatprep.subr.mxu0 0.0
        %3956 = vmatpush1.msra.mxu0 0.0
        %3957 = vmatprep.mubr.f32.mxu0 0.0
        %3958 = vmatmul.mubr.f32.gmra.mrb[0].mxu0 %v3864
        %v3959 = vpop.f32.mrb[0].mxu0
        %v3960 = vadd.f32 %v3861, %v3959
        %v3961 = vpop.f32.mrb[0].mxu0
        %3962 = vmatprep.mubr.f32.mxu0 0.0
        %3963 = vmatmul.mubr.f32.gmra.mrb[0].mxu0 %v3867
        %v3964 = vpop.f32.mrb[0].mxu0
        %v3965 = vadd.f32 %v3861, %v3964
        %v3966 = vpop.f32.mrb[0].mxu0
        %3967 = vmatprep.mubr.f32.mxu0 0.0
        %3968 = vmatmul.mubr.f32.gmra.mrb[0].mxu0 %v3870
        %v3969 = vpop.f32.mrb[0].mxu0
        %v3970 = vadd.f32 %v3861, %v3969
        %v3971 = vpop.f32.mrb[0].mxu0
        %3972 = vmatprep.mubr.f32.mxu0 0.0
        %3973 = vmatmul.mubr.f32.gmra.mrb[0].mxu0 %v3873
        %v3974 = vpop.f32.mrb[0].mxu0
        %v3975 = vadd.f32 %v3861, %v3974
        %v3976 = vpop.f32.mrb[0].mxu0
        %3977 = vmatprep.mubr.f32.mxu0 0.0
        %3978 = vmatmul.mubr.f32.gmra.mrb[0].mxu0 %v3876
        %v3979 = vpop.f32.mrb[0].mxu0
        %v3980 = vadd.f32 %v3861, %v3979
        %v3981 = vpop.f32.mrb[0].mxu0
        %3982 = vmatprep.mubr.f32.mxu0 0.0
        %3983 = vmatmul.mubr.f32.gmra.mrb[0].mxu0 %v3879
        %v3984 = vpop.f32.mrb[0].mxu0
        %v3985 = vadd.f32 %v3861, %v3984
        %v3986 = vpop.f32.mrb[0].mxu0
        %3987 = vmatprep.mubr.f32.mxu0 0.0
        %3988 = vmatmul.mubr.f32.gmra.mrb[0].mxu0 %v3882
        %v3989 = vpop.f32.mrb[0].mxu0
        %v3990 = vadd.f32 %v3861, %v3989
        %v3991 = vpop.f32.mrb[0].mxu0
        %3992 = vmatprep.mubr.f32.mxu0 0.0
        %3993 = vmatmul.mubr.f32.gmra.mrb[0].mxu0 %v3885
        %v3994 = vpop.f32.mrb[0].mxu0
        %v3995 = vadd.f32 %v3861, %v3994
        %v3996 = vpop.f32.mrb[0].mxu0
        %3997 = vmatprep.mubr.f32.mxu0 0.0
        %3998 = vmatmul.mubr.f32.gmra.mrb[0].mxu0 %v3888
        %v3999 = vpop.f32.mrb[0].mxu0
        %v4000 = vadd.f32 %v3861, %v3999
        %v4001 = vpop.f32.mrb[0].mxu0
        %4002 = vmatprep.mubr.f32.mxu0 0.0
        %4003 = vmatmul.mubr.f32.gmra.mrb[0].mxu0 %v3891
        %v4004 = vpop.f32.mrb[0].mxu0
        %v4005 = vadd.f32 %v3861, %v4004
        %v4006 = vpop.f32.mrb[0].mxu0
        %4007 = vdwg.mxu0
        %v4008 = vmax.f32 %v3960, 0.0
        %v4009 = vmax.f32 %v3965, 0.0
        %v4010 = vmax.f32 %v3970, 0.0
        %v4011 = vmax.f32 %v3975, 0.0
        %v4012 = vmax.f32 %v3980, 0.0
        %v4013 = vmax.f32 %v3985, 0.0
        %v4014 = vmax.f32 %v3990, 0.0
        %v4015 = vmax.f32 %v3995, 0.0
        %v4016 = vmax.f32 %v4000, 0.0
        %v4017 = vmax.f32 %v4005, 0.0
        %v4018 = vld [vmem:[%s16] sm:$0xff]
        %v4019 = vld [vmem:[%s16 + $0x8] sm:$0xff]
        %v4020 = vld [vmem:[%s16 + $0x10] sm:$0xff]
        %v4021 = vld [vmem:[%s16 + $0x18] sm:$0xff]
        %v4022 = vld [vmem:[%s16 + $0x20] sm:$0xff]
        %v4023 = vld [vmem:[%s16 + $0x28] sm:$0xff]
        %v4024 = vld [vmem:[%s16 + $0x30] sm:$0xff]
        %v4025 = vld [vmem:[%s16 + $0x38] sm:$0xff]
        %vm4026 = vcmask 523264
        %v4028 = vsel %vm4026, %v4008, 0
        %v4031 = vsel %vm4026, %v4009, 0
        %v4034 = vsel %vm4026, %v4010, 0
        %v4037 = vsel %vm4026, %v4011, 0
        %v4040 = vsel %vm4026, %v4012, 0
        %v4043 = vsel %vm4026, %v4013, 0
        %v4046 = vsel %vm4026, %v4014, 0
        %v4049 = vsel %vm4026, %v4015, 0
        %v4052 = vsel %vm4026, %v4016, 0
        %v4055 = vsel %vm4026, %v4017, 0
        %4057 = vmatprep.subr.mxu0 0.0
        %4058 = vmatpush1.msra.mxu0 %v4018
        %4059 = vmatprep.subr.mxu0 0.0
        %4060 = vmatpush1.msra.mxu0 %v4019
        %4061 = vmatprep.subr.mxu0 0.0
        %4062 = vmatpush1.msra.mxu0 %v4020
        %4063 = vmatprep.subr.mxu0 0.0
        %4064 = vmatpush1.msra.mxu0 %v4021
        %4065 = vmatprep.subr.mxu0 0.0
        %4066 = vmatpush1.msra.mxu0 %v4022
        %4067 = vmatprep.subr.mxu0 0.0
        %4068 = vmatpush1.msra.mxu0 %v4023
        %4069 = vmatprep.subr.mxu0 0.0
        %4070 = vmatpush1.msra.mxu0 %v4024
        %4071 = vmatprep.subr.mxu0 0.0
        %4072 = vmatpush1.msra.mxu0 %v4025
        %4073 = vmatprep.subr.mxu0 0.0
        %4074 = vmatpush1.msra.mxu0 0.0
        %4075 = vmatprep.subr.mxu0 0.0
        %4076 = vmatpush1.msra.mxu0 0.0
        %4077 = vmatprep.subr.mxu0 0.0
        %4078 = vmatpush1.msra.mxu0 0.0
        %4079 = vmatprep.subr.mxu0 0.0
        %4080 = vmatpush1.msra.mxu0 0.0
        %4081 = vmatprep.subr.mxu0 0.0
        %4082 = vmatpush1.msra.mxu0 0.0
        %4083 = vmatprep.subr.mxu0 0.0
        %4084 = vmatpush1.msra.mxu0 0.0
        %4085 = vmatprep.subr.mxu0 0.0
        %4086 = vmatpush1.msra.mxu0 0.0
        %4087 = vmatprep.subr.mxu0 0.0
        %4088 = vmatpush1.msra.mxu0 0.0
        %4089 = vmatprep.subr.mxu0 0.0
        %4090 = vmatpush1.msra.mxu0 0.0
        %4091 = vmatprep.subr.mxu0 0.0
        %4092 = vmatpush1.msra.mxu0 0.0
        %4093 = vmatprep.subr.mxu0 0.0
        %4094 = vmatpush1.msra.mxu0 0.0
        %4095 = vmatprep.subr.mxu0 0.0
        %4096 = vmatpush1.msra.mxu0 0.0
        %4097 = vmatprep.subr.mxu0 0.0
        %4098 = vmatpush1.msra.mxu0 0.0
        %4099 = vmatprep.subr.mxu0 0.0
        %4100 = vmatpush1.msra.mxu0 0.0
        %4101 = vmatprep.subr.mxu0 0.0
        %4102 = vmatpush1.msra.mxu0 0.0
        %4103 = vmatprep.subr.mxu0 0.0
        %4104 = vmatpush1.msra.mxu0 0.0
        %4105 = vmatprep.subr.mxu0 0.0
        %4106 = vmatpush1.msra.mxu0 0.0
        %4107 = vmatprep.subr.mxu0 0.0
        %4108 = vmatpush1.msra.mxu0 0.0
        %4109 = vmatprep.subr.mxu0 0.0
        %4110 = vmatpush1.msra.mxu0 0.0
        %4111 = vmatprep.subr.mxu0 0.0
        %4112 = vmatpush1.msra.mxu0 0.0
        %4113 = vmatprep.subr.mxu0 0.0
        %4114 = vmatpush1.msra.mxu0 0.0
        %4115 = vmatprep.subr.mxu0 0.0
        %4116 = vmatpush1.msra.mxu0 0.0
        %4117 = vmatprep.subr.mxu0 0.0
        %4118 = vmatpush1.msra.mxu0 0.0
        %4119 = vmatprep.subr.mxu0 0.0
        %4120 = vmatpush1.msra.mxu0 0.0
        %4121 = vmatprep.mubr.f32.mxu0 0.0
        %4122 = vmatmul.mubr.f32.gmra.mrb[0].mxu0 %v4028
        %v4123 = vpop.f32.mrb[0].mxu0
        %v4124 = vadd.f32 0.0, %v4123
        %v4125 = vpop.f32.mrb[0].mxu0
        %4126 = vmatprep.mubr.f32.mxu0 0.0
        %4127 = vmatmul.mubr.f32.gmra.mrb[0].mxu0 %v4031
        %v4128 = vpop.f32.mrb[0].mxu0
        %v4129 = vadd.f32 0.0, %v4128
        %v4130 = vpop.f32.mrb[0].mxu0
        %4131 = vmatprep.mubr.f32.mxu0 0.0
        %4132 = vmatmul.mubr.f32.gmra.mrb[0].mxu0 %v4034
        %v4133 = vpop.f32.mrb[0].mxu0
        %v4134 = vadd.f32 0.0, %v4133
        %v4135 = vpop.f32.mrb[0].mxu0
        %4136 = vmatprep.mubr.f32.mxu0 0.0
        %4137 = vmatmul.mubr.f32.gmra.mrb[0].mxu0 %v4037
        %v4138 = vpop.f32.mrb[0].mxu0
        %v4139 = vadd.f32 0.0, %v4138
        %v4140 = vpop.f32.mrb[0].mxu0
        %4141 = vmatprep.mubr.f32.mxu0 0.0
        %4142 = vmatmul.mubr.f32.gmra.mrb[0].mxu0 %v4040
        %v4143 = vpop.f32.mrb[0].mxu0
        %v4144 = vadd.f32 0.0, %v4143
        %v4145 = vpop.f32.mrb[0].mxu0
        %4146 = vmatprep.mubr.f32.mxu0 0.0
        %4147 = vmatmul.mubr.f32.gmra.mrb[0].mxu0 %v4043
        %v4148 = vpop.f32.mrb[0].mxu0
        %v4149 = vadd.f32 0.0, %v4148
        %v4150 = vpop.f32.mrb[0].mxu0
        %4151 = vmatprep.mubr.f32.mxu0 0.0
        %4152 = vmatmul.mubr.f32.gmra.mrb[0].mxu0 %v4046
        %v4153 = vpop.f32.mrb[0].mxu0
        %v4154 = vadd.f32 0.0, %v4153
        %v4155 = vpop.f32.mrb[0].mxu0
        %4156 = vmatprep.mubr.f32.mxu0 0.0
        %4157 = vmatmul.mubr.f32.gmra.mrb[0].mxu0 %v4049
        %v4158 = vpop.f32.mrb[0].mxu0
        %v4159 = vadd.f32 0.0, %v4158
        %v4160 = vpop.f32.mrb[0].mxu0
        %4161 = vmatprep.mubr.f32.mxu0 0.0
        %4162 = vmatmul.mubr.f32.gmra.mrb[0].mxu0 %v4052
        %v4163 = vpop.f32.mrb[0].mxu0
        %v4164 = vadd.f32 0.0, %v4163
        %v4165 = vpop.f32.mrb[0].mxu0
        %4166 = vmatprep.mubr.f32.mxu0 0.0
        %4167 = vmatmul.mubr.f32.gmra.mrb[0].mxu0 %v4055
        %v4168 = vpop.f32.mrb[0].mxu0
        %v4169 = vadd.f32 0.0, %v4168
        %v4170 = vpop.f32.mrb[0].mxu0
        %4171 = vdwg.mxu0
        %v4172 = vadd.f32 %v3842, %v4124
        %v4173 = vadd.f32 %v3843, %v4129
        %v4174 = vadd.f32 %v3844, %v4134
        %v4175 = vadd.f32 %v3845, %v4139
        %v4176 = vadd.f32 %v3846, %v4144
        %v4177 = vadd.f32 %v3847, %v4149
        %v4178 = vadd.f32 %v3848, %v4154
        %v4179 = vadd.f32 %v3849, %v4159
        %v4180 = vadd.f32 %v3850, %v4164
        %v4181 = vadd.f32 %v3851, %v4169
        %v4182 = vld [vmem:[%s17] sm:$0x1]
        %v4184 = vlaneseq
        %v4185 = vshrl.u32 %v4184, 7
        %v4186 = vsub.s32 0, %v4185
        %v4187 = vrot.slane %v4182, %v4186
        %v4189 = vadd.f32 %v4172, %v4187
        %v4190 = vadd.f32 %v4173, %v4187
        %v4191 = vadd.f32 %v4174, %v4187
        %v4192 = vadd.f32 %v4175, %v4187
        %v4193 = vadd.f32 %v4176, %v4187
        %v4194 = vadd.f32 %v4177, %v4187
        %v4195 = vadd.f32 %v4178, %v4187
        %v4196 = vadd.f32 %v4179, %v4187
        %v4197 = vadd.f32 %v4180, %v4187
        %v4198 = vadd.f32 %v4181, %v4187
        %v4199 = vld [vmem:[%s18] sm:$0x1]
        %v4200 = vld [vmem:[%s19] sm:$0x1]
        %v4201 = vsel %vm809, %v4189, 0.0
        %4202 = vadd.xlane.f32.xlu0 %v4201
        %v4203 = vpop.xlane.xlu0 %4202
        %v4204 = vsel %vm809, %v4190, 0.0
        %4205 = vadd.xlane.f32.xlu0 %v4204
        %v4206 = vpop.xlane.xlu0 %4205
        %v4207 = vsel %vm809, %v4191, 0.0
        %4208 = vadd.xlane.f32.xlu0 %v4207
        %v4209 = vpop.xlane.xlu0 %4208
        %v4210 = vsel %vm809, %v4192, 0.0
        %4211 = vadd.xlane.f32.xlu0 %v4210
        %v4212 = vpop.xlane.xlu0 %4211
        %v4213 = vsel %vm809, %v4193, 0.0
        %4214 = vadd.xlane.f32.xlu0 %v4213
        %v4215 = vpop.xlane.xlu0 %4214
        %v4216 = vsel %vm809, %v4194, 0.0
        %4217 = vadd.xlane.f32.xlu0 %v4216
        %v4218 = vpop.xlane.xlu0 %4217
        %v4219 = vsel %vm809, %v4195, 0.0
        %4220 = vadd.xlane.f32.xlu0 %v4219
        %v4221 = vpop.xlane.xlu0 %4220
        %v4222 = vsel %vm809, %v4196, 0.0
        %4223 = vadd.xlane.f32.xlu0 %v4222
        %v4224 = vpop.xlane.xlu0 %4223
        %v4225 = vsel %vm809, %v4197, 0.0
        %4226 = vadd.xlane.f32.xlu0 %v4225
        %v4227 = vpop.xlane.xlu0 %4226
        %v4228 = vsel %vm809, %v4198, 0.0
        %4229 = vadd.xlane.f32.xlu0 %v4228
        %v4230 = vpop.xlane.xlu0 %4229
        %v4231 = vmul.f32 %v4203, %v813
        %v4232 = vmul.f32 %v4206, %v813
        %v4233 = vmul.f32 %v4209, %v813
        %v4234 = vmul.f32 %v4212, %v813
        %v4235 = vmul.f32 %v4215, %v813
        %v4236 = vmul.f32 %v4218, %v813
        %v4237 = vmul.f32 %v4221, %v813
        %v4238 = vmul.f32 %v4224, %v813
        %v4239 = vmul.f32 %v4227, %v813
        %v4240 = vmul.f32 %v4230, %v813
        %v4241 = vmul.f32 %v4189, %v4189
        %v4242 = vmul.f32 %v4190, %v4190
        %v4243 = vmul.f32 %v4191, %v4191
        %v4244 = vmul.f32 %v4192, %v4192
        %v4245 = vmul.f32 %v4193, %v4193
        %v4246 = vmul.f32 %v4194, %v4194
        %v4247 = vmul.f32 %v4195, %v4195
        %v4248 = vmul.f32 %v4196, %v4196
        %v4249 = vmul.f32 %v4197, %v4197
        %v4250 = vmul.f32 %v4198, %v4198
        %v4251 = vsel %vm809, %v4241, 0.0
        %4252 = vadd.xlane.f32.xlu0 %v4251
        %v4253 = vpop.xlane.xlu0 %4252
        %v4254 = vsel %vm809, %v4242, 0.0
        %4255 = vadd.xlane.f32.xlu0 %v4254
        %v4256 = vpop.xlane.xlu0 %4255
        %v4257 = vsel %vm809, %v4243, 0.0
        %4258 = vadd.xlane.f32.xlu0 %v4257
        %v4259 = vpop.xlane.xlu0 %4258
        %v4260 = vsel %vm809, %v4244, 0.0
        %4261 = vadd.xlane.f32.xlu0 %v4260
        %v4262 = vpop.xlane.xlu0 %4261
        %v4263 = vsel %vm809, %v4245, 0.0
        %4264 = vadd.xlane.f32.xlu0 %v4263
        %v4265 = vpop.xlane.xlu0 %4264
        %v4266 = vsel %vm809, %v4246, 0.0
        %4267 = vadd.xlane.f32.xlu0 %v4266
        %v4268 = vpop.xlane.xlu0 %4267
        %v4269 = vsel %vm809, %v4247, 0.0
        %4270 = vadd.xlane.f32.xlu0 %v4269
        %v4271 = vpop.xlane.xlu0 %4270
        %v4272 = vsel %vm809, %v4248, 0.0
        %4273 = vadd.xlane.f32.xlu0 %v4272
        %v4274 = vpop.xlane.xlu0 %4273
        %v4275 = vsel %vm809, %v4249, 0.0
        %4276 = vadd.xlane.f32.xlu0 %v4275
        %v4277 = vpop.xlane.xlu0 %4276
        %v4278 = vsel %vm809, %v4250, 0.0
        %4279 = vadd.xlane.f32.xlu0 %v4278
        %v4280 = vpop.xlane.xlu0 %4279
        %v4281 = vmul.f32 %v4253, %v813
        %v4282 = vmul.f32 %v4256, %v813
        %v4283 = vmul.f32 %v4259, %v813
        %v4284 = vmul.f32 %v4262, %v813
        %v4285 = vmul.f32 %v4265, %v813
        %v4286 = vmul.f32 %v4268, %v813
        %v4287 = vmul.f32 %v4271, %v813
        %v4288 = vmul.f32 %v4274, %v813
        %v4289 = vmul.f32 %v4277, %v813
        %v4290 = vmul.f32 %v4280, %v813
        %v4291 = vmul.f32 %v4231, %v4231
        %v4292 = vmul.f32 %v4232, %v4232
        %v4293 = vmul.f32 %v4233, %v4233
        %v4294 = vmul.f32 %v4234, %v4234
        %v4295 = vmul.f32 %v4235, %v4235
        %v4296 = vmul.f32 %v4236, %v4236
        %v4297 = vmul.f32 %v4237, %v4237
        %v4298 = vmul.f32 %v4238, %v4238
        %v4299 = vmul.f32 %v4239, %v4239
        %v4300 = vmul.f32 %v4240, %v4240
        %v4301 = vsub.f32 %v4281, %v4291
        %v4302 = vsub.f32 %v4282, %v4292
        %v4303 = vsub.f32 %v4283, %v4293
        %v4304 = vsub.f32 %v4284, %v4294
        %v4305 = vsub.f32 %v4285, %v4295
        %v4306 = vsub.f32 %v4286, %v4296
        %v4307 = vsub.f32 %v4287, %v4297
        %v4308 = vsub.f32 %v4288, %v4298
        %v4309 = vsub.f32 %v4289, %v4299
        %v4310 = vsub.f32 %v4290, %v4300
        %v4311 = vsub.f32 %v4189, %v4231
        %v4312 = vsub.f32 %v4190, %v4232
        %v4313 = vsub.f32 %v4191, %v4233
        %v4314 = vsub.f32 %v4192, %v4234
        %v4315 = vsub.f32 %v4193, %v4235
        %v4316 = vsub.f32 %v4194, %v4236
        %v4317 = vsub.f32 %v4195, %v4237
        %v4318 = vsub.f32 %v4196, %v4238
        %v4319 = vsub.f32 %v4197, %v4239
        %v4320 = vsub.f32 %v4198, %v4240
        %v4321 = vadd.f32 %v4301, 1e-05
        %v4322 = vadd.f32 %v4302, 1e-05
        %v4323 = vadd.f32 %v4303, 1e-05
        %v4324 = vadd.f32 %v4304, 1e-05
        %v4325 = vadd.f32 %v4305, 1e-05
        %v4326 = vadd.f32 %v4306, 1e-05
        %v4327 = vadd.f32 %v4307, 1e-05
        %v4328 = vadd.f32 %v4308, 1e-05
        %v4329 = vadd.f32 %v4309, 1e-05
        %v4330 = vadd.f32 %v4310, 1e-05
        %v4331 = vrsqrt.pop %v4321
        %v4332 = vrsqrt.pop %v4322
        %v4333 = vrsqrt.pop %v4323
        %v4334 = vrsqrt.pop %v4324
        %v4335 = vrsqrt.pop %v4325
        %v4336 = vrsqrt.pop %v4326
        %v4337 = vrsqrt.pop %v4327
        %v4338 = vrsqrt.pop %v4328
        %v4339 = vrsqrt.pop %v4329
        %v4340 = vrsqrt.pop %v4330
        %v4341 = vmul.f32 %v4311, %v4331
        %v4342 = vmul.f32 %v4312, %v4332
        %v4343 = vmul.f32 %v4313, %v4333
        %v4344 = vmul.f32 %v4314, %v4334
        %v4345 = vmul.f32 %v4315, %v4335
        %v4346 = vmul.f32 %v4316, %v4336
        %v4347 = vmul.f32 %v4317, %v4337
        %v4348 = vmul.f32 %v4318, %v4338
        %v4349 = vmul.f32 %v4319, %v4339
        %v4350 = vmul.f32 %v4320, %v4340
        %v4352 = vlaneseq
        %v4353 = vshrl.u32 %v4352, 7
        %v4354 = vsub.s32 0, %v4353
        %v4355 = vrot.slane %v4199, %v4354
        %v4357 = vmul.f32 %v4341, %v4355
        %v4358 = vmul.f32 %v4342, %v4355
        %v4359 = vmul.f32 %v4343, %v4355
        %v4360 = vmul.f32 %v4344, %v4355
        %v4361 = vmul.f32 %v4345, %v4355
        %v4362 = vmul.f32 %v4346, %v4355
        %v4363 = vmul.f32 %v4347, %v4355
        %v4364 = vmul.f32 %v4348, %v4355
        %v4365 = vmul.f32 %v4349, %v4355
        %v4366 = vmul.f32 %v4350, %v4355
        %v4368 = vlaneseq
        %v4369 = vshrl.u32 %v4368, 7
        %v4370 = vsub.s32 0, %v4369
        %v4371 = vrot.slane %v4200, %v4370
        %v4373 = vadd.f32 %v4357, %v4371
        %v4374 = vadd.f32 %v4358, %v4371
        %v4375 = vadd.f32 %v4359, %v4371
        %v4376 = vadd.f32 %v4360, %v4371
        %v4377 = vadd.f32 %v4361, %v4371
        %v4378 = vadd.f32 %v4362, %v4371
        %v4379 = vadd.f32 %v4363, %v4371
        %v4380 = vadd.f32 %v4364, %v4371
        %v4381 = vadd.f32 %v4365, %v4371
        %v4382 = vadd.f32 %v4366, %v4371
        %4383 = vst.msk [vmem:[%s718] sm:$0xff] %vm809, %v4373
        %4384 = vst.msk [vmem:[%s718 + $0x8] sm:$0xff] %vm809, %v4374
        %4385 = vst.msk [vmem:[%s718 + $0x10] sm:$0xff] %vm809, %v4375
        %4386 = vst.msk [vmem:[%s718 + $0x18] sm:$0xff] %vm809, %v4376
        %4387 = vst.msk [vmem:[%s718 + $0x20] sm:$0xff] %vm809, %v4377
        %4388 = vst.msk [vmem:[%s718 + $0x28] sm:$0xff] %vm809, %v4378
        %4389 = vst.msk [vmem:[%s718 + $0x30] sm:$0xff] %vm809, %v4379
        %4390 = vst.msk [vmem:[%s718 + $0x38] sm:$0xff] %vm809, %v4380
        %4391 = vst.msk [vmem:[%s718 + $0x40] sm:$0xff] %vm809, %v4381
        %4392 = vst.msk [vmem:[%s718 + $0x48] sm:$0xff] %vm809, %v4382
        %p4393 = scmp.lt.s32.totalorder %s36, 1
        %s4394 = scalar_select %p4393, %s36, 1
        %s4395 = smul.addr %s4394, 10
        %s4396 = smul.addr %s4395, 8
        %s4397 = scalar_lea.vmem %s20, %s4396
        %s4398 = sand.u32 %s510, 1
        %s4399 = scalar_lea.sflag [#allocation3], %s4398
        %s4400 = sand.u32 %s510, 1
        %s4401 = smul.addr %s4400, 8
        %s4402 = scalar_lea.vmem [#allocation2], %s4401
        // Predicated region
        $region101: #{are_encoder_forward.2} parent=99 // pred_check
          %p4403 = pneg %p494
        $region102: #{are_encoder_forward.2} parent=99 // pred_check_branch
          %4405 = sbr.rel (%p4403) target = $region104
        $region103: #{are_encoder_forward.2} parent=99 // pred_region
          _
        $region104: #{are_encoder_forward.2} parent=99 // pred_fallthru
          _
        // Predicated region
        $region105: #{are_encoder_forward.2} parent=99 // pred_check
          %p4406 = pneg %p520
        $region106: #{are_encoder_forward.2} parent=99 // pred_check_branch
          %4408 = sbr.rel (%p4406) target = $region108
        $region107: #{are_encoder_forward.2} parent=99 // pred_region
          %s4410 = ssub.s32 128, 128
          %4411 = vsyncadd %s4399, %s4410
          %s4412 = smul.addr %s36, 128
          %s4413 = scalar_lea.hbm %s21, %s4412
          %s4415 = sshll.u32 %s4402, 4
          %s4416 = int_to_ptr.vmem [resolvable:$true] %s4415
          %4418 = dma.vmem_to_hbm [thread:$0]  %s4416, 128, %s4413, %s4399
        $region108: #{are_encoder_forward.2} parent=99 // pred_fallthru
          _
      $region100: #{are_encoder_forward.2} parent=5 // pred_fallthru
        _
      %p4419 = scmp.le.s32.totalorder 2, %s31
      // Predicated region
      $region109: #{are_encoder_forward.2} parent=5 // pred_check
        %p4420 = pneg %p4419
      $region110: #{are_encoder_forward.2} parent=5 // pred_check_branch
        %4422 = sbr.rel (%p4420) target = $region112
      $region111: #{are_encoder_forward.2} parent=5 // pred_region
        %s4423 = ssub.s32 %s31, 2
        // Predicated region
        $region113: #{are_encoder_forward.2} parent=111 // pred_check
          %p4424 = pneg %p500
        $region114: #{are_encoder_forward.2} parent=111 // pred_check_branch
          %4426 = sbr.rel (%p4424) target = $region116
        $region115: #{are_encoder_forward.2} parent=111 // pred_region
          %p4427 = scmp.lt.s32.totalorder %s37, 1
          %s4428 = scalar_select %p4427, %s37, 1
          %s4429 = smul.addr %s4428, 10
          %s4430 = smul.addr %s4429, 8
          %s4431 = scalar_lea.vmem %s20, %s4430
        $region116: #{are_encoder_forward.2} parent=111 // pred_fallthru
          _
        // Predicated region
        $region117: #{are_encoder_forward.2} parent=111 // pred_check
          %p4432 = pneg %p526
        $region118: #{are_encoder_forward.2} parent=111 // pred_check_branch
          %4434 = sbr.rel (%p4432) target = $region120
        $region119: #{are_encoder_forward.2} parent=111 // pred_region
          %s4435 = sand.u32 %s511, 1
          %s4436 = scalar_lea.sflag [#allocation3], %s4435
          %s4437 = sand.u32 %s511, 1
          %s4438 = smul.addr %s4437, 8
          %s4439 = scalar_lea.vmem [#allocation2], %s4438
          %4440 = dma.done %s4436, 128
        $region120: #{are_encoder_forward.2} parent=111 // pred_fallthru
          _
      $region112: #{are_encoder_forward.2} parent=5 // pred_fallthru
        _
    $region6: #{are_encoder_forward.2} parent=1 // loop_footer
      %s35 = sadd.s32 1, %s31
    $region7: #{are_encoder_forward.2} parent=1 // loop_footer_branch
      %30 = sbr.rel target = $region3
    $region8: #{are_encoder_forward.2} parent=1 // loop_exit
      _
    %4441 = vsyncpa [#allocation3], 1
    %s4442 = scalar_lea.sflag [#allocation3], 1
    %4443 = vsyncpa %s4442, 1

</llo_original>
